<compile_context>
chip_gen: v6e
topology: v6e:2x2x1
jax: 0.10.0
libtpu: 0.0.40
codegen_flags: <defaults>
</compile_context>

<pallas_src>
import functools

import jax
import jax.numpy as jnp
from jax.experimental import pallas as pl
from jax.experimental.pallas import tpu as pltpu


def _round_up(x, m):
    return ((x + m - 1) // m) * m


def _sigmoid(x):
    # exp is a guaranteed EUP lowering inside Mosaic; keep the formula simple.
    return 1.0 / (1.0 + jnp.exp(-x))


# ---------------------------------------------------------------------------
# Pallas kernel 1: GEMM (+ optional fused bias, + optional fused activation)
# ---------------------------------------------------------------------------
def _gemm_kernel(*refs, activation, has_bias):
    if has_bias:
        a_ref, b_ref, bias_ref, o_ref = refs
    else:
        a_ref, b_ref, o_ref = refs
    acc = jnp.dot(a_ref[...], b_ref[...], preferred_element_type=jnp.float32)
    if has_bias:
        acc = acc + bias_ref[...]
    if activation == "sigmoid":
        acc = _sigmoid(acc)
    o_ref[...] = acc.astype(o_ref.dtype)


def pallas_matmul(a, b, bias=None, activation="none",
                  out_dtype=jnp.float32, tm=512):
    """a: (M, K), b: (K, N), bias: (N,) or None -> (M, N) in out_dtype."""
    M, K = a.shape
    Kb, N = b.shape
    assert K == Kb
    tm = min(tm, M)
    grid_m = pl.cdiv(M, tm)          # ragged last block handled by Pallas
    has_bias = bias is not None
    in_specs = [pl.BlockSpec((tm, K), lambda i: (i, 0)),
                pl.BlockSpec((K, N), lambda i: (0, 0))]
    args = [a, b]
    if has_bias:
        in_specs.append(pl.BlockSpec((1, N), lambda i: (0, 0)))
        args.append(bias.reshape(1, N).astype(jnp.float32))
    return pl.pallas_call(
        functools.partial(_gemm_kernel, activation=activation,
                          has_bias=has_bias),
        out_shape=jax.ShapeDtypeStruct((M, N), out_dtype),
        grid=(grid_m,),
        in_specs=in_specs,
        out_specs=pl.BlockSpec((tm, N), lambda i: (i, 0)),
        compiler_params=pltpu.CompilerParams(
            dimension_semantics=("parallel",)),
    )(*args)


# ---------------------------------------------------------------------------
# Pallas kernel 2: fused ConvLSTM recurrence over the whole time axis
#   grid = (T,); batch folded into the lane (pixel) axis; h/c persist in VMEM
#   scratch; hidden-path 3x3 conv = 9-tap concat in VMEM + ONE K=9*hd matmul.
# ---------------------------------------------------------------------------
def _convlstm_step_kernel(gx_ref, whh_ref, mask_ref, h0_ref, c0_ref,
                          hseq_ref, hlast_ref, clast_ref,
                          h_state, c_state, hcat_ref,
                          *, hd, W, taps, cdt):
    t = pl.program_id(0)

    @pl.when(t == 0)
    def _():
        h_state[...] = h0_ref[...]
        c_state[...] = c0_ref[...]

    h_c = h_state[...].astype(cdt)          # (hd, B*HW), lane-dense
    n = h_c.shape[1]

    # Build the 9-tap shifted/masked hidden tensor (9*hd, B*HW) in VMEM scratch.
    # The lane axis is the flattened (batch, pixel) index; out-of-image taps are
    # zeroed by the mask, which also kills any cross-batch / row wraparound.
    for tap, (dy, dx) in enumerate(taps):
        off = dy * W + dx
        if off == 0:
            ht = h_c
        else:
            ht = pltpu.roll(h_c, shift=(-off) % n, axis=1)
            ht = ht * mask_ref[tap * hd:(tap + 1) * hd, :]
        hcat_ref[tap * hd:(tap + 1) * hd, :] = ht

    # Hidden-path conv == ONE K=9*hd matmul on the MXU, f32 accumulate.
    gates = gx_ref[...] + jnp.dot(whh_ref[...], hcat_ref[...],
                                  preferred_element_type=jnp.float32)

    # Gate order: i, f, o, g (see TODO at top of file).  One sigmoid pass over
    # the contiguous 3*hd sublane block, then cheap sublane slices.
    sig = _sigmoid(gates[0:3 * hd, :])
    i_g = sig[0 * hd:1 * hd, :]
    f_g = sig[1 * hd:2 * hd, :]
    o_g = sig[2 * hd:3 * hd, :]
    g_g = jnp.tanh(gates[3 * hd:4 * hd, :])

    c_new = f_g * c_state[...] + i_g * g_g
    h_new = o_g * jnp.tanh(c_new)

    h_state[...] = h_new
    c_state[...] = c_new
    hseq_ref[...] = h_new.astype(hseq_ref.dtype)
    # h_last/c_last have a constant block index over the "arbitrary" T axis:
    # they stay VMEM-resident and are flushed to HBM once, after the last step.
    # (Do NOT mark T parallel or reorder it - the recurrence requires order.)
    hlast_ref[...] = h_new
    clast_ref[...] = c_new


def _convlstm_recurrence(gx, whh, mask, h0, c0, *, W, hd, taps,
                         compute_dtype, out_dtype):
    """gx: (T, 4*hd, B*HW) f32; whh: (4*hd, 9*hd); mask: (9*hd, B*HW);
    h0, c0: (hd, B*HW) f32  ->  h_seq (T, hd, B*HW), h_last, c_last."""
    T, four_hd, BHW = gx.shape
    n_taps = len(taps)
    kernel = functools.partial(_convlstm_step_kernel, hd=hd, W=W, taps=taps,
                               cdt=compute_dtype)
    return pl.pallas_call(
        kernel,
        out_shape=(
            jax.ShapeDtypeStruct((T, hd, BHW), out_dtype),
            jax.ShapeDtypeStruct((hd, BHW), jnp.float32),
            jax.ShapeDtypeStruct((hd, BHW), jnp.float32),
        ),
        grid=(T,),
        in_specs=[
            pl.BlockSpec((None, four_hd, BHW), lambda t: (t, 0, 0)),
            pl.BlockSpec((four_hd, n_taps * hd), lambda t: (0, 0)),
            pl.BlockSpec((n_taps * hd, BHW), lambda t: (0, 0)),
            pl.BlockSpec((hd, BHW), lambda t: (0, 0)),
            pl.BlockSpec((hd, BHW), lambda t: (0, 0)),
        ],
        out_specs=(
            pl.BlockSpec((None, hd, BHW), lambda t: (t, 0, 0)),
            pl.BlockSpec((hd, BHW), lambda t: (0, 0)),
            pl.BlockSpec((hd, BHW), lambda t: (0, 0)),
        ),
        scratch_shapes=[
            pltpu.VMEM((hd, BHW), jnp.float32),             # h state (f32)
            pltpu.VMEM((hd, BHW), jnp.float32),             # c state (f32)
            pltpu.VMEM((n_taps * hd, BHW), compute_dtype),  # 9-tap concat
        ],
        compiler_params=pltpu.CompilerParams(
            dimension_semantics=("arbitrary",)),            # true recurrence
    )(gx, whh, mask, h0, c0)


# ---------------------------------------------------------------------------
# im2col glue (XLA) + conv wrappers calling the Pallas GEMM
# ---------------------------------------------------------------------------
def _conv2d_seq_gemm(x_seq, w, b, gemm_dtype):
    """x_seq: (T,B,H,W,Cin); w: Conv2d layout (Cout,Cin,k,k); b: (Cout,)."""
    T, B, H, W, Cin = x_seq.shape
    Cout, _, k, _ = w.shape
    p = k // 2
    x_seq = x_seq.astype(gemm_dtype)       # cast BEFORE im2col: half HBM bytes
    xp = jnp.pad(x_seq, ((0, 0), (0, 0), (p, p), (p, p), (0, 0)))
    cols = [xp[:, :, dh:dh + H, dw:dw + W, :]
            for dh in range(k) for dw in range(k)]
    Kc = k * k * Cin
    Kp = _round_up(Kc, 128)                # lane-aligned K
    if Kp > Kc:
        cols.append(jnp.zeros((T, B, H, W, Kp - Kc), gemm_dtype))
    patches = jnp.concatenate(cols, axis=-1).reshape(T * B * H * W, Kp)
    wmat = jnp.transpose(w, (2, 3, 1, 0)).reshape(Kc, Cout)
    wmat = jnp.pad(wmat, ((0, Kp - Kc), (0, 0))).astype(gemm_dtype)
    out = pallas_matmul(patches, wmat, bias=b, activation="none",
                        out_dtype=jnp.float32)     # gx kept f32 for accuracy
    return out.reshape(T, B, H * W, Cout)


def _conv3d_gemm(x, w, gemm_dtype, activation="sigmoid"):
    """x: (B,T,H,W,Cin); w: Conv3d layout (Cout,Cin,k,k,k), no bias."""
    B, T, H, W, Cin = x.shape
    Cout, _, k, _, _ = w.shape
    p = k // 2
    x = x.astype(gemm_dtype)
    xp = jnp.pad(x, ((0, 0), (p, p), (p, p), (p, p), (0, 0)))
    cols = [xp[:, dt:dt + T, dh:dh + H, dw:dw + W, :]
            for dt in range(k) for dh in range(k) for dw in range(k)]
    Kc = k * k * k * Cin
    Kp = _round_up(Kc, 128)
    if Kp > Kc:
        cols.append(jnp.zeros((B, T, H, W, Kp - Kc), gemm_dtype))
    patches = jnp.concatenate(cols, axis=-1).reshape(B * T * H * W, Kp)
    wmat = jnp.transpose(w, (2, 3, 4, 1, 0)).reshape(Kc, Cout)
    Np = _round_up(Cout, 128)              # lane-dense output slab
    wmat = jnp.pad(wmat, ((0, Kp - Kc), (0, Np - Cout))).astype(gemm_dtype)
    out = pallas_matmul(patches, wmat, bias=None, activation=activation,
                        out_dtype=jnp.float32)
    return out.reshape(B, T, H, W, Np)[..., :Cout]


def _make_tap_mask(B, H, W, hd, taps, dtype):
    """(n_taps*hd, B*H*W) {0,1} border-validity mask, lane-dense layout."""
    ys = jnp.repeat(jnp.arange(H), W)
    xs = jnp.tile(jnp.arange(W), H)
    rows = []
    for dy, dx in taps:
        valid = ((ys + dy >= 0) & (ys + dy < H) &
                 (xs + dx >= 0) & (xs + dx < W)).astype(dtype)   # (H*W,)
        v = jnp.tile(valid, (B,))                                # (B*H*W,)
        rows.append(jnp.broadcast_to(v[None, :], (hd, B * H * W)))
    return jnp.concatenate(rows, axis=0)


# ---------------------------------------------------------------------------
# DeterministicConvLSTM (reconstructed) and SSTA_Net forward
# ---------------------------------------------------------------------------
def conv_lstm_forward(x, hidden, lstm_params, gemm_dtype):
    """x: (B,T,H,W,Cin); hidden: list of (h, c), each (B,H,W,hd)."""
    B, T, H, W, _ = x.shape
    k = lstm_params[0]["w"].shape[-1]
    p = k // 2
    taps = tuple((dh - p, dw - p) for dh in range(k) for dw in range(k))
    HW = H * W
    inp_seq = jnp.transpose(x, (1, 0, 2, 3, 4))        # (T,B,H,W,Cin)

    new_hidden = []
    for l, prm in enumerate(lstm_params):
        w, b = prm["w"], prm["b"]
        four_hd = w.shape[0]
        hd = four_hd // 4
        in_ch = inp_seq.shape[-1]
        w_x = w[:, :in_ch]                              # input-path weights
        w_h = w[:, in_ch:]                              # hidden-path weights

        # Stage A: input-path gate conv (+bias) for ALL T frames in one GEMM.
        gx = _conv2d_seq_gemm(inp_seq, w_x, b, gemm_dtype)   # (T,B,HW,4hd) f32
        # channels-first, batch folded into the lane (pixel) axis.
        gx = jnp.transpose(gx, (0, 3, 1, 2)).reshape(T, four_hd, B * HW)

        # Stage B: fused recurrence; h/c resident in VMEM across the time loop.
        whh = jnp.transpose(w_h, (0, 2, 3, 1)).reshape(four_hd, k * k * hd)
        mask = _make_tap_mask(B, H, W, hd, taps, gemm_dtype)
        h0, c0 = hidden[l]
        h0 = jnp.transpose(h0, (3, 0, 1, 2)).reshape(hd, B * HW)
        c0 = jnp.transpose(c0, (3, 0, 1, 2)).reshape(hd, B * HW)
        h_seq, h_last, c_last = _convlstm_recurrence(
            gx, whh.astype(gemm_dtype), mask,
            h0.astype(jnp.float32), c0.astype(jnp.float32),
            W=W, hd=hd, taps=taps,
            compute_dtype=gemm_dtype, out_dtype=gemm_dtype)

        new_hidden.append(
            (jnp.transpose(h_last.reshape(hd, B, H, W), (1, 2, 3, 0)),
             jnp.transpose(c_last.reshape(hd, B, H, W), (1, 2, 3, 0))))
        # back to channels-last (T,B,H,W,hd) for the next layer / Conv3d.
        inp_seq = jnp.transpose(h_seq.reshape(T, hd, B, H, W), (0, 2, 3, 4, 1))

    h_out = jnp.transpose(inp_seq, (1, 0, 2, 3, 4))    # (B,T,H,W,hd)
    return h_out, new_hidden


def ssta_forward(params, x_t, m_t, m_t_others, frame_predictor_hidden,
                 h_t, c_t, delta_c_list, delta_m_list, *,
                 gemm_dtype=jnp.bfloat16):
    # torch.cat([x_t, m_t, m_t_others], -1); the NCTHW permutes are no-ops here.
    x = jnp.concatenate([x_t, m_t, m_t_others], axis=-1)      # (B,T,H,W,Cin)
    h, frame_predictor_hidden = conv_lstm_forward(
        x, frame_predictor_hidden, params["lstm"], gemm_dtype)
    # l3: Conv3d(hidden -> 3, bias=False); sigmoid fused into the GEMM epilogue.
    pred_x_tp1 = _conv3d_gemm(h, params["l3_w"], gemm_dtype, activation="sigmoid")
    message = None
    return (pred_x_tp1, message, frame_predictor_hidden,
            h_t, c_t, delta_c_list, delta_m_list)


# ---------------------------------------------------------------------------
# Pure-JAX (XLA) reference for validation (HIGHEST precision for tight tols)
# ---------------------------------------------------------------------------
def _ref_conv2d_same(x, w, b=None):
    out = jax.lax.conv_general_dilated(
        x, jnp.transpose(w, (2, 3, 1, 0)), window_strides=(1, 1),
        padding="SAME", dimension_numbers=("NHWC", "HWIO", "NHWC"),
        precision=jax.lax.Precision.HIGHEST)
    return out if b is None else out + b


def _ref_conv3d_same(x, w):
    return jax.lax.conv_general_dilated(
        x, jnp.transpose(w, (2, 3, 4, 1, 0)), window_strides=(1, 1, 1),
        padding="SAME", dimension_numbers=("NDHWC", "DHWIO", "NDHWC"),
        precision=jax.lax.Precision.HIGHEST)


def ref_forward(params, x_t, m_t, m_t_others, hidden):
    x = jnp.concatenate([x_t, m_t, m_t_others], axis=-1)
    B, T, H, W, _ = x.shape
    hidden = [tuple(hc) for hc in hidden]
    outs = []
    for t in range(T):
        inp = x[:, t]
        for l, prm in enumerate(params["lstm"]):
            h_prev, c_prev = hidden[l]
            hd = prm["w"].shape[0] // 4
            cat = jnp.concatenate([inp, h_prev], axis=-1)
            g = _ref_conv2d_same(cat, prm["w"], prm["b"])
            i = jax.nn.sigmoid(g[..., 0 * hd:1 * hd])
            f = jax.nn.sigmoid(g[..., 1 * hd:2 * hd])
            o = jax.nn.sigmoid(g[..., 2 * hd:3 * hd])
            gg = jnp.tanh(g[..., 3 * hd:4 * hd])
            c_new = f * c_prev + i * gg
            h_new = o * jnp.tanh(c_new)
            hidden[l] = (h_new, c_new)
            inp = h_new
        outs.append(inp)
    h_seq = jnp.stack(outs, axis=1)
    pred = jax.nn.sigmoid(_ref_conv3d_same(h_seq, params["l3_w"]))
    return pred, hidden


# ---------------------------------------------------------------------------
# Parameter init + demo
# ---------------------------------------------------------------------------
def init_params(key, input_dim, h_units, filter_size):
    hd = h_units[0]
    lstm = []
    for l in range(len(h_units)):
        in_ch = (input_dim if l == 0 else hd) + hd
        key, kw, kb = jax.random.split(key, 3)
        lstm.append({
            "w": 0.1 * jax.random.normal(
                kw, (4 * hd, in_ch, filter_size, filter_size), jnp.float32),
            "b": 0.1 * jax.random.normal(kb, (4 * hd,), jnp.float32),
        })
    key, kl3 = jax.random.split(key)
    l3_w = 0.1 * jax.random.normal(
        kl3, (3, h_units[-1], filter_size, filter_size, filter_size), jnp.float32)
    return {"lstm": lstm, "l3_w": l3_w}


if __name__ == "__main__":
    B, T, H, W = 2, 4, 16, 16
    C_x, C_m = 3, 1                  # RGB frames, 1-channel messages
    input_dim = C_x + 2 * C_m        # 5
    h_units = [32, 32]               # 4*hd = 128 -> lane-dense gate GEMM output
    filter_size = 3

    key = jax.random.PRNGKey(0)
    key, k1, k2, k3, k4, k5 = jax.random.split(key, 6)
    x_t = jax.random.uniform(k1, (B, T, H, W, C_x), jnp.float32)
    m_t = jax.random.uniform(k2, (B, T, H, W, C_m), jnp.float32)
    m_t_others = jax.random.uniform(k3, (B, T, H, W, C_m), jnp.float32)

    params = init_params(jax.random.PRNGKey(42), input_dim, h_units, filter_size)

    hd = h_units[0]
    hidden0 = [
        (0.1 * jax.random.normal(jax.random.fold_in(k4, l), (B, H, W, hd), jnp.float32),
         0.1 * jax.random.normal(jax.random.fold_in(k5, l), (B, H, W, hd), jnp.float32))
        for l in range(len(h_units))
    ]
    h_t = [jnp.zeros((B, H, W, hd), jnp.float32) for _ in h_units]
    c_t = [jnp.zeros((B, H, W, hd), jnp.float32) for _ in h_units]

    fwd_f32 = jax.jit(functools.partial(ssta_forward, gemm_dtype=jnp.float32))
    fwd_bf16 = jax.jit(functools.partial(ssta_forward, gemm_dtype=jnp.bfloat16))
    ref_fn = jax.jit(ref_forward)

    # --- correctness: Pallas f32 path vs pure-JAX reference (tight tolerance) --
    pred32, _, hid32, *_ = fwd_f32(params, x_t, m_t, m_t_others, hidden0,
                                   h_t, c_t, [], [])
    pred_ref, hid_ref = ref_fn(params, x_t, m_t, m_t_others, hidden0)
    pred32 = jax.block_until_ready(pred32)
    # 1e-3: ~10-100x above accumulation-order / transcendental noise, but tight
    # enough to catch any layout / gate-slice / roll-direction bug (>=1e-2).
    err = float(jnp.max(jnp.abs(pred32 - pred_ref)))
    assert err < 1e-3, f"Pallas (f32 GEMM) vs reference mismatch: {err}"
    for l in range(len(h_units)):
        eh = float(jnp.max(jnp.abs(hid32[l][0] - hid_ref[l][0])))
        ec = float(jnp.max(jnp.abs(hid32[l][1] - hid_ref[l][1])))
        assert eh < 1e-3 and ec < 1e-3, (l, eh, ec)

    # --- performance path: bf16 MXU inputs, f32 accumulate / state / epilogue --
    pred, message, mem, h_t, c_t, delta_c_list, delta_m_list = fwd_bf16(
        params, x_t, m_t, m_t_others, hidden0, h_t, c_t, [], [])
    pred = jax.block_until_ready(pred)
    assert pred.shape == (B, T, H, W, 3), pred.shape
    assert bool(jnp.all(jnp.isfinite(pred)))
    assert bool(jnp.all((pred >= 0.0) & (pred <= 1.0)))     # sigmoid range
    errb = float(jnp.max(jnp.abs(pred - pred_ref)))
    assert errb < 1e-1, f"Pallas (bf16 GEMM) vs reference mismatch: {errb}"
    print("KERNEL_OK")
</pallas_src>

<mosaic_0001>
module attributes {stable_mosaic.version = 11 : i64} {
  func.func @_gemm_kernel(%arg0: i32, %arg1: memref<512x128xf32, #tpu.memory_space<vmem>>, %arg2: memref<128x128xf32, #tpu.memory_space<vmem>>, %arg3: memref<1x128xf32, #tpu.memory_space<vmem>>, %arg4: memref<512x128xf32, #tpu.memory_space<vmem>>) attributes {dimension_semantics = [#tpu.dimension_semantics<parallel>], iteration_bounds = array<i64: 4>, scalar_prefetch = 0 : i64, scratch_operands = 0 : i64, tpu.core_type = #tpu.core_type<tc>, window_params = [{transform_indices = @transform_0, window_bounds = array<i64: 512, 128>}, {pipeline_mode = #tpu.pipeline_mode<synchronous>, transform_indices = @transform_1, window_bounds = array<i64: 128, 128>}, {pipeline_mode = #tpu.pipeline_mode<synchronous>, transform_indices = @transform_2, window_bounds = array<i64: 1, 128>}, {transform_indices = @transform_3, window_bounds = array<i64: 512, 128>}]} {
    %c0 = arith.constant 0 : index
    %c0_0 = arith.constant 0 : index
    %0 = vector.load %arg1[%c0, %c0_0] : memref<512x128xf32, #tpu.memory_space<vmem>>, vector<512x128xf32>
    %c0_1 = arith.constant 0 : index
    %c0_2 = arith.constant 0 : index
    %1 = vector.load %arg2[%c0_1, %c0_2] : memref<128x128xf32, #tpu.memory_space<vmem>>, vector<128x128xf32>
    %cst = arith.constant dense<0.000000e+00> : vector<512x128xf32>
    %2 = tpu.matmul %0, %1, %cst {dimension_numbers = #tpu.dot_dimension_numbers<[1], [0], [0], [1], [0, 0, 1, 1], [], []>} : vector<512x128xf32>, vector<128x128xf32>, vector<512x128xf32> -> vector<512x128xf32>
    %c0_3 = arith.constant 0 : index
    %c0_4 = arith.constant 0 : index
    %3 = vector.load %arg3[%c0_3, %c0_4] : memref<1x128xf32, #tpu.memory_space<vmem>>, vector<1x128xf32>
    %4 = vector.broadcast %3 : vector<1x128xf32> to vector<512x128xf32>
    %5 = arith.addf %2, %4 : vector<512x128xf32>
    %c0_5 = arith.constant 0 : index
    %c0_6 = arith.constant 0 : index
    %6 = vector.load %arg4[%c0_5, %c0_6] : memref<512x128xf32, #tpu.memory_space<vmem>>, vector<512x128xf32>
    tpu.vector_store %arg4[%c0_5, %c0_6], %5 {strides = array<i32>} : memref<512x128xf32, #tpu.memory_space<vmem>>, vector<512x128xf32>,
    return
  }
  func.func @transform_0(%arg0: i32) -> (i32, i32) {
    %c0_i32 = arith.constant 0 : i32
    %c0_i32_0 = arith.constant 0 : i32
    return %arg0, %c0_i32 : i32, i32
  }
  func.func @transform_1(%arg0: i32) -> (i32, i32) {
    %c0_i32 = arith.constant 0 : i32
    %c0_i32_0 = arith.constant 0 : i32
    %c0_i32_1 = arith.constant 0 : i32
    return %c0_i32, %c0_i32_0 : i32, i32
  }
  func.func @transform_2(%arg0: i32) -> (i32, i32) {
    %c0_i32 = arith.constant 0 : i32
    %c0_i32_0 = arith.constant 0 : i32
    %c0_i32_1 = arith.constant 0 : i32
    return %c0_i32, %c0_i32_0 : i32, i32
  }
  func.func @transform_3(%arg0: i32) -> (i32, i32) {
    %c0_i32 = arith.constant 0 : i32
    %c0_i32_0 = arith.constant 0 : i32
    return %arg0, %c0_i32 : i32, i32
  }
}

module attributes {stable_mosaic.version = 11 : i64} {
  func.func @_convlstm_step_kernel(%arg0: i32, %arg1: memref<1x128x512xf32, #tpu.memory_space<vmem>>, %arg2: memref<128x288xf32, #tpu.memory_space<vmem>>, %arg3: memref<288x512xf32, #tpu.memory_space<vmem>>, %arg4: memref<32x512xf32, #tpu.memory_space<vmem>>, %arg5: memref<32x512xf32, #tpu.memory_space<vmem>>, %arg6: memref<1x32x512xf32, #tpu.memory_space<vmem>>, %arg7: memref<32x512xf32, #tpu.memory_space<vmem>>, %arg8: memref<32x512xf32, #tpu.memory_space<vmem>>, %arg9: memref<32x512xf32, #tpu.memory_space<vmem>>, %arg10: memref<32x512xf32, #tpu.memory_space<vmem>>, %arg11: memref<288x512xf32, #tpu.memory_space<vmem>>) attributes {dimension_semantics = [#tpu.dimension_semantics<arbitrary>], iteration_bounds = array<i64: 4>, scalar_prefetch = 0 : i64, scratch_operands = 3 : i64, tpu.core_type = #tpu.core_type<tc>, window_params = [{transform_indices = @transform_0, window_bounds = array<i64: 1, 128, 512>}, {pipeline_mode = #tpu.pipeline_mode<synchronous>, transform_indices = @transform_1, window_bounds = array<i64: 128, 288>}, {pipeline_mode = #tpu.pipeline_mode<synchronous>, transform_indices = @transform_2, window_bounds = array<i64: 288, 512>}, {pipeline_mode = #tpu.pipeline_mode<synchronous>, transform_indices = @transform_3, window_bounds = array<i64: 32, 512>}, {pipeline_mode = #tpu.pipeline_mode<synchronous>, transform_indices = @transform_4, window_bounds = array<i64: 32, 512>}, {transform_indices = @transform_5, window_bounds = array<i64: 1, 32, 512>}, {pipeline_mode = #tpu.pipeline_mode<synchronous>, transform_indices = @transform_6, window_bounds = array<i64: 32, 512>}, {pipeline_mode = #tpu.pipeline_mode<synchronous>, transform_indices = @transform_7, window_bounds = array<i64: 32, 512>}]} {
    %c0_i32 = arith.constant 0 : i32
    %0 = arith.cmpi eq, %arg0, %c0_i32 : i32
    %1 = arith.extui %0 : i1 to i32
    %c0_i32_0 = arith.constant 0 : i32
    %2 = arith.cmpi ne, %1, %c0_i32_0 : i32
    scf.if %2 {
      %c0_51 = arith.constant 0 : index
      %c0_52 = arith.constant 0 : index
      %69 = vector.load %arg4[%c0_51, %c0_52] : memref<32x512xf32, #tpu.memory_space<vmem>>, vector<32x512xf32>
      %c0_53 = arith.constant 0 : index
      %c0_54 = arith.constant 0 : index
      %70 = vector.load %arg9[%c0_53, %c0_54] : memref<32x512xf32, #tpu.memory_space<vmem>>, vector<32x512xf32>
      tpu.vector_store %arg9[%c0_53, %c0_54], %69 {strides = array<i32>} : memref<32x512xf32, #tpu.memory_space<vmem>>, vector<32x512xf32>,
      %c0_55 = arith.constant 0 : index
      %c0_56 = arith.constant 0 : index
      %71 = vector.load %arg5[%c0_55, %c0_56] : memref<32x512xf32, #tpu.memory_space<vmem>>, vector<32x512xf32>
      %c0_57 = arith.constant 0 : index
      %c0_58 = arith.constant 0 : index
      %72 = vector.load %arg10[%c0_57, %c0_58] : memref<32x512xf32, #tpu.memory_space<vmem>>, vector<32x512xf32>
      tpu.vector_store %arg10[%c0_57, %c0_58], %71 {strides = array<i32>} : memref<32x512xf32, #tpu.memory_space<vmem>>, vector<32x512xf32>,
    } else {
    }
    %c0 = arith.constant 0 : index
    %c0_1 = arith.constant 0 : index
    %3 = vector.load %arg9[%c0, %c0_1] : memref<32x512xf32, #tpu.memory_space<vmem>>, vector<32x512xf32>
    %c17_i32 = arith.constant 17 : i32
    %4 = tpu.dynamic_rotate %3 by %c17_i32 dim 1 : vector<32x512xf32>, i32 -> vector<32x512xf32>
    %c0_2 = arith.constant 0 : index
    %c0_3 = arith.constant 0 : index
    %5 = vector.load %arg3[%c0_2, %c0_3] : memref<288x512xf32, #tpu.memory_space<vmem>>, vector<32x512xf32>
    %6 = arith.mulf %4, %5 : vector<32x512xf32>
    %c0_4 = arith.constant 0 : index
    %c0_5 = arith.constant 0 : index
    %7 = vector.load %arg11[%c0_4, %c0_5] : memref<288x512xf32, #tpu.memory_space<vmem>>, vector<32x512xf32>
    tpu.vector_store %arg11[%c0_4, %c0_5], %6 {strides = array<i32>} : memref<288x512xf32, #tpu.memory_space<vmem>>, vector<32x512xf32>,
    %c16_i32 = arith.constant 16 : i32
    %8 = tpu.dynamic_rotate %3 by %c16_i32 dim 1 : vector<32x512xf32>, i32 -> vector<32x512xf32>
    %c32 = arith.constant 32 : index
    %c0_6 = arith.constant 0 : index
    %9 = vector.load %arg3[%c32, %c0_6] : memref<288x512xf32, #tpu.memory_space<vmem>>, vector<32x512xf32>
    %10 = arith.mulf %8, %9 : vector<32x512xf32>
    %c32_7 = arith.constant 32 : index
    %c0_8 = arith.constant 0 : index
    %11 = vector.load %arg11[%c32_7, %c0_8] : memref<288x512xf32, #tpu.memory_space<vmem>>, vector<32x512xf32>
    tpu.vector_store %arg11[%c32_7, %c0_8], %10 {strides = array<i32>} : memref<288x512xf32, #tpu.memory_space<vmem>>, vector<32x512xf32>,
    %c15_i32 = arith.constant 15 : i32
    %12 = tpu.dynamic_rotate %3 by %c15_i32 dim 1 : vector<32x512xf32>, i32 -> vector<32x512xf32>
    %c64 = arith.constant 64 : index
    %c0_9 = arith.constant 0 : index
    %13 = vector.load %arg3[%c64, %c0_9] : memref<288x512xf32, #tpu.memory_space<vmem>>, vector<32x512xf32>
    %14 = arith.mulf %12, %13 : vector<32x512xf32>
    %c64_10 = arith.constant 64 : index
    %c0_11 = arith.constant 0 : index
    %15 = vector.load %arg11[%c64_10, %c0_11] : memref<288x512xf32, #tpu.memory_space<vmem>>, vector<32x512xf32>
    tpu.vector_store %arg11[%c64_10, %c0_11], %14 {strides = array<i32>} : memref<288x512xf32, #tpu.memory_space<vmem>>, vector<32x512xf32>,
    %c1_i32 = arith.constant 1 : i32
    %16 = tpu.dynamic_rotate %3 by %c1_i32 dim 1 : vector<32x512xf32>, i32 -> vector<32x512xf32>
    %c96 = arith.constant 96 : index
    %c0_12 = arith.constant 0 : index
    %17 = vector.load %arg3[%c96, %c0_12] : memref<288x512xf32, #tpu.memory_space<vmem>>, vector<32x512xf32>
    %18 = arith.mulf %16, %17 : vector<32x512xf32>
    %c96_13 = arith.constant 96 : index
    %c0_14 = arith.constant 0 : index
    %19 = vector.load %arg11[%c96_13, %c0_14] : memref<288x512xf32, #tpu.memory_space<vmem>>, vector<32x512xf32>
    tpu.vector_store %arg11[%c96_13, %c0_14], %18 {strides = array<i32>} : memref<288x512xf32, #tpu.memory_space<vmem>>, vector<32x512xf32>,
    %c128 = arith.constant 128 : index
    %c0_15 = arith.constant 0 : index
    %20 = vector.load %arg11[%c128, %c0_15] : memref<288x512xf32, #tpu.memory_space<vmem>>, vector<32x512xf32>
    tpu.vector_store %arg11[%c128, %c0_15], %3 {strides = array<i32>} : memref<288x512xf32, #tpu.memory_space<vmem>>, vector<32x512xf32>,
    %c511_i32 = arith.constant 511 : i32
    %21 = tpu.dynamic_rotate %3 by %c511_i32 dim 1 : vector<32x512xf32>, i32 -> vector<32x512xf32>
    %c160 = arith.constant 160 : index
    %c0_16 = arith.constant 0 : index
    %22 = vector.load %arg3[%c160, %c0_16] : memref<288x512xf32, #tpu.memory_space<vmem>>, vector<32x512xf32>
    %23 = arith.mulf %21, %22 : vector<32x512xf32>
    %c160_17 = arith.constant 160 : index
    %c0_18 = arith.constant 0 : index
    %24 = vector.load %arg11[%c160_17, %c0_18] : memref<288x512xf32, #tpu.memory_space<vmem>>, vector<32x512xf32>
    tpu.vector_store %arg11[%c160_17, %c0_18], %23 {strides = array<i32>} : memref<288x512xf32, #tpu.memory_space<vmem>>, vector<32x512xf32>,
    %c497_i32 = arith.constant 497 : i32
    %25 = tpu.dynamic_rotate %3 by %c497_i32 dim 1 : vector<32x512xf32>, i32 -> vector<32x512xf32>
    %c192 = arith.constant 192 : index
    %c0_19 = arith.constant 0 : index
    %26 = vector.load %arg3[%c192, %c0_19] : memref<288x512xf32, #tpu.memory_space<vmem>>, vector<32x512xf32>
    %27 = arith.mulf %25, %26 : vector<32x512xf32>
    %c192_20 = arith.constant 192 : index
    %c0_21 = arith.constant 0 : index
    %28 = vector.load %arg11[%c192_20, %c0_21] : memref<288x512xf32, #tpu.memory_space<vmem>>, vector<32x512xf32>
    tpu.vector_store %arg11[%c192_20, %c0_21], %27 {strides = array<i32>} : memref<288x512xf32, #tpu.memory_space<vmem>>, vector<32x512xf32>,
    %c496_i32 = arith.constant 496 : i32
    %29 = tpu.dynamic_rotate %3 by %c496_i32 dim 1 : vector<32x512xf32>, i32 -> vector<32x512xf32>
    %c224 = arith.constant 224 : index
    %c0_22 = arith.constant 0 : index
    %30 = vector.load %arg3[%c224, %c0_22] : memref<288x512xf32, #tpu.memory_space<vmem>>, vector<32x512xf32>
    %31 = arith.mulf %29, %30 : vector<32x512xf32>
    %c224_23 = arith.constant 224 : index
    %c0_24 = arith.constant 0 : index
    %32 = vector.load %arg11[%c224_23, %c0_24] : memref<288x512xf32, #tpu.memory_space<vmem>>, vector<32x512xf32>
    tpu.vector_store %arg11[%c224_23, %c0_24], %31 {strides = array<i32>} : memref<288x512xf32, #tpu.memory_space<vmem>>, vector<32x512xf32>,
    %c495_i32 = arith.constant 495 : i32
    %33 = tpu.dynamic_rotate %3 by %c495_i32 dim 1 : vector<32x512xf32>, i32 -> vector<32x512xf32>
    %c256 = arith.constant 256 : index
    %c0_25 = arith.constant 0 : index
    %34 = vector.load %arg3[%c256, %c0_25] : memref<288x512xf32, #tpu.memory_space<vmem>>, vector<32x512xf32>
    %35 = arith.mulf %33, %34 : vector<32x512xf32>
    %c256_26 = arith.constant 256 : index
    %c0_27 = arith.constant 0 : index
    %36 = vector.load %arg11[%c256_26, %c0_27] : memref<288x512xf32, #tpu.memory_space<vmem>>, vector<32x512xf32>
    tpu.vector_store %arg11[%c256_26, %c0_27], %35 {strides = array<i32>} : memref<288x512xf32, #tpu.memory_space<vmem>>, vector<32x512xf32>,
    %c0_28 = arith.constant 0 : index
    %c0_29 = arith.constant 0 : index
    %c0_30 = arith.constant 0 : index
    %37 = vector.load %arg1[%c0_28, %c0_29, %c0_30] : memref<1x128x512xf32, #tpu.memory_space<vmem>>, vector<1x128x512xf32>
    %38 = vector.shape_cast %37 : vector<1x128x512xf32> to vector<128x512xf32>
    %c0_31 = arith.constant 0 : index
    %c0_32 = arith.constant 0 : index
    %39 = vector.load %arg2[%c0_31, %c0_32] : memref<128x288xf32, #tpu.memory_space<vmem>>, vector<128x288xf32>
    %c0_33 = arith.constant 0 : index
    %c0_34 = arith.constant 0 : index
    %40 = vector.load %arg11[%c0_33, %c0_34] : memref<288x512xf32, #tpu.memory_space<vmem>>, vector<288x512xf32>
    %cst = arith.constant dense<0.000000e+00> : vector<128x512xf32>
    %41 = tpu.matmul %39, %40, %cst {dimension_numbers = #tpu.dot_dimension_numbers<[1], [0], [0], [1], [0, 0, 1, 1], [], []>} : vector<128x288xf32>, vector<288x512xf32>, vector<128x512xf32> -> vector<128x512xf32>
    %42 = arith.addf %38, %41 : vector<128x512xf32>
    %43 = vector.extract_strided_slice %42 {offsets = [0, 0], sizes = [96, 512], strides = [1, 1]} : vector<128x512xf32> to vector<96x512xf32>
    %cst_35 = arith.constant 0.000000e+00 : f32
    %44 = vector.broadcast %cst_35 : f32 to vector<96x512xf32>
    %45 = arith.subf %44, %43 : vector<96x512xf32>
    %46 = math.exp %45 : vector<96x512xf32>
    %cst_36 = arith.constant 1.000000e+00 : f32
    %47 = vector.broadcast %cst_36 : f32 to vector<96x512xf32>
    %48 = arith.addf %47, %46 : vector<96x512xf32>
    %cst_37 = arith.constant 1.000000e+00 : f32
    %49 = vector.broadcast %cst_37 : f32 to vector<96x512xf32>
    %50 = arith.divf %49, %48 : vector<96x512xf32>
    %51 = vector.extract_strided_slice %50 {offsets = [0, 0], sizes = [32, 512], strides = [1, 1]} : vector<96x512xf32> to vector<32x512xf32>
    %52 = vector.extract_strided_slice %50 {offsets = [32, 0], sizes = [32, 512], strides = [1, 1]} : vector<96x512xf32> to vector<32x512xf32>
    %53 = vector.extract_strided_slice %50 {offsets = [64, 0], sizes = [32, 512], strides = [1, 1]} : vector<96x512xf32> to vector<32x512xf32>
    %54 = vector.extract_strided_slice %42 {offsets = [96, 0], sizes = [32, 512], strides = [1, 1]} : vector<128x512xf32> to vector<32x512xf32>
    %55 = math.tanh %54 : vector<32x512xf32>
    %c0_38 = arith.constant 0 : index
    %c0_39 = arith.constant 0 : index
    %56 = vector.load %arg10[%c0_38, %c0_39] : memref<32x512xf32, #tpu.memory_space<vmem>>, vector<32x512xf32>
    %57 = arith.mulf %52, %56 : vector<32x512xf32>
    %58 = arith.mulf %51, %55 : vector<32x512xf32>
    %59 = arith.addf %57, %58 : vector<32x512xf32>
    %60 = math.tanh %59 : vector<32x512xf32>
    %61 = arith.mulf %53, %60 : vector<32x512xf32>
    %c0_40 = arith.constant 0 : index
    %c0_41 = arith.constant 0 : index
    %62 = vector.load %arg9[%c0_40, %c0_41] : memref<32x512xf32, #tpu.memory_space<vmem>>, vector<32x512xf32>
    tpu.vector_store %arg9[%c0_40, %c0_41], %61 {strides = array<i32>} : memref<32x512xf32, #tpu.memory_space<vmem>>, vector<32x512xf32>,
    %c0_42 = arith.constant 0 : index
    %c0_43 = arith.constant 0 : index
    %63 = vector.load %arg10[%c0_42, %c0_43] : memref<32x512xf32, #tpu.memory_space<vmem>>, vector<32x512xf32>
    tpu.vector_store %arg10[%c0_42, %c0_43], %59 {strides = array<i32>} : memref<32x512xf32, #tpu.memory_space<vmem>>, vector<32x512xf32>,
    %c0_44 = arith.constant 0 : index
    %c0_45 = arith.constant 0 : index
    %c0_46 = arith.constant 0 : index
    %64 = vector.load %arg6[%c0_44, %c0_45, %c0_46] : memref<1x32x512xf32, #tpu.memory_space<vmem>>, vector<1x32x512xf32>
    %65 = vector.shape_cast %64 : vector<1x32x512xf32> to vector<32x512xf32>
    %66 = vector.shape_cast %61 : vector<32x512xf32> to vector<1x32x512xf32>
    tpu.vector_store %arg6[%c0_44, %c0_45, %c0_46], %66 {strides = array<i32>} : memref<1x32x512xf32, #tpu.memory_space<vmem>>, vector<1x32x512xf32>,
    %c0_47 = arith.constant 0 : index
    %c0_48 = arith.constant 0 : index
    %67 = vector.load %arg7[%c0_47, %c0_48] : memref<32x512xf32, #tpu.memory_space<vmem>>, vector<32x512xf32>
    tpu.vector_store %arg7[%c0_47, %c0_48], %61 {strides = array<i32>} : memref<32x512xf32, #tpu.memory_space<vmem>>, vector<32x512xf32>,
    %c0_49 = arith.constant 0 : index
    %c0_50 = arith.constant 0 : index
    %68 = vector.load %arg8[%c0_49, %c0_50] : memref<32x512xf32, #tpu.memory_space<vmem>>, vector<32x512xf32>
    tpu.vector_store %arg8[%c0_49, %c0_50], %59 {strides = array<i32>} : memref<32x512xf32, #tpu.memory_space<vmem>>, vector<32x512xf32>,
    return
  }
  func.func @transform_0(%arg0: i32) -> (i32, i32, i32) {
    %c0_i32 = arith.constant 0 : i32
    %c0_i32_0 = arith.constant 0 : i32
    %c0_i32_1 = arith.constant 0 : i32
    return %arg0, %c0_i32, %c0_i32_0 : i32, i32, i32
  }
  func.func @transform_1(%arg0: i32) -> (i32, i32) {
    %c0_i32 = arith.constant 0 : i32
    %c0_i32_0 = arith.constant 0 : i32
    %c0_i32_1 = arith.constant 0 : i32
    return %c0_i32, %c0_i32_0 : i32, i32
  }
  func.func @transform_2(%arg0: i32) -> (i32, i32) {
    %c0_i32 = arith.constant 0 : i32
    %c0_i32_0 = arith.constant 0 : i32
    %c0_i32_1 = arith.constant 0 : i32
    return %c0_i32, %c0_i32_0 : i32, i32
  }
  func.func @transform_3(%arg0: i32) -> (i32, i32) {
    %c0_i32 = arith.constant 0 : i32
    %c0_i32_0 = arith.constant 0 : i32
    %c0_i32_1 = arith.constant 0 : i32
    return %c0_i32, %c0_i32_0 : i32, i32
  }
  func.func @transform_4(%arg0: i32) -> (i32, i32) {
    %c0_i32 = arith.constant 0 : i32
    %c0_i32_0 = arith.constant 0 : i32
    %c0_i32_1 = arith.constant 0 : i32
    return %c0_i32, %c0_i32_0 : i32, i32
  }
  func.func @transform_5(%arg0: i32) -> (i32, i32, i32) {
    %c0_i32 = arith.constant 0 : i32
    %c0_i32_0 = arith.constant 0 : i32
    %c0_i32_1 = arith.constant 0 : i32
    return %arg0, %c0_i32, %c0_i32_0 : i32, i32, i32
  }
  func.func @transform_6(%arg0: i32) -> (i32, i32) {
    %c0_i32 = arith.constant 0 : i32
    %c0_i32_0 = arith.constant 0 : i32
    %c0_i32_1 = arith.constant 0 : i32
    return %c0_i32, %c0_i32_0 : i32, i32
  }
  func.func @transform_7(%arg0: i32) -> (i32, i32) {
    %c0_i32 = arith.constant 0 : i32
    %c0_i32_0 = arith.constant 0 : i32
    %c0_i32_1 = arith.constant 0 : i32
    return %c0_i32, %c0_i32_0 : i32, i32
  }
}

module attributes {stable_mosaic.version = 11 : i64} {
  func.func @_gemm_kernel(%arg0: i32, %arg1: memref<512x384xf32, #tpu.memory_space<vmem>>, %arg2: memref<384x128xf32, #tpu.memory_space<vmem>>, %arg3: memref<1x128xf32, #tpu.memory_space<vmem>>, %arg4: memref<512x128xf32, #tpu.memory_space<vmem>>) attributes {dimension_semantics = [#tpu.dimension_semantics<parallel>], iteration_bounds = array<i64: 4>, scalar_prefetch = 0 : i64, scratch_operands = 0 : i64, tpu.core_type = #tpu.core_type<tc>, window_params = [{transform_indices = @transform_0, window_bounds = array<i64: 512, 384>}, {pipeline_mode = #tpu.pipeline_mode<synchronous>, transform_indices = @transform_1, window_bounds = array<i64: 384, 128>}, {pipeline_mode = #tpu.pipeline_mode<synchronous>, transform_indices = @transform_2, window_bounds = array<i64: 1, 128>}, {transform_indices = @transform_3, window_bounds = array<i64: 512, 128>}]} {
    %c0 = arith.constant 0 : index
    %c0_0 = arith.constant 0 : index
    %0 = vector.load %arg1[%c0, %c0_0] : memref<512x384xf32, #tpu.memory_space<vmem>>, vector<512x384xf32>
    %c0_1 = arith.constant 0 : index
    %c0_2 = arith.constant 0 : index
    %1 = vector.load %arg2[%c0_1, %c0_2] : memref<384x128xf32, #tpu.memory_space<vmem>>, vector<384x128xf32>
    %cst = arith.constant dense<0.000000e+00> : vector<512x128xf32>
    %2 = tpu.matmul %0, %1, %cst {dimension_numbers = #tpu.dot_dimension_numbers<[1], [0], [0], [1], [0, 0, 1, 1], [], []>} : vector<512x384xf32>, vector<384x128xf32>, vector<512x128xf32> -> vector<512x128xf32>
    %c0_3 = arith.constant 0 : index
    %c0_4 = arith.constant 0 : index
    %3 = vector.load %arg3[%c0_3, %c0_4] : memref<1x128xf32, #tpu.memory_space<vmem>>, vector<1x128xf32>
    %4 = vector.broadcast %3 : vector<1x128xf32> to vector<512x128xf32>
    %5 = arith.addf %2, %4 : vector<512x128xf32>
    %c0_5 = arith.constant 0 : index
    %c0_6 = arith.constant 0 : index
    %6 = vector.load %arg4[%c0_5, %c0_6] : memref<512x128xf32, #tpu.memory_space<vmem>>, vector<512x128xf32>
    tpu.vector_store %arg4[%c0_5, %c0_6], %5 {strides = array<i32>} : memref<512x128xf32, #tpu.memory_space<vmem>>, vector<512x128xf32>,
    return
  }
  func.func @transform_0(%arg0: i32) -> (i32, i32) {
    %c0_i32 = arith.constant 0 : i32
    %c0_i32_0 = arith.constant 0 : i32
    return %arg0, %c0_i32 : i32, i32
  }
  func.func @transform_1(%arg0: i32) -> (i32, i32) {
    %c0_i32 = arith.constant 0 : i32
    %c0_i32_0 = arith.constant 0 : i32
    %c0_i32_1 = arith.constant 0 : i32
    return %c0_i32, %c0_i32_0 : i32, i32
  }
  func.func @transform_2(%arg0: i32) -> (i32, i32) {
    %c0_i32 = arith.constant 0 : i32
    %c0_i32_0 = arith.constant 0 : i32
    %c0_i32_1 = arith.constant 0 : i32
    return %c0_i32, %c0_i32_0 : i32, i32
  }
  func.func @transform_3(%arg0: i32) -> (i32, i32) {
    %c0_i32 = arith.constant 0 : i32
    %c0_i32_0 = arith.constant 0 : i32
    return %arg0, %c0_i32 : i32, i32
  }
}

module attributes {stable_mosaic.version = 11 : i64} {
  func.func @_gemm_kernel(%arg0: i32, %arg1: memref<512x896xf32, #tpu.memory_space<vmem>>, %arg2: memref<896x128xf32, #tpu.memory_space<vmem>>, %arg3: memref<512x128xf32, #tpu.memory_space<vmem>>) attributes {dimension_semantics = [#tpu.dimension_semantics<parallel>], iteration_bounds = array<i64: 4>, scalar_prefetch = 0 : i64, scratch_operands = 0 : i64, tpu.core_type = #tpu.core_type<tc>, window_params = [{transform_indices = @transform_0, window_bounds = array<i64: 512, 896>}, {pipeline_mode = #tpu.pipeline_mode<synchronous>, transform_indices = @transform_1, window_bounds = array<i64: 896, 128>}, {transform_indices = @transform_2, window_bounds = array<i64: 512, 128>}]} {
    %c0 = arith.constant 0 : index
    %c0_0 = arith.constant 0 : index
    %0 = vector.load %arg1[%c0, %c0_0] : memref<512x896xf32, #tpu.memory_space<vmem>>, vector<512x896xf32>
    %c0_1 = arith.constant 0 : index
    %c0_2 = arith.constant 0 : index
    %1 = vector.load %arg2[%c0_1, %c0_2] : memref<896x128xf32, #tpu.memory_space<vmem>>, vector<896x128xf32>
    %cst = arith.constant dense<0.000000e+00> : vector<512x128xf32>
    %2 = tpu.matmul %0, %1, %cst {dimension_numbers = #tpu.dot_dimension_numbers<[1], [0], [0], [1], [0, 0, 1, 1], [], []>} : vector<512x896xf32>, vector<896x128xf32>, vector<512x128xf32> -> vector<512x128xf32>
    %cst_3 = arith.constant 0.000000e+00 : f32
    %3 = vector.broadcast %cst_3 : f32 to vector<512x128xf32>
    %4 = arith.subf %3, %2 : vector<512x128xf32>
    %5 = math.exp %4 : vector<512x128xf32>
    %cst_4 = arith.constant 1.000000e+00 : f32
    %6 = vector.broadcast %cst_4 : f32 to vector<512x128xf32>
    %7 = arith.addf %6, %5 : vector<512x128xf32>
    %cst_5 = arith.constant 1.000000e+00 : f32
    %8 = vector.broadcast %cst_5 : f32 to vector<512x128xf32>
    %9 = arith.divf %8, %7 : vector<512x128xf32>
    %c0_6 = arith.constant 0 : index
    %c0_7 = arith.constant 0 : index
    %10 = vector.load %arg3[%c0_6, %c0_7] : memref<512x128xf32, #tpu.memory_space<vmem>>, vector<512x128xf32>
    tpu.vector_store %arg3[%c0_6, %c0_7], %9 {strides = array<i32>} : memref<512x128xf32, #tpu.memory_space<vmem>>, vector<512x128xf32>,
    return
  }
  func.func @transform_0(%arg0: i32) -> (i32, i32) {
    %c0_i32 = arith.constant 0 : i32
    %c0_i32_0 = arith.constant 0 : i32
    return %arg0, %c0_i32 : i32, i32
  }
  func.func @transform_1(%arg0: i32) -> (i32, i32) {
    %c0_i32 = arith.constant 0 : i32
    %c0_i32_0 = arith.constant 0 : i32
    %c0_i32_1 = arith.constant 0 : i32
    return %c0_i32, %c0_i32_0 : i32, i32
  }
  func.func @transform_2(%arg0: i32) -> (i32, i32) {
    %c0_i32 = arith.constant 0 : i32
    %c0_i32_0 = arith.constant 0 : i32
    return %arg0, %c0_i32 : i32, i32
  }
}

</mosaic_0001>

<llo_original>
// kernel: ssta_forward.5
$region0: #{ssta_forward.5}
  #allocation0 [shape = 'u32[]', space=smem, size = 0x4, offset = 0x4, fixed_abs, tag = 'smem constant byte address 0x4 - core index']
  #allocation1 [shape = 'u32[144,128]{1,0:T(1,128)}', space=vmem, size = 0x12000, scoped, tag = 'internal scratch']
  %s0 = inlined_call_operand.vmem [shape: f32[2048,128], index: 0, kind: input, shape index: {}]
  %s1 = inlined_call_operand.vmem [shape: f32[128,128], index: 1, kind: input, shape index: {}]
  %s2 = inlined_call_operand.vmem [shape: f32[1,128], index: 2, kind: input, shape index: {}]
  %s3 = inlined_call_operand.vmem [shape: f32[2048,128], index: 3, kind: output, shape index: {}]
  %s4 = sld [smem:[#allocation0]]
  $region45: #{ssta_forward.5} parent=0
    _
  %s6 = ssub.s32 1, %s4
  %s7 = scalar_select 0, %s6, %s4
  loop: start=0, step=1, limit=6
  $region2: #{ssta_forward.5} parent=0 // loop_pre_header
    _
  $region3: #{ssta_forward.5} parent=0 // loop_header
    %s9 = sphi 0, %s13
    %p10 = scmp.ge.s32.totalorder %s9, 6
    %s19 = sphi 0, %s21
    %s22 = sphi 0, %s19
    %s23 = sphi 0, %s22
    %s39 = sphi 0, %s23
    %s43 = sphi 0, %s43
    %s45 = sphi 0, %s43
    %s46 = sphi 0, %s45
    %s60 = sphi 0, %s46
    %s64 = sphi 0, %s64
    %s66 = sphi 0, %s64
    %s67 = sphi 0, %s66
    %s81 = sphi 0, %s67
    %s87 = sphi 0, %s89
    %s90 = sphi 0, %s87
    %s91 = sphi 0, %s90
    %s107 = sphi 0, %s91
  $region4: #{ssta_forward.5} parent=0 // loop_header_branch
    %12 = sbr.rel (%p10) target = $region8
  $region5: #{ssta_forward.5} parent=0 // loop_body
    %s14 = ssub.s32 %s9, 1
    %s15 = ssub.s32 %s9, 2
    %s16 = sadd.s32 %s9, 1
    %s17 = ssub.s32 %s9, %s16
    %p18 = scmp.eq.s32.totalorder %s17, 0
    %s20 = sadd.s32 %s19, 1
    %s21 = scalar_select %p18, %s19, %s20
    %p24 = pneg %p18
    %p25 = scmp.eq.s32.totalorder %s9, 3
    %p26 = por %p24, %p25
    %p27 = scmp.ne.s32.totalorder %s19, %s22
    %p28 = scmp.eq.s32.totalorder %s9, 0
    %p29 = por %p27, %p28
    %p30 = scmp.ne.s32.totalorder %s19, %s22
    %p31 = scmp.eq.s32.totalorder %s14, 3
    %p32 = por %p30, %p31
    %p33 = scmp.ne.s32.totalorder %s22, %s23
    %p34 = scmp.eq.s32.totalorder %s14, 0
    %p35 = por %p33, %p34
    %p36 = scmp.ne.s32.totalorder %s22, %s23
    %p37 = scmp.eq.s32.totalorder %s15, 3
    %p38 = por %p36, %p37
    %p40 = scmp.ne.s32.totalorder %s23, %s39
    %p41 = scmp.eq.s32.totalorder %s15, 0
    %p42 = por %p40, %p41
    %s44 = sadd.s32 %s43, 1
    %p47 = scmp.eq.s32.totalorder %s9, 3
    %p48 = scmp.ne.s32.totalorder %s43, %s45
    %p49 = scmp.eq.s32.totalorder %s9, 0
    %p50 = por %p48, %p49
    %p51 = scmp.ne.s32.totalorder %s43, %s45
    %p52 = scmp.eq.s32.totalorder %s14, 3
    %p53 = por %p51, %p52
    %p54 = scmp.ne.s32.totalorder %s45, %s46
    %p55 = scmp.eq.s32.totalorder %s14, 0
    %p56 = por %p54, %p55
    %p57 = scmp.ne.s32.totalorder %s45, %s46
    %p58 = scmp.eq.s32.totalorder %s15, 3
    %p59 = por %p57, %p58
    %p61 = scmp.ne.s32.totalorder %s46, %s60
    %p62 = scmp.eq.s32.totalorder %s15, 0
    %p63 = por %p61, %p62
    %s65 = sadd.s32 %s64, 1
    %p68 = scmp.eq.s32.totalorder %s9, 3
    %p69 = scmp.ne.s32.totalorder %s64, %s66
    %p70 = scmp.eq.s32.totalorder %s9, 0
    %p71 = por %p69, %p70
    %p72 = scmp.ne.s32.totalorder %s64, %s66
    %p73 = scmp.eq.s32.totalorder %s14, 3
    %p74 = por %p72, %p73
    %p75 = scmp.ne.s32.totalorder %s66, %s67
    %p76 = scmp.eq.s32.totalorder %s14, 0
    %p77 = por %p75, %p76
    %p78 = scmp.ne.s32.totalorder %s66, %s67
    %p79 = scmp.eq.s32.totalorder %s15, 3
    %p80 = por %p78, %p79
    %p82 = scmp.ne.s32.totalorder %s67, %s81
    %p83 = scmp.eq.s32.totalorder %s15, 0
    %p84 = por %p82, %p83
    %s85 = ssub.s32 %s9, %s16
    %p86 = scmp.eq.s32.totalorder %s85, 0
    %s88 = sadd.s32 %s87, 1
    %s89 = scalar_select %p86, %s87, %s88
    %p92 = pneg %p86
    %p93 = scmp.eq.s32.totalorder %s9, 3
    %p94 = por %p92, %p93
    %p95 = scmp.ne.s32.totalorder %s87, %s90
    %p96 = scmp.eq.s32.totalorder %s9, 0
    %p97 = por %p95, %p96
    %p98 = scmp.ne.s32.totalorder %s87, %s90
    %p99 = scmp.eq.s32.totalorder %s14, 3
    %p100 = por %p98, %p99
    %p101 = scmp.ne.s32.totalorder %s90, %s91
    %p102 = scmp.eq.s32.totalorder %s14, 0
    %p103 = por %p101, %p102
    %p104 = scmp.ne.s32.totalorder %s90, %s91
    %p105 = scmp.eq.s32.totalorder %s15, 3
    %p106 = por %p104, %p105
    %p108 = scmp.ne.s32.totalorder %s91, %s107
    %p109 = scmp.eq.s32.totalorder %s15, 0
    %p110 = por %p108, %p109
    %p111 = scmp.le.s32.totalorder 1, %s9
    %p112 = scmp.lt.s32.totalorder %s9, 5
    %p113 = pnand %p111, %p112
    %p114 = pneg %p113
    // Predicated region
    $region9: #{ssta_forward.5} parent=5 // pred_check
      _
    $region10: #{ssta_forward.5} parent=5 // pred_check_branch
      %116 = sbr.rel (%p113) target = $region12
    $region11: #{ssta_forward.5} parent=5 // pred_region
      %s117 = ssub.s32 %s9, 1
      // Predicated region
      $region13: #{ssta_forward.5} parent=11 // pred_check
        %p118 = pneg %p56
      $region14: #{ssta_forward.5} parent=11 // pred_check_branch
        %120 = sbr.rel (%p118) target = $region16
      $region15: #{ssta_forward.5} parent=11 // pred_region
        _
      $region16: #{ssta_forward.5} parent=11 // pred_fallthru
        _
      // Predicated region
      $region17: #{ssta_forward.5} parent=11 // pred_check
        %p121 = pneg %p77
      $region18: #{ssta_forward.5} parent=11 // pred_check_branch
        %123 = sbr.rel (%p121) target = $region20
      $region19: #{ssta_forward.5} parent=11 // pred_region
        _
      $region20: #{ssta_forward.5} parent=11 // pred_fallthru
        _
    $region12: #{ssta_forward.5} parent=5 // pred_fallthru
      _
    %p124 = scmp.lt.s32.totalorder %s9, 4
    // Predicated region
    $region21: #{ssta_forward.5} parent=5 // pred_check
      %p125 = pneg %p124
    $region22: #{ssta_forward.5} parent=5 // pred_check_branch
      %127 = sbr.rel (%p125) target = $region24
    $region23: #{ssta_forward.5} parent=5 // pred_region
      // Predicated region
      $region25: #{ssta_forward.5} parent=23 // pred_check
        %p128 = pneg %p29
      $region26: #{ssta_forward.5} parent=23 // pred_check_branch
        %130 = sbr.rel (%p128) target = $region28
      $region27: #{ssta_forward.5} parent=23 // pred_region
        %s131 = smul.u32 64, %s9
        %p132 = scmp.lt.s32.totalorder %s131, 255
        %s133 = scalar_select %p132, %s131, 255
        %s134 = smul.addr %s133, 8
        %s135 = scalar_lea.vmem %s0, %s134
        %s136 = smul.u32 64, %s9
      $region28: #{ssta_forward.5} parent=23 // pred_fallthru
        _
    $region24: #{ssta_forward.5} parent=5 // pred_fallthru
      _
    %p137 = scmp.le.s32.totalorder 1, %s9
    %p138 = scmp.lt.s32.totalorder %s9, 5
    %p139 = pnand %p137, %p138
    %p140 = pneg %p139
    // Predicated region
    $region29: #{ssta_forward.5} parent=5 // pred_check
      _
    $region30: #{ssta_forward.5} parent=5 // pred_check_branch
      %142 = sbr.rel (%p139) target = $region32
    $region31: #{ssta_forward.5} parent=5 // pred_region
      %s143 = ssub.s32 %s9, 1
      %s144 = smul.u32 64, %s14
      %p145 = scmp.lt.s32.totalorder %s144, 255
      %s146 = scalar_select %p145, %s144, 255
      %s147 = smul.addr %s146, 8
      %s148 = scalar_lea.vmem %s0, %s147
      %p149 = pneg %p35
      %p150 = pneg %p32
      %p151 = pneg %p56
      %p152 = pneg %p53
      %p153 = pneg %p77
      %p154 = pneg %p74
      %p155 = pneg %p103
      %p156 = pneg %p100
      %s157 = smul.u32 64, %s14
      %p158 = scmp.lt.s32.totalorder %s157, 255
      %s159 = scalar_select %p158, %s157, 255
      %s160 = smul.addr %s159, 8
      %s161 = scalar_lea.vmem %s3, %s160
      %s162 = smul.u32 64, %s14
      %p163 = scmp.lt.s32.totalorder %s162, 255
      %s164 = scalar_select %p163, %s162, 255
      %s165 = smul.addr %s164, 8
      %s166 = scalar_lea.vmem %s0, %s165
      %s167 = smul.u32 64, %s14
      %s168 = smul.u32 64, %s14
      %p169 = scmp.lt.s32.totalorder %s168, 255
      %s170 = scalar_select %p169, %s168, 255
      %s171 = smul.addr %s170, 8
      %s172 = scalar_lea.vmem %s3, %s171
      %s173 = smul.u32 64, %s14
      %v174 = vld [vmem:[%s166] sm:$0xff]
      %v175 = vld [vmem:[%s166 + $0x8] sm:$0xff]
      %v176 = vld [vmem:[%s166 + $0x10] sm:$0xff]
      %v177 = vld [vmem:[%s166 + $0x18] sm:$0xff]
      %v178 = vld [vmem:[%s166 + $0x20] sm:$0xff]
      %v179 = vld [vmem:[%s166 + $0x28] sm:$0xff]
      %v180 = vld [vmem:[%s166 + $0x30] sm:$0xff]
      %v181 = vld [vmem:[%s166 + $0x38] sm:$0xff]
      %v182 = vld [vmem:[%s166 + $0x40] sm:$0xff]
      %v183 = vld [vmem:[%s166 + $0x48] sm:$0xff]
      %v184 = vld [vmem:[%s166 + $0x50] sm:$0xff]
      %v185 = vld [vmem:[%s166 + $0x58] sm:$0xff]
      %v186 = vld [vmem:[%s166 + $0x60] sm:$0xff]
      %v187 = vld [vmem:[%s166 + $0x68] sm:$0xff]
      %v188 = vld [vmem:[%s166 + $0x70] sm:$0xff]
      %v189 = vld [vmem:[%s166 + $0x78] sm:$0xff]
      %v190 = vld [vmem:[%s166 + $0x80] sm:$0xff]
      %v191 = vld [vmem:[%s166 + $0x88] sm:$0xff]
      %v192 = vld [vmem:[%s166 + $0x90] sm:$0xff]
      %v193 = vld [vmem:[%s166 + $0x98] sm:$0xff]
      %v194 = vld [vmem:[%s166 + $0xa0] sm:$0xff]
      %v195 = vld [vmem:[%s166 + $0xa8] sm:$0xff]
      %v196 = vld [vmem:[%s166 + $0xb0] sm:$0xff]
      %v197 = vld [vmem:[%s166 + $0xb8] sm:$0xff]
      %v198 = vld [vmem:[%s166 + $0xc0] sm:$0xff]
      %v199 = vld [vmem:[%s166 + $0xc8] sm:$0xff]
      %v200 = vld [vmem:[%s166 + $0xd0] sm:$0xff]
      %v201 = vld [vmem:[%s166 + $0xd8] sm:$0xff]
      %v202 = vld [vmem:[%s166 + $0xe0] sm:$0xff]
      %v203 = vld [vmem:[%s166 + $0xe8] sm:$0xff]
      %v204 = vld [vmem:[%s166 + $0xf0] sm:$0xff]
      %v205 = vld [vmem:[%s166 + $0xf8] sm:$0xff]
      %v206 = vld [vmem:[%s166 + $0x100] sm:$0xff]
      %v207 = vld [vmem:[%s166 + $0x108] sm:$0xff]
      %v208 = vld [vmem:[%s166 + $0x110] sm:$0xff]
      %v209 = vld [vmem:[%s166 + $0x118] sm:$0xff]
      %v210 = vld [vmem:[%s166 + $0x120] sm:$0xff]
      %v211 = vld [vmem:[%s166 + $0x128] sm:$0xff]
      %v212 = vld [vmem:[%s166 + $0x130] sm:$0xff]
      %v213 = vld [vmem:[%s166 + $0x138] sm:$0xff]
      %v214 = vld [vmem:[%s166 + $0x140] sm:$0xff]
      %v215 = vld [vmem:[%s166 + $0x148] sm:$0xff]
      %v216 = vld [vmem:[%s166 + $0x150] sm:$0xff]
      %v217 = vld [vmem:[%s166 + $0x158] sm:$0xff]
      %v218 = vld [vmem:[%s166 + $0x160] sm:$0xff]
      %v219 = vld [vmem:[%s166 + $0x168] sm:$0xff]
      %v220 = vld [vmem:[%s166 + $0x170] sm:$0xff]
      %v221 = vld [vmem:[%s166 + $0x178] sm:$0xff]
      %v222 = vld [vmem:[%s166 + $0x180] sm:$0xff]
      %v223 = vld [vmem:[%s166 + $0x188] sm:$0xff]
      %v224 = vld [vmem:[%s166 + $0x190] sm:$0xff]
      %v225 = vld [vmem:[%s166 + $0x198] sm:$0xff]
      %v226 = vld [vmem:[%s166 + $0x1a0] sm:$0xff]
      %v227 = vld [vmem:[%s166 + $0x1a8] sm:$0xff]
      %v228 = vld [vmem:[%s166 + $0x1b0] sm:$0xff]
      %v229 = vld [vmem:[%s166 + $0x1b8] sm:$0xff]
      %v230 = vld [vmem:[%s166 + $0x1c0] sm:$0xff]
      %v231 = vld [vmem:[%s166 + $0x1c8] sm:$0xff]
      %v232 = vld [vmem:[%s166 + $0x1d0] sm:$0xff]
      %v233 = vld [vmem:[%s166 + $0x1d8] sm:$0xff]
      %v234 = vld [vmem:[%s166 + $0x1e0] sm:$0xff]
      %v235 = vld [vmem:[%s166 + $0x1e8] sm:$0xff]
      %v236 = vld [vmem:[%s166 + $0x1f0] sm:$0xff]
      %v237 = vld [vmem:[%s166 + $0x1f8] sm:$0xff]
      %v238 = vld [vmem:[%s1] sm:$0xff]
      %v239 = vld [vmem:[%s1 + $0x8] sm:$0xff]
      %v240 = vld [vmem:[%s1 + $0x10] sm:$0xff]
      %v241 = vld [vmem:[%s1 + $0x18] sm:$0xff]
      %v242 = vld [vmem:[%s1 + $0x20] sm:$0xff]
      %v243 = vld [vmem:[%s1 + $0x28] sm:$0xff]
      %v244 = vld [vmem:[%s1 + $0x30] sm:$0xff]
      %v245 = vld [vmem:[%s1 + $0x38] sm:$0xff]
      %v246 = vld [vmem:[%s1 + $0x40] sm:$0xff]
      %v247 = vld [vmem:[%s1 + $0x48] sm:$0xff]
      %v248 = vld [vmem:[%s1 + $0x50] sm:$0xff]
      %v249 = vld [vmem:[%s1 + $0x58] sm:$0xff]
      %v250 = vld [vmem:[%s1 + $0x60] sm:$0xff]
      %v251 = vld [vmem:[%s1 + $0x68] sm:$0xff]
      %v252 = vld [vmem:[%s1 + $0x70] sm:$0xff]
      %v253 = vld [vmem:[%s1 + $0x78] sm:$0xff]
      %v254 = vld [vmem:[%s2] sm:$0x1]
      %v256 = vlaneseq
      %v257 = vshrl.u32 %v256, 7
      %v258 = vsub.s32 0, %v257
      %v259 = vrot.slane %v254, %v258
      %261 = vmatprep.subr.mxu0 0.0
      %262 = vmatpush1.msra.mxu0 %v253
      %263 = vmatprep.subr.mxu0 0.0
      %264 = vmatpush1.msra.mxu0 %v252
      %265 = vmatprep.subr.mxu0 0.0
      %266 = vmatpush1.msra.mxu0 %v251
      %267 = vmatprep.subr.mxu0 0.0
      %268 = vmatpush1.msra.mxu0 %v250
      %269 = vmatprep.subr.mxu0 0.0
      %270 = vmatpush1.msra.mxu0 %v249
      %271 = vmatprep.subr.mxu0 0.0
      %272 = vmatpush1.msra.mxu0 %v248
      %273 = vmatprep.subr.mxu0 0.0
      %274 = vmatpush1.msra.mxu0 %v247
      %275 = vmatprep.subr.mxu0 0.0
      %276 = vmatpush1.msra.mxu0 %v246
      %277 = vmatprep.subr.mxu0 0.0
      %278 = vmatpush1.msra.mxu0 %v245
      %279 = vmatprep.subr.mxu0 0.0
      %280 = vmatpush1.msra.mxu0 %v244
      %281 = vmatprep.subr.mxu0 0.0
      %282 = vmatpush1.msra.mxu0 %v243
      %283 = vmatprep.subr.mxu0 0.0
      %284 = vmatpush1.msra.mxu0 %v242
      %285 = vmatprep.subr.mxu0 0.0
      %286 = vmatpush1.msra.mxu0 %v241
      %287 = vmatprep.subr.mxu0 0.0
      %288 = vmatpush1.msra.mxu0 %v240
      %289 = vmatprep.subr.mxu0 0.0
      %290 = vmatpush1.msra.mxu0 %v239
      %291 = vmatprep.subr.mxu0 0.0
      %292 = vmatpush1.msra.mxu0 %v238
      %293 = vmatprep.subr.mxu0 0.0
      %294 = vmatpush2.msra.mxu0 0.0
      %295 = vmatprep.subr.mxu0 0.0
      %296 = vmatpush2.msra.mxu0 0.0
      %297 = vmatprep.subr.mxu0 0.0
      %298 = vmatpush2.msra.mxu0 0.0
      %299 = vmatprep.subr.mxu0 0.0
      %300 = vmatpush2.msra.mxu0 0.0
      %301 = vmatprep.subr.mxu0 0.0
      %302 = vmatpush2.msra.mxu0 0.0
      %303 = vmatprep.subr.mxu0 0.0
      %304 = vmatpush2.msra.mxu0 0.0
      %305 = vmatprep.subr.mxu0 0.0
      %306 = vmatpush2.msra.mxu0 0.0
      %307 = vmatprep.subr.mxu0 0.0
      %308 = vmatpush2.msra.mxu0 0.0
      %309 = vmatprep.subr.mxu0 0.0
      %310 = vmatpush2.msra.mxu0 0.0
      %311 = vmatprep.subr.mxu0 0.0
      %312 = vmatpush2.msra.mxu0 0.0
      %313 = vmatprep.subr.mxu0 0.0
      %314 = vmatpush2.msra.mxu0 0.0
      %315 = vmatprep.subr.mxu0 0.0
      %316 = vmatpush2.msra.mxu0 0.0
      %317 = vmatprep.subr.mxu0 0.0
      %318 = vmatpush2.msra.mxu0 0.0
      %319 = vmatprep.subr.mxu0 0.0
      %320 = vmatpush2.msra.mxu0 0.0
      %321 = vmatprep.subr.mxu0 0.0
      %322 = vmatpush2.msra.mxu0 0.0
      %323 = vmatprep.subr.mxu0 0.0
      %324 = vmatpush2.msra.mxu0 0.0
      %325 = vmatprep.mubr.f32.mxu0 0.0
      %326 = vmatmul.mubr.f32.gmra.mxu0 %v174
      %v327 = vpop.f32.mrf.mxu0
      %v328 = vadd.f32 %v259, %v327
      %v329 = vpop.f32.mrf.mxu0
      %330 = vmatprep.mubr.f32.mxu0 0.0
      %331 = vmatmul.mubr.f32.gmra.mxu0 %v175
      %v332 = vpop.f32.mrf.mxu0
      %v333 = vadd.f32 %v259, %v332
      %v334 = vpop.f32.mrf.mxu0
      %335 = vmatprep.mubr.f32.mxu0 0.0
      %336 = vmatmul.mubr.f32.gmra.mxu0 %v176
      %v337 = vpop.f32.mrf.mxu0
      %v338 = vadd.f32 %v259, %v337
      %v339 = vpop.f32.mrf.mxu0
      %340 = vmatprep.mubr.f32.mxu0 0.0
      %341 = vmatmul.mubr.f32.gmra.mxu0 %v177
      %v342 = vpop.f32.mrf.mxu0
      %v343 = vadd.f32 %v259, %v342
      %v344 = vpop.f32.mrf.mxu0
      %345 = vmatprep.mubr.f32.mxu0 0.0
      %346 = vmatmul.mubr.f32.gmra.mxu0 %v178
      %v347 = vpop.f32.mrf.mxu0
      %v348 = vadd.f32 %v259, %v347
      %v349 = vpop.f32.mrf.mxu0
      %350 = vmatprep.mubr.f32.mxu0 0.0
      %351 = vmatmul.mubr.f32.gmra.mxu0 %v179
      %v352 = vpop.f32.mrf.mxu0
      %v353 = vadd.f32 %v259, %v352
      %v354 = vpop.f32.mrf.mxu0
      %355 = vmatprep.mubr.f32.mxu0 0.0
      %356 = vmatmul.mubr.f32.gmra.mxu0 %v180
      %v357 = vpop.f32.mrf.mxu0
      %v358 = vadd.f32 %v259, %v357
      %v359 = vpop.f32.mrf.mxu0
      %360 = vmatprep.mubr.f32.mxu0 0.0
      %361 = vmatmul.mubr.f32.gmra.mxu0 %v181
      %v362 = vpop.f32.mrf.mxu0
      %v363 = vadd.f32 %v259, %v362
      %v364 = vpop.f32.mrf.mxu0
      %365 = vmatprep.mubr.f32.mxu0 0.0
      %366 = vmatmul.mubr.f32.gmra.mxu0 %v182
      %v367 = vpop.f32.mrf.mxu0
      %v368 = vadd.f32 %v259, %v367
      %v369 = vpop.f32.mrf.mxu0
      %370 = vmatprep.mubr.f32.mxu0 0.0
      %371 = vmatmul.mubr.f32.gmra.mxu0 %v183
      %v372 = vpop.f32.mrf.mxu0
      %v373 = vadd.f32 %v259, %v372
      %v374 = vpop.f32.mrf.mxu0
      %375 = vmatprep.mubr.f32.mxu0 0.0
      %376 = vmatmul.mubr.f32.gmra.mxu0 %v184
      %v377 = vpop.f32.mrf.mxu0
      %v378 = vadd.f32 %v259, %v377
      %v379 = vpop.f32.mrf.mxu0
      %380 = vmatprep.mubr.f32.mxu0 0.0
      %381 = vmatmul.mubr.f32.gmra.mxu0 %v185
      %v382 = vpop.f32.mrf.mxu0
      %v383 = vadd.f32 %v259, %v382
      %v384 = vpop.f32.mrf.mxu0
      %385 = vmatprep.mubr.f32.mxu0 0.0
      %386 = vmatmul.mubr.f32.gmra.mxu0 %v186
      %v387 = vpop.f32.mrf.mxu0
      %v388 = vadd.f32 %v259, %v387
      %v389 = vpop.f32.mrf.mxu0
      %390 = vmatprep.mubr.f32.mxu0 0.0
      %391 = vmatmul.mubr.f32.gmra.mxu0 %v187
      %v392 = vpop.f32.mrf.mxu0
      %v393 = vadd.f32 %v259, %v392
      %v394 = vpop.f32.mrf.mxu0
      %395 = vmatprep.mubr.f32.mxu0 0.0
      %396 = vmatmul.mubr.f32.gmra.mxu0 %v188
      %v397 = vpop.f32.mrf.mxu0
      %v398 = vadd.f32 %v259, %v397
      %v399 = vpop.f32.mrf.mxu0
      %400 = vmatprep.mubr.f32.mxu0 0.0
      %401 = vmatmul.mubr.f32.gmra.mxu0 %v189
      %v402 = vpop.f32.mrf.mxu0
      %v403 = vadd.f32 %v259, %v402
      %v404 = vpop.f32.mrf.mxu0
      %405 = vmatprep.mubr.f32.mxu0 0.0
      %406 = vmatmul.mubr.f32.gmra.mxu0 %v190
      %v407 = vpop.f32.mrf.mxu0
      %v408 = vadd.f32 %v259, %v407
      %v409 = vpop.f32.mrf.mxu0
      %410 = vmatprep.mubr.f32.mxu0 0.0
      %411 = vmatmul.mubr.f32.gmra.mxu0 %v191
      %v412 = vpop.f32.mrf.mxu0
      %v413 = vadd.f32 %v259, %v412
      %v414 = vpop.f32.mrf.mxu0
      %415 = vmatprep.mubr.f32.mxu0 0.0
      %416 = vmatmul.mubr.f32.gmra.mxu0 %v192
      %v417 = vpop.f32.mrf.mxu0
      %v418 = vadd.f32 %v259, %v417
      %v419 = vpop.f32.mrf.mxu0
      %420 = vmatprep.mubr.f32.mxu0 0.0
      %421 = vmatmul.mubr.f32.gmra.mxu0 %v193
      %v422 = vpop.f32.mrf.mxu0
      %v423 = vadd.f32 %v259, %v422
      %v424 = vpop.f32.mrf.mxu0
      %425 = vmatprep.mubr.f32.mxu0 0.0
      %426 = vmatmul.mubr.f32.gmra.mxu0 %v194
      %v427 = vpop.f32.mrf.mxu0
      %v428 = vadd.f32 %v259, %v427
      %v429 = vpop.f32.mrf.mxu0
      %430 = vmatprep.mubr.f32.mxu0 0.0
      %431 = vmatmul.mubr.f32.gmra.mxu0 %v195
      %v432 = vpop.f32.mrf.mxu0
      %v433 = vadd.f32 %v259, %v432
      %v434 = vpop.f32.mrf.mxu0
      %435 = vmatprep.mubr.f32.mxu0 0.0
      %436 = vmatmul.mubr.f32.gmra.mxu0 %v196
      %v437 = vpop.f32.mrf.mxu0
      %v438 = vadd.f32 %v259, %v437
      %v439 = vpop.f32.mrf.mxu0
      %440 = vmatprep.mubr.f32.mxu0 0.0
      %441 = vmatmul.mubr.f32.gmra.mxu0 %v197
      %v442 = vpop.f32.mrf.mxu0
      %v443 = vadd.f32 %v259, %v442
      %v444 = vpop.f32.mrf.mxu0
      %445 = vmatprep.mubr.f32.mxu0 0.0
      %446 = vmatmul.mubr.f32.gmra.mxu0 %v198
      %v447 = vpop.f32.mrf.mxu0
      %v448 = vadd.f32 %v259, %v447
      %v449 = vpop.f32.mrf.mxu0
      %450 = vmatprep.mubr.f32.mxu0 0.0
      %451 = vmatmul.mubr.f32.gmra.mxu0 %v199
      %v452 = vpop.f32.mrf.mxu0
      %v453 = vadd.f32 %v259, %v452
      %v454 = vpop.f32.mrf.mxu0
      %455 = vmatprep.mubr.f32.mxu0 0.0
      %456 = vmatmul.mubr.f32.gmra.mxu0 %v200
      %v457 = vpop.f32.mrf.mxu0
      %v458 = vadd.f32 %v259, %v457
      %v459 = vpop.f32.mrf.mxu0
      %460 = vmatprep.mubr.f32.mxu0 0.0
      %461 = vmatmul.mubr.f32.gmra.mxu0 %v201
      %v462 = vpop.f32.mrf.mxu0
      %v463 = vadd.f32 %v259, %v462
      %v464 = vpop.f32.mrf.mxu0
      %465 = vmatprep.mubr.f32.mxu0 0.0
      %466 = vmatmul.mubr.f32.gmra.mxu0 %v202
      %v467 = vpop.f32.mrf.mxu0
      %v468 = vadd.f32 %v259, %v467
      %v469 = vpop.f32.mrf.mxu0
      %470 = vmatprep.mubr.f32.mxu0 0.0
      %471 = vmatmul.mubr.f32.gmra.mxu0 %v203
      %v472 = vpop.f32.mrf.mxu0
      %v473 = vadd.f32 %v259, %v472
      %v474 = vpop.f32.mrf.mxu0
      %475 = vmatprep.mubr.f32.mxu0 0.0
      %476 = vmatmul.mubr.f32.gmra.mxu0 %v204
      %v477 = vpop.f32.mrf.mxu0
      %v478 = vadd.f32 %v259, %v477
      %v479 = vpop.f32.mrf.mxu0
      %480 = vmatprep.mubr.f32.mxu0 0.0
      %481 = vmatmul.mubr.f32.gmra.mxu0 %v205
      %v482 = vpop.f32.mrf.mxu0
      %v483 = vadd.f32 %v259, %v482
      %v484 = vpop.f32.mrf.mxu0
      %485 = vmatprep.mubr.f32.mxu0 0.0
      %486 = vmatmul.mubr.f32.gmra.mxu0 %v206
      %v487 = vpop.f32.mrf.mxu0
      %v488 = vadd.f32 %v259, %v487
      %v489 = vpop.f32.mrf.mxu0
      %490 = vmatprep.mubr.f32.mxu0 0.0
      %491 = vmatmul.mubr.f32.gmra.mxu0 %v207
      %v492 = vpop.f32.mrf.mxu0
      %v493 = vadd.f32 %v259, %v492
      %v494 = vpop.f32.mrf.mxu0
      %495 = vmatprep.mubr.f32.mxu0 0.0
      %496 = vmatmul.mubr.f32.gmra.mxu0 %v208
      %v497 = vpop.f32.mrf.mxu0
      %v498 = vadd.f32 %v259, %v497
      %v499 = vpop.f32.mrf.mxu0
      %500 = vmatprep.mubr.f32.mxu0 0.0
      %501 = vmatmul.mubr.f32.gmra.mxu0 %v209
      %v502 = vpop.f32.mrf.mxu0
      %v503 = vadd.f32 %v259, %v502
      %v504 = vpop.f32.mrf.mxu0
      %505 = vmatprep.mubr.f32.mxu0 0.0
      %506 = vmatmul.mubr.f32.gmra.mxu0 %v210
      %v507 = vpop.f32.mrf.mxu0
      %v508 = vadd.f32 %v259, %v507
      %v509 = vpop.f32.mrf.mxu0
      %510 = vmatprep.mubr.f32.mxu0 0.0
      %511 = vmatmul.mubr.f32.gmra.mxu0 %v211
      %v512 = vpop.f32.mrf.mxu0
      %v513 = vadd.f32 %v259, %v512
      %v514 = vpop.f32.mrf.mxu0
      %515 = vmatprep.mubr.f32.mxu0 0.0
      %516 = vmatmul.mubr.f32.gmra.mxu0 %v212
      %v517 = vpop.f32.mrf.mxu0
      %v518 = vadd.f32 %v259, %v517
      %v519 = vpop.f32.mrf.mxu0
      %520 = vmatprep.mubr.f32.mxu0 0.0
      %521 = vmatmul.mubr.f32.gmra.mxu0 %v213
      %v522 = vpop.f32.mrf.mxu0
      %v523 = vadd.f32 %v259, %v522
      %v524 = vpop.f32.mrf.mxu0
      %525 = vmatprep.mubr.f32.mxu0 0.0
      %526 = vmatmul.mubr.f32.gmra.mxu0 %v214
      %v527 = vpop.f32.mrf.mxu0
      %v528 = vadd.f32 %v259, %v527
      %v529 = vpop.f32.mrf.mxu0
      %530 = vmatprep.mubr.f32.mxu0 0.0
      %531 = vmatmul.mubr.f32.gmra.mxu0 %v215
      %v532 = vpop.f32.mrf.mxu0
      %v533 = vadd.f32 %v259, %v532
      %v534 = vpop.f32.mrf.mxu0
      %535 = vmatprep.mubr.f32.mxu0 0.0
      %536 = vmatmul.mubr.f32.gmra.mxu0 %v216
      %v537 = vpop.f32.mrf.mxu0
      %v538 = vadd.f32 %v259, %v537
      %v539 = vpop.f32.mrf.mxu0
      %540 = vmatprep.mubr.f32.mxu0 0.0
      %541 = vmatmul.mubr.f32.gmra.mxu0 %v217
      %v542 = vpop.f32.mrf.mxu0
      %v543 = vadd.f32 %v259, %v542
      %v544 = vpop.f32.mrf.mxu0
      %545 = vmatprep.mubr.f32.mxu0 0.0
      %546 = vmatmul.mubr.f32.gmra.mxu0 %v218
      %v547 = vpop.f32.mrf.mxu0
      %v548 = vadd.f32 %v259, %v547
      %v549 = vpop.f32.mrf.mxu0
      %550 = vmatprep.mubr.f32.mxu0 0.0
      %551 = vmatmul.mubr.f32.gmra.mxu0 %v219
      %v552 = vpop.f32.mrf.mxu0
      %v553 = vadd.f32 %v259, %v552
      %v554 = vpop.f32.mrf.mxu0
      %555 = vmatprep.mubr.f32.mxu0 0.0
      %556 = vmatmul.mubr.f32.gmra.mxu0 %v220
      %v557 = vpop.f32.mrf.mxu0
      %v558 = vadd.f32 %v259, %v557
      %v559 = vpop.f32.mrf.mxu0
      %560 = vmatprep.mubr.f32.mxu0 0.0
      %561 = vmatmul.mubr.f32.gmra.mxu0 %v221
      %v562 = vpop.f32.mrf.mxu0
      %v563 = vadd.f32 %v259, %v562
      %v564 = vpop.f32.mrf.mxu0
      %565 = vmatprep.mubr.f32.mxu0 0.0
      %566 = vmatmul.mubr.f32.gmra.mxu0 %v222
      %v567 = vpop.f32.mrf.mxu0
      %v568 = vadd.f32 %v259, %v567
      %v569 = vpop.f32.mrf.mxu0
      %570 = vmatprep.mubr.f32.mxu0 0.0
      %571 = vmatmul.mubr.f32.gmra.mxu0 %v223
      %v572 = vpop.f32.mrf.mxu0
      %v573 = vadd.f32 %v259, %v572
      %v574 = vpop.f32.mrf.mxu0
      %575 = vmatprep.mubr.f32.mxu0 0.0
      %576 = vmatmul.mubr.f32.gmra.mxu0 %v224
      %v577 = vpop.f32.mrf.mxu0
      %v578 = vadd.f32 %v259, %v577
      %v579 = vpop.f32.mrf.mxu0
      %580 = vmatprep.mubr.f32.mxu0 0.0
      %581 = vmatmul.mubr.f32.gmra.mxu0 %v225
      %v582 = vpop.f32.mrf.mxu0
      %v583 = vadd.f32 %v259, %v582
      %v584 = vpop.f32.mrf.mxu0
      %585 = vmatprep.mubr.f32.mxu0 0.0
      %586 = vmatmul.mubr.f32.gmra.mxu0 %v226
      %v587 = vpop.f32.mrf.mxu0
      %v588 = vadd.f32 %v259, %v587
      %v589 = vpop.f32.mrf.mxu0
      %590 = vmatprep.mubr.f32.mxu0 0.0
      %591 = vmatmul.mubr.f32.gmra.mxu0 %v227
      %v592 = vpop.f32.mrf.mxu0
      %v593 = vadd.f32 %v259, %v592
      %v594 = vpop.f32.mrf.mxu0
      %595 = vmatprep.mubr.f32.mxu0 0.0
      %596 = vmatmul.mubr.f32.gmra.mxu0 %v228
      %v597 = vpop.f32.mrf.mxu0
      %v598 = vadd.f32 %v259, %v597
      %v599 = vpop.f32.mrf.mxu0
      %600 = vmatprep.mubr.f32.mxu0 0.0
      %601 = vmatmul.mubr.f32.gmra.mxu0 %v229
      %v602 = vpop.f32.mrf.mxu0
      %v603 = vadd.f32 %v259, %v602
      %v604 = vpop.f32.mrf.mxu0
      %605 = vmatprep.mubr.f32.mxu0 0.0
      %606 = vmatmul.mubr.f32.gmra.mxu0 %v230
      %v607 = vpop.f32.mrf.mxu0
      %v608 = vadd.f32 %v259, %v607
      %v609 = vpop.f32.mrf.mxu0
      %610 = vmatprep.mubr.f32.mxu0 0.0
      %611 = vmatmul.mubr.f32.gmra.mxu0 %v231
      %v612 = vpop.f32.mrf.mxu0
      %v613 = vadd.f32 %v259, %v612
      %v614 = vpop.f32.mrf.mxu0
      %615 = vmatprep.mubr.f32.mxu0 0.0
      %616 = vmatmul.mubr.f32.gmra.mxu0 %v232
      %v617 = vpop.f32.mrf.mxu0
      %v618 = vadd.f32 %v259, %v617
      %v619 = vpop.f32.mrf.mxu0
      %620 = vmatprep.mubr.f32.mxu0 0.0
      %621 = vmatmul.mubr.f32.gmra.mxu0 %v233
      %v622 = vpop.f32.mrf.mxu0
      %v623 = vadd.f32 %v259, %v622
      %v624 = vpop.f32.mrf.mxu0
      %625 = vmatprep.mubr.f32.mxu0 0.0
      %626 = vmatmul.mubr.f32.gmra.mxu0 %v234
      %v627 = vpop.f32.mrf.mxu0
      %v628 = vadd.f32 %v259, %v627
      %v629 = vpop.f32.mrf.mxu0
      %630 = vmatprep.mubr.f32.mxu0 0.0
      %631 = vmatmul.mubr.f32.gmra.mxu0 %v235
      %v632 = vpop.f32.mrf.mxu0
      %v633 = vadd.f32 %v259, %v632
      %v634 = vpop.f32.mrf.mxu0
      %635 = vmatprep.mubr.f32.mxu0 0.0
      %636 = vmatmul.mubr.f32.gmra.mxu0 %v236
      %v637 = vpop.f32.mrf.mxu0
      %v638 = vadd.f32 %v259, %v637
      %v639 = vpop.f32.mrf.mxu0
      %640 = vmatprep.mubr.f32.mxu0 0.0
      %641 = vmatmul.mubr.f32.gmra.mxu0 %v237
      %v642 = vpop.f32.mrf.mxu0
      %v643 = vadd.f32 %v259, %v642
      %v644 = vpop.f32.mrf.mxu0
      %645 = vdwg.mxu0
      %646 = vst [vmem:[%s172] sm:$0xff] %v328
      %647 = vst [vmem:[%s172 + $0x8] sm:$0xff] %v333
      %648 = vst [vmem:[%s172 + $0x10] sm:$0xff] %v338
      %649 = vst [vmem:[%s172 + $0x18] sm:$0xff] %v343
      %650 = vst [vmem:[%s172 + $0x20] sm:$0xff] %v348
      %651 = vst [vmem:[%s172 + $0x28] sm:$0xff] %v353
      %652 = vst [vmem:[%s172 + $0x30] sm:$0xff] %v358
      %653 = vst [vmem:[%s172 + $0x38] sm:$0xff] %v363
      %654 = vst [vmem:[%s172 + $0x40] sm:$0xff] %v368
      %655 = vst [vmem:[%s172 + $0x48] sm:$0xff] %v373
      %656 = vst [vmem:[%s172 + $0x50] sm:$0xff] %v378
      %657 = vst [vmem:[%s172 + $0x58] sm:$0xff] %v383
      %658 = vst [vmem:[%s172 + $0x60] sm:$0xff] %v388
      %659 = vst [vmem:[%s172 + $0x68] sm:$0xff] %v393
      %660 = vst [vmem:[%s172 + $0x70] sm:$0xff] %v398
      %661 = vst [vmem:[%s172 + $0x78] sm:$0xff] %v403
      %662 = vst [vmem:[%s172 + $0x80] sm:$0xff] %v408
      %663 = vst [vmem:[%s172 + $0x88] sm:$0xff] %v413
      %664 = vst [vmem:[%s172 + $0x90] sm:$0xff] %v418
      %665 = vst [vmem:[%s172 + $0x98] sm:$0xff] %v423
      %666 = vst [vmem:[%s172 + $0xa0] sm:$0xff] %v428
      %667 = vst [vmem:[%s172 + $0xa8] sm:$0xff] %v433
      %668 = vst [vmem:[%s172 + $0xb0] sm:$0xff] %v438
      %669 = vst [vmem:[%s172 + $0xb8] sm:$0xff] %v443
      %670 = vst [vmem:[%s172 + $0xc0] sm:$0xff] %v448
      %671 = vst [vmem:[%s172 + $0xc8] sm:$0xff] %v453
      %672 = vst [vmem:[%s172 + $0xd0] sm:$0xff] %v458
      %673 = vst [vmem:[%s172 + $0xd8] sm:$0xff] %v463
      %674 = vst [vmem:[%s172 + $0xe0] sm:$0xff] %v468
      %675 = vst [vmem:[%s172 + $0xe8] sm:$0xff] %v473
      %676 = vst [vmem:[%s172 + $0xf0] sm:$0xff] %v478
      %677 = vst [vmem:[%s172 + $0xf8] sm:$0xff] %v483
      %678 = vst [vmem:[%s172 + $0x100] sm:$0xff] %v488
      %679 = vst [vmem:[%s172 + $0x108] sm:$0xff] %v493
      %680 = vst [vmem:[%s172 + $0x110] sm:$0xff] %v498
      %681 = vst [vmem:[%s172 + $0x118] sm:$0xff] %v503
      %682 = vst [vmem:[%s172 + $0x120] sm:$0xff] %v508
      %683 = vst [vmem:[%s172 + $0x128] sm:$0xff] %v513
      %684 = vst [vmem:[%s172 + $0x130] sm:$0xff] %v518
      %685 = vst [vmem:[%s172 + $0x138] sm:$0xff] %v523
      %686 = vst [vmem:[%s172 + $0x140] sm:$0xff] %v528
      %687 = vst [vmem:[%s172 + $0x148] sm:$0xff] %v533
      %688 = vst [vmem:[%s172 + $0x150] sm:$0xff] %v538
      %689 = vst [vmem:[%s172 + $0x158] sm:$0xff] %v543
      %690 = vst [vmem:[%s172 + $0x160] sm:$0xff] %v548
      %691 = vst [vmem:[%s172 + $0x168] sm:$0xff] %v553
      %692 = vst [vmem:[%s172 + $0x170] sm:$0xff] %v558
      %693 = vst [vmem:[%s172 + $0x178] sm:$0xff] %v563
      %694 = vst [vmem:[%s172 + $0x180] sm:$0xff] %v568
      %695 = vst [vmem:[%s172 + $0x188] sm:$0xff] %v573
      %696 = vst [vmem:[%s172 + $0x190] sm:$0xff] %v578
      %697 = vst [vmem:[%s172 + $0x198] sm:$0xff] %v583
      %698 = vst [vmem:[%s172 + $0x1a0] sm:$0xff] %v588
      %699 = vst [vmem:[%s172 + $0x1a8] sm:$0xff] %v593
      %700 = vst [vmem:[%s172 + $0x1b0] sm:$0xff] %v598
      %701 = vst [vmem:[%s172 + $0x1b8] sm:$0xff] %v603
      %702 = vst [vmem:[%s172 + $0x1c0] sm:$0xff] %v608
      %703 = vst [vmem:[%s172 + $0x1c8] sm:$0xff] %v613
      %704 = vst [vmem:[%s172 + $0x1d0] sm:$0xff] %v618
      %705 = vst [vmem:[%s172 + $0x1d8] sm:$0xff] %v623
      %706 = vst [vmem:[%s172 + $0x1e0] sm:$0xff] %v628
      %707 = vst [vmem:[%s172 + $0x1e8] sm:$0xff] %v633
      %708 = vst [vmem:[%s172 + $0x1f0] sm:$0xff] %v638
      %709 = vst [vmem:[%s172 + $0x1f8] sm:$0xff] %v643
      %s710 = smul.u32 64, %s14
      %p711 = scmp.lt.s32.totalorder %s710, 255
      %s712 = scalar_select %p711, %s710, 255
      %s713 = smul.addr %s712, 8
      %s714 = scalar_lea.vmem %s3, %s713
      // Predicated region
      $region33: #{ssta_forward.5} parent=31 // pred_check
        %p715 = pneg %p100
      $region34: #{ssta_forward.5} parent=31 // pred_check_branch
        %717 = sbr.rel (%p715) target = $region36
      $region35: #{ssta_forward.5} parent=31 // pred_region
        %s718 = smul.u32 64, %s14
      $region36: #{ssta_forward.5} parent=31 // pred_fallthru
        _
    $region32: #{ssta_forward.5} parent=5 // pred_fallthru
      _
    %p719 = scmp.le.s32.totalorder 2, %s9
    // Predicated region
    $region37: #{ssta_forward.5} parent=5 // pred_check
      %p720 = pneg %p719
    $region38: #{ssta_forward.5} parent=5 // pred_check_branch
      %722 = sbr.rel (%p720) target = $region40
    $region39: #{ssta_forward.5} parent=5 // pred_region
      %s723 = ssub.s32 %s9, 2
      // Predicated region
      $region41: #{ssta_forward.5} parent=39 // pred_check
        %p724 = pneg %p106
      $region42: #{ssta_forward.5} parent=39 // pred_check_branch
        %726 = sbr.rel (%p724) target = $region44
      $region43: #{ssta_forward.5} parent=39 // pred_region
        %s727 = smul.u32 64, %s15
        %p728 = scmp.lt.s32.totalorder %s727, 255
        %s729 = scalar_select %p728, %s727, 255
        %s730 = smul.addr %s729, 8
        %s731 = scalar_lea.vmem %s3, %s730
      $region44: #{ssta_forward.5} parent=39 // pred_fallthru
        _
    $region40: #{ssta_forward.5} parent=5 // pred_fallthru
      _
  $region6: #{ssta_forward.5} parent=0 // loop_footer
    %s13 = sadd.s32 1, %s9
  $region7: #{ssta_forward.5} parent=0 // loop_footer_branch
    %8 = sbr.rel target = $region3
  $region8: #{ssta_forward.5} parent=0 // loop_exit
    _

// kernel: ssta_forward.6
$region0: #{ssta_forward.6}
  #allocation0 [shape = 'u32[]', space=smem, size = 0x4, offset = 0x4, fixed_abs, tag = 'smem constant byte address 0x4 - core index']
  #allocation1 [shape = 'u32[144,128]{1,0:T(1,128)}', space=vmem, size = 0x12000, scoped, tag = 'internal scratch']
  #allocation2 [shape = 'f32[32,512]{1,0:T(8,128)}', space=vmem, size = 0x10000, scoped, tag = 'scratch operand']
  #allocation3 [shape = 'f32[32,512]{1,0:T(8,128)}', space=vmem, size = 0x10000, scoped, tag = 'scratch operand']
  #allocation4 [shape = 'f32[288,512]{1,0:T(8,128)}', space=vmem, size = 0x90000, scoped, tag = 'scratch operand']
  %s0 = inlined_call_operand.vmem [shape: f32[4,128,512], index: 0, kind: input, shape index: {}]
  %s1 = inlined_call_operand.vmem [shape: f32[128,288], index: 1, kind: input, shape index: {}]
  %s2 = inlined_call_operand.vmem [shape: f32[288,512], index: 2, kind: input, shape index: {}]
  %s3 = inlined_call_operand.vmem [shape: f32[32,512], index: 3, kind: input, shape index: {}]
  %s4 = inlined_call_operand.vmem [shape: f32[32,512], index: 4, kind: input, shape index: {}]
  %s5 = inlined_call_operand.vmem [shape: f32[4,32,512], index: 5, kind: output, shape index: {0}]
  %s6 = inlined_call_operand.vmem [shape: f32[32,512], index: 6, kind: output, shape index: {1}]
  %s7 = inlined_call_operand.vmem [shape: f32[32,512], index: 7, kind: output, shape index: {2}]
  %8 = xla_tuple %s5, %s6, %s7
  %s9 = sld [smem:[#allocation0]]
  $region73: #{ssta_forward.6} parent=0
    _
  %s11 = ssub.s32 1, %s9
  %s12 = scalar_select 0, %s11, %s9
  loop: start=0, step=1, limit=6
  $region2: #{ssta_forward.6} parent=0 // loop_pre_header
    _
  $region3: #{ssta_forward.6} parent=0 // loop_header
    %s14 = sphi 0, %s18
    %p15 = scmp.ge.s32.totalorder %s14, 6
    %s24 = sphi 0, %s26
    %s27 = sphi 0, %s24
    %s28 = sphi 0, %s27
    %s44 = sphi 0, %s28
    %s48 = sphi 0, %s48
    %s50 = sphi 0, %s48
    %s51 = sphi 0, %s50
    %s65 = sphi 0, %s51
    %s69 = sphi 0, %s69
    %s71 = sphi 0, %s69
    %s72 = sphi 0, %s71
    %s86 = sphi 0, %s72
    %s90 = sphi 0, %s90
    %s92 = sphi 0, %s90
    %s93 = sphi 0, %s92
    %s107 = sphi 0, %s93
    %s111 = sphi 0, %s111
    %s113 = sphi 0, %s111
    %s114 = sphi 0, %s113
    %s128 = sphi 0, %s114
    %s134 = sphi 0, %s136
    %s137 = sphi 0, %s134
    %s138 = sphi 0, %s137
    %s154 = sphi 0, %s138
    %s158 = sphi 0, %s158
    %s160 = sphi 0, %s158
    %s161 = sphi 0, %s160
    %s175 = sphi 0, %s161
    %s179 = sphi 0, %s179
    %s181 = sphi 0, %s179
    %s182 = sphi 0, %s181
    %s196 = sphi 0, %s182
  $region4: #{ssta_forward.6} parent=0 // loop_header_branch
    %17 = sbr.rel (%p15) target = $region8
  $region5: #{ssta_forward.6} parent=0 // loop_body
    %s19 = ssub.s32 %s14, 1
    %s20 = ssub.s32 %s14, 2
    %s21 = sadd.s32 %s14, 1
    %s22 = ssub.s32 %s14, %s21
    %p23 = scmp.eq.s32.totalorder %s22, 0
    %s25 = sadd.s32 %s24, 1
    %s26 = scalar_select %p23, %s24, %s25
    %p29 = pneg %p23
    %p30 = scmp.eq.s32.totalorder %s14, 3
    %p31 = por %p29, %p30
    %p32 = scmp.ne.s32.totalorder %s24, %s27
    %p33 = scmp.eq.s32.totalorder %s14, 0
    %p34 = por %p32, %p33
    %p35 = scmp.ne.s32.totalorder %s24, %s27
    %p36 = scmp.eq.s32.totalorder %s19, 3
    %p37 = por %p35, %p36
    %p38 = scmp.ne.s32.totalorder %s27, %s28
    %p39 = scmp.eq.s32.totalorder %s19, 0
    %p40 = por %p38, %p39
    %p41 = scmp.ne.s32.totalorder %s27, %s28
    %p42 = scmp.eq.s32.totalorder %s20, 3
    %p43 = por %p41, %p42
    %p45 = scmp.ne.s32.totalorder %s28, %s44
    %p46 = scmp.eq.s32.totalorder %s20, 0
    %p47 = por %p45, %p46
    %s49 = sadd.s32 %s48, 1
    %p52 = scmp.eq.s32.totalorder %s14, 3
    %p53 = scmp.ne.s32.totalorder %s48, %s50
    %p54 = scmp.eq.s32.totalorder %s14, 0
    %p55 = por %p53, %p54
    %p56 = scmp.ne.s32.totalorder %s48, %s50
    %p57 = scmp.eq.s32.totalorder %s19, 3
    %p58 = por %p56, %p57
    %p59 = scmp.ne.s32.totalorder %s50, %s51
    %p60 = scmp.eq.s32.totalorder %s19, 0
    %p61 = por %p59, %p60
    %p62 = scmp.ne.s32.totalorder %s50, %s51
    %p63 = scmp.eq.s32.totalorder %s20, 3
    %p64 = por %p62, %p63
    %p66 = scmp.ne.s32.totalorder %s51, %s65
    %p67 = scmp.eq.s32.totalorder %s20, 0
    %p68 = por %p66, %p67
    %s70 = sadd.s32 %s69, 1
    %p73 = scmp.eq.s32.totalorder %s14, 3
    %p74 = scmp.ne.s32.totalorder %s69, %s71
    %p75 = scmp.eq.s32.totalorder %s14, 0
    %p76 = por %p74, %p75
    %p77 = scmp.ne.s32.totalorder %s69, %s71
    %p78 = scmp.eq.s32.totalorder %s19, 3
    %p79 = por %p77, %p78
    %p80 = scmp.ne.s32.totalorder %s71, %s72
    %p81 = scmp.eq.s32.totalorder %s19, 0
    %p82 = por %p80, %p81
    %p83 = scmp.ne.s32.totalorder %s71, %s72
    %p84 = scmp.eq.s32.totalorder %s20, 3
    %p85 = por %p83, %p84
    %p87 = scmp.ne.s32.totalorder %s72, %s86
    %p88 = scmp.eq.s32.totalorder %s20, 0
    %p89 = por %p87, %p88
    %s91 = sadd.s32 %s90, 1
    %p94 = scmp.eq.s32.totalorder %s14, 3
    %p95 = scmp.ne.s32.totalorder %s90, %s92
    %p96 = scmp.eq.s32.totalorder %s14, 0
    %p97 = por %p95, %p96
    %p98 = scmp.ne.s32.totalorder %s90, %s92
    %p99 = scmp.eq.s32.totalorder %s19, 3
    %p100 = por %p98, %p99
    %p101 = scmp.ne.s32.totalorder %s92, %s93
    %p102 = scmp.eq.s32.totalorder %s19, 0
    %p103 = por %p101, %p102
    %p104 = scmp.ne.s32.totalorder %s92, %s93
    %p105 = scmp.eq.s32.totalorder %s20, 3
    %p106 = por %p104, %p105
    %p108 = scmp.ne.s32.totalorder %s93, %s107
    %p109 = scmp.eq.s32.totalorder %s20, 0
    %p110 = por %p108, %p109
    %s112 = sadd.s32 %s111, 1
    %p115 = scmp.eq.s32.totalorder %s14, 3
    %p116 = scmp.ne.s32.totalorder %s111, %s113
    %p117 = scmp.eq.s32.totalorder %s14, 0
    %p118 = por %p116, %p117
    %p119 = scmp.ne.s32.totalorder %s111, %s113
    %p120 = scmp.eq.s32.totalorder %s19, 3
    %p121 = por %p119, %p120
    %p122 = scmp.ne.s32.totalorder %s113, %s114
    %p123 = scmp.eq.s32.totalorder %s19, 0
    %p124 = por %p122, %p123
    %p125 = scmp.ne.s32.totalorder %s113, %s114
    %p126 = scmp.eq.s32.totalorder %s20, 3
    %p127 = por %p125, %p126
    %p129 = scmp.ne.s32.totalorder %s114, %s128
    %p130 = scmp.eq.s32.totalorder %s20, 0
    %p131 = por %p129, %p130
    %s132 = ssub.s32 %s14, %s21
    %p133 = scmp.eq.s32.totalorder %s132, 0
    %s135 = sadd.s32 %s134, 1
    %s136 = scalar_select %p133, %s134, %s135
    %p139 = pneg %p133
    %p140 = scmp.eq.s32.totalorder %s14, 3
    %p141 = por %p139, %p140
    %p142 = scmp.ne.s32.totalorder %s134, %s137
    %p143 = scmp.eq.s32.totalorder %s14, 0
    %p144 = por %p142, %p143
    %p145 = scmp.ne.s32.totalorder %s134, %s137
    %p146 = scmp.eq.s32.totalorder %s19, 3
    %p147 = por %p145, %p146
    %p148 = scmp.ne.s32.totalorder %s137, %s138
    %p149 = scmp.eq.s32.totalorder %s19, 0
    %p150 = por %p148, %p149
    %p151 = scmp.ne.s32.totalorder %s137, %s138
    %p152 = scmp.eq.s32.totalorder %s20, 3
    %p153 = por %p151, %p152
    %p155 = scmp.ne.s32.totalorder %s138, %s154
    %p156 = scmp.eq.s32.totalorder %s20, 0
    %p157 = por %p155, %p156
    %s159 = sadd.s32 %s158, 1
    %p162 = scmp.eq.s32.totalorder %s14, 3
    %p163 = scmp.ne.s32.totalorder %s158, %s160
    %p164 = scmp.eq.s32.totalorder %s14, 0
    %p165 = por %p163, %p164
    %p166 = scmp.ne.s32.totalorder %s158, %s160
    %p167 = scmp.eq.s32.totalorder %s19, 3
    %p168 = por %p166, %p167
    %p169 = scmp.ne.s32.totalorder %s160, %s161
    %p170 = scmp.eq.s32.totalorder %s19, 0
    %p171 = por %p169, %p170
    %p172 = scmp.ne.s32.totalorder %s160, %s161
    %p173 = scmp.eq.s32.totalorder %s20, 3
    %p174 = por %p172, %p173
    %p176 = scmp.ne.s32.totalorder %s161, %s175
    %p177 = scmp.eq.s32.totalorder %s20, 0
    %p178 = por %p176, %p177
    %s180 = sadd.s32 %s179, 1
    %p183 = scmp.eq.s32.totalorder %s14, 3
    %p184 = scmp.ne.s32.totalorder %s179, %s181
    %p185 = scmp.eq.s32.totalorder %s14, 0
    %p186 = por %p184, %p185
    %p187 = scmp.ne.s32.totalorder %s179, %s181
    %p188 = scmp.eq.s32.totalorder %s19, 3
    %p189 = por %p187, %p188
    %p190 = scmp.ne.s32.totalorder %s181, %s182
    %p191 = scmp.eq.s32.totalorder %s19, 0
    %p192 = por %p190, %p191
    %p193 = scmp.ne.s32.totalorder %s181, %s182
    %p194 = scmp.eq.s32.totalorder %s20, 3
    %p195 = por %p193, %p194
    %p197 = scmp.ne.s32.totalorder %s182, %s196
    %p198 = scmp.eq.s32.totalorder %s20, 0
    %p199 = por %p197, %p198
    %p200 = scmp.le.s32.totalorder 1, %s14
    %p201 = scmp.lt.s32.totalorder %s14, 5
    %p202 = pnand %p200, %p201
    %p203 = pneg %p202
    // Predicated region
    $region9: #{ssta_forward.6} parent=5 // pred_check
      _
    $region10: #{ssta_forward.6} parent=5 // pred_check_branch
      %205 = sbr.rel (%p202) target = $region12
    $region11: #{ssta_forward.6} parent=5 // pred_region
      %s206 = ssub.s32 %s14, 1
      // Predicated region
      $region13: #{ssta_forward.6} parent=11 // pred_check
        %p207 = pneg %p61
      $region14: #{ssta_forward.6} parent=11 // pred_check_branch
        %209 = sbr.rel (%p207) target = $region16
      $region15: #{ssta_forward.6} parent=11 // pred_region
        _
      $region16: #{ssta_forward.6} parent=11 // pred_fallthru
        _
      // Predicated region
      $region17: #{ssta_forward.6} parent=11 // pred_check
        %p210 = pneg %p82
      $region18: #{ssta_forward.6} parent=11 // pred_check_branch
        %212 = sbr.rel (%p210) target = $region20
      $region19: #{ssta_forward.6} parent=11 // pred_region
        _
      $region20: #{ssta_forward.6} parent=11 // pred_fallthru
        _
      // Predicated region
      $region21: #{ssta_forward.6} parent=11 // pred_check
        %p213 = pneg %p103
      $region22: #{ssta_forward.6} parent=11 // pred_check_branch
        %215 = sbr.rel (%p213) target = $region24
      $region23: #{ssta_forward.6} parent=11 // pred_region
        _
      $region24: #{ssta_forward.6} parent=11 // pred_fallthru
        _
      // Predicated region
      $region25: #{ssta_forward.6} parent=11 // pred_check
        %p216 = pneg %p124
      $region26: #{ssta_forward.6} parent=11 // pred_check_branch
        %218 = sbr.rel (%p216) target = $region28
      $region27: #{ssta_forward.6} parent=11 // pred_region
        _
      $region28: #{ssta_forward.6} parent=11 // pred_fallthru
        _
    $region12: #{ssta_forward.6} parent=5 // pred_fallthru
      _
    %p219 = scmp.lt.s32.totalorder %s14, 4
    // Predicated region
    $region29: #{ssta_forward.6} parent=5 // pred_check
      %p220 = pneg %p219
    $region30: #{ssta_forward.6} parent=5 // pred_check_branch
      %222 = sbr.rel (%p220) target = $region32
    $region31: #{ssta_forward.6} parent=5 // pred_region
      // Predicated region
      $region33: #{ssta_forward.6} parent=31 // pred_check
        %p223 = pneg %p34
      $region34: #{ssta_forward.6} parent=31 // pred_check_branch
        %225 = sbr.rel (%p223) target = $region36
      $region35: #{ssta_forward.6} parent=31 // pred_region
        %p226 = scmp.lt.s32.totalorder %s14, 3
        %s227 = scalar_select %p226, %s14, 3
        %s228 = smul.addr %s227, 64
        %s229 = smul.addr %s228, 8
        %s230 = scalar_lea.vmem %s0, %s229
      $region36: #{ssta_forward.6} parent=31 // pred_fallthru
        _
    $region32: #{ssta_forward.6} parent=5 // pred_fallthru
      _
    %p231 = scmp.le.s32.totalorder 1, %s14
    %p232 = scmp.lt.s32.totalorder %s14, 5
    %p233 = pnand %p231, %p232
    %p234 = pneg %p233
    // Predicated region
    $region37: #{ssta_forward.6} parent=5 // pred_check
      _
    $region38: #{ssta_forward.6} parent=5 // pred_check_branch
      %236 = sbr.rel (%p233) target = $region40
    $region39: #{ssta_forward.6} parent=5 // pred_region
      %s237 = ssub.s32 %s14, 1
      %p238 = scmp.lt.s32.totalorder %s19, 3
      %s239 = scalar_select %p238, %s19, 3
      %s240 = smul.addr %s239, 64
      %s241 = smul.addr %s240, 8
      %s242 = scalar_lea.vmem %s0, %s241
      %p243 = pneg %p40
      %p244 = pneg %p37
      %p245 = pneg %p61
      %p246 = pneg %p58
      %p247 = pneg %p82
      %p248 = pneg %p79
      %p249 = pneg %p103
      %p250 = pneg %p100
      %p251 = pneg %p124
      %p252 = pneg %p121
      %p253 = pneg %p150
      %p254 = pneg %p147
      %p255 = scmp.lt.s32.totalorder %s19, 3
      %s256 = scalar_select %p255, %s19, 3
      %s257 = smul.addr %s256, 16
      %s258 = smul.addr %s257, 8
      %s259 = scalar_lea.vmem %s5, %s258
      %p260 = pneg %p171
      %p261 = pneg %p168
      %p262 = pneg %p192
      %p263 = pneg %p189
      %p264 = scmp.lt.s32.totalorder %s19, 3
      %s265 = scalar_select %p264, %s19, 3
      %s266 = smul.addr %s265, 64
      %s267 = smul.addr %s266, 8
      %s268 = scalar_lea.vmem %s0, %s267
      %p269 = scmp.lt.s32.totalorder %s19, 3
      %s270 = scalar_select %p269, %s19, 3
      %s271 = smul.addr %s270, 16
      %s272 = smul.addr %s271, 8
      %s273 = scalar_lea.vmem %s5, %s272
      %p274 = scmp.eq.s32.totalorder %s19, 0
      // Predicated region
      $region41: #{ssta_forward.6} parent=39 // pred_check
        %p275 = pneg %p274
      $region42: #{ssta_forward.6} parent=39 // pred_check_branch
        %277 = sbr.rel (%p275) target = $region44
      $region43: #{ssta_forward.6} parent=39 // pred_region
        %v278 = vld [vmem:[%s3] sm:$0xff]
        %v279 = vld [vmem:[%s3 + $0x8] sm:$0xff]
        %v280 = vld [vmem:[%s3 + $0x10] sm:$0xff]
        %v281 = vld [vmem:[%s3 + $0x18] sm:$0xff]
        %v282 = vld [vmem:[%s3 + $0x20] sm:$0xff]
        %v283 = vld [vmem:[%s3 + $0x28] sm:$0xff]
        %v284 = vld [vmem:[%s3 + $0x30] sm:$0xff]
        %v285 = vld [vmem:[%s3 + $0x38] sm:$0xff]
        %v286 = vld [vmem:[%s3 + $0x40] sm:$0xff]
        %v287 = vld [vmem:[%s3 + $0x48] sm:$0xff]
        %v288 = vld [vmem:[%s3 + $0x50] sm:$0xff]
        %v289 = vld [vmem:[%s3 + $0x58] sm:$0xff]
        %v290 = vld [vmem:[%s3 + $0x60] sm:$0xff]
        %v291 = vld [vmem:[%s3 + $0x68] sm:$0xff]
        %v292 = vld [vmem:[%s3 + $0x70] sm:$0xff]
        %v293 = vld [vmem:[%s3 + $0x78] sm:$0xff]
        %294 = vst [vmem:[#allocation2] sm:$0xff] %v278
        %295 = vst [vmem:[#allocation2 + $0x8] sm:$0xff] %v279
        %296 = vst [vmem:[#allocation2 + $0x10] sm:$0xff] %v280
        %297 = vst [vmem:[#allocation2 + $0x18] sm:$0xff] %v281
        %298 = vst [vmem:[#allocation2 + $0x20] sm:$0xff] %v282
        %299 = vst [vmem:[#allocation2 + $0x28] sm:$0xff] %v283
        %300 = vst [vmem:[#allocation2 + $0x30] sm:$0xff] %v284
        %301 = vst [vmem:[#allocation2 + $0x38] sm:$0xff] %v285
        %302 = vst [vmem:[#allocation2 + $0x40] sm:$0xff] %v286
        %303 = vst [vmem:[#allocation2 + $0x48] sm:$0xff] %v287
        %304 = vst [vmem:[#allocation2 + $0x50] sm:$0xff] %v288
        %305 = vst [vmem:[#allocation2 + $0x58] sm:$0xff] %v289
        %306 = vst [vmem:[#allocation2 + $0x60] sm:$0xff] %v290
        %307 = vst [vmem:[#allocation2 + $0x68] sm:$0xff] %v291
        %308 = vst [vmem:[#allocation2 + $0x70] sm:$0xff] %v292
        %309 = vst [vmem:[#allocation2 + $0x78] sm:$0xff] %v293
        %v310 = vld [vmem:[%s4] sm:$0xff]
        %v311 = vld [vmem:[%s4 + $0x8] sm:$0xff]
        %v312 = vld [vmem:[%s4 + $0x10] sm:$0xff]
        %v313 = vld [vmem:[%s4 + $0x18] sm:$0xff]
        %v314 = vld [vmem:[%s4 + $0x20] sm:$0xff]
        %v315 = vld [vmem:[%s4 + $0x28] sm:$0xff]
        %v316 = vld [vmem:[%s4 + $0x30] sm:$0xff]
        %v317 = vld [vmem:[%s4 + $0x38] sm:$0xff]
        %v318 = vld [vmem:[%s4 + $0x40] sm:$0xff]
        %v319 = vld [vmem:[%s4 + $0x48] sm:$0xff]
        %v320 = vld [vmem:[%s4 + $0x50] sm:$0xff]
        %v321 = vld [vmem:[%s4 + $0x58] sm:$0xff]
        %v322 = vld [vmem:[%s4 + $0x60] sm:$0xff]
        %v323 = vld [vmem:[%s4 + $0x68] sm:$0xff]
        %v324 = vld [vmem:[%s4 + $0x70] sm:$0xff]
        %v325 = vld [vmem:[%s4 + $0x78] sm:$0xff]
        %326 = vst [vmem:[#allocation3] sm:$0xff] %v310
        %327 = vst [vmem:[#allocation3 + $0x8] sm:$0xff] %v311
        %328 = vst [vmem:[#allocation3 + $0x10] sm:$0xff] %v312
        %329 = vst [vmem:[#allocation3 + $0x18] sm:$0xff] %v313
        %330 = vst [vmem:[#allocation3 + $0x20] sm:$0xff] %v314
        %331 = vst [vmem:[#allocation3 + $0x28] sm:$0xff] %v315
        %332 = vst [vmem:[#allocation3 + $0x30] sm:$0xff] %v316
        %333 = vst [vmem:[#allocation3 + $0x38] sm:$0xff] %v317
        %334 = vst [vmem:[#allocation3 + $0x40] sm:$0xff] %v318
        %335 = vst [vmem:[#allocation3 + $0x48] sm:$0xff] %v319
        %336 = vst [vmem:[#allocation3 + $0x50] sm:$0xff] %v320
        %337 = vst [vmem:[#allocation3 + $0x58] sm:$0xff] %v321
        %338 = vst [vmem:[#allocation3 + $0x60] sm:$0xff] %v322
        %339 = vst [vmem:[#allocation3 + $0x68] sm:$0xff] %v323
        %340 = vst [vmem:[#allocation3 + $0x70] sm:$0xff] %v324
        %341 = vst [vmem:[#allocation3 + $0x78] sm:$0xff] %v325
      $region44: #{ssta_forward.6} parent=39 // pred_fallthru
        _
      %v342 = vld [vmem:[#allocation2] sm:$0xff]
      %v343 = vld [vmem:[#allocation2 + $0x8] sm:$0xff]
      %v344 = vld [vmem:[#allocation2 + $0x10] sm:$0xff]
      %v345 = vld [vmem:[#allocation2 + $0x18] sm:$0xff]
      %v346 = vld [vmem:[#allocation2 + $0x20] sm:$0xff]
      %v347 = vld [vmem:[#allocation2 + $0x28] sm:$0xff]
      %v348 = vld [vmem:[#allocation2 + $0x30] sm:$0xff]
      %v349 = vld [vmem:[#allocation2 + $0x38] sm:$0xff]
      %v350 = vld [vmem:[#allocation2 + $0x40] sm:$0xff]
      %v351 = vld [vmem:[#allocation2 + $0x48] sm:$0xff]
      %v352 = vld [vmem:[#allocation2 + $0x50] sm:$0xff]
      %v353 = vld [vmem:[#allocation2 + $0x58] sm:$0xff]
      %v354 = vld [vmem:[#allocation2 + $0x60] sm:$0xff]
      %v355 = vld [vmem:[#allocation2 + $0x68] sm:$0xff]
      %v356 = vld [vmem:[#allocation2 + $0x70] sm:$0xff]
      %v357 = vld [vmem:[#allocation2 + $0x78] sm:$0xff]
      %358 = vrot.lane.b32.xlu0 %v342, 17
      %v359 = vpop.permute.xlu0 %358
      %360 = vrot.lane.b32.xlu0 %v346, 17
      %v361 = vpop.permute.xlu0 %360
      %362 = vrot.lane.b32.xlu0 %v350, 17
      %v363 = vpop.permute.xlu0 %362
      %364 = vrot.lane.b32.xlu0 %v354, 17
      %v365 = vpop.permute.xlu0 %364
      %366 = vrot.lane.b32.xlu0 %v343, 17
      %v367 = vpop.permute.xlu0 %366
      %368 = vrot.lane.b32.xlu0 %v347, 17
      %v369 = vpop.permute.xlu0 %368
      %370 = vrot.lane.b32.xlu0 %v351, 17
      %v371 = vpop.permute.xlu0 %370
      %372 = vrot.lane.b32.xlu0 %v355, 17
      %v373 = vpop.permute.xlu0 %372
      %374 = vrot.lane.b32.xlu0 %v344, 17
      %v375 = vpop.permute.xlu0 %374
      %376 = vrot.lane.b32.xlu0 %v348, 17
      %v377 = vpop.permute.xlu0 %376
      %378 = vrot.lane.b32.xlu0 %v352, 17
      %v379 = vpop.permute.xlu0 %378
      %380 = vrot.lane.b32.xlu0 %v356, 17
      %v381 = vpop.permute.xlu0 %380
      %382 = vrot.lane.b32.xlu0 %v345, 17
      %v383 = vpop.permute.xlu0 %382
      %384 = vrot.lane.b32.xlu0 %v349, 17
      %v385 = vpop.permute.xlu0 %384
      %386 = vrot.lane.b32.xlu0 %v353, 17
      %v387 = vpop.permute.xlu0 %386
      %388 = vrot.lane.b32.xlu0 %v357, 17
      %v389 = vpop.permute.xlu0 %388
      %v390 = vlaneseq
      %v391 = vand.u32 %v390, 127
      %vm392 = vcmp.lt.s32.totalorder %v391, 17
      %v393 = vsel %vm392, %v375, %v383
      %v394 = vsel %vm392, %v377, %v385
      %v395 = vsel %vm392, %v379, %v387
      %v396 = vsel %vm392, %v381, %v389
      %v397 = vsel %vm392, %v367, %v375
      %v398 = vsel %vm392, %v369, %v377
      %v399 = vsel %vm392, %v371, %v379
      %v400 = vsel %vm392, %v373, %v381
      %v401 = vsel %vm392, %v359, %v367
      %v402 = vsel %vm392, %v361, %v369
      %v403 = vsel %vm392, %v363, %v371
      %v404 = vsel %vm392, %v365, %v373
      %v405 = vsel %vm392, %v383, %v359
      %v406 = vsel %vm392, %v385, %v361
      %v407 = vsel %vm392, %v387, %v363
      %v408 = vsel %vm392, %v389, %v365
      %v409 = vld [vmem:[%s2] sm:$0xff]
      %v410 = vld [vmem:[%s2 + $0x8] sm:$0xff]
      %v411 = vld [vmem:[%s2 + $0x10] sm:$0xff]
      %v412 = vld [vmem:[%s2 + $0x18] sm:$0xff]
      %v413 = vld [vmem:[%s2 + $0x20] sm:$0xff]
      %v414 = vld [vmem:[%s2 + $0x28] sm:$0xff]
      %v415 = vld [vmem:[%s2 + $0x30] sm:$0xff]
      %v416 = vld [vmem:[%s2 + $0x38] sm:$0xff]
      %v417 = vld [vmem:[%s2 + $0x40] sm:$0xff]
      %v418 = vld [vmem:[%s2 + $0x48] sm:$0xff]
      %v419 = vld [vmem:[%s2 + $0x50] sm:$0xff]
      %v420 = vld [vmem:[%s2 + $0x58] sm:$0xff]
      %v421 = vld [vmem:[%s2 + $0x60] sm:$0xff]
      %v422 = vld [vmem:[%s2 + $0x68] sm:$0xff]
      %v423 = vld [vmem:[%s2 + $0x70] sm:$0xff]
      %v424 = vld [vmem:[%s2 + $0x78] sm:$0xff]
      %v425 = vmul.f32 %v405, %v409
      %v426 = vmul.f32 %v401, %v410
      %v427 = vmul.f32 %v397, %v411
      %v428 = vmul.f32 %v393, %v412
      %v429 = vmul.f32 %v406, %v413
      %v430 = vmul.f32 %v402, %v414
      %v431 = vmul.f32 %v398, %v415
      %v432 = vmul.f32 %v394, %v416
      %v433 = vmul.f32 %v407, %v417
      %v434 = vmul.f32 %v403, %v418
      %v435 = vmul.f32 %v399, %v419
      %v436 = vmul.f32 %v395, %v420
      %v437 = vmul.f32 %v408, %v421
      %v438 = vmul.f32 %v404, %v422
      %v439 = vmul.f32 %v400, %v423
      %v440 = vmul.f32 %v396, %v424
      %441 = vst [vmem:[#allocation4] sm:$0xff] %v425
      %442 = vst [vmem:[#allocation4 + $0x8] sm:$0xff] %v426
      %443 = vst [vmem:[#allocation4 + $0x10] sm:$0xff] %v427
      %444 = vst [vmem:[#allocation4 + $0x18] sm:$0xff] %v428
      %445 = vst [vmem:[#allocation4 + $0x20] sm:$0xff] %v429
      %446 = vst [vmem:[#allocation4 + $0x28] sm:$0xff] %v430
      %447 = vst [vmem:[#allocation4 + $0x30] sm:$0xff] %v431
      %448 = vst [vmem:[#allocation4 + $0x38] sm:$0xff] %v432
      %449 = vst [vmem:[#allocation4 + $0x40] sm:$0xff] %v433
      %450 = vst [vmem:[#allocation4 + $0x48] sm:$0xff] %v434
      %451 = vst [vmem:[#allocation4 + $0x50] sm:$0xff] %v435
      %452 = vst [vmem:[#allocation4 + $0x58] sm:$0xff] %v436
      %453 = vst [vmem:[#allocation4 + $0x60] sm:$0xff] %v437
      %454 = vst [vmem:[#allocation4 + $0x68] sm:$0xff] %v438
      %455 = vst [vmem:[#allocation4 + $0x70] sm:$0xff] %v439
      %456 = vst [vmem:[#allocation4 + $0x78] sm:$0xff] %v440
      %457 = vrot.lane.b32.xlu0 %v342, 16
      %v458 = vpop.permute.xlu0 %457
      %459 = vrot.lane.b32.xlu0 %v346, 16
      %v460 = vpop.permute.xlu0 %459
      %461 = vrot.lane.b32.xlu0 %v350, 16
      %v462 = vpop.permute.xlu0 %461
      %463 = vrot.lane.b32.xlu0 %v354, 16
      %v464 = vpop.permute.xlu0 %463
      %465 = vrot.lane.b32.xlu0 %v343, 16
      %v466 = vpop.permute.xlu0 %465
      %467 = vrot.lane.b32.xlu0 %v347, 16
      %v468 = vpop.permute.xlu0 %467
      %469 = vrot.lane.b32.xlu0 %v351, 16
      %v470 = vpop.permute.xlu0 %469
      %471 = vrot.lane.b32.xlu0 %v355, 16
      %v472 = vpop.permute.xlu0 %471
      %473 = vrot.lane.b32.xlu0 %v344, 16
      %v474 = vpop.permute.xlu0 %473
      %475 = vrot.lane.b32.xlu0 %v348, 16
      %v476 = vpop.permute.xlu0 %475
      %477 = vrot.lane.b32.xlu0 %v352, 16
      %v478 = vpop.permute.xlu0 %477
      %479 = vrot.lane.b32.xlu0 %v356, 16
      %v480 = vpop.permute.xlu0 %479
      %481 = vrot.lane.b32.xlu0 %v345, 16
      %v482 = vpop.permute.xlu0 %481
      %483 = vrot.lane.b32.xlu0 %v349, 16
      %v484 = vpop.permute.xlu0 %483
      %485 = vrot.lane.b32.xlu0 %v353, 16
      %v486 = vpop.permute.xlu0 %485
      %487 = vrot.lane.b32.xlu0 %v357, 16
      %v488 = vpop.permute.xlu0 %487
      %vm489 = vcmp.lt.s32.totalorder %v391, 16
      %v490 = vsel %vm489, %v474, %v482
      %v491 = vsel %vm489, %v476, %v484
      %v492 = vsel %vm489, %v478, %v486
      %v493 = vsel %vm489, %v480, %v488
      %v494 = vsel %vm489, %v466, %v474
      %v495 = vsel %vm489, %v468, %v476
      %v496 = vsel %vm489, %v470, %v478
      %v497 = vsel %vm489, %v472, %v480
      %v498 = vsel %vm489, %v458, %v466
      %v499 = vsel %vm489, %v460, %v468
      %v500 = vsel %vm489, %v462, %v470
      %v501 = vsel %vm489, %v464, %v472
      %v502 = vsel %vm489, %v482, %v458
      %v503 = vsel %vm489, %v484, %v460
      %v504 = vsel %vm489, %v486, %v462
      %v505 = vsel %vm489, %v488, %v464
      %v506 = vld [vmem:[%s2 + $0x80] sm:$0xff]
      %v507 = vld [vmem:[%s2 + $0x88] sm:$0xff]
      %v508 = vld [vmem:[%s2 + $0x90] sm:$0xff]
      %v509 = vld [vmem:[%s2 + $0x98] sm:$0xff]
      %v510 = vld [vmem:[%s2 + $0xa0] sm:$0xff]
      %v511 = vld [vmem:[%s2 + $0xa8] sm:$0xff]
      %v512 = vld [vmem:[%s2 + $0xb0] sm:$0xff]
      %v513 = vld [vmem:[%s2 + $0xb8] sm:$0xff]
      %v514 = vld [vmem:[%s2 + $0xc0] sm:$0xff]
      %v515 = vld [vmem:[%s2 + $0xc8] sm:$0xff]
      %v516 = vld [vmem:[%s2 + $0xd0] sm:$0xff]
      %v517 = vld [vmem:[%s2 + $0xd8] sm:$0xff]
      %v518 = vld [vmem:[%s2 + $0xe0] sm:$0xff]
      %v519 = vld [vmem:[%s2 + $0xe8] sm:$0xff]
      %v520 = vld [vmem:[%s2 + $0xf0] sm:$0xff]
      %v521 = vld [vmem:[%s2 + $0xf8] sm:$0xff]
      %v522 = vmul.f32 %v502, %v506
      %v523 = vmul.f32 %v498, %v507
      %v524 = vmul.f32 %v494, %v508
      %v525 = vmul.f32 %v490, %v509
      %v526 = vmul.f32 %v503, %v510
      %v527 = vmul.f32 %v499, %v511
      %v528 = vmul.f32 %v495, %v512
      %v529 = vmul.f32 %v491, %v513
      %v530 = vmul.f32 %v504, %v514
      %v531 = vmul.f32 %v500, %v515
      %v532 = vmul.f32 %v496, %v516
      %v533 = vmul.f32 %v492, %v517
      %v534 = vmul.f32 %v505, %v518
      %v535 = vmul.f32 %v501, %v519
      %v536 = vmul.f32 %v497, %v520
      %v537 = vmul.f32 %v493, %v521
      %538 = vst [vmem:[#allocation4 + $0x80] sm:$0xff] %v522
      %539 = vst [vmem:[#allocation4 + $0x88] sm:$0xff] %v523
      %540 = vst [vmem:[#allocation4 + $0x90] sm:$0xff] %v524
      %541 = vst [vmem:[#allocation4 + $0x98] sm:$0xff] %v525
      %542 = vst [vmem:[#allocation4 + $0xa0] sm:$0xff] %v526
      %543 = vst [vmem:[#allocation4 + $0xa8] sm:$0xff] %v527
      %544 = vst [vmem:[#allocation4 + $0xb0] sm:$0xff] %v528
      %545 = vst [vmem:[#allocation4 + $0xb8] sm:$0xff] %v529
      %546 = vst [vmem:[#allocation4 + $0xc0] sm:$0xff] %v530
      %547 = vst [vmem:[#allocation4 + $0xc8] sm:$0xff] %v531
      %548 = vst [vmem:[#allocation4 + $0xd0] sm:$0xff] %v532
      %549 = vst [vmem:[#allocation4 + $0xd8] sm:$0xff] %v533
      %550 = vst [vmem:[#allocation4 + $0xe0] sm:$0xff] %v534
      %551 = vst [vmem:[#allocation4 + $0xe8] sm:$0xff] %v535
      %552 = vst [vmem:[#allocation4 + $0xf0] sm:$0xff] %v536
      %553 = vst [vmem:[#allocation4 + $0xf8] sm:$0xff] %v537
      %554 = vrot.lane.b32.xlu0 %v342, 15
      %v555 = vpop.permute.xlu0 %554
      %556 = vrot.lane.b32.xlu0 %v346, 15
      %v557 = vpop.permute.xlu0 %556
      %558 = vrot.lane.b32.xlu0 %v350, 15
      %v559 = vpop.permute.xlu0 %558
      %560 = vrot.lane.b32.xlu0 %v354, 15
      %v561 = vpop.permute.xlu0 %560
      %562 = vrot.lane.b32.xlu0 %v343, 15
      %v563 = vpop.permute.xlu0 %562
      %564 = vrot.lane.b32.xlu0 %v347, 15
      %v565 = vpop.permute.xlu0 %564
      %566 = vrot.lane.b32.xlu0 %v351, 15
      %v567 = vpop.permute.xlu0 %566
      %568 = vrot.lane.b32.xlu0 %v355, 15
      %v569 = vpop.permute.xlu0 %568
      %570 = vrot.lane.b32.xlu0 %v344, 15
      %v571 = vpop.permute.xlu0 %570
      %572 = vrot.lane.b32.xlu0 %v348, 15
      %v573 = vpop.permute.xlu0 %572
      %574 = vrot.lane.b32.xlu0 %v352, 15
      %v575 = vpop.permute.xlu0 %574
      %576 = vrot.lane.b32.xlu0 %v356, 15
      %v577 = vpop.permute.xlu0 %576
      %578 = vrot.lane.b32.xlu0 %v345, 15
      %v579 = vpop.permute.xlu0 %578
      %580 = vrot.lane.b32.xlu0 %v349, 15
      %v581 = vpop.permute.xlu0 %580
      %582 = vrot.lane.b32.xlu0 %v353, 15
      %v583 = vpop.permute.xlu0 %582
      %584 = vrot.lane.b32.xlu0 %v357, 15
      %v585 = vpop.permute.xlu0 %584
      %vm586 = vcmp.lt.s32.totalorder %v391, 15
      %v587 = vsel %vm586, %v571, %v579
      %v588 = vsel %vm586, %v573, %v581
      %v589 = vsel %vm586, %v575, %v583
      %v590 = vsel %vm586, %v577, %v585
      %v591 = vsel %vm586, %v563, %v571
      %v592 = vsel %vm586, %v565, %v573
      %v593 = vsel %vm586, %v567, %v575
      %v594 = vsel %vm586, %v569, %v577
      %v595 = vsel %vm586, %v555, %v563
      %v596 = vsel %vm586, %v557, %v565
      %v597 = vsel %vm586, %v559, %v567
      %v598 = vsel %vm586, %v561, %v569
      %v599 = vsel %vm586, %v579, %v555
      %v600 = vsel %vm586, %v581, %v557
      %v601 = vsel %vm586, %v583, %v559
      %v602 = vsel %vm586, %v585, %v561
      %v603 = vld [vmem:[%s2 + $0x100] sm:$0xff]
      %v604 = vld [vmem:[%s2 + $0x108] sm:$0xff]
      %v605 = vld [vmem:[%s2 + $0x110] sm:$0xff]
      %v606 = vld [vmem:[%s2 + $0x118] sm:$0xff]
      %v607 = vld [vmem:[%s2 + $0x120] sm:$0xff]
      %v608 = vld [vmem:[%s2 + $0x128] sm:$0xff]
      %v609 = vld [vmem:[%s2 + $0x130] sm:$0xff]
      %v610 = vld [vmem:[%s2 + $0x138] sm:$0xff]
      %v611 = vld [vmem:[%s2 + $0x140] sm:$0xff]
      %v612 = vld [vmem:[%s2 + $0x148] sm:$0xff]
      %v613 = vld [vmem:[%s2 + $0x150] sm:$0xff]
      %v614 = vld [vmem:[%s2 + $0x158] sm:$0xff]
      %v615 = vld [vmem:[%s2 + $0x160] sm:$0xff]
      %v616 = vld [vmem:[%s2 + $0x168] sm:$0xff]
      %v617 = vld [vmem:[%s2 + $0x170] sm:$0xff]
      %v618 = vld [vmem:[%s2 + $0x178] sm:$0xff]
      %v619 = vmul.f32 %v599, %v603
      %v620 = vmul.f32 %v595, %v604
      %v621 = vmul.f32 %v591, %v605
      %v622 = vmul.f32 %v587, %v606
      %v623 = vmul.f32 %v600, %v607
      %v624 = vmul.f32 %v596, %v608
      %v625 = vmul.f32 %v592, %v609
      %v626 = vmul.f32 %v588, %v610
      %v627 = vmul.f32 %v601, %v611
      %v628 = vmul.f32 %v597, %v612
      %v629 = vmul.f32 %v593, %v613
      %v630 = vmul.f32 %v589, %v614
      %v631 = vmul.f32 %v602, %v615
      %v632 = vmul.f32 %v598, %v616
      %v633 = vmul.f32 %v594, %v617
      %v634 = vmul.f32 %v590, %v618
      %635 = vst [vmem:[#allocation4 + $0x100] sm:$0xff] %v619
      %636 = vst [vmem:[#allocation4 + $0x108] sm:$0xff] %v620
      %637 = vst [vmem:[#allocation4 + $0x110] sm:$0xff] %v621
      %638 = vst [vmem:[#allocation4 + $0x118] sm:$0xff] %v622
      %639 = vst [vmem:[#allocation4 + $0x120] sm:$0xff] %v623
      %640 = vst [vmem:[#allocation4 + $0x128] sm:$0xff] %v624
      %641 = vst [vmem:[#allocation4 + $0x130] sm:$0xff] %v625
      %642 = vst [vmem:[#allocation4 + $0x138] sm:$0xff] %v626
      %643 = vst [vmem:[#allocation4 + $0x140] sm:$0xff] %v627
      %644 = vst [vmem:[#allocation4 + $0x148] sm:$0xff] %v628
      %645 = vst [vmem:[#allocation4 + $0x150] sm:$0xff] %v629
      %646 = vst [vmem:[#allocation4 + $0x158] sm:$0xff] %v630
      %647 = vst [vmem:[#allocation4 + $0x160] sm:$0xff] %v631
      %648 = vst [vmem:[#allocation4 + $0x168] sm:$0xff] %v632
      %649 = vst [vmem:[#allocation4 + $0x170] sm:$0xff] %v633
      %650 = vst [vmem:[#allocation4 + $0x178] sm:$0xff] %v634
      %651 = vrot.lane.b32.xlu0 %v342, 1
      %v652 = vpop.permute.xlu0 %651
      %653 = vrot.lane.b32.xlu0 %v346, 1
      %v654 = vpop.permute.xlu0 %653
      %655 = vrot.lane.b32.xlu0 %v350, 1
      %v656 = vpop.permute.xlu0 %655
      %657 = vrot.lane.b32.xlu0 %v354, 1
      %v658 = vpop.permute.xlu0 %657
      %659 = vrot.lane.b32.xlu0 %v343, 1
      %v660 = vpop.permute.xlu0 %659
      %661 = vrot.lane.b32.xlu0 %v347, 1
      %v662 = vpop.permute.xlu0 %661
      %663 = vrot.lane.b32.xlu0 %v351, 1
      %v664 = vpop.permute.xlu0 %663
      %665 = vrot.lane.b32.xlu0 %v355, 1
      %v666 = vpop.permute.xlu0 %665
      %667 = vrot.lane.b32.xlu0 %v344, 1
      %v668 = vpop.permute.xlu0 %667
      %669 = vrot.lane.b32.xlu0 %v348, 1
      %v670 = vpop.permute.xlu0 %669
      %671 = vrot.lane.b32.xlu0 %v352, 1
      %v672 = vpop.permute.xlu0 %671
      %673 = vrot.lane.b32.xlu0 %v356, 1
      %v674 = vpop.permute.xlu0 %673
      %675 = vrot.lane.b32.xlu0 %v345, 1
      %v676 = vpop.permute.xlu0 %675
      %677 = vrot.lane.b32.xlu0 %v349, 1
      %v678 = vpop.permute.xlu0 %677
      %679 = vrot.lane.b32.xlu0 %v353, 1
      %v680 = vpop.permute.xlu0 %679
      %681 = vrot.lane.b32.xlu0 %v357, 1
      %v682 = vpop.permute.xlu0 %681
      %vm683 = vcmp.lt.s32.totalorder %v391, 1
      %v684 = vsel %vm683, %v668, %v676
      %v685 = vsel %vm683, %v670, %v678
      %v686 = vsel %vm683, %v672, %v680
      %v687 = vsel %vm683, %v674, %v682
      %v688 = vsel %vm683, %v660, %v668
      %v689 = vsel %vm683, %v662, %v670
      %v690 = vsel %vm683, %v664, %v672
      %v691 = vsel %vm683, %v666, %v674
      %v692 = vsel %vm683, %v652, %v660
      %v693 = vsel %vm683, %v654, %v662
      %v694 = vsel %vm683, %v656, %v664
      %v695 = vsel %vm683, %v658, %v666
      %v696 = vsel %vm683, %v676, %v652
      %v697 = vsel %vm683, %v678, %v654
      %v698 = vsel %vm683, %v680, %v656
      %v699 = vsel %vm683, %v682, %v658
      %v700 = vld [vmem:[%s2 + $0x180] sm:$0xff]
      %v701 = vld [vmem:[%s2 + $0x188] sm:$0xff]
      %v702 = vld [vmem:[%s2 + $0x190] sm:$0xff]
      %v703 = vld [vmem:[%s2 + $0x198] sm:$0xff]
      %v704 = vld [vmem:[%s2 + $0x1a0] sm:$0xff]
      %v705 = vld [vmem:[%s2 + $0x1a8] sm:$0xff]
      %v706 = vld [vmem:[%s2 + $0x1b0] sm:$0xff]
      %v707 = vld [vmem:[%s2 + $0x1b8] sm:$0xff]
      %v708 = vld [vmem:[%s2 + $0x1c0] sm:$0xff]
      %v709 = vld [vmem:[%s2 + $0x1c8] sm:$0xff]
      %v710 = vld [vmem:[%s2 + $0x1d0] sm:$0xff]
      %v711 = vld [vmem:[%s2 + $0x1d8] sm:$0xff]
      %v712 = vld [vmem:[%s2 + $0x1e0] sm:$0xff]
      %v713 = vld [vmem:[%s2 + $0x1e8] sm:$0xff]
      %v714 = vld [vmem:[%s2 + $0x1f0] sm:$0xff]
      %v715 = vld [vmem:[%s2 + $0x1f8] sm:$0xff]
      %v716 = vmul.f32 %v696, %v700
      %v717 = vmul.f32 %v692, %v701
      %v718 = vmul.f32 %v688, %v702
      %v719 = vmul.f32 %v684, %v703
      %v720 = vmul.f32 %v697, %v704
      %v721 = vmul.f32 %v693, %v705
      %v722 = vmul.f32 %v689, %v706
      %v723 = vmul.f32 %v685, %v707
      %v724 = vmul.f32 %v698, %v708
      %v725 = vmul.f32 %v694, %v709
      %v726 = vmul.f32 %v690, %v710
      %v727 = vmul.f32 %v686, %v711
      %v728 = vmul.f32 %v699, %v712
      %v729 = vmul.f32 %v695, %v713
      %v730 = vmul.f32 %v691, %v714
      %v731 = vmul.f32 %v687, %v715
      %732 = vst [vmem:[#allocation4 + $0x180] sm:$0xff] %v716
      %733 = vst [vmem:[#allocation4 + $0x188] sm:$0xff] %v717
      %734 = vst [vmem:[#allocation4 + $0x190] sm:$0xff] %v718
      %735 = vst [vmem:[#allocation4 + $0x198] sm:$0xff] %v719
      %736 = vst [vmem:[#allocation4 + $0x1a0] sm:$0xff] %v720
      %737 = vst [vmem:[#allocation4 + $0x1a8] sm:$0xff] %v721
      %738 = vst [vmem:[#allocation4 + $0x1b0] sm:$0xff] %v722
      %739 = vst [vmem:[#allocation4 + $0x1b8] sm:$0xff] %v723
      %740 = vst [vmem:[#allocation4 + $0x1c0] sm:$0xff] %v724
      %741 = vst [vmem:[#allocation4 + $0x1c8] sm:$0xff] %v725
      %742 = vst [vmem:[#allocation4 + $0x1d0] sm:$0xff] %v726
      %743 = vst [vmem:[#allocation4 + $0x1d8] sm:$0xff] %v727
      %744 = vst [vmem:[#allocation4 + $0x1e0] sm:$0xff] %v728
      %745 = vst [vmem:[#allocation4 + $0x1e8] sm:$0xff] %v729
      %746 = vst [vmem:[#allocation4 + $0x1f0] sm:$0xff] %v730
      %747 = vst [vmem:[#allocation4 + $0x1f8] sm:$0xff] %v731
      %748 = vst [vmem:[#allocation4 + $0x200] sm:$0xff] %v342
      %749 = vst [vmem:[#allocation4 + $0x208] sm:$0xff] %v343
      %750 = vst [vmem:[#allocation4 + $0x210] sm:$0xff] %v344
      %751 = vst [vmem:[#allocation4 + $0x218] sm:$0xff] %v345
      %752 = vst [vmem:[#allocation4 + $0x220] sm:$0xff] %v346
      %753 = vst [vmem:[#allocation4 + $0x228] sm:$0xff] %v347
      %754 = vst [vmem:[#allocation4 + $0x230] sm:$0xff] %v348
      %755 = vst [vmem:[#allocation4 + $0x238] sm:$0xff] %v349
      %756 = vst [vmem:[#allocation4 + $0x240] sm:$0xff] %v350
      %757 = vst [vmem:[#allocation4 + $0x248] sm:$0xff] %v351
      %758 = vst [vmem:[#allocation4 + $0x250] sm:$0xff] %v352
      %759 = vst [vmem:[#allocation4 + $0x258] sm:$0xff] %v353
      %760 = vst [vmem:[#allocation4 + $0x260] sm:$0xff] %v354
      %761 = vst [vmem:[#allocation4 + $0x268] sm:$0xff] %v355
      %762 = vst [vmem:[#allocation4 + $0x270] sm:$0xff] %v356
      %763 = vst [vmem:[#allocation4 + $0x278] sm:$0xff] %v357
      %764 = vrot.lane.b32.xlu0 %v342, 127
      %v765 = vpop.permute.xlu0 %764
      %766 = vrot.lane.b32.xlu0 %v346, 127
      %v767 = vpop.permute.xlu0 %766
      %768 = vrot.lane.b32.xlu0 %v350, 127
      %v769 = vpop.permute.xlu0 %768
      %770 = vrot.lane.b32.xlu0 %v354, 127
      %v771 = vpop.permute.xlu0 %770
      %772 = vrot.lane.b32.xlu0 %v343, 127
      %v773 = vpop.permute.xlu0 %772
      %774 = vrot.lane.b32.xlu0 %v347, 127
      %v775 = vpop.permute.xlu0 %774
      %776 = vrot.lane.b32.xlu0 %v351, 127
      %v777 = vpop.permute.xlu0 %776
      %778 = vrot.lane.b32.xlu0 %v355, 127
      %v779 = vpop.permute.xlu0 %778
      %780 = vrot.lane.b32.xlu0 %v344, 127
      %v781 = vpop.permute.xlu0 %780
      %782 = vrot.lane.b32.xlu0 %v348, 127
      %v783 = vpop.permute.xlu0 %782
      %784 = vrot.lane.b32.xlu0 %v352, 127
      %v785 = vpop.permute.xlu0 %784
      %786 = vrot.lane.b32.xlu0 %v356, 127
      %v787 = vpop.permute.xlu0 %786
      %788 = vrot.lane.b32.xlu0 %v345, 127
      %v789 = vpop.permute.xlu0 %788
      %790 = vrot.lane.b32.xlu0 %v349, 127
      %v791 = vpop.permute.xlu0 %790
      %792 = vrot.lane.b32.xlu0 %v353, 127
      %v793 = vpop.permute.xlu0 %792
      %794 = vrot.lane.b32.xlu0 %v357, 127
      %v795 = vpop.permute.xlu0 %794
      %vm796 = vcmp.lt.s32.totalorder %v391, 127
      %v797 = vsel %vm796, %v781, %v789
      %v798 = vsel %vm796, %v783, %v791
      %v799 = vsel %vm796, %v785, %v793
      %v800 = vsel %vm796, %v787, %v795
      %v801 = vsel %vm796, %v773, %v781
      %v802 = vsel %vm796, %v775, %v783
      %v803 = vsel %vm796, %v777, %v785
      %v804 = vsel %vm796, %v779, %v787
      %v805 = vsel %vm796, %v765, %v773
      %v806 = vsel %vm796, %v767, %v775
      %v807 = vsel %vm796, %v769, %v777
      %v808 = vsel %vm796, %v771, %v779
      %v809 = vsel %vm796, %v789, %v765
      %v810 = vsel %vm796, %v791, %v767
      %v811 = vsel %vm796, %v793, %v769
      %v812 = vsel %vm796, %v795, %v771
      %v813 = vld [vmem:[%s2 + $0x280] sm:$0xff]
      %v814 = vld [vmem:[%s2 + $0x288] sm:$0xff]
      %v815 = vld [vmem:[%s2 + $0x290] sm:$0xff]
      %v816 = vld [vmem:[%s2 + $0x298] sm:$0xff]
      %v817 = vld [vmem:[%s2 + $0x2a0] sm:$0xff]
      %v818 = vld [vmem:[%s2 + $0x2a8] sm:$0xff]
      %v819 = vld [vmem:[%s2 + $0x2b0] sm:$0xff]
      %v820 = vld [vmem:[%s2 + $0x2b8] sm:$0xff]
      %v821 = vld [vmem:[%s2 + $0x2c0] sm:$0xff]
      %v822 = vld [vmem:[%s2 + $0x2c8] sm:$0xff]
      %v823 = vld [vmem:[%s2 + $0x2d0] sm:$0xff]
      %v824 = vld [vmem:[%s2 + $0x2d8] sm:$0xff]
      %v825 = vld [vmem:[%s2 + $0x2e0] sm:$0xff]
      %v826 = vld [vmem:[%s2 + $0x2e8] sm:$0xff]
      %v827 = vld [vmem:[%s2 + $0x2f0] sm:$0xff]
      %v828 = vld [vmem:[%s2 + $0x2f8] sm:$0xff]
      %v829 = vmul.f32 %v805, %v813
      %v830 = vmul.f32 %v801, %v814
      %v831 = vmul.f32 %v797, %v815
      %v832 = vmul.f32 %v809, %v816
      %v833 = vmul.f32 %v806, %v817
      %v834 = vmul.f32 %v802, %v818
      %v835 = vmul.f32 %v798, %v819
      %v836 = vmul.f32 %v810, %v820
      %v837 = vmul.f32 %v807, %v821
      %v838 = vmul.f32 %v803, %v822
      %v839 = vmul.f32 %v799, %v823
      %v840 = vmul.f32 %v811, %v824
      %v841 = vmul.f32 %v808, %v825
      %v842 = vmul.f32 %v804, %v826
      %v843 = vmul.f32 %v800, %v827
      %v844 = vmul.f32 %v812, %v828
      %845 = vst [vmem:[#allocation4 + $0x280] sm:$0xff] %v829
      %846 = vst [vmem:[#allocation4 + $0x288] sm:$0xff] %v830
      %847 = vst [vmem:[#allocation4 + $0x290] sm:$0xff] %v831
      %848 = vst [vmem:[#allocation4 + $0x298] sm:$0xff] %v832
      %849 = vst [vmem:[#allocation4 + $0x2a0] sm:$0xff] %v833
      %850 = vst [vmem:[#allocation4 + $0x2a8] sm:$0xff] %v834
      %851 = vst [vmem:[#allocation4 + $0x2b0] sm:$0xff] %v835
      %852 = vst [vmem:[#allocation4 + $0x2b8] sm:$0xff] %v836
      %853 = vst [vmem:[#allocation4 + $0x2c0] sm:$0xff] %v837
      %854 = vst [vmem:[#allocation4 + $0x2c8] sm:$0xff] %v838
      %855 = vst [vmem:[#allocation4 + $0x2d0] sm:$0xff] %v839
      %856 = vst [vmem:[#allocation4 + $0x2d8] sm:$0xff] %v840
      %857 = vst [vmem:[#allocation4 + $0x2e0] sm:$0xff] %v841
      %858 = vst [vmem:[#allocation4 + $0x2e8] sm:$0xff] %v842
      %859 = vst [vmem:[#allocation4 + $0x2f0] sm:$0xff] %v843
      %860 = vst [vmem:[#allocation4 + $0x2f8] sm:$0xff] %v844
      %861 = vrot.lane.b32.xlu0 %v342, 113
      %v862 = vpop.permute.xlu0 %861
      %863 = vrot.lane.b32.xlu0 %v346, 113
      %v864 = vpop.permute.xlu0 %863
      %865 = vrot.lane.b32.xlu0 %v350, 113
      %v866 = vpop.permute.xlu0 %865
      %867 = vrot.lane.b32.xlu0 %v354, 113
      %v868 = vpop.permute.xlu0 %867
      %869 = vrot.lane.b32.xlu0 %v343, 113
      %v870 = vpop.permute.xlu0 %869
      %871 = vrot.lane.b32.xlu0 %v347, 113
      %v872 = vpop.permute.xlu0 %871
      %873 = vrot.lane.b32.xlu0 %v351, 113
      %v874 = vpop.permute.xlu0 %873
      %875 = vrot.lane.b32.xlu0 %v355, 113
      %v876 = vpop.permute.xlu0 %875
      %877 = vrot.lane.b32.xlu0 %v344, 113
      %v878 = vpop.permute.xlu0 %877
      %879 = vrot.lane.b32.xlu0 %v348, 113
      %v880 = vpop.permute.xlu0 %879
      %881 = vrot.lane.b32.xlu0 %v352, 113
      %v882 = vpop.permute.xlu0 %881
      %883 = vrot.lane.b32.xlu0 %v356, 113
      %v884 = vpop.permute.xlu0 %883
      %885 = vrot.lane.b32.xlu0 %v345, 113
      %v886 = vpop.permute.xlu0 %885
      %887 = vrot.lane.b32.xlu0 %v349, 113
      %v888 = vpop.permute.xlu0 %887
      %889 = vrot.lane.b32.xlu0 %v353, 113
      %v890 = vpop.permute.xlu0 %889
      %891 = vrot.lane.b32.xlu0 %v357, 113
      %v892 = vpop.permute.xlu0 %891
      %vm893 = vcmp.lt.s32.totalorder %v391, 113
      %v894 = vsel %vm893, %v878, %v886
      %v895 = vsel %vm893, %v880, %v888
      %v896 = vsel %vm893, %v882, %v890
      %v897 = vsel %vm893, %v884, %v892
      %v898 = vsel %vm893, %v870, %v878
      %v899 = vsel %vm893, %v872, %v880
      %v900 = vsel %vm893, %v874, %v882
      %v901 = vsel %vm893, %v876, %v884
      %v902 = vsel %vm893, %v862, %v870
      %v903 = vsel %vm893, %v864, %v872
      %v904 = vsel %vm893, %v866, %v874
      %v905 = vsel %vm893, %v868, %v876
      %v906 = vsel %vm893, %v886, %v862
      %v907 = vsel %vm893, %v888, %v864
      %v908 = vsel %vm893, %v890, %v866
      %v909 = vsel %vm893, %v892, %v868
      %v910 = vld [vmem:[%s2 + $0x300] sm:$0xff]
      %v911 = vld [vmem:[%s2 + $0x308] sm:$0xff]
      %v912 = vld [vmem:[%s2 + $0x310] sm:$0xff]
      %v913 = vld [vmem:[%s2 + $0x318] sm:$0xff]
      %v914 = vld [vmem:[%s2 + $0x320] sm:$0xff]
      %v915 = vld [vmem:[%s2 + $0x328] sm:$0xff]
      %v916 = vld [vmem:[%s2 + $0x330] sm:$0xff]
      %v917 = vld [vmem:[%s2 + $0x338] sm:$0xff]
      %v918 = vld [vmem:[%s2 + $0x340] sm:$0xff]
      %v919 = vld [vmem:[%s2 + $0x348] sm:$0xff]
      %v920 = vld [vmem:[%s2 + $0x350] sm:$0xff]
      %v921 = vld [vmem:[%s2 + $0x358] sm:$0xff]
      %v922 = vld [vmem:[%s2 + $0x360] sm:$0xff]
      %v923 = vld [vmem:[%s2 + $0x368] sm:$0xff]
      %v924 = vld [vmem:[%s2 + $0x370] sm:$0xff]
      %v925 = vld [vmem:[%s2 + $0x378] sm:$0xff]
      %v926 = vmul.f32 %v902, %v910
      %v927 = vmul.f32 %v898, %v911
      %v928 = vmul.f32 %v894, %v912
      %v929 = vmul.f32 %v906, %v913
      %v930 = vmul.f32 %v903, %v914
      %v931 = vmul.f32 %v899, %v915
      %v932 = vmul.f32 %v895, %v916
      %v933 = vmul.f32 %v907, %v917
      %v934 = vmul.f32 %v904, %v918
      %v935 = vmul.f32 %v900, %v919
      %v936 = vmul.f32 %v896, %v920
      %v937 = vmul.f32 %v908, %v921
      %v938 = vmul.f32 %v905, %v922
      %v939 = vmul.f32 %v901, %v923
      %v940 = vmul.f32 %v897, %v924
      %v941 = vmul.f32 %v909, %v925
      %942 = vst [vmem:[#allocation4 + $0x300] sm:$0xff] %v926
      %943 = vst [vmem:[#allocation4 + $0x308] sm:$0xff] %v927
      %944 = vst [vmem:[#allocation4 + $0x310] sm:$0xff] %v928
      %945 = vst [vmem:[#allocation4 + $0x318] sm:$0xff] %v929
      %946 = vst [vmem:[#allocation4 + $0x320] sm:$0xff] %v930
      %947 = vst [vmem:[#allocation4 + $0x328] sm:$0xff] %v931
      %948 = vst [vmem:[#allocation4 + $0x330] sm:$0xff] %v932
      %949 = vst [vmem:[#allocation4 + $0x338] sm:$0xff] %v933
      %950 = vst [vmem:[#allocation4 + $0x340] sm:$0xff] %v934
      %951 = vst [vmem:[#allocation4 + $0x348] sm:$0xff] %v935
      %952 = vst [vmem:[#allocation4 + $0x350] sm:$0xff] %v936
      %953 = vst [vmem:[#allocation4 + $0x358] sm:$0xff] %v937
      %954 = vst [vmem:[#allocation4 + $0x360] sm:$0xff] %v938
      %955 = vst [vmem:[#allocation4 + $0x368] sm:$0xff] %v939
      %956 = vst [vmem:[#allocation4 + $0x370] sm:$0xff] %v940
      %957 = vst [vmem:[#allocation4 + $0x378] sm:$0xff] %v941
      %958 = vrot.lane.b32.xlu0 %v342, 112
      %v959 = vpop.permute.xlu0 %958
      %960 = vrot.lane.b32.xlu0 %v346, 112
      %v961 = vpop.permute.xlu0 %960
      %962 = vrot.lane.b32.xlu0 %v350, 112
      %v963 = vpop.permute.xlu0 %962
      %964 = vrot.lane.b32.xlu0 %v354, 112
      %v965 = vpop.permute.xlu0 %964
      %966 = vrot.lane.b32.xlu0 %v343, 112
      %v967 = vpop.permute.xlu0 %966
      %968 = vrot.lane.b32.xlu0 %v347, 112
      %v969 = vpop.permute.xlu0 %968
      %970 = vrot.lane.b32.xlu0 %v351, 112
      %v971 = vpop.permute.xlu0 %970
      %972 = vrot.lane.b32.xlu0 %v355, 112
      %v973 = vpop.permute.xlu0 %972
      %974 = vrot.lane.b32.xlu0 %v344, 112
      %v975 = vpop.permute.xlu0 %974
      %976 = vrot.lane.b32.xlu0 %v348, 112
      %v977 = vpop.permute.xlu0 %976
      %978 = vrot.lane.b32.xlu0 %v352, 112
      %v979 = vpop.permute.xlu0 %978
      %980 = vrot.lane.b32.xlu0 %v356, 112
      %v981 = vpop.permute.xlu0 %980
      %982 = vrot.lane.b32.xlu0 %v345, 112
      %v983 = vpop.permute.xlu0 %982
      %984 = vrot.lane.b32.xlu0 %v349, 112
      %v985 = vpop.permute.xlu0 %984
      %986 = vrot.lane.b32.xlu0 %v353, 112
      %v987 = vpop.permute.xlu0 %986
      %988 = vrot.lane.b32.xlu0 %v357, 112
      %v989 = vpop.permute.xlu0 %988
      %vm990 = vcmp.lt.s32.totalorder %v391, 112
      %v991 = vsel %vm990, %v975, %v983
      %v992 = vsel %vm990, %v977, %v985
      %v993 = vsel %vm990, %v979, %v987
      %v994 = vsel %vm990, %v981, %v989
      %v995 = vsel %vm990, %v967, %v975
      %v996 = vsel %vm990, %v969, %v977
      %v997 = vsel %vm990, %v971, %v979
      %v998 = vsel %vm990, %v973, %v981
      %v999 = vsel %vm990, %v959, %v967
      %v1000 = vsel %vm990, %v961, %v969
      %v1001 = vsel %vm990, %v963, %v971
      %v1002 = vsel %vm990, %v965, %v973
      %v1003 = vsel %vm990, %v983, %v959
      %v1004 = vsel %vm990, %v985, %v961
      %v1005 = vsel %vm990, %v987, %v963
      %v1006 = vsel %vm990, %v989, %v965
      %v1007 = vld [vmem:[%s2 + $0x380] sm:$0xff]
      %v1008 = vld [vmem:[%s2 + $0x388] sm:$0xff]
      %v1009 = vld [vmem:[%s2 + $0x390] sm:$0xff]
      %v1010 = vld [vmem:[%s2 + $0x398] sm:$0xff]
      %v1011 = vld [vmem:[%s2 + $0x3a0] sm:$0xff]
      %v1012 = vld [vmem:[%s2 + $0x3a8] sm:$0xff]
      %v1013 = vld [vmem:[%s2 + $0x3b0] sm:$0xff]
      %v1014 = vld [vmem:[%s2 + $0x3b8] sm:$0xff]
      %v1015 = vld [vmem:[%s2 + $0x3c0] sm:$0xff]
      %v1016 = vld [vmem:[%s2 + $0x3c8] sm:$0xff]
      %v1017 = vld [vmem:[%s2 + $0x3d0] sm:$0xff]
      %v1018 = vld [vmem:[%s2 + $0x3d8] sm:$0xff]
      %v1019 = vld [vmem:[%s2 + $0x3e0] sm:$0xff]
      %v1020 = vld [vmem:[%s2 + $0x3e8] sm:$0xff]
      %v1021 = vld [vmem:[%s2 + $0x3f0] sm:$0xff]
      %v1022 = vld [vmem:[%s2 + $0x3f8] sm:$0xff]
      %v1023 = vmul.f32 %v999, %v1007
      %v1024 = vmul.f32 %v995, %v1008
      %v1025 = vmul.f32 %v991, %v1009
      %v1026 = vmul.f32 %v1003, %v1010
      %v1027 = vmul.f32 %v1000, %v1011
      %v1028 = vmul.f32 %v996, %v1012
      %v1029 = vmul.f32 %v992, %v1013
      %v1030 = vmul.f32 %v1004, %v1014
      %v1031 = vmul.f32 %v1001, %v1015
      %v1032 = vmul.f32 %v997, %v1016
      %v1033 = vmul.f32 %v993, %v1017
      %v1034 = vmul.f32 %v1005, %v1018
      %v1035 = vmul.f32 %v1002, %v1019
      %v1036 = vmul.f32 %v998, %v1020
      %v1037 = vmul.f32 %v994, %v1021
      %v1038 = vmul.f32 %v1006, %v1022
      %1039 = vst [vmem:[#allocation4 + $0x380] sm:$0xff] %v1023
      %1040 = vst [vmem:[#allocation4 + $0x388] sm:$0xff] %v1024
      %1041 = vst [vmem:[#allocation4 + $0x390] sm:$0xff] %v1025
      %1042 = vst [vmem:[#allocation4 + $0x398] sm:$0xff] %v1026
      %1043 = vst [vmem:[#allocation4 + $0x3a0] sm:$0xff] %v1027
      %1044 = vst [vmem:[#allocation4 + $0x3a8] sm:$0xff] %v1028
      %1045 = vst [vmem:[#allocation4 + $0x3b0] sm:$0xff] %v1029
      %1046 = vst [vmem:[#allocation4 + $0x3b8] sm:$0xff] %v1030
      %1047 = vst [vmem:[#allocation4 + $0x3c0] sm:$0xff] %v1031
      %1048 = vst [vmem:[#allocation4 + $0x3c8] sm:$0xff] %v1032
      %1049 = vst [vmem:[#allocation4 + $0x3d0] sm:$0xff] %v1033
      %1050 = vst [vmem:[#allocation4 + $0x3d8] sm:$0xff] %v1034
      %1051 = vst [vmem:[#allocation4 + $0x3e0] sm:$0xff] %v1035
      %1052 = vst [vmem:[#allocation4 + $0x3e8] sm:$0xff] %v1036
      %1053 = vst [vmem:[#allocation4 + $0x3f0] sm:$0xff] %v1037
      %1054 = vst [vmem:[#allocation4 + $0x3f8] sm:$0xff] %v1038
      %1055 = vrot.lane.b32.xlu0 %v342, 111
      %v1056 = vpop.permute.xlu0 %1055
      %1057 = vrot.lane.b32.xlu0 %v346, 111
      %v1058 = vpop.permute.xlu0 %1057
      %1059 = vrot.lane.b32.xlu0 %v350, 111
      %v1060 = vpop.permute.xlu0 %1059
      %1061 = vrot.lane.b32.xlu0 %v354, 111
      %v1062 = vpop.permute.xlu0 %1061
      %1063 = vrot.lane.b32.xlu0 %v343, 111
      %v1064 = vpop.permute.xlu0 %1063
      %1065 = vrot.lane.b32.xlu0 %v347, 111
      %v1066 = vpop.permute.xlu0 %1065
      %1067 = vrot.lane.b32.xlu0 %v351, 111
      %v1068 = vpop.permute.xlu0 %1067
      %1069 = vrot.lane.b32.xlu0 %v355, 111
      %v1070 = vpop.permute.xlu0 %1069
      %1071 = vrot.lane.b32.xlu0 %v344, 111
      %v1072 = vpop.permute.xlu0 %1071
      %1073 = vrot.lane.b32.xlu0 %v348, 111
      %v1074 = vpop.permute.xlu0 %1073
      %1075 = vrot.lane.b32.xlu0 %v352, 111
      %v1076 = vpop.permute.xlu0 %1075
      %1077 = vrot.lane.b32.xlu0 %v356, 111
      %v1078 = vpop.permute.xlu0 %1077
      %1079 = vrot.lane.b32.xlu0 %v345, 111
      %v1080 = vpop.permute.xlu0 %1079
      %1081 = vrot.lane.b32.xlu0 %v349, 111
      %v1082 = vpop.permute.xlu0 %1081
      %1083 = vrot.lane.b32.xlu0 %v353, 111
      %v1084 = vpop.permute.xlu0 %1083
      %1085 = vrot.lane.b32.xlu0 %v357, 111
      %v1086 = vpop.permute.xlu0 %1085
      %vm1087 = vcmp.lt.s32.totalorder %v391, 111
      %v1088 = vsel %vm1087, %v1072, %v1080
      %v1089 = vsel %vm1087, %v1074, %v1082
      %v1090 = vsel %vm1087, %v1076, %v1084
      %v1091 = vsel %vm1087, %v1078, %v1086
      %v1092 = vsel %vm1087, %v1064, %v1072
      %v1093 = vsel %vm1087, %v1066, %v1074
      %v1094 = vsel %vm1087, %v1068, %v1076
      %v1095 = vsel %vm1087, %v1070, %v1078
      %v1096 = vsel %vm1087, %v1056, %v1064
      %v1097 = vsel %vm1087, %v1058, %v1066
      %v1098 = vsel %vm1087, %v1060, %v1068
      %v1099 = vsel %vm1087, %v1062, %v1070
      %v1100 = vsel %vm1087, %v1080, %v1056
      %v1101 = vsel %vm1087, %v1082, %v1058
      %v1102 = vsel %vm1087, %v1084, %v1060
      %v1103 = vsel %vm1087, %v1086, %v1062
      %v1104 = vld [vmem:[%s2 + $0x400] sm:$0xff]
      %v1105 = vld [vmem:[%s2 + $0x408] sm:$0xff]
      %v1106 = vld [vmem:[%s2 + $0x410] sm:$0xff]
      %v1107 = vld [vmem:[%s2 + $0x418] sm:$0xff]
      %v1108 = vld [vmem:[%s2 + $0x420] sm:$0xff]
      %v1109 = vld [vmem:[%s2 + $0x428] sm:$0xff]
      %v1110 = vld [vmem:[%s2 + $0x430] sm:$0xff]
      %v1111 = vld [vmem:[%s2 + $0x438] sm:$0xff]
      %v1112 = vld [vmem:[%s2 + $0x440] sm:$0xff]
      %v1113 = vld [vmem:[%s2 + $0x448] sm:$0xff]
      %v1114 = vld [vmem:[%s2 + $0x450] sm:$0xff]
      %v1115 = vld [vmem:[%s2 + $0x458] sm:$0xff]
      %v1116 = vld [vmem:[%s2 + $0x460] sm:$0xff]
      %v1117 = vld [vmem:[%s2 + $0x468] sm:$0xff]
      %v1118 = vld [vmem:[%s2 + $0x470] sm:$0xff]
      %v1119 = vld [vmem:[%s2 + $0x478] sm:$0xff]
      %v1120 = vmul.f32 %v1096, %v1104
      %v1121 = vmul.f32 %v1092, %v1105
      %v1122 = vmul.f32 %v1088, %v1106
      %v1123 = vmul.f32 %v1100, %v1107
      %v1124 = vmul.f32 %v1097, %v1108
      %v1125 = vmul.f32 %v1093, %v1109
      %v1126 = vmul.f32 %v1089, %v1110
      %v1127 = vmul.f32 %v1101, %v1111
      %v1128 = vmul.f32 %v1098, %v1112
      %v1129 = vmul.f32 %v1094, %v1113
      %v1130 = vmul.f32 %v1090, %v1114
      %v1131 = vmul.f32 %v1102, %v1115
      %v1132 = vmul.f32 %v1099, %v1116
      %v1133 = vmul.f32 %v1095, %v1117
      %v1134 = vmul.f32 %v1091, %v1118
      %v1135 = vmul.f32 %v1103, %v1119
      %1136 = vst [vmem:[#allocation4 + $0x400] sm:$0xff] %v1120
      %1137 = vst [vmem:[#allocation4 + $0x408] sm:$0xff] %v1121
      %1138 = vst [vmem:[#allocation4 + $0x410] sm:$0xff] %v1122
      %1139 = vst [vmem:[#allocation4 + $0x418] sm:$0xff] %v1123
      %1140 = vst [vmem:[#allocation4 + $0x420] sm:$0xff] %v1124
      %1141 = vst [vmem:[#allocation4 + $0x428] sm:$0xff] %v1125
      %1142 = vst [vmem:[#allocation4 + $0x430] sm:$0xff] %v1126
      %1143 = vst [vmem:[#allocation4 + $0x438] sm:$0xff] %v1127
      %1144 = vst [vmem:[#allocation4 + $0x440] sm:$0xff] %v1128
      %1145 = vst [vmem:[#allocation4 + $0x448] sm:$0xff] %v1129
      %1146 = vst [vmem:[#allocation4 + $0x450] sm:$0xff] %v1130
      %1147 = vst [vmem:[#allocation4 + $0x458] sm:$0xff] %v1131
      %1148 = vst [vmem:[#allocation4 + $0x460] sm:$0xff] %v1132
      %1149 = vst [vmem:[#allocation4 + $0x468] sm:$0xff] %v1133
      %1150 = vst [vmem:[#allocation4 + $0x470] sm:$0xff] %v1134
      %1151 = vst [vmem:[#allocation4 + $0x478] sm:$0xff] %v1135
      %v1152 = vld [vmem:[%s268] sm:$0xff]
      %v1153 = vld [vmem:[%s268 + $0x8] sm:$0xff]
      %v1154 = vld [vmem:[%s268 + $0x10] sm:$0xff]
      %v1155 = vld [vmem:[%s268 + $0x18] sm:$0xff]
      %v1156 = vld [vmem:[%s268 + $0x20] sm:$0xff]
      %v1157 = vld [vmem:[%s268 + $0x28] sm:$0xff]
      %v1158 = vld [vmem:[%s268 + $0x30] sm:$0xff]
      %v1159 = vld [vmem:[%s268 + $0x38] sm:$0xff]
      %v1160 = vld [vmem:[%s268 + $0x40] sm:$0xff]
      %v1161 = vld [vmem:[%s268 + $0x48] sm:$0xff]
      %v1162 = vld [vmem:[%s268 + $0x50] sm:$0xff]
      %v1163 = vld [vmem:[%s268 + $0x58] sm:$0xff]
      %v1164 = vld [vmem:[%s268 + $0x60] sm:$0xff]
      %v1165 = vld [vmem:[%s268 + $0x68] sm:$0xff]
      %v1166 = vld [vmem:[%s268 + $0x70] sm:$0xff]
      %v1167 = vld [vmem:[%s268 + $0x78] sm:$0xff]
      %v1168 = vld [vmem:[%s268 + $0x80] sm:$0xff]
      %v1169 = vld [vmem:[%s268 + $0x88] sm:$0xff]
      %v1170 = vld [vmem:[%s268 + $0x90] sm:$0xff]
      %v1171 = vld [vmem:[%s268 + $0x98] sm:$0xff]
      %v1172 = vld [vmem:[%s268 + $0xa0] sm:$0xff]
      %v1173 = vld [vmem:[%s268 + $0xa8] sm:$0xff]
      %v1174 = vld [vmem:[%s268 + $0xb0] sm:$0xff]
      %v1175 = vld [vmem:[%s268 + $0xb8] sm:$0xff]
      %v1176 = vld [vmem:[%s268 + $0xc0] sm:$0xff]
      %v1177 = vld [vmem:[%s268 + $0xc8] sm:$0xff]
      %v1178 = vld [vmem:[%s268 + $0xd0] sm:$0xff]
      %v1179 = vld [vmem:[%s268 + $0xd8] sm:$0xff]
      %v1180 = vld [vmem:[%s268 + $0xe0] sm:$0xff]
      %v1181 = vld [vmem:[%s268 + $0xe8] sm:$0xff]
      %v1182 = vld [vmem:[%s268 + $0xf0] sm:$0xff]
      %v1183 = vld [vmem:[%s268 + $0xf8] sm:$0xff]
      %v1184 = vld [vmem:[%s268 + $0x100] sm:$0xff]
      %v1185 = vld [vmem:[%s268 + $0x108] sm:$0xff]
      %v1186 = vld [vmem:[%s268 + $0x110] sm:$0xff]
      %v1187 = vld [vmem:[%s268 + $0x118] sm:$0xff]
      %v1188 = vld [vmem:[%s268 + $0x120] sm:$0xff]
      %v1189 = vld [vmem:[%s268 + $0x128] sm:$0xff]
      %v1190 = vld [vmem:[%s268 + $0x130] sm:$0xff]
      %v1191 = vld [vmem:[%s268 + $0x138] sm:$0xff]
      %v1192 = vld [vmem:[%s268 + $0x140] sm:$0xff]
      %v1193 = vld [vmem:[%s268 + $0x148] sm:$0xff]
      %v1194 = vld [vmem:[%s268 + $0x150] sm:$0xff]
      %v1195 = vld [vmem:[%s268 + $0x158] sm:$0xff]
      %v1196 = vld [vmem:[%s268 + $0x160] sm:$0xff]
      %v1197 = vld [vmem:[%s268 + $0x168] sm:$0xff]
      %v1198 = vld [vmem:[%s268 + $0x170] sm:$0xff]
      %v1199 = vld [vmem:[%s268 + $0x178] sm:$0xff]
      %v1200 = vld [vmem:[%s268 + $0x180] sm:$0xff]
      %v1201 = vld [vmem:[%s268 + $0x188] sm:$0xff]
      %v1202 = vld [vmem:[%s268 + $0x190] sm:$0xff]
      %v1203 = vld [vmem:[%s268 + $0x198] sm:$0xff]
      %v1204 = vld [vmem:[%s268 + $0x1a0] sm:$0xff]
      %v1205 = vld [vmem:[%s268 + $0x1a8] sm:$0xff]
      %v1206 = vld [vmem:[%s268 + $0x1b0] sm:$0xff]
      %v1207 = vld [vmem:[%s268 + $0x1b8] sm:$0xff]
      %v1208 = vld [vmem:[%s268 + $0x1c0] sm:$0xff]
      %v1209 = vld [vmem:[%s268 + $0x1c8] sm:$0xff]
      %v1210 = vld [vmem:[%s268 + $0x1d0] sm:$0xff]
      %v1211 = vld [vmem:[%s268 + $0x1d8] sm:$0xff]
      %v1212 = vld [vmem:[%s268 + $0x1e0] sm:$0xff]
      %v1213 = vld [vmem:[%s268 + $0x1e8] sm:$0xff]
      %v1214 = vld [vmem:[%s268 + $0x1f0] sm:$0xff]
      %v1215 = vld [vmem:[%s268 + $0x1f8] sm:$0xff]
      %v1216 = vld [vmem:[%s1] sm:$0xff]
      %v1217 = vld [vmem:[%s1 + $0x8] sm:$0xff]
      %v1218 = vld [vmem:[%s1 + $0x10] sm:$0xff]
      %v1219 = vld [vmem:[%s1 + $0x18] sm:$0xff]
      %v1220 = vld [vmem:[%s1 + $0x20] sm:$0xff]
      %v1221 = vld [vmem:[%s1 + $0x28] sm:$0xff]
      %v1222 = vld [vmem:[%s1 + $0x30] sm:$0xff]
      %v1223 = vld [vmem:[%s1 + $0x38] sm:$0xff]
      %v1224 = vld [vmem:[%s1 + $0x40] sm:$0xff]
      %v1225 = vld [vmem:[%s1 + $0x48] sm:$0xff]
      %v1226 = vld [vmem:[%s1 + $0x50] sm:$0xff]
      %v1227 = vld [vmem:[%s1 + $0x58] sm:$0xff]
      %v1228 = vld [vmem:[%s1 + $0x60] sm:$0xff]
      %v1229 = vld [vmem:[%s1 + $0x68] sm:$0xff]
      %v1230 = vld [vmem:[%s1 + $0x70] sm:$0xff]
      %v1231 = vld [vmem:[%s1 + $0x78] sm:$0xff]
      %v1232 = vld [vmem:[%s1 + $0x80] sm:$0xff]
      %v1233 = vld [vmem:[%s1 + $0x88] sm:$0xff]
      %v1234 = vld [vmem:[%s1 + $0x90] sm:$0xff]
      %v1235 = vld [vmem:[%s1 + $0x98] sm:$0xff]
      %v1236 = vld [vmem:[%s1 + $0xa0] sm:$0xff]
      %v1237 = vld [vmem:[%s1 + $0xa8] sm:$0xff]
      %v1238 = vld [vmem:[%s1 + $0xb0] sm:$0xff]
      %v1239 = vld [vmem:[%s1 + $0xb8] sm:$0xff]
      %v1240 = vld [vmem:[%s1 + $0xc0] sm:$0xff]
      %v1241 = vld [vmem:[%s1 + $0xc8] sm:$0xff]
      %v1242 = vld [vmem:[%s1 + $0xd0] sm:$0xff]
      %v1243 = vld [vmem:[%s1 + $0xd8] sm:$0xff]
      %v1244 = vld [vmem:[%s1 + $0xe0] sm:$0xff]
      %v1245 = vld [vmem:[%s1 + $0xe8] sm:$0xff]
      %v1246 = vld [vmem:[%s1 + $0xf0] sm:$0xff]
      %v1247 = vld [vmem:[%s1 + $0xf8] sm:$0xff]
      %v1248 = vld [vmem:[%s1 + $0x100] sm:$0xff]
      %v1249 = vld [vmem:[%s1 + $0x108] sm:$0xff]
      %v1250 = vld [vmem:[%s1 + $0x110] sm:$0xff]
      %v1251 = vld [vmem:[%s1 + $0x118] sm:$0xff]
      %v1252 = vld [vmem:[%s1 + $0x120] sm:$0xff]
      %v1253 = vld [vmem:[%s1 + $0x128] sm:$0xff]
      %v1254 = vld [vmem:[%s1 + $0x130] sm:$0xff]
      %v1255 = vld [vmem:[%s1 + $0x138] sm:$0xff]
      %v1256 = vld [vmem:[%s1 + $0x140] sm:$0xff]
      %v1257 = vld [vmem:[%s1 + $0x148] sm:$0xff]
      %v1258 = vld [vmem:[%s1 + $0x150] sm:$0xff]
      %v1259 = vld [vmem:[%s1 + $0x158] sm:$0xff]
      %v1260 = vld [vmem:[%s1 + $0x160] sm:$0xff]
      %v1261 = vld [vmem:[%s1 + $0x168] sm:$0xff]
      %v1262 = vld [vmem:[%s1 + $0x170] sm:$0xff]
      %v1263 = vld [vmem:[%s1 + $0x178] sm:$0xff]
      %v1264 = vld [vmem:[#allocation4] sm:$0xff]
      %v1265 = vld [vmem:[#allocation4 + $0x8] sm:$0xff]
      %v1266 = vld [vmem:[#allocation4 + $0x10] sm:$0xff]
      %v1267 = vld [vmem:[#allocation4 + $0x18] sm:$0xff]
      %v1268 = vld [vmem:[#allocation4 + $0x20] sm:$0xff]
      %v1269 = vld [vmem:[#allocation4 + $0x28] sm:$0xff]
      %v1270 = vld [vmem:[#allocation4 + $0x30] sm:$0xff]
      %v1271 = vld [vmem:[#allocation4 + $0x38] sm:$0xff]
      %v1272 = vld [vmem:[#allocation4 + $0x40] sm:$0xff]
      %v1273 = vld [vmem:[#allocation4 + $0x48] sm:$0xff]
      %v1274 = vld [vmem:[#allocation4 + $0x50] sm:$0xff]
      %v1275 = vld [vmem:[#allocation4 + $0x58] sm:$0xff]
      %v1276 = vld [vmem:[#allocation4 + $0x60] sm:$0xff]
      %v1277 = vld [vmem:[#allocation4 + $0x68] sm:$0xff]
      %v1278 = vld [vmem:[#allocation4 + $0x70] sm:$0xff]
      %v1279 = vld [vmem:[#allocation4 + $0x78] sm:$0xff]
      %v1280 = vld [vmem:[#allocation4 + $0x80] sm:$0xff]
      %v1281 = vld [vmem:[#allocation4 + $0x88] sm:$0xff]
      %v1282 = vld [vmem:[#allocation4 + $0x90] sm:$0xff]
      %v1283 = vld [vmem:[#allocation4 + $0x98] sm:$0xff]
      %v1284 = vld [vmem:[#allocation4 + $0xa0] sm:$0xff]
      %v1285 = vld [vmem:[#allocation4 + $0xa8] sm:$0xff]
      %v1286 = vld [vmem:[#allocation4 + $0xb0] sm:$0xff]
      %v1287 = vld [vmem:[#allocation4 + $0xb8] sm:$0xff]
      %v1288 = vld [vmem:[#allocation4 + $0xc0] sm:$0xff]
      %v1289 = vld [vmem:[#allocation4 + $0xc8] sm:$0xff]
      %v1290 = vld [vmem:[#allocation4 + $0xd0] sm:$0xff]
      %v1291 = vld [vmem:[#allocation4 + $0xd8] sm:$0xff]
      %v1292 = vld [vmem:[#allocation4 + $0xe0] sm:$0xff]
      %v1293 = vld [vmem:[#allocation4 + $0xe8] sm:$0xff]
      %v1294 = vld [vmem:[#allocation4 + $0xf0] sm:$0xff]
      %v1295 = vld [vmem:[#allocation4 + $0xf8] sm:$0xff]
      %v1296 = vld [vmem:[#allocation4 + $0x100] sm:$0xff]
      %v1297 = vld [vmem:[#allocation4 + $0x108] sm:$0xff]
      %v1298 = vld [vmem:[#allocation4 + $0x110] sm:$0xff]
      %v1299 = vld [vmem:[#allocation4 + $0x118] sm:$0xff]
      %v1300 = vld [vmem:[#allocation4 + $0x120] sm:$0xff]
      %v1301 = vld [vmem:[#allocation4 + $0x128] sm:$0xff]
      %v1302 = vld [vmem:[#allocation4 + $0x130] sm:$0xff]
      %v1303 = vld [vmem:[#allocation4 + $0x138] sm:$0xff]
      %v1304 = vld [vmem:[#allocation4 + $0x140] sm:$0xff]
      %v1305 = vld [vmem:[#allocation4 + $0x148] sm:$0xff]
      %v1306 = vld [vmem:[#allocation4 + $0x150] sm:$0xff]
      %v1307 = vld [vmem:[#allocation4 + $0x158] sm:$0xff]
      %v1308 = vld [vmem:[#allocation4 + $0x160] sm:$0xff]
      %v1309 = vld [vmem:[#allocation4 + $0x168] sm:$0xff]
      %v1310 = vld [vmem:[#allocation4 + $0x170] sm:$0xff]
      %v1311 = vld [vmem:[#allocation4 + $0x178] sm:$0xff]
      %v1312 = vld [vmem:[#allocation4 + $0x180] sm:$0xff]
      %v1313 = vld [vmem:[#allocation4 + $0x188] sm:$0xff]
      %v1314 = vld [vmem:[#allocation4 + $0x190] sm:$0xff]
      %v1315 = vld [vmem:[#allocation4 + $0x198] sm:$0xff]
      %v1316 = vld [vmem:[#allocation4 + $0x1a0] sm:$0xff]
      %v1317 = vld [vmem:[#allocation4 + $0x1a8] sm:$0xff]
      %v1318 = vld [vmem:[#allocation4 + $0x1b0] sm:$0xff]
      %v1319 = vld [vmem:[#allocation4 + $0x1b8] sm:$0xff]
      %v1320 = vld [vmem:[#allocation4 + $0x1c0] sm:$0xff]
      %v1321 = vld [vmem:[#allocation4 + $0x1c8] sm:$0xff]
      %v1322 = vld [vmem:[#allocation4 + $0x1d0] sm:$0xff]
      %v1323 = vld [vmem:[#allocation4 + $0x1d8] sm:$0xff]
      %v1324 = vld [vmem:[#allocation4 + $0x1e0] sm:$0xff]
      %v1325 = vld [vmem:[#allocation4 + $0x1e8] sm:$0xff]
      %v1326 = vld [vmem:[#allocation4 + $0x1f0] sm:$0xff]
      %v1327 = vld [vmem:[#allocation4 + $0x1f8] sm:$0xff]
      %v1328 = vld [vmem:[#allocation4 + $0x200] sm:$0xff]
      %v1329 = vld [vmem:[#allocation4 + $0x208] sm:$0xff]
      %v1330 = vld [vmem:[#allocation4 + $0x210] sm:$0xff]
      %v1331 = vld [vmem:[#allocation4 + $0x218] sm:$0xff]
      %v1332 = vld [vmem:[#allocation4 + $0x220] sm:$0xff]
      %v1333 = vld [vmem:[#allocation4 + $0x228] sm:$0xff]
      %v1334 = vld [vmem:[#allocation4 + $0x230] sm:$0xff]
      %v1335 = vld [vmem:[#allocation4 + $0x238] sm:$0xff]
      %v1336 = vld [vmem:[#allocation4 + $0x240] sm:$0xff]
      %v1337 = vld [vmem:[#allocation4 + $0x248] sm:$0xff]
      %v1338 = vld [vmem:[#allocation4 + $0x250] sm:$0xff]
      %v1339 = vld [vmem:[#allocation4 + $0x258] sm:$0xff]
      %v1340 = vld [vmem:[#allocation4 + $0x260] sm:$0xff]
      %v1341 = vld [vmem:[#allocation4 + $0x268] sm:$0xff]
      %v1342 = vld [vmem:[#allocation4 + $0x270] sm:$0xff]
      %v1343 = vld [vmem:[#allocation4 + $0x278] sm:$0xff]
      %v1344 = vld [vmem:[#allocation4 + $0x280] sm:$0xff]
      %v1345 = vld [vmem:[#allocation4 + $0x288] sm:$0xff]
      %v1346 = vld [vmem:[#allocation4 + $0x290] sm:$0xff]
      %v1347 = vld [vmem:[#allocation4 + $0x298] sm:$0xff]
      %v1348 = vld [vmem:[#allocation4 + $0x2a0] sm:$0xff]
      %v1349 = vld [vmem:[#allocation4 + $0x2a8] sm:$0xff]
      %v1350 = vld [vmem:[#allocation4 + $0x2b0] sm:$0xff]
      %v1351 = vld [vmem:[#allocation4 + $0x2b8] sm:$0xff]
      %v1352 = vld [vmem:[#allocation4 + $0x2c0] sm:$0xff]
      %v1353 = vld [vmem:[#allocation4 + $0x2c8] sm:$0xff]
      %v1354 = vld [vmem:[#allocation4 + $0x2d0] sm:$0xff]
      %v1355 = vld [vmem:[#allocation4 + $0x2d8] sm:$0xff]
      %v1356 = vld [vmem:[#allocation4 + $0x2e0] sm:$0xff]
      %v1357 = vld [vmem:[#allocation4 + $0x2e8] sm:$0xff]
      %v1358 = vld [vmem:[#allocation4 + $0x2f0] sm:$0xff]
      %v1359 = vld [vmem:[#allocation4 + $0x2f8] sm:$0xff]
      %v1360 = vld [vmem:[#allocation4 + $0x300] sm:$0xff]
      %v1361 = vld [vmem:[#allocation4 + $0x308] sm:$0xff]
      %v1362 = vld [vmem:[#allocation4 + $0x310] sm:$0xff]
      %v1363 = vld [vmem:[#allocation4 + $0x318] sm:$0xff]
      %v1364 = vld [vmem:[#allocation4 + $0x320] sm:$0xff]
      %v1365 = vld [vmem:[#allocation4 + $0x328] sm:$0xff]
      %v1366 = vld [vmem:[#allocation4 + $0x330] sm:$0xff]
      %v1367 = vld [vmem:[#allocation4 + $0x338] sm:$0xff]
      %v1368 = vld [vmem:[#allocation4 + $0x340] sm:$0xff]
      %v1369 = vld [vmem:[#allocation4 + $0x348] sm:$0xff]
      %v1370 = vld [vmem:[#allocation4 + $0x350] sm:$0xff]
      %v1371 = vld [vmem:[#allocation4 + $0x358] sm:$0xff]
      %v1372 = vld [vmem:[#allocation4 + $0x360] sm:$0xff]
      %v1373 = vld [vmem:[#allocation4 + $0x368] sm:$0xff]
      %v1374 = vld [vmem:[#allocation4 + $0x370] sm:$0xff]
      %v1375 = vld [vmem:[#allocation4 + $0x378] sm:$0xff]
      %v1376 = vld [vmem:[#allocation4 + $0x380] sm:$0xff]
      %v1377 = vld [vmem:[#allocation4 + $0x388] sm:$0xff]
      %v1378 = vld [vmem:[#allocation4 + $0x390] sm:$0xff]
      %v1379 = vld [vmem:[#allocation4 + $0x398] sm:$0xff]
      %v1380 = vld [vmem:[#allocation4 + $0x3a0] sm:$0xff]
      %v1381 = vld [vmem:[#allocation4 + $0x3a8] sm:$0xff]
      %v1382 = vld [vmem:[#allocation4 + $0x3b0] sm:$0xff]
      %v1383 = vld [vmem:[#allocation4 + $0x3b8] sm:$0xff]
      %v1384 = vld [vmem:[#allocation4 + $0x3c0] sm:$0xff]
      %v1385 = vld [vmem:[#allocation4 + $0x3c8] sm:$0xff]
      %v1386 = vld [vmem:[#allocation4 + $0x3d0] sm:$0xff]
      %v1387 = vld [vmem:[#allocation4 + $0x3d8] sm:$0xff]
      %v1388 = vld [vmem:[#allocation4 + $0x3e0] sm:$0xff]
      %v1389 = vld [vmem:[#allocation4 + $0x3e8] sm:$0xff]
      %v1390 = vld [vmem:[#allocation4 + $0x3f0] sm:$0xff]
      %v1391 = vld [vmem:[#allocation4 + $0x3f8] sm:$0xff]
      %v1392 = vld [vmem:[#allocation4 + $0x400] sm:$0xff]
      %v1393 = vld [vmem:[#allocation4 + $0x408] sm:$0xff]
      %v1394 = vld [vmem:[#allocation4 + $0x410] sm:$0xff]
      %v1395 = vld [vmem:[#allocation4 + $0x418] sm:$0xff]
      %v1396 = vld [vmem:[#allocation4 + $0x420] sm:$0xff]
      %v1397 = vld [vmem:[#allocation4 + $0x428] sm:$0xff]
      %v1398 = vld [vmem:[#allocation4 + $0x430] sm:$0xff]
      %v1399 = vld [vmem:[#allocation4 + $0x438] sm:$0xff]
      %v1400 = vld [vmem:[#allocation4 + $0x440] sm:$0xff]
      %v1401 = vld [vmem:[#allocation4 + $0x448] sm:$0xff]
      %v1402 = vld [vmem:[#allocation4 + $0x450] sm:$0xff]
      %v1403 = vld [vmem:[#allocation4 + $0x458] sm:$0xff]
      %v1404 = vld [vmem:[#allocation4 + $0x460] sm:$0xff]
      %v1405 = vld [vmem:[#allocation4 + $0x468] sm:$0xff]
      %v1406 = vld [vmem:[#allocation4 + $0x470] sm:$0xff]
      %v1407 = vld [vmem:[#allocation4 + $0x478] sm:$0xff]
      %vm1408 = vcmask 261120
      %v1410 = vsel %vm1408, %v1218, 0
      %v1413 = vsel %vm1408, %v1221, 0
      %v1416 = vsel %vm1408, %v1224, 0
      %v1419 = vsel %vm1408, %v1227, 0
      %v1422 = vsel %vm1408, %v1230, 0
      %v1425 = vsel %vm1408, %v1233, 0
      %v1428 = vsel %vm1408, %v1236, 0
      %v1431 = vsel %vm1408, %v1239, 0
      %v1434 = vsel %vm1408, %v1242, 0
      %v1437 = vsel %vm1408, %v1245, 0
      %v1440 = vsel %vm1408, %v1248, 0
      %v1443 = vsel %vm1408, %v1251, 0
      %v1446 = vsel %vm1408, %v1254, 0
      %v1449 = vsel %vm1408, %v1257, 0
      %v1452 = vsel %vm1408, %v1260, 0
      %v1455 = vsel %vm1408, %v1263, 0
      %1457 = vmatprep.subr.mxu0 %v1325
      %1458 = vmatpush1.msra.mxu0 %v1324
      %1459 = vmatprep.subr.mxu0 %v1321
      %1460 = vmatpush1.msra.mxu0 %v1320
      %1461 = vmatprep.subr.mxu0 %v1317
      %1462 = vmatpush1.msra.mxu0 %v1316
      %1463 = vmatprep.subr.mxu0 %v1313
      %1464 = vmatpush1.msra.mxu0 %v1312
      %1465 = vmatprep.subr.mxu0 %v1309
      %1466 = vmatpush1.msra.mxu0 %v1308
      %1467 = vmatprep.subr.mxu0 %v1305
      %1468 = vmatpush1.msra.mxu0 %v1304
      %1469 = vmatprep.subr.mxu0 %v1301
      %1470 = vmatpush1.msra.mxu0 %v1300
      %1471 = vmatprep.subr.mxu0 %v1297
      %1472 = vmatpush1.msra.mxu0 %v1296
      %1473 = vmatprep.subr.mxu0 %v1293
      %1474 = vmatpush1.msra.mxu0 %v1292
      %1475 = vmatprep.subr.mxu0 %v1289
      %1476 = vmatpush1.msra.mxu0 %v1288
      %1477 = vmatprep.subr.mxu0 %v1285
      %1478 = vmatpush1.msra.mxu0 %v1284
      %1479 = vmatprep.subr.mxu0 %v1281
      %1480 = vmatpush1.msra.mxu0 %v1280
      %1481 = vmatprep.subr.mxu0 %v1277
      %1482 = vmatpush1.msra.mxu0 %v1276
      %1483 = vmatprep.subr.mxu0 %v1273
      %1484 = vmatpush1.msra.mxu0 %v1272
      %1485 = vmatprep.subr.mxu0 %v1269
      %1486 = vmatpush1.msra.mxu0 %v1268
      %1487 = vmatprep.subr.mxu0 %v1265
      %1488 = vmatpush1.msra.mxu0 %v1264
      %1489 = vmatprep.subr.mxu0 %v1389
      %1490 = vmatpush2.msra.mxu0 %v1388
      %1491 = vmatprep.subr.mxu0 %v1385
      %1492 = vmatpush2.msra.mxu0 %v1384
      %1493 = vmatprep.subr.mxu0 %v1381
      %1494 = vmatpush2.msra.mxu0 %v1380
      %1495 = vmatprep.subr.mxu0 %v1377
      %1496 = vmatpush2.msra.mxu0 %v1376
      %1497 = vmatprep.subr.mxu0 %v1373
      %1498 = vmatpush2.msra.mxu0 %v1372
      %1499 = vmatprep.subr.mxu0 %v1369
      %1500 = vmatpush2.msra.mxu0 %v1368
      %1501 = vmatprep.subr.mxu0 %v1365
      %1502 = vmatpush2.msra.mxu0 %v1364
      %1503 = vmatprep.subr.mxu0 %v1361
      %1504 = vmatpush2.msra.mxu0 %v1360
      %1505 = vmatprep.subr.mxu0 %v1357
      %1506 = vmatpush2.msra.mxu0 %v1356
      %1507 = vmatprep.subr.mxu0 %v1353
      %1508 = vmatpush2.msra.mxu0 %v1352
      %1509 = vmatprep.subr.mxu0 %v1349
      %1510 = vmatpush2.msra.mxu0 %v1348
      %1511 = vmatprep.subr.mxu0 %v1345
      %1512 = vmatpush2.msra.mxu0 %v1344
      %1513 = vmatprep.subr.mxu0 %v1341
      %1514 = vmatpush2.msra.mxu0 %v1340
      %1515 = vmatprep.subr.mxu0 %v1337
      %1516 = vmatpush2.msra.mxu0 %v1336
      %1517 = vmatprep.subr.mxu0 %v1333
      %1518 = vmatpush2.msra.mxu0 %v1332
      %1519 = vmatprep.subr.mxu0 %v1329
      %1520 = vmatpush2.msra.mxu0 %v1328
      %1521 = vmatprep.mubr.f32.mxu0 %v1217
      %1522 = vmatmul.mubr.f32.gmra.mxu0 %v1216
      %v1523 = vpop.f32.mrf.mxu0
      %v1524 = vadd.f32 0.0, %v1523
      %v1525 = vpop.f32.mrf.mxu0
      %v1526 = vadd.f32 0.0, %v1525
      %1527 = vmatprep.mubr.f32.mxu0 %v1220
      %1528 = vmatmul.mubr.f32.gmra.mxu0 %v1219
      %v1529 = vpop.f32.mrf.mxu0
      %v1530 = vadd.f32 0.0, %v1529
      %v1531 = vpop.f32.mrf.mxu0
      %v1532 = vadd.f32 0.0, %v1531
      %1533 = vmatprep.mubr.f32.mxu0 %v1223
      %1534 = vmatmul.mubr.f32.gmra.mxu0 %v1222
      %v1535 = vpop.f32.mrf.mxu0
      %v1536 = vadd.f32 0.0, %v1535
      %v1537 = vpop.f32.mrf.mxu0
      %v1538 = vadd.f32 0.0, %v1537
      %1539 = vmatprep.mubr.f32.mxu0 %v1226
      %1540 = vmatmul.mubr.f32.gmra.mxu0 %v1225
      %v1541 = vpop.f32.mrf.mxu0
      %v1542 = vadd.f32 0.0, %v1541
      %v1543 = vpop.f32.mrf.mxu0
      %v1544 = vadd.f32 0.0, %v1543
      %1545 = vmatprep.mubr.f32.mxu0 %v1229
      %1546 = vmatmul.mubr.f32.gmra.mxu0 %v1228
      %v1547 = vpop.f32.mrf.mxu0
      %v1548 = vadd.f32 0.0, %v1547
      %v1549 = vpop.f32.mrf.mxu0
      %v1550 = vadd.f32 0.0, %v1549
      %1551 = vmatprep.mubr.f32.mxu0 %v1232
      %1552 = vmatmul.mubr.f32.gmra.mxu0 %v1231
      %v1553 = vpop.f32.mrf.mxu0
      %v1554 = vadd.f32 0.0, %v1553
      %v1555 = vpop.f32.mrf.mxu0
      %v1556 = vadd.f32 0.0, %v1555
      %1557 = vmatprep.mubr.f32.mxu0 %v1235
      %1558 = vmatmul.mubr.f32.gmra.mxu0 %v1234
      %v1559 = vpop.f32.mrf.mxu0
      %v1560 = vadd.f32 0.0, %v1559
      %v1561 = vpop.f32.mrf.mxu0
      %v1562 = vadd.f32 0.0, %v1561
      %1563 = vmatprep.mubr.f32.mxu0 %v1238
      %1564 = vmatmul.mubr.f32.gmra.mxu0 %v1237
      %v1565 = vpop.f32.mrf.mxu0
      %v1566 = vadd.f32 0.0, %v1565
      %v1567 = vpop.f32.mrf.mxu0
      %v1568 = vadd.f32 0.0, %v1567
      %1569 = vmatprep.mubr.f32.mxu0 %v1241
      %1570 = vmatmul.mubr.f32.gmra.mxu0 %v1240
      %v1571 = vpop.f32.mrf.mxu0
      %v1572 = vadd.f32 0.0, %v1571
      %v1573 = vpop.f32.mrf.mxu0
      %v1574 = vadd.f32 0.0, %v1573
      %1575 = vmatprep.mubr.f32.mxu0 %v1244
      %1576 = vmatmul.mubr.f32.gmra.mxu0 %v1243
      %v1577 = vpop.f32.mrf.mxu0
      %v1578 = vadd.f32 0.0, %v1577
      %v1579 = vpop.f32.mrf.mxu0
      %v1580 = vadd.f32 0.0, %v1579
      %1581 = vmatprep.mubr.f32.mxu0 %v1247
      %1582 = vmatmul.mubr.f32.gmra.mxu0 %v1246
      %v1583 = vpop.f32.mrf.mxu0
      %v1584 = vadd.f32 0.0, %v1583
      %v1585 = vpop.f32.mrf.mxu0
      %v1586 = vadd.f32 0.0, %v1585
      %1587 = vmatprep.mubr.f32.mxu0 %v1250
      %1588 = vmatmul.mubr.f32.gmra.mxu0 %v1249
      %v1589 = vpop.f32.mrf.mxu0
      %v1590 = vadd.f32 0.0, %v1589
      %v1591 = vpop.f32.mrf.mxu0
      %v1592 = vadd.f32 0.0, %v1591
      %1593 = vmatprep.mubr.f32.mxu0 %v1253
      %1594 = vmatmul.mubr.f32.gmra.mxu0 %v1252
      %v1595 = vpop.f32.mrf.mxu0
      %v1596 = vadd.f32 0.0, %v1595
      %v1597 = vpop.f32.mrf.mxu0
      %v1598 = vadd.f32 0.0, %v1597
      %1599 = vmatprep.mubr.f32.mxu0 %v1256
      %1600 = vmatmul.mubr.f32.gmra.mxu0 %v1255
      %v1601 = vpop.f32.mrf.mxu0
      %v1602 = vadd.f32 0.0, %v1601
      %v1603 = vpop.f32.mrf.mxu0
      %v1604 = vadd.f32 0.0, %v1603
      %1605 = vmatprep.mubr.f32.mxu0 %v1259
      %1606 = vmatmul.mubr.f32.gmra.mxu0 %v1258
      %v1607 = vpop.f32.mrf.mxu0
      %v1608 = vadd.f32 0.0, %v1607
      %v1609 = vpop.f32.mrf.mxu0
      %v1610 = vadd.f32 0.0, %v1609
      %1611 = vmatprep.mubr.f32.mxu0 %v1262
      %1612 = vmatmul.mubr.f32.gmra.mxu0 %v1261
      %v1613 = vpop.f32.mrf.mxu0
      %v1614 = vadd.f32 0.0, %v1613
      %v1615 = vpop.f32.mrf.mxu0
      %v1616 = vadd.f32 0.0, %v1615
      %1617 = vdwg.mxu0
      %1618 = vmatprep.subr.mxu0 0.0
      %1619 = vmatpush1.msra.mxu0 0.0
      %1620 = vmatprep.subr.mxu0 0.0
      %1621 = vmatpush1.msra.mxu0 0.0
      %1622 = vmatprep.subr.mxu0 0.0
      %1623 = vmatpush1.msra.mxu0 0.0
      %1624 = vmatprep.subr.mxu0 0.0
      %1625 = vmatpush1.msra.mxu0 0.0
      %1626 = vmatprep.subr.mxu0 0.0
      %1627 = vmatpush1.msra.mxu0 0.0
      %1628 = vmatprep.subr.mxu0 0.0
      %1629 = vmatpush1.msra.mxu0 0.0
      %1630 = vmatprep.subr.mxu0 0.0
      %1631 = vmatpush1.msra.mxu0 0.0
      %1632 = vmatprep.subr.mxu0 0.0
      %1633 = vmatpush1.msra.mxu0 0.0
      %1634 = vmatprep.subr.mxu0 0.0
      %1635 = vmatpush1.msra.mxu0 0.0
      %1636 = vmatprep.subr.mxu0 0.0
      %1637 = vmatpush1.msra.mxu0 0.0
      %1638 = vmatprep.subr.mxu0 0.0
      %1639 = vmatpush1.msra.mxu0 0.0
      %1640 = vmatprep.subr.mxu0 0.0
      %1641 = vmatpush1.msra.mxu0 0.0
      %1642 = vmatprep.subr.mxu0 %v1405
      %1643 = vmatpush1.msra.mxu0 %v1404
      %1644 = vmatprep.subr.mxu0 %v1401
      %1645 = vmatpush1.msra.mxu0 %v1400
      %1646 = vmatprep.subr.mxu0 %v1397
      %1647 = vmatpush1.msra.mxu0 %v1396
      %1648 = vmatprep.subr.mxu0 %v1393
      %1649 = vmatpush1.msra.mxu0 %v1392
      %1650 = vmatprep.subr.mxu0 0.0
      %1651 = vmatpush2.msra.mxu0 0.0
      %1652 = vmatprep.subr.mxu0 0.0
      %1653 = vmatpush2.msra.mxu0 0.0
      %1654 = vmatprep.subr.mxu0 0.0
      %1655 = vmatpush2.msra.mxu0 0.0
      %1656 = vmatprep.subr.mxu0 0.0
      %1657 = vmatpush2.msra.mxu0 0.0
      %1658 = vmatprep.subr.mxu0 0.0
      %1659 = vmatpush2.msra.mxu0 0.0
      %1660 = vmatprep.subr.mxu0 0.0
      %1661 = vmatpush2.msra.mxu0 0.0
      %1662 = vmatprep.subr.mxu0 0.0
      %1663 = vmatpush2.msra.mxu0 0.0
      %1664 = vmatprep.subr.mxu0 0.0
      %1665 = vmatpush2.msra.mxu0 0.0
      %1666 = vmatprep.subr.mxu0 0.0
      %1667 = vmatpush2.msra.mxu0 0.0
      %1668 = vmatprep.subr.mxu0 0.0
      %1669 = vmatpush2.msra.mxu0 0.0
      %1670 = vmatprep.subr.mxu0 0.0
      %1671 = vmatpush2.msra.mxu0 0.0
      %1672 = vmatprep.subr.mxu0 0.0
      %1673 = vmatpush2.msra.mxu0 0.0
      %1674 = vmatprep.subr.mxu0 0.0
      %1675 = vmatpush2.msra.mxu0 0.0
      %1676 = vmatprep.subr.mxu0 0.0
      %1677 = vmatpush2.msra.mxu0 0.0
      %1678 = vmatprep.subr.mxu0 0.0
      %1679 = vmatpush2.msra.mxu0 0.0
      %1680 = vmatprep.subr.mxu0 0.0
      %1681 = vmatpush2.msra.mxu0 0.0
      %1682 = vmatprep.mubr.f32.mxu0 0.0
      %1683 = vmatmul.mubr.f32.gmra.mxu0 %v1410
      %v1684 = vpop.f32.mrf.mxu0
      %v1685 = vadd.f32 %v1524, %v1684
      %v1686 = vpop.f32.mrf.mxu0
      %v1687 = vadd.f32 %v1526, %v1686
      %1688 = vmatprep.mubr.f32.mxu0 0.0
      %1689 = vmatmul.mubr.f32.gmra.mxu0 %v1413
      %v1690 = vpop.f32.mrf.mxu0
      %v1691 = vadd.f32 %v1530, %v1690
      %v1692 = vpop.f32.mrf.mxu0
      %v1693 = vadd.f32 %v1532, %v1692
      %1694 = vmatprep.mubr.f32.mxu0 0.0
      %1695 = vmatmul.mubr.f32.gmra.mxu0 %v1416
      %v1696 = vpop.f32.mrf.mxu0
      %v1697 = vadd.f32 %v1536, %v1696
      %v1698 = vpop.f32.mrf.mxu0
      %v1699 = vadd.f32 %v1538, %v1698
      %1700 = vmatprep.mubr.f32.mxu0 0.0
      %1701 = vmatmul.mubr.f32.gmra.mxu0 %v1419
      %v1702 = vpop.f32.mrf.mxu0
      %v1703 = vadd.f32 %v1542, %v1702
      %v1704 = vpop.f32.mrf.mxu0
      %v1705 = vadd.f32 %v1544, %v1704
      %1706 = vmatprep.mubr.f32.mxu0 0.0
      %1707 = vmatmul.mubr.f32.gmra.mxu0 %v1422
      %v1708 = vpop.f32.mrf.mxu0
      %v1709 = vadd.f32 %v1548, %v1708
      %v1710 = vpop.f32.mrf.mxu0
      %v1711 = vadd.f32 %v1550, %v1710
      %1712 = vmatprep.mubr.f32.mxu0 0.0
      %1713 = vmatmul.mubr.f32.gmra.mxu0 %v1425
      %v1714 = vpop.f32.mrf.mxu0
      %v1715 = vadd.f32 %v1554, %v1714
      %v1716 = vpop.f32.mrf.mxu0
      %v1717 = vadd.f32 %v1556, %v1716
      %1718 = vmatprep.mubr.f32.mxu0 0.0
      %1719 = vmatmul.mubr.f32.gmra.mxu0 %v1428
      %v1720 = vpop.f32.mrf.mxu0
      %v1721 = vadd.f32 %v1560, %v1720
      %v1722 = vpop.f32.mrf.mxu0
      %v1723 = vadd.f32 %v1562, %v1722
      %1724 = vmatprep.mubr.f32.mxu0 0.0
      %1725 = vmatmul.mubr.f32.gmra.mxu0 %v1431
      %v1726 = vpop.f32.mrf.mxu0
      %v1727 = vadd.f32 %v1566, %v1726
      %v1728 = vpop.f32.mrf.mxu0
      %v1729 = vadd.f32 %v1568, %v1728
      %1730 = vmatprep.mubr.f32.mxu0 0.0
      %1731 = vmatmul.mubr.f32.gmra.mxu0 %v1434
      %v1732 = vpop.f32.mrf.mxu0
      %v1733 = vadd.f32 %v1572, %v1732
      %v1734 = vpop.f32.mrf.mxu0
      %v1735 = vadd.f32 %v1574, %v1734
      %1736 = vmatprep.mubr.f32.mxu0 0.0
      %1737 = vmatmul.mubr.f32.gmra.mxu0 %v1437
      %v1738 = vpop.f32.mrf.mxu0
      %v1739 = vadd.f32 %v1578, %v1738
      %v1740 = vpop.f32.mrf.mxu0
      %v1741 = vadd.f32 %v1580, %v1740
      %1742 = vmatprep.mubr.f32.mxu0 0.0
      %1743 = vmatmul.mubr.f32.gmra.mxu0 %v1440
      %v1744 = vpop.f32.mrf.mxu0
      %v1745 = vadd.f32 %v1584, %v1744
      %v1746 = vpop.f32.mrf.mxu0
      %v1747 = vadd.f32 %v1586, %v1746
      %1748 = vmatprep.mubr.f32.mxu0 0.0
      %1749 = vmatmul.mubr.f32.gmra.mxu0 %v1443
      %v1750 = vpop.f32.mrf.mxu0
      %v1751 = vadd.f32 %v1590, %v1750
      %v1752 = vpop.f32.mrf.mxu0
      %v1753 = vadd.f32 %v1592, %v1752
      %1754 = vmatprep.mubr.f32.mxu0 0.0
      %1755 = vmatmul.mubr.f32.gmra.mxu0 %v1446
      %v1756 = vpop.f32.mrf.mxu0
      %v1757 = vadd.f32 %v1596, %v1756
      %v1758 = vpop.f32.mrf.mxu0
      %v1759 = vadd.f32 %v1598, %v1758
      %1760 = vmatprep.mubr.f32.mxu0 0.0
      %1761 = vmatmul.mubr.f32.gmra.mxu0 %v1449
      %v1762 = vpop.f32.mrf.mxu0
      %v1763 = vadd.f32 %v1602, %v1762
      %v1764 = vpop.f32.mrf.mxu0
      %v1765 = vadd.f32 %v1604, %v1764
      %1766 = vmatprep.mubr.f32.mxu0 0.0
      %1767 = vmatmul.mubr.f32.gmra.mxu0 %v1452
      %v1768 = vpop.f32.mrf.mxu0
      %v1769 = vadd.f32 %v1608, %v1768
      %v1770 = vpop.f32.mrf.mxu0
      %v1771 = vadd.f32 %v1610, %v1770
      %1772 = vmatprep.mubr.f32.mxu0 0.0
      %1773 = vmatmul.mubr.f32.gmra.mxu0 %v1455
      %v1774 = vpop.f32.mrf.mxu0
      %v1775 = vadd.f32 %v1614, %v1774
      %v1776 = vpop.f32.mrf.mxu0
      %v1777 = vadd.f32 %v1616, %v1776
      %1778 = vdwg.mxu0
      %1779 = vmatprep.subr.mxu0 %v1327
      %1780 = vmatpush1.msra.mxu0 %v1326
      %1781 = vmatprep.subr.mxu0 %v1323
      %1782 = vmatpush1.msra.mxu0 %v1322
      %1783 = vmatprep.subr.mxu0 %v1319
      %1784 = vmatpush1.msra.mxu0 %v1318
      %1785 = vmatprep.subr.mxu0 %v1315
      %1786 = vmatpush1.msra.mxu0 %v1314
      %1787 = vmatprep.subr.mxu0 %v1311
      %1788 = vmatpush1.msra.mxu0 %v1310
      %1789 = vmatprep.subr.mxu0 %v1307
      %1790 = vmatpush1.msra.mxu0 %v1306
      %1791 = vmatprep.subr.mxu0 %v1303
      %1792 = vmatpush1.msra.mxu0 %v1302
      %1793 = vmatprep.subr.mxu0 %v1299
      %1794 = vmatpush1.msra.mxu0 %v1298
      %1795 = vmatprep.subr.mxu0 %v1295
      %1796 = vmatpush1.msra.mxu0 %v1294
      %1797 = vmatprep.subr.mxu0 %v1291
      %1798 = vmatpush1.msra.mxu0 %v1290
      %1799 = vmatprep.subr.mxu0 %v1287
      %1800 = vmatpush1.msra.mxu0 %v1286
      %1801 = vmatprep.subr.mxu0 %v1283
      %1802 = vmatpush1.msra.mxu0 %v1282
      %1803 = vmatprep.subr.mxu0 %v1279
      %1804 = vmatpush1.msra.mxu0 %v1278
      %1805 = vmatprep.subr.mxu0 %v1275
      %1806 = vmatpush1.msra.mxu0 %v1274
      %1807 = vmatprep.subr.mxu0 %v1271
      %1808 = vmatpush1.msra.mxu0 %v1270
      %1809 = vmatprep.subr.mxu0 %v1267
      %1810 = vmatpush1.msra.mxu0 %v1266
      %1811 = vmatprep.subr.mxu0 %v1391
      %1812 = vmatpush2.msra.mxu0 %v1390
      %1813 = vmatprep.subr.mxu0 %v1387
      %1814 = vmatpush2.msra.mxu0 %v1386
      %1815 = vmatprep.subr.mxu0 %v1383
      %1816 = vmatpush2.msra.mxu0 %v1382
      %1817 = vmatprep.subr.mxu0 %v1379
      %1818 = vmatpush2.msra.mxu0 %v1378
      %1819 = vmatprep.subr.mxu0 %v1375
      %1820 = vmatpush2.msra.mxu0 %v1374
      %1821 = vmatprep.subr.mxu0 %v1371
      %1822 = vmatpush2.msra.mxu0 %v1370
      %1823 = vmatprep.subr.mxu0 %v1367
      %1824 = vmatpush2.msra.mxu0 %v1366
      %1825 = vmatprep.subr.mxu0 %v1363
      %1826 = vmatpush2.msra.mxu0 %v1362
      %1827 = vmatprep.subr.mxu0 %v1359
      %1828 = vmatpush2.msra.mxu0 %v1358
      %1829 = vmatprep.subr.mxu0 %v1355
      %1830 = vmatpush2.msra.mxu0 %v1354
      %1831 = vmatprep.subr.mxu0 %v1351
      %1832 = vmatpush2.msra.mxu0 %v1350
      %1833 = vmatprep.subr.mxu0 %v1347
      %1834 = vmatpush2.msra.mxu0 %v1346
      %1835 = vmatprep.subr.mxu0 %v1343
      %1836 = vmatpush2.msra.mxu0 %v1342
      %1837 = vmatprep.subr.mxu0 %v1339
      %1838 = vmatpush2.msra.mxu0 %v1338
      %1839 = vmatprep.subr.mxu0 %v1335
      %1840 = vmatpush2.msra.mxu0 %v1334
      %1841 = vmatprep.subr.mxu0 %v1331
      %1842 = vmatpush2.msra.mxu0 %v1330
      %1843 = vmatprep.mubr.f32.mxu0 %v1217
      %1844 = vmatmul.mubr.f32.gmra.mxu0 %v1216
      %v1845 = vpop.f32.mrf.mxu0
      %v1846 = vadd.f32 0.0, %v1845
      %v1847 = vpop.f32.mrf.mxu0
      %v1848 = vadd.f32 0.0, %v1847
      %1849 = vmatprep.mubr.f32.mxu0 %v1220
      %1850 = vmatmul.mubr.f32.gmra.mxu0 %v1219
      %v1851 = vpop.f32.mrf.mxu0
      %v1852 = vadd.f32 0.0, %v1851
      %v1853 = vpop.f32.mrf.mxu0
      %v1854 = vadd.f32 0.0, %v1853
      %1855 = vmatprep.mubr.f32.mxu0 %v1223
      %1856 = vmatmul.mubr.f32.gmra.mxu0 %v1222
      %v1857 = vpop.f32.mrf.mxu0
      %v1858 = vadd.f32 0.0, %v1857
      %v1859 = vpop.f32.mrf.mxu0
      %v1860 = vadd.f32 0.0, %v1859
      %1861 = vmatprep.mubr.f32.mxu0 %v1226
      %1862 = vmatmul.mubr.f32.gmra.mxu0 %v1225
      %v1863 = vpop.f32.mrf.mxu0
      %v1864 = vadd.f32 0.0, %v1863
      %v1865 = vpop.f32.mrf.mxu0
      %v1866 = vadd.f32 0.0, %v1865
      %1867 = vmatprep.mubr.f32.mxu0 %v1229
      %1868 = vmatmul.mubr.f32.gmra.mxu0 %v1228
      %v1869 = vpop.f32.mrf.mxu0
      %v1870 = vadd.f32 0.0, %v1869
      %v1871 = vpop.f32.mrf.mxu0
      %v1872 = vadd.f32 0.0, %v1871
      %1873 = vmatprep.mubr.f32.mxu0 %v1232
      %1874 = vmatmul.mubr.f32.gmra.mxu0 %v1231
      %v1875 = vpop.f32.mrf.mxu0
      %v1876 = vadd.f32 0.0, %v1875
      %v1877 = vpop.f32.mrf.mxu0
      %v1878 = vadd.f32 0.0, %v1877
      %1879 = vmatprep.mubr.f32.mxu0 %v1235
      %1880 = vmatmul.mubr.f32.gmra.mxu0 %v1234
      %v1881 = vpop.f32.mrf.mxu0
      %v1882 = vadd.f32 0.0, %v1881
      %v1883 = vpop.f32.mrf.mxu0
      %v1884 = vadd.f32 0.0, %v1883
      %1885 = vmatprep.mubr.f32.mxu0 %v1238
      %1886 = vmatmul.mubr.f32.gmra.mxu0 %v1237
      %v1887 = vpop.f32.mrf.mxu0
      %v1888 = vadd.f32 0.0, %v1887
      %v1889 = vpop.f32.mrf.mxu0
      %v1890 = vadd.f32 0.0, %v1889
      %1891 = vmatprep.mubr.f32.mxu0 %v1241
      %1892 = vmatmul.mubr.f32.gmra.mxu0 %v1240
      %v1893 = vpop.f32.mrf.mxu0
      %v1894 = vadd.f32 0.0, %v1893
      %v1895 = vpop.f32.mrf.mxu0
      %v1896 = vadd.f32 0.0, %v1895
      %1897 = vmatprep.mubr.f32.mxu0 %v1244
      %1898 = vmatmul.mubr.f32.gmra.mxu0 %v1243
      %v1899 = vpop.f32.mrf.mxu0
      %v1900 = vadd.f32 0.0, %v1899
      %v1901 = vpop.f32.mrf.mxu0
      %v1902 = vadd.f32 0.0, %v1901
      %1903 = vmatprep.mubr.f32.mxu0 %v1247
      %1904 = vmatmul.mubr.f32.gmra.mxu0 %v1246
      %v1905 = vpop.f32.mrf.mxu0
      %v1906 = vadd.f32 0.0, %v1905
      %v1907 = vpop.f32.mrf.mxu0
      %v1908 = vadd.f32 0.0, %v1907
      %1909 = vmatprep.mubr.f32.mxu0 %v1250
      %1910 = vmatmul.mubr.f32.gmra.mxu0 %v1249
      %v1911 = vpop.f32.mrf.mxu0
      %v1912 = vadd.f32 0.0, %v1911
      %v1913 = vpop.f32.mrf.mxu0
      %v1914 = vadd.f32 0.0, %v1913
      %1915 = vmatprep.mubr.f32.mxu0 %v1253
      %1916 = vmatmul.mubr.f32.gmra.mxu0 %v1252
      %v1917 = vpop.f32.mrf.mxu0
      %v1918 = vadd.f32 0.0, %v1917
      %v1919 = vpop.f32.mrf.mxu0
      %v1920 = vadd.f32 0.0, %v1919
      %1921 = vmatprep.mubr.f32.mxu0 %v1256
      %1922 = vmatmul.mubr.f32.gmra.mxu0 %v1255
      %v1923 = vpop.f32.mrf.mxu0
      %v1924 = vadd.f32 0.0, %v1923
      %v1925 = vpop.f32.mrf.mxu0
      %v1926 = vadd.f32 0.0, %v1925
      %1927 = vmatprep.mubr.f32.mxu0 %v1259
      %1928 = vmatmul.mubr.f32.gmra.mxu0 %v1258
      %v1929 = vpop.f32.mrf.mxu0
      %v1930 = vadd.f32 0.0, %v1929
      %v1931 = vpop.f32.mrf.mxu0
      %v1932 = vadd.f32 0.0, %v1931
      %1933 = vmatprep.mubr.f32.mxu0 %v1262
      %1934 = vmatmul.mubr.f32.gmra.mxu0 %v1261
      %v1935 = vpop.f32.mrf.mxu0
      %v1936 = vadd.f32 0.0, %v1935
      %v1937 = vpop.f32.mrf.mxu0
      %v1938 = vadd.f32 0.0, %v1937
      %1939 = vdwg.mxu0
      %1940 = vmatprep.subr.mxu0 0.0
      %1941 = vmatpush1.msra.mxu0 0.0
      %1942 = vmatprep.subr.mxu0 0.0
      %1943 = vmatpush1.msra.mxu0 0.0
      %1944 = vmatprep.subr.mxu0 0.0
      %1945 = vmatpush1.msra.mxu0 0.0
      %1946 = vmatprep.subr.mxu0 0.0
      %1947 = vmatpush1.msra.mxu0 0.0
      %1948 = vmatprep.subr.mxu0 0.0
      %1949 = vmatpush1.msra.mxu0 0.0
      %1950 = vmatprep.subr.mxu0 0.0
      %1951 = vmatpush1.msra.mxu0 0.0
      %1952 = vmatprep.subr.mxu0 0.0
      %1953 = vmatpush1.msra.mxu0 0.0
      %1954 = vmatprep.subr.mxu0 0.0
      %1955 = vmatpush1.msra.mxu0 0.0
      %1956 = vmatprep.subr.mxu0 0.0
      %1957 = vmatpush1.msra.mxu0 0.0
      %1958 = vmatprep.subr.mxu0 0.0
      %1959 = vmatpush1.msra.mxu0 0.0
      %1960 = vmatprep.subr.mxu0 0.0
      %1961 = vmatpush1.msra.mxu0 0.0
      %1962 = vmatprep.subr.mxu0 0.0
      %1963 = vmatpush1.msra.mxu0 0.0
      %1964 = vmatprep.subr.mxu0 %v1407
      %1965 = vmatpush1.msra.mxu0 %v1406
      %1966 = vmatprep.subr.mxu0 %v1403
      %1967 = vmatpush1.msra.mxu0 %v1402
      %1968 = vmatprep.subr.mxu0 %v1399
      %1969 = vmatpush1.msra.mxu0 %v1398
      %1970 = vmatprep.subr.mxu0 %v1395
      %1971 = vmatpush1.msra.mxu0 %v1394
      %1972 = vmatprep.subr.mxu0 0.0
      %1973 = vmatpush2.msra.mxu0 0.0
      %1974 = vmatprep.subr.mxu0 0.0
      %1975 = vmatpush2.msra.mxu0 0.0
      %1976 = vmatprep.subr.mxu0 0.0
      %1977 = vmatpush2.msra.mxu0 0.0
      %1978 = vmatprep.subr.mxu0 0.0
      %1979 = vmatpush2.msra.mxu0 0.0
      %1980 = vmatprep.subr.mxu0 0.0
      %1981 = vmatpush2.msra.mxu0 0.0
      %1982 = vmatprep.subr.mxu0 0.0
      %1983 = vmatpush2.msra.mxu0 0.0
      %1984 = vmatprep.subr.mxu0 0.0
      %1985 = vmatpush2.msra.mxu0 0.0
      %1986 = vmatprep.subr.mxu0 0.0
      %1987 = vmatpush2.msra.mxu0 0.0
      %1988 = vmatprep.subr.mxu0 0.0
      %1989 = vmatpush2.msra.mxu0 0.0
      %1990 = vmatprep.subr.mxu0 0.0
      %1991 = vmatpush2.msra.mxu0 0.0
      %1992 = vmatprep.subr.mxu0 0.0
      %1993 = vmatpush2.msra.mxu0 0.0
      %1994 = vmatprep.subr.mxu0 0.0
      %1995 = vmatpush2.msra.mxu0 0.0
      %1996 = vmatprep.subr.mxu0 0.0
      %1997 = vmatpush2.msra.mxu0 0.0
      %1998 = vmatprep.subr.mxu0 0.0
      %1999 = vmatpush2.msra.mxu0 0.0
      %2000 = vmatprep.subr.mxu0 0.0
      %2001 = vmatpush2.msra.mxu0 0.0
      %2002 = vmatprep.subr.mxu0 0.0
      %2003 = vmatpush2.msra.mxu0 0.0
      %2004 = vmatprep.mubr.f32.mxu0 0.0
      %2005 = vmatmul.mubr.f32.gmra.mxu0 %v1410
      %v2006 = vpop.f32.mrf.mxu0
      %v2007 = vadd.f32 %v1846, %v2006
      %v2008 = vpop.f32.mrf.mxu0
      %v2009 = vadd.f32 %v1848, %v2008
      %2010 = vmatprep.mubr.f32.mxu0 0.0
      %2011 = vmatmul.mubr.f32.gmra.mxu0 %v1413
      %v2012 = vpop.f32.mrf.mxu0
      %v2013 = vadd.f32 %v1852, %v2012
      %v2014 = vpop.f32.mrf.mxu0
      %v2015 = vadd.f32 %v1854, %v2014
      %2016 = vmatprep.mubr.f32.mxu0 0.0
      %2017 = vmatmul.mubr.f32.gmra.mxu0 %v1416
      %v2018 = vpop.f32.mrf.mxu0
      %v2019 = vadd.f32 %v1858, %v2018
      %v2020 = vpop.f32.mrf.mxu0
      %v2021 = vadd.f32 %v1860, %v2020
      %2022 = vmatprep.mubr.f32.mxu0 0.0
      %2023 = vmatmul.mubr.f32.gmra.mxu0 %v1419
      %v2024 = vpop.f32.mrf.mxu0
      %v2025 = vadd.f32 %v1864, %v2024
      %v2026 = vpop.f32.mrf.mxu0
      %v2027 = vadd.f32 %v1866, %v2026
      %2028 = vmatprep.mubr.f32.mxu0 0.0
      %2029 = vmatmul.mubr.f32.gmra.mxu0 %v1422
      %v2030 = vpop.f32.mrf.mxu0
      %v2031 = vadd.f32 %v1870, %v2030
      %v2032 = vpop.f32.mrf.mxu0
      %v2033 = vadd.f32 %v1872, %v2032
      %2034 = vmatprep.mubr.f32.mxu0 0.0
      %2035 = vmatmul.mubr.f32.gmra.mxu0 %v1425
      %v2036 = vpop.f32.mrf.mxu0
      %v2037 = vadd.f32 %v1876, %v2036
      %v2038 = vpop.f32.mrf.mxu0
      %v2039 = vadd.f32 %v1878, %v2038
      %2040 = vmatprep.mubr.f32.mxu0 0.0
      %2041 = vmatmul.mubr.f32.gmra.mxu0 %v1428
      %v2042 = vpop.f32.mrf.mxu0
      %v2043 = vadd.f32 %v1882, %v2042
      %v2044 = vpop.f32.mrf.mxu0
      %v2045 = vadd.f32 %v1884, %v2044
      %2046 = vmatprep.mubr.f32.mxu0 0.0
      %2047 = vmatmul.mubr.f32.gmra.mxu0 %v1431
      %v2048 = vpop.f32.mrf.mxu0
      %v2049 = vadd.f32 %v1888, %v2048
      %v2050 = vpop.f32.mrf.mxu0
      %v2051 = vadd.f32 %v1890, %v2050
      %2052 = vmatprep.mubr.f32.mxu0 0.0
      %2053 = vmatmul.mubr.f32.gmra.mxu0 %v1434
      %v2054 = vpop.f32.mrf.mxu0
      %v2055 = vadd.f32 %v1894, %v2054
      %v2056 = vpop.f32.mrf.mxu0
      %v2057 = vadd.f32 %v1896, %v2056
      %2058 = vmatprep.mubr.f32.mxu0 0.0
      %2059 = vmatmul.mubr.f32.gmra.mxu0 %v1437
      %v2060 = vpop.f32.mrf.mxu0
      %v2061 = vadd.f32 %v1900, %v2060
      %v2062 = vpop.f32.mrf.mxu0
      %v2063 = vadd.f32 %v1902, %v2062
      %2064 = vmatprep.mubr.f32.mxu0 0.0
      %2065 = vmatmul.mubr.f32.gmra.mxu0 %v1440
      %v2066 = vpop.f32.mrf.mxu0
      %v2067 = vadd.f32 %v1906, %v2066
      %v2068 = vpop.f32.mrf.mxu0
      %v2069 = vadd.f32 %v1908, %v2068
      %2070 = vmatprep.mubr.f32.mxu0 0.0
      %2071 = vmatmul.mubr.f32.gmra.mxu0 %v1443
      %v2072 = vpop.f32.mrf.mxu0
      %v2073 = vadd.f32 %v1912, %v2072
      %v2074 = vpop.f32.mrf.mxu0
      %v2075 = vadd.f32 %v1914, %v2074
      %2076 = vmatprep.mubr.f32.mxu0 0.0
      %2077 = vmatmul.mubr.f32.gmra.mxu0 %v1446
      %v2078 = vpop.f32.mrf.mxu0
      %v2079 = vadd.f32 %v1918, %v2078
      %v2080 = vpop.f32.mrf.mxu0
      %v2081 = vadd.f32 %v1920, %v2080
      %2082 = vmatprep.mubr.f32.mxu0 0.0
      %2083 = vmatmul.mubr.f32.gmra.mxu0 %v1449
      %v2084 = vpop.f32.mrf.mxu0
      %v2085 = vadd.f32 %v1924, %v2084
      %v2086 = vpop.f32.mrf.mxu0
      %v2087 = vadd.f32 %v1926, %v2086
      %2088 = vmatprep.mubr.f32.mxu0 0.0
      %2089 = vmatmul.mubr.f32.gmra.mxu0 %v1452
      %v2090 = vpop.f32.mrf.mxu0
      %v2091 = vadd.f32 %v1930, %v2090
      %v2092 = vpop.f32.mrf.mxu0
      %v2093 = vadd.f32 %v1932, %v2092
      %2094 = vmatprep.mubr.f32.mxu0 0.0
      %2095 = vmatmul.mubr.f32.gmra.mxu0 %v1455
      %v2096 = vpop.f32.mrf.mxu0
      %v2097 = vadd.f32 %v1936, %v2096
      %v2098 = vpop.f32.mrf.mxu0
      %v2099 = vadd.f32 %v1938, %v2098
      %2100 = vdwg.mxu0
      %v2101 = vadd.f32 %v1152, %v1685
      %v2102 = vadd.f32 %v1153, %v1687
      %v2103 = vadd.f32 %v1154, %v2007
      %v2104 = vadd.f32 %v1155, %v2009
      %v2105 = vadd.f32 %v1156, %v1691
      %v2106 = vadd.f32 %v1157, %v1693
      %v2107 = vadd.f32 %v1158, %v2013
      %v2108 = vadd.f32 %v1159, %v2015
      %v2109 = vadd.f32 %v1160, %v1697
      %v2110 = vadd.f32 %v1161, %v1699
      %v2111 = vadd.f32 %v1162, %v2019
      %v2112 = vadd.f32 %v1163, %v2021
      %v2113 = vadd.f32 %v1164, %v1703
      %v2114 = vadd.f32 %v1165, %v1705
      %v2115 = vadd.f32 %v1166, %v2025
      %v2116 = vadd.f32 %v1167, %v2027
      %v2117 = vadd.f32 %v1168, %v1709
      %v2118 = vadd.f32 %v1169, %v1711
      %v2119 = vadd.f32 %v1170, %v2031
      %v2120 = vadd.f32 %v1171, %v2033
      %v2121 = vadd.f32 %v1172, %v1715
      %v2122 = vadd.f32 %v1173, %v1717
      %v2123 = vadd.f32 %v1174, %v2037
      %v2124 = vadd.f32 %v1175, %v2039
      %v2125 = vadd.f32 %v1176, %v1721
      %v2126 = vadd.f32 %v1177, %v1723
      %v2127 = vadd.f32 %v1178, %v2043
      %v2128 = vadd.f32 %v1179, %v2045
      %v2129 = vadd.f32 %v1180, %v1727
      %v2130 = vadd.f32 %v1181, %v1729
      %v2131 = vadd.f32 %v1182, %v2049
      %v2132 = vadd.f32 %v1183, %v2051
      %v2133 = vadd.f32 %v1184, %v1733
      %v2134 = vadd.f32 %v1185, %v1735
      %v2135 = vadd.f32 %v1186, %v2055
      %v2136 = vadd.f32 %v1187, %v2057
      %v2137 = vadd.f32 %v1188, %v1739
      %v2138 = vadd.f32 %v1189, %v1741
      %v2139 = vadd.f32 %v1190, %v2061
      %v2140 = vadd.f32 %v1191, %v2063
      %v2141 = vadd.f32 %v1192, %v1745
      %v2142 = vadd.f32 %v1193, %v1747
      %v2143 = vadd.f32 %v1194, %v2067
      %v2144 = vadd.f32 %v1195, %v2069
      %v2145 = vadd.f32 %v1196, %v1751
      %v2146 = vadd.f32 %v1197, %v1753
      %v2147 = vadd.f32 %v1198, %v2073
      %v2148 = vadd.f32 %v1199, %v2075
      %v2149 = vadd.f32 %v1200, %v1757
      %v2150 = vadd.f32 %v1201, %v1759
      %v2151 = vadd.f32 %v1202, %v2079
      %v2152 = vadd.f32 %v1203, %v2081
      %v2153 = vadd.f32 %v1204, %v1763
      %v2154 = vadd.f32 %v1205, %v1765
      %v2155 = vadd.f32 %v1206, %v2085
      %v2156 = vadd.f32 %v1207, %v2087
      %v2157 = vadd.f32 %v1208, %v1769
      %v2158 = vadd.f32 %v1209, %v1771
      %v2159 = vadd.f32 %v1210, %v2091
      %v2160 = vadd.f32 %v1211, %v2093
      %v2161 = vadd.f32 %v1212, %v1775
      %v2162 = vadd.f32 %v1213, %v1777
      %v2163 = vadd.f32 %v1214, %v2097
      %v2164 = vadd.f32 %v1215, %v2099
      %v2165 = vsub.f32 0.0, %v2101
      %v2166 = vsub.f32 0.0, %v2102
      %v2167 = vsub.f32 0.0, %v2103
      %v2168 = vsub.f32 0.0, %v2104
      %v2169 = vsub.f32 0.0, %v2105
      %v2170 = vsub.f32 0.0, %v2106
      %v2171 = vsub.f32 0.0, %v2107
      %v2172 = vsub.f32 0.0, %v2108
      %v2173 = vsub.f32 0.0, %v2109
      %v2174 = vsub.f32 0.0, %v2110
      %v2175 = vsub.f32 0.0, %v2111
      %v2176 = vsub.f32 0.0, %v2112
      %v2177 = vsub.f32 0.0, %v2113
      %v2178 = vsub.f32 0.0, %v2114
      %v2179 = vsub.f32 0.0, %v2115
      %v2180 = vsub.f32 0.0, %v2116
      %v2181 = vsub.f32 0.0, %v2117
      %v2182 = vsub.f32 0.0, %v2118
      %v2183 = vsub.f32 0.0, %v2119
      %v2184 = vsub.f32 0.0, %v2120
      %v2185 = vsub.f32 0.0, %v2121
      %v2186 = vsub.f32 0.0, %v2122
      %v2187 = vsub.f32 0.0, %v2123
      %v2188 = vsub.f32 0.0, %v2124
      %v2189 = vsub.f32 0.0, %v2125
      %v2190 = vsub.f32 0.0, %v2126
      %v2191 = vsub.f32 0.0, %v2127
      %v2192 = vsub.f32 0.0, %v2128
      %v2193 = vsub.f32 0.0, %v2129
      %v2194 = vsub.f32 0.0, %v2130
      %v2195 = vsub.f32 0.0, %v2131
      %v2196 = vsub.f32 0.0, %v2132
      %v2197 = vsub.f32 0.0, %v2133
      %v2198 = vsub.f32 0.0, %v2134
      %v2199 = vsub.f32 0.0, %v2135
      %v2200 = vsub.f32 0.0, %v2136
      %v2201 = vsub.f32 0.0, %v2137
      %v2202 = vsub.f32 0.0, %v2138
      %v2203 = vsub.f32 0.0, %v2139
      %v2204 = vsub.f32 0.0, %v2140
      %v2205 = vsub.f32 0.0, %v2141
      %v2206 = vsub.f32 0.0, %v2142
      %v2207 = vsub.f32 0.0, %v2143
      %v2208 = vsub.f32 0.0, %v2144
      %v2209 = vsub.f32 0.0, %v2145
      %v2210 = vsub.f32 0.0, %v2146
      %v2211 = vsub.f32 0.0, %v2147
      %v2212 = vsub.f32 0.0, %v2148
      %v2213 = vmul.f32 %v2165, 1.442695
      %v2214 = vpow.pop %v2213
      %v2215 = vmul.f32 %v2166, 1.442695
      %v2216 = vpow.pop %v2215
      %v2217 = vmul.f32 %v2167, 1.442695
      %v2218 = vpow.pop %v2217
      %v2219 = vmul.f32 %v2168, 1.442695
      %v2220 = vpow.pop %v2219
      %v2221 = vmul.f32 %v2169, 1.442695
      %v2222 = vpow.pop %v2221
      %v2223 = vmul.f32 %v2170, 1.442695
      %v2224 = vpow.pop %v2223
      %v2225 = vmul.f32 %v2171, 1.442695
      %v2226 = vpow.pop %v2225
      %v2227 = vmul.f32 %v2172, 1.442695
      %v2228 = vpow.pop %v2227
      %v2229 = vmul.f32 %v2173, 1.442695
      %v2230 = vpow.pop %v2229
      %v2231 = vmul.f32 %v2174, 1.442695
      %v2232 = vpow.pop %v2231
      %v2233 = vmul.f32 %v2175, 1.442695
      %v2234 = vpow.pop %v2233
      %v2235 = vmul.f32 %v2176, 1.442695
      %v2236 = vpow.pop %v2235
      %v2237 = vmul.f32 %v2177, 1.442695
      %v2238 = vpow.pop %v2237
      %v2239 = vmul.f32 %v2178, 1.442695
      %v2240 = vpow.pop %v2239
      %v2241 = vmul.f32 %v2179, 1.442695
      %v2242 = vpow.pop %v2241
      %v2243 = vmul.f32 %v2180, 1.442695
      %v2244 = vpow.pop %v2243
      %v2245 = vmul.f32 %v2181, 1.442695
      %v2246 = vpow.pop %v2245
      %v2247 = vmul.f32 %v2182, 1.442695
      %v2248 = vpow.pop %v2247
      %v2249 = vmul.f32 %v2183, 1.442695
      %v2250 = vpow.pop %v2249
      %v2251 = vmul.f32 %v2184, 1.442695
      %v2252 = vpow.pop %v2251
      %v2253 = vmul.f32 %v2185, 1.442695
      %v2254 = vpow.pop %v2253
      %v2255 = vmul.f32 %v2186, 1.442695
      %v2256 = vpow.pop %v2255
      %v2257 = vmul.f32 %v2187, 1.442695
      %v2258 = vpow.pop %v2257
      %v2259 = vmul.f32 %v2188, 1.442695
      %v2260 = vpow.pop %v2259
      %v2261 = vmul.f32 %v2189, 1.442695
      %v2262 = vpow.pop %v2261
      %v2263 = vmul.f32 %v2190, 1.442695
      %v2264 = vpow.pop %v2263
      %v2265 = vmul.f32 %v2191, 1.442695
      %v2266 = vpow.pop %v2265
      %v2267 = vmul.f32 %v2192, 1.442695
      %v2268 = vpow.pop %v2267
      %v2269 = vmul.f32 %v2193, 1.442695
      %v2270 = vpow.pop %v2269
      %v2271 = vmul.f32 %v2194, 1.442695
      %v2272 = vpow.pop %v2271
      %v2273 = vmul.f32 %v2195, 1.442695
      %v2274 = vpow.pop %v2273
      %v2275 = vmul.f32 %v2196, 1.442695
      %v2276 = vpow.pop %v2275
      %v2277 = vmul.f32 %v2197, 1.442695
      %v2278 = vpow.pop %v2277
      %v2279 = vmul.f32 %v2198, 1.442695
      %v2280 = vpow.pop %v2279
      %v2281 = vmul.f32 %v2199, 1.442695
      %v2282 = vpow.pop %v2281
      %v2283 = vmul.f32 %v2200, 1.442695
      %v2284 = vpow.pop %v2283
      %v2285 = vmul.f32 %v2201, 1.442695
      %v2286 = vpow.pop %v2285
      %v2287 = vmul.f32 %v2202, 1.442695
      %v2288 = vpow.pop %v2287
      %v2289 = vmul.f32 %v2203, 1.442695
      %v2290 = vpow.pop %v2289
      %v2291 = vmul.f32 %v2204, 1.442695
      %v2292 = vpow.pop %v2291
      %v2293 = vmul.f32 %v2205, 1.442695
      %v2294 = vpow.pop %v2293
      %v2295 = vmul.f32 %v2206, 1.442695
      %v2296 = vpow.pop %v2295
      %v2297 = vmul.f32 %v2207, 1.442695
      %v2298 = vpow.pop %v2297
      %v2299 = vmul.f32 %v2208, 1.442695
      %v2300 = vpow.pop %v2299
      %v2301 = vmul.f32 %v2209, 1.442695
      %v2302 = vpow.pop %v2301
      %v2303 = vmul.f32 %v2210, 1.442695
      %v2304 = vpow.pop %v2303
      %v2305 = vmul.f32 %v2211, 1.442695
      %v2306 = vpow.pop %v2305
      %v2307 = vmul.f32 %v2212, 1.442695
      %v2308 = vpow.pop %v2307
      %v2309 = vadd.f32 %v2214, 1.0
      %v2310 = vadd.f32 %v2216, 1.0
      %v2311 = vadd.f32 %v2218, 1.0
      %v2312 = vadd.f32 %v2220, 1.0
      %v2313 = vadd.f32 %v2222, 1.0
      %v2314 = vadd.f32 %v2224, 1.0
      %v2315 = vadd.f32 %v2226, 1.0
      %v2316 = vadd.f32 %v2228, 1.0
      %v2317 = vadd.f32 %v2230, 1.0
      %v2318 = vadd.f32 %v2232, 1.0
      %v2319 = vadd.f32 %v2234, 1.0
      %v2320 = vadd.f32 %v2236, 1.0
      %v2321 = vadd.f32 %v2238, 1.0
      %v2322 = vadd.f32 %v2240, 1.0
      %v2323 = vadd.f32 %v2242, 1.0
      %v2324 = vadd.f32 %v2244, 1.0
      %v2325 = vadd.f32 %v2246, 1.0
      %v2326 = vadd.f32 %v2248, 1.0
      %v2327 = vadd.f32 %v2250, 1.0
      %v2328 = vadd.f32 %v2252, 1.0
      %v2329 = vadd.f32 %v2254, 1.0
      %v2330 = vadd.f32 %v2256, 1.0
      %v2331 = vadd.f32 %v2258, 1.0
      %v2332 = vadd.f32 %v2260, 1.0
      %v2333 = vadd.f32 %v2262, 1.0
      %v2334 = vadd.f32 %v2264, 1.0
      %v2335 = vadd.f32 %v2266, 1.0
      %v2336 = vadd.f32 %v2268, 1.0
      %v2337 = vadd.f32 %v2270, 1.0
      %v2338 = vadd.f32 %v2272, 1.0
      %v2339 = vadd.f32 %v2274, 1.0
      %v2340 = vadd.f32 %v2276, 1.0
      %v2341 = vadd.f32 %v2278, 1.0
      %v2342 = vadd.f32 %v2280, 1.0
      %v2343 = vadd.f32 %v2282, 1.0
      %v2344 = vadd.f32 %v2284, 1.0
      %v2345 = vadd.f32 %v2286, 1.0
      %v2346 = vadd.f32 %v2288, 1.0
      %v2347 = vadd.f32 %v2290, 1.0
      %v2348 = vadd.f32 %v2292, 1.0
      %v2349 = vadd.f32 %v2294, 1.0
      %v2350 = vadd.f32 %v2296, 1.0
      %v2351 = vadd.f32 %v2298, 1.0
      %v2352 = vadd.f32 %v2300, 1.0
      %v2353 = vadd.f32 %v2302, 1.0
      %v2354 = vadd.f32 %v2304, 1.0
      %v2355 = vadd.f32 %v2306, 1.0
      %v2356 = vadd.f32 %v2308, 1.0
      %v2357 = vrcp.pop %v2309
      %v2358 = vmul.f32 1.0, %v2357
      %v2359 = vrcp.pop %v2310
      %v2360 = vmul.f32 1.0, %v2359
      %v2361 = vrcp.pop %v2311
      %v2362 = vmul.f32 1.0, %v2361
      %v2363 = vrcp.pop %v2312
      %v2364 = vmul.f32 1.0, %v2363
      %v2365 = vrcp.pop %v2313
      %v2366 = vmul.f32 1.0, %v2365
      %v2367 = vrcp.pop %v2314
      %v2368 = vmul.f32 1.0, %v2367
      %v2369 = vrcp.pop %v2315
      %v2370 = vmul.f32 1.0, %v2369
      %v2371 = vrcp.pop %v2316
      %v2372 = vmul.f32 1.0, %v2371
      %v2373 = vrcp.pop %v2317
      %v2374 = vmul.f32 1.0, %v2373
      %v2375 = vrcp.pop %v2318
      %v2376 = vmul.f32 1.0, %v2375
      %v2377 = vrcp.pop %v2319
      %v2378 = vmul.f32 1.0, %v2377
      %v2379 = vrcp.pop %v2320
      %v2380 = vmul.f32 1.0, %v2379
      %v2381 = vrcp.pop %v2321
      %v2382 = vmul.f32 1.0, %v2381
      %v2383 = vrcp.pop %v2322
      %v2384 = vmul.f32 1.0, %v2383
      %v2385 = vrcp.pop %v2323
      %v2386 = vmul.f32 1.0, %v2385
      %v2387 = vrcp.pop %v2324
      %v2388 = vmul.f32 1.0, %v2387
      %v2389 = vrcp.pop %v2325
      %v2390 = vmul.f32 1.0, %v2389
      %v2391 = vrcp.pop %v2326
      %v2392 = vmul.f32 1.0, %v2391
      %v2393 = vrcp.pop %v2327
      %v2394 = vmul.f32 1.0, %v2393
      %v2395 = vrcp.pop %v2328
      %v2396 = vmul.f32 1.0, %v2395
      %v2397 = vrcp.pop %v2329
      %v2398 = vmul.f32 1.0, %v2397
      %v2399 = vrcp.pop %v2330
      %v2400 = vmul.f32 1.0, %v2399
      %v2401 = vrcp.pop %v2331
      %v2402 = vmul.f32 1.0, %v2401
      %v2403 = vrcp.pop %v2332
      %v2404 = vmul.f32 1.0, %v2403
      %v2405 = vrcp.pop %v2333
      %v2406 = vmul.f32 1.0, %v2405
      %v2407 = vrcp.pop %v2334
      %v2408 = vmul.f32 1.0, %v2407
      %v2409 = vrcp.pop %v2335
      %v2410 = vmul.f32 1.0, %v2409
      %v2411 = vrcp.pop %v2336
      %v2412 = vmul.f32 1.0, %v2411
      %v2413 = vrcp.pop %v2337
      %v2414 = vmul.f32 1.0, %v2413
      %v2415 = vrcp.pop %v2338
      %v2416 = vmul.f32 1.0, %v2415
      %v2417 = vrcp.pop %v2339
      %v2418 = vmul.f32 1.0, %v2417
      %v2419 = vrcp.pop %v2340
      %v2420 = vmul.f32 1.0, %v2419
      %v2421 = vrcp.pop %v2341
      %v2422 = vmul.f32 1.0, %v2421
      %v2423 = vrcp.pop %v2342
      %v2424 = vmul.f32 1.0, %v2423
      %v2425 = vrcp.pop %v2343
      %v2426 = vmul.f32 1.0, %v2425
      %v2427 = vrcp.pop %v2344
      %v2428 = vmul.f32 1.0, %v2427
      %v2429 = vrcp.pop %v2345
      %v2430 = vmul.f32 1.0, %v2429
      %v2431 = vrcp.pop %v2346
      %v2432 = vmul.f32 1.0, %v2431
      %v2433 = vrcp.pop %v2347
      %v2434 = vmul.f32 1.0, %v2433
      %v2435 = vrcp.pop %v2348
      %v2436 = vmul.f32 1.0, %v2435
      %v2437 = vrcp.pop %v2349
      %v2438 = vmul.f32 1.0, %v2437
      %v2439 = vrcp.pop %v2350
      %v2440 = vmul.f32 1.0, %v2439
      %v2441 = vrcp.pop %v2351
      %v2442 = vmul.f32 1.0, %v2441
      %v2443 = vrcp.pop %v2352
      %v2444 = vmul.f32 1.0, %v2443
      %v2445 = vrcp.pop %v2353
      %v2446 = vmul.f32 1.0, %v2445
      %v2447 = vrcp.pop %v2354
      %v2448 = vmul.f32 1.0, %v2447
      %v2449 = vrcp.pop %v2355
      %v2450 = vmul.f32 1.0, %v2449
      %v2451 = vrcp.pop %v2356
      %v2452 = vmul.f32 1.0, %v2451
      %v2453 = vtanh.pop %v2149
      %v2454 = vtanh.pop %v2150
      %v2455 = vtanh.pop %v2151
      %v2456 = vtanh.pop %v2152
      %v2457 = vtanh.pop %v2153
      %v2458 = vtanh.pop %v2154
      %v2459 = vtanh.pop %v2155
      %v2460 = vtanh.pop %v2156
      %v2461 = vtanh.pop %v2157
      %v2462 = vtanh.pop %v2158
      %v2463 = vtanh.pop %v2159
      %v2464 = vtanh.pop %v2160
      %v2465 = vtanh.pop %v2161
      %v2466 = vtanh.pop %v2162
      %v2467 = vtanh.pop %v2163
      %v2468 = vtanh.pop %v2164
      %v2469 = vld [vmem:[#allocation3] sm:$0xff]
      %v2470 = vld [vmem:[#allocation3 + $0x8] sm:$0xff]
      %v2471 = vld [vmem:[#allocation3 + $0x10] sm:$0xff]
      %v2472 = vld [vmem:[#allocation3 + $0x18] sm:$0xff]
      %v2473 = vld [vmem:[#allocation3 + $0x20] sm:$0xff]
      %v2474 = vld [vmem:[#allocation3 + $0x28] sm:$0xff]
      %v2475 = vld [vmem:[#allocation3 + $0x30] sm:$0xff]
      %v2476 = vld [vmem:[#allocation3 + $0x38] sm:$0xff]
      %v2477 = vld [vmem:[#allocation3 + $0x40] sm:$0xff]
      %v2478 = vld [vmem:[#allocation3 + $0x48] sm:$0xff]
      %v2479 = vld [vmem:[#allocation3 + $0x50] sm:$0xff]
      %v2480 = vld [vmem:[#allocation3 + $0x58] sm:$0xff]
      %v2481 = vld [vmem:[#allocation3 + $0x60] sm:$0xff]
      %v2482 = vld [vmem:[#allocation3 + $0x68] sm:$0xff]
      %v2483 = vld [vmem:[#allocation3 + $0x70] sm:$0xff]
      %v2484 = vld [vmem:[#allocation3 + $0x78] sm:$0xff]
      %v2485 = vmul.f32 %v2390, %v2469
      %v2486 = vmul.f32 %v2392, %v2470
      %v2487 = vmul.f32 %v2394, %v2471
      %v2488 = vmul.f32 %v2396, %v2472
      %v2489 = vmul.f32 %v2398, %v2473
      %v2490 = vmul.f32 %v2400, %v2474
      %v2491 = vmul.f32 %v2402, %v2475
      %v2492 = vmul.f32 %v2404, %v2476
      %v2493 = vmul.f32 %v2406, %v2477
      %v2494 = vmul.f32 %v2408, %v2478
      %v2495 = vmul.f32 %v2410, %v2479
      %v2496 = vmul.f32 %v2412, %v2480
      %v2497 = vmul.f32 %v2414, %v2481
      %v2498 = vmul.f32 %v2416, %v2482
      %v2499 = vmul.f32 %v2418, %v2483
      %v2500 = vmul.f32 %v2420, %v2484
      %v2501 = vmul.f32 %v2358, %v2453
      %v2502 = vmul.f32 %v2360, %v2454
      %v2503 = vmul.f32 %v2362, %v2455
      %v2504 = vmul.f32 %v2364, %v2456
      %v2505 = vmul.f32 %v2366, %v2457
      %v2506 = vmul.f32 %v2368, %v2458
      %v2507 = vmul.f32 %v2370, %v2459
      %v2508 = vmul.f32 %v2372, %v2460
      %v2509 = vmul.f32 %v2374, %v2461
      %v2510 = vmul.f32 %v2376, %v2462
      %v2511 = vmul.f32 %v2378, %v2463
      %v2512 = vmul.f32 %v2380, %v2464
      %v2513 = vmul.f32 %v2382, %v2465
      %v2514 = vmul.f32 %v2384, %v2466
      %v2515 = vmul.f32 %v2386, %v2467
      %v2516 = vmul.f32 %v2388, %v2468
      %v2517 = vadd.f32 %v2485, %v2501
      %v2518 = vadd.f32 %v2486, %v2502
      %v2519 = vadd.f32 %v2487, %v2503
      %v2520 = vadd.f32 %v2488, %v2504
      %v2521 = vadd.f32 %v2489, %v2505
      %v2522 = vadd.f32 %v2490, %v2506
      %v2523 = vadd.f32 %v2491, %v2507
      %v2524 = vadd.f32 %v2492, %v2508
      %v2525 = vadd.f32 %v2493, %v2509
      %v2526 = vadd.f32 %v2494, %v2510
      %v2527 = vadd.f32 %v2495, %v2511
      %v2528 = vadd.f32 %v2496, %v2512
      %v2529 = vadd.f32 %v2497, %v2513
      %v2530 = vadd.f32 %v2498, %v2514
      %v2531 = vadd.f32 %v2499, %v2515
      %v2532 = vadd.f32 %v2500, %v2516
      %v2533 = vtanh.pop %v2517
      %v2534 = vtanh.pop %v2518
      %v2535 = vtanh.pop %v2519
      %v2536 = vtanh.pop %v2520
      %v2537 = vtanh.pop %v2521
      %v2538 = vtanh.pop %v2522
      %v2539 = vtanh.pop %v2523
      %v2540 = vtanh.pop %v2524
      %v2541 = vtanh.pop %v2525
      %v2542 = vtanh.pop %v2526
      %v2543 = vtanh.pop %v2527
      %v2544 = vtanh.pop %v2528
      %v2545 = vtanh.pop %v2529
      %v2546 = vtanh.pop %v2530
      %v2547 = vtanh.pop %v2531
      %v2548 = vtanh.pop %v2532
      %v2549 = vmul.f32 %v2422, %v2533
      %v2550 = vmul.f32 %v2424, %v2534
      %v2551 = vmul.f32 %v2426, %v2535
      %v2552 = vmul.f32 %v2428, %v2536
      %v2553 = vmul.f32 %v2430, %v2537
      %v2554 = vmul.f32 %v2432, %v2538
      %v2555 = vmul.f32 %v2434, %v2539
      %v2556 = vmul.f32 %v2436, %v2540
      %v2557 = vmul.f32 %v2438, %v2541
      %v2558 = vmul.f32 %v2440, %v2542
      %v2559 = vmul.f32 %v2442, %v2543
      %v2560 = vmul.f32 %v2444, %v2544
      %v2561 = vmul.f32 %v2446, %v2545
      %v2562 = vmul.f32 %v2448, %v2546
      %v2563 = vmul.f32 %v2450, %v2547
      %v2564 = vmul.f32 %v2452, %v2548
      %2565 = vst [vmem:[#allocation2] sm:$0xff] %v2549
      %2566 = vst [vmem:[#allocation2 + $0x8] sm:$0xff] %v2550
      %2567 = vst [vmem:[#allocation2 + $0x10] sm:$0xff] %v2551
      %2568 = vst [vmem:[#allocation2 + $0x18] sm:$0xff] %v2552
      %2569 = vst [vmem:[#allocation2 + $0x20] sm:$0xff] %v2553
      %2570 = vst [vmem:[#allocation2 + $0x28] sm:$0xff] %v2554
      %2571 = vst [vmem:[#allocation2 + $0x30] sm:$0xff] %v2555
      %2572 = vst [vmem:[#allocation2 + $0x38] sm:$0xff] %v2556
      %2573 = vst [vmem:[#allocation2 + $0x40] sm:$0xff] %v2557
      %2574 = vst [vmem:[#allocation2 + $0x48] sm:$0xff] %v2558
      %2575 = vst [vmem:[#allocation2 + $0x50] sm:$0xff] %v2559
      %2576 = vst [vmem:[#allocation2 + $0x58] sm:$0xff] %v2560
      %2577 = vst [vmem:[#allocation2 + $0x60] sm:$0xff] %v2561
      %2578 = vst [vmem:[#allocation2 + $0x68] sm:$0xff] %v2562
      %2579 = vst [vmem:[#allocation2 + $0x70] sm:$0xff] %v2563
      %2580 = vst [vmem:[#allocation2 + $0x78] sm:$0xff] %v2564
      %2581 = vst [vmem:[#allocation3] sm:$0xff] %v2517
      %2582 = vst [vmem:[#allocation3 + $0x8] sm:$0xff] %v2518
      %2583 = vst [vmem:[#allocation3 + $0x10] sm:$0xff] %v2519
      %2584 = vst [vmem:[#allocation3 + $0x18] sm:$0xff] %v2520
      %2585 = vst [vmem:[#allocation3 + $0x20] sm:$0xff] %v2521
      %2586 = vst [vmem:[#allocation3 + $0x28] sm:$0xff] %v2522
      %2587 = vst [vmem:[#allocation3 + $0x30] sm:$0xff] %v2523
      %2588 = vst [vmem:[#allocation3 + $0x38] sm:$0xff] %v2524
      %2589 = vst [vmem:[#allocation3 + $0x40] sm:$0xff] %v2525
      %2590 = vst [vmem:[#allocation3 + $0x48] sm:$0xff] %v2526
      %2591 = vst [vmem:[#allocation3 + $0x50] sm:$0xff] %v2527
      %2592 = vst [vmem:[#allocation3 + $0x58] sm:$0xff] %v2528
      %2593 = vst [vmem:[#allocation3 + $0x60] sm:$0xff] %v2529
      %2594 = vst [vmem:[#allocation3 + $0x68] sm:$0xff] %v2530
      %2595 = vst [vmem:[#allocation3 + $0x70] sm:$0xff] %v2531
      %2596 = vst [vmem:[#allocation3 + $0x78] sm:$0xff] %v2532
      %2597 = vst [vmem:[%s273] sm:$0xff] %v2549
      %2598 = vst [vmem:[%s273 + $0x8] sm:$0xff] %v2550
      %2599 = vst [vmem:[%s273 + $0x10] sm:$0xff] %v2551
      %2600 = vst [vmem:[%s273 + $0x18] sm:$0xff] %v2552
      %2601 = vst [vmem:[%s273 + $0x20] sm:$0xff] %v2553
      %2602 = vst [vmem:[%s273 + $0x28] sm:$0xff] %v2554
      %2603 = vst [vmem:[%s273 + $0x30] sm:$0xff] %v2555
      %2604 = vst [vmem:[%s273 + $0x38] sm:$0xff] %v2556
      %2605 = vst [vmem:[%s273 + $0x40] sm:$0xff] %v2557
      %2606 = vst [vmem:[%s273 + $0x48] sm:$0xff] %v2558
      %2607 = vst [vmem:[%s273 + $0x50] sm:$0xff] %v2559
      %2608 = vst [vmem:[%s273 + $0x58] sm:$0xff] %v2560
      %2609 = vst [vmem:[%s273 + $0x60] sm:$0xff] %v2561
      %2610 = vst [vmem:[%s273 + $0x68] sm:$0xff] %v2562
      %2611 = vst [vmem:[%s273 + $0x70] sm:$0xff] %v2563
      %2612 = vst [vmem:[%s273 + $0x78] sm:$0xff] %v2564
      %2613 = vst [vmem:[%s6] sm:$0xff] %v2549
      %2614 = vst [vmem:[%s6 + $0x8] sm:$0xff] %v2550
      %2615 = vst [vmem:[%s6 + $0x10] sm:$0xff] %v2551
      %2616 = vst [vmem:[%s6 + $0x18] sm:$0xff] %v2552
      %2617 = vst [vmem:[%s6 + $0x20] sm:$0xff] %v2553
      %2618 = vst [vmem:[%s6 + $0x28] sm:$0xff] %v2554
      %2619 = vst [vmem:[%s6 + $0x30] sm:$0xff] %v2555
      %2620 = vst [vmem:[%s6 + $0x38] sm:$0xff] %v2556
      %2621 = vst [vmem:[%s6 + $0x40] sm:$0xff] %v2557
      %2622 = vst [vmem:[%s6 + $0x48] sm:$0xff] %v2558
      %2623 = vst [vmem:[%s6 + $0x50] sm:$0xff] %v2559
      %2624 = vst [vmem:[%s6 + $0x58] sm:$0xff] %v2560
      %2625 = vst [vmem:[%s6 + $0x60] sm:$0xff] %v2561
      %2626 = vst [vmem:[%s6 + $0x68] sm:$0xff] %v2562
      %2627 = vst [vmem:[%s6 + $0x70] sm:$0xff] %v2563
      %2628 = vst [vmem:[%s6 + $0x78] sm:$0xff] %v2564
      %2629 = vst [vmem:[%s7] sm:$0xff] %v2517
      %2630 = vst [vmem:[%s7 + $0x8] sm:$0xff] %v2518
      %2631 = vst [vmem:[%s7 + $0x10] sm:$0xff] %v2519
      %2632 = vst [vmem:[%s7 + $0x18] sm:$0xff] %v2520
      %2633 = vst [vmem:[%s7 + $0x20] sm:$0xff] %v2521
      %2634 = vst [vmem:[%s7 + $0x28] sm:$0xff] %v2522
      %2635 = vst [vmem:[%s7 + $0x30] sm:$0xff] %v2523
      %2636 = vst [vmem:[%s7 + $0x38] sm:$0xff] %v2524
      %2637 = vst [vmem:[%s7 + $0x40] sm:$0xff] %v2525
      %2638 = vst [vmem:[%s7 + $0x48] sm:$0xff] %v2526
      %2639 = vst [vmem:[%s7 + $0x50] sm:$0xff] %v2527
      %2640 = vst [vmem:[%s7 + $0x58] sm:$0xff] %v2528
      %2641 = vst [vmem:[%s7 + $0x60] sm:$0xff] %v2529
      %2642 = vst [vmem:[%s7 + $0x68] sm:$0xff] %v2530
      %2643 = vst [vmem:[%s7 + $0x70] sm:$0xff] %v2531
      %2644 = vst [vmem:[%s7 + $0x78] sm:$0xff] %v2532
      %p2645 = scmp.lt.s32.totalorder %s19, 3
      %s2646 = scalar_select %p2645, %s19, 3
      %s2647 = smul.addr %s2646, 16
      %s2648 = smul.addr %s2647, 8
      %s2649 = scalar_lea.vmem %s5, %s2648
      // Predicated region
      $region45: #{ssta_forward.6} parent=39 // pred_check
        %p2650 = pneg %p147
      $region46: #{ssta_forward.6} parent=39 // pred_check_branch
        %2652 = sbr.rel (%p2650) target = $region48
      $region47: #{ssta_forward.6} parent=39 // pred_region
        _
      $region48: #{ssta_forward.6} parent=39 // pred_fallthru
        _
      // Predicated region
      $region49: #{ssta_forward.6} parent=39 // pred_check
        %p2653 = pneg %p168
      $region50: #{ssta_forward.6} parent=39 // pred_check_branch
        %2655 = sbr.rel (%p2653) target = $region52
      $region51: #{ssta_forward.6} parent=39 // pred_region
        _
      $region52: #{ssta_forward.6} parent=39 // pred_fallthru
        _
      // Predicated region
      $region53: #{ssta_forward.6} parent=39 // pred_check
        %p2656 = pneg %p189
      $region54: #{ssta_forward.6} parent=39 // pred_check_branch
        %2658 = sbr.rel (%p2656) target = $region56
      $region55: #{ssta_forward.6} parent=39 // pred_region
        _
      $region56: #{ssta_forward.6} parent=39 // pred_fallthru
        _
      // Predicated region
      $region57: #{ssta_forward.6} parent=39 // pred_check
        %p2659 = pneg %p168
      $region58: #{ssta_forward.6} parent=39 // pred_check_branch
        %2661 = sbr.rel (%p2659) target = $region60
      $region59: #{ssta_forward.6} parent=39 // pred_region
        _
      $region60: #{ssta_forward.6} parent=39 // pred_fallthru
        _
      // Predicated region
      $region61: #{ssta_forward.6} parent=39 // pred_check
        %p2662 = pneg %p189
      $region62: #{ssta_forward.6} parent=39 // pred_check_branch
        %2664 = sbr.rel (%p2662) target = $region64
      $region63: #{ssta_forward.6} parent=39 // pred_region
        _
      $region64: #{ssta_forward.6} parent=39 // pred_fallthru
        _
    $region40: #{ssta_forward.6} parent=5 // pred_fallthru
      _
    %p2665 = scmp.le.s32.totalorder 2, %s14
    // Predicated region
    $region65: #{ssta_forward.6} parent=5 // pred_check
      %p2666 = pneg %p2665
    $region66: #{ssta_forward.6} parent=5 // pred_check_branch
      %2668 = sbr.rel (%p2666) target = $region68
    $region67: #{ssta_forward.6} parent=5 // pred_region
      %s2669 = ssub.s32 %s14, 2
      // Predicated region
      $region69: #{ssta_forward.6} parent=67 // pred_check
        %p2670 = pneg %p153
      $region70: #{ssta_forward.6} parent=67 // pred_check_branch
        %2672 = sbr.rel (%p2670) target = $region72
      $region71: #{ssta_forward.6} parent=67 // pred_region
        %p2673 = scmp.lt.s32.totalorder %s20, 3
        %s2674 = scalar_select %p2673, %s20, 3
        %s2675 = smul.addr %s2674, 16
        %s2676 = smul.addr %s2675, 8
        %s2677 = scalar_lea.vmem %s5, %s2676
      $region72: #{ssta_forward.6} parent=67 // pred_fallthru
        _
    $region68: #{ssta_forward.6} parent=5 // pred_fallthru
      _
  $region6: #{ssta_forward.6} parent=0 // loop_footer
    %s18 = sadd.s32 1, %s14
  $region7: #{ssta_forward.6} parent=0 // loop_footer_branch
    %13 = sbr.rel target = $region3
  $region8: #{ssta_forward.6} parent=0 // loop_exit
    _

// kernel: ssta_forward.7
$region0: #{ssta_forward.7}
  #allocation0 [shape = 'u32[]', space=smem, size = 0x4, offset = 0x4, fixed_abs, tag = 'smem constant byte address 0x4 - core index']
  #allocation1 [shape = 'u32[144,128]{1,0:T(1,128)}', space=vmem, size = 0x12000, scoped, tag = 'internal scratch']
  %s0 = inlined_call_operand.vmem [shape: f32[2048,384], index: 0, kind: input, shape index: {}]
  %s1 = inlined_call_operand.vmem [shape: f32[384,128], index: 1, kind: input, shape index: {}]
  %s2 = inlined_call_operand.vmem [shape: f32[1,128], index: 2, kind: input, shape index: {}]
  %s3 = inlined_call_operand.vmem [shape: f32[2048,128], index: 3, kind: output, shape index: {}]
  %s4 = sld [smem:[#allocation0]]
  $region45: #{ssta_forward.7} parent=0
    _
  %s6 = ssub.s32 1, %s4
  %s7 = scalar_select 0, %s6, %s4
  loop: start=0, step=1, limit=6
  $region2: #{ssta_forward.7} parent=0 // loop_pre_header
    _
  $region3: #{ssta_forward.7} parent=0 // loop_header
    %s9 = sphi 0, %s13
    %p10 = scmp.ge.s32.totalorder %s9, 6
    %s19 = sphi 0, %s21
    %s22 = sphi 0, %s19
    %s23 = sphi 0, %s22
    %s39 = sphi 0, %s23
    %s43 = sphi 0, %s43
    %s45 = sphi 0, %s43
    %s46 = sphi 0, %s45
    %s60 = sphi 0, %s46
    %s64 = sphi 0, %s64
    %s66 = sphi 0, %s64
    %s67 = sphi 0, %s66
    %s81 = sphi 0, %s67
    %s87 = sphi 0, %s89
    %s90 = sphi 0, %s87
    %s91 = sphi 0, %s90
    %s107 = sphi 0, %s91
  $region4: #{ssta_forward.7} parent=0 // loop_header_branch
    %12 = sbr.rel (%p10) target = $region8
  $region5: #{ssta_forward.7} parent=0 // loop_body
    %s14 = ssub.s32 %s9, 1
    %s15 = ssub.s32 %s9, 2
    %s16 = sadd.s32 %s9, 1
    %s17 = ssub.s32 %s9, %s16
    %p18 = scmp.eq.s32.totalorder %s17, 0
    %s20 = sadd.s32 %s19, 1
    %s21 = scalar_select %p18, %s19, %s20
    %p24 = pneg %p18
    %p25 = scmp.eq.s32.totalorder %s9, 3
    %p26 = por %p24, %p25
    %p27 = scmp.ne.s32.totalorder %s19, %s22
    %p28 = scmp.eq.s32.totalorder %s9, 0
    %p29 = por %p27, %p28
    %p30 = scmp.ne.s32.totalorder %s19, %s22
    %p31 = scmp.eq.s32.totalorder %s14, 3
    %p32 = por %p30, %p31
    %p33 = scmp.ne.s32.totalorder %s22, %s23
    %p34 = scmp.eq.s32.totalorder %s14, 0
    %p35 = por %p33, %p34
    %p36 = scmp.ne.s32.totalorder %s22, %s23
    %p37 = scmp.eq.s32.totalorder %s15, 3
    %p38 = por %p36, %p37
    %p40 = scmp.ne.s32.totalorder %s23, %s39
    %p41 = scmp.eq.s32.totalorder %s15, 0
    %p42 = por %p40, %p41
    %s44 = sadd.s32 %s43, 1
    %p47 = scmp.eq.s32.totalorder %s9, 3
    %p48 = scmp.ne.s32.totalorder %s43, %s45
    %p49 = scmp.eq.s32.totalorder %s9, 0
    %p50 = por %p48, %p49
    %p51 = scmp.ne.s32.totalorder %s43, %s45
    %p52 = scmp.eq.s32.totalorder %s14, 3
    %p53 = por %p51, %p52
    %p54 = scmp.ne.s32.totalorder %s45, %s46
    %p55 = scmp.eq.s32.totalorder %s14, 0
    %p56 = por %p54, %p55
    %p57 = scmp.ne.s32.totalorder %s45, %s46
    %p58 = scmp.eq.s32.totalorder %s15, 3
    %p59 = por %p57, %p58
    %p61 = scmp.ne.s32.totalorder %s46, %s60
    %p62 = scmp.eq.s32.totalorder %s15, 0
    %p63 = por %p61, %p62
    %s65 = sadd.s32 %s64, 1
    %p68 = scmp.eq.s32.totalorder %s9, 3
    %p69 = scmp.ne.s32.totalorder %s64, %s66
    %p70 = scmp.eq.s32.totalorder %s9, 0
    %p71 = por %p69, %p70
    %p72 = scmp.ne.s32.totalorder %s64, %s66
    %p73 = scmp.eq.s32.totalorder %s14, 3
    %p74 = por %p72, %p73
    %p75 = scmp.ne.s32.totalorder %s66, %s67
    %p76 = scmp.eq.s32.totalorder %s14, 0
    %p77 = por %p75, %p76
    %p78 = scmp.ne.s32.totalorder %s66, %s67
    %p79 = scmp.eq.s32.totalorder %s15, 3
    %p80 = por %p78, %p79
    %p82 = scmp.ne.s32.totalorder %s67, %s81
    %p83 = scmp.eq.s32.totalorder %s15, 0
    %p84 = por %p82, %p83
    %s85 = ssub.s32 %s9, %s16
    %p86 = scmp.eq.s32.totalorder %s85, 0
    %s88 = sadd.s32 %s87, 1
    %s89 = scalar_select %p86, %s87, %s88
    %p92 = pneg %p86
    %p93 = scmp.eq.s32.totalorder %s9, 3
    %p94 = por %p92, %p93
    %p95 = scmp.ne.s32.totalorder %s87, %s90
    %p96 = scmp.eq.s32.totalorder %s9, 0
    %p97 = por %p95, %p96
    %p98 = scmp.ne.s32.totalorder %s87, %s90
    %p99 = scmp.eq.s32.totalorder %s14, 3
    %p100 = por %p98, %p99
    %p101 = scmp.ne.s32.totalorder %s90, %s91
    %p102 = scmp.eq.s32.totalorder %s14, 0
    %p103 = por %p101, %p102
    %p104 = scmp.ne.s32.totalorder %s90, %s91
    %p105 = scmp.eq.s32.totalorder %s15, 3
    %p106 = por %p104, %p105
    %p108 = scmp.ne.s32.totalorder %s91, %s107
    %p109 = scmp.eq.s32.totalorder %s15, 0
    %p110 = por %p108, %p109
    %p111 = scmp.le.s32.totalorder 1, %s9
    %p112 = scmp.lt.s32.totalorder %s9, 5
    %p113 = pnand %p111, %p112
    %p114 = pneg %p113
    // Predicated region
    $region9: #{ssta_forward.7} parent=5 // pred_check
      _
    $region10: #{ssta_forward.7} parent=5 // pred_check_branch
      %116 = sbr.rel (%p113) target = $region12
    $region11: #{ssta_forward.7} parent=5 // pred_region
      %s117 = ssub.s32 %s9, 1
      // Predicated region
      $region13: #{ssta_forward.7} parent=11 // pred_check
        %p118 = pneg %p56
      $region14: #{ssta_forward.7} parent=11 // pred_check_branch
        %120 = sbr.rel (%p118) target = $region16
      $region15: #{ssta_forward.7} parent=11 // pred_region
        _
      $region16: #{ssta_forward.7} parent=11 // pred_fallthru
        _
      // Predicated region
      $region17: #{ssta_forward.7} parent=11 // pred_check
        %p121 = pneg %p77
      $region18: #{ssta_forward.7} parent=11 // pred_check_branch
        %123 = sbr.rel (%p121) target = $region20
      $region19: #{ssta_forward.7} parent=11 // pred_region
        _
      $region20: #{ssta_forward.7} parent=11 // pred_fallthru
        _
    $region12: #{ssta_forward.7} parent=5 // pred_fallthru
      _
    %p124 = scmp.lt.s32.totalorder %s9, 4
    // Predicated region
    $region21: #{ssta_forward.7} parent=5 // pred_check
      %p125 = pneg %p124
    $region22: #{ssta_forward.7} parent=5 // pred_check_branch
      %127 = sbr.rel (%p125) target = $region24
    $region23: #{ssta_forward.7} parent=5 // pred_region
      // Predicated region
      $region25: #{ssta_forward.7} parent=23 // pred_check
        %p128 = pneg %p29
      $region26: #{ssta_forward.7} parent=23 // pred_check_branch
        %130 = sbr.rel (%p128) target = $region28
      $region27: #{ssta_forward.7} parent=23 // pred_region
        %s131 = smul.u32 64, %s9
        %p132 = scmp.lt.s32.totalorder %s131, 255
        %s133 = scalar_select %p132, %s131, 255
        %s134 = smul.addr %s133, 3
        %s135 = smul.addr %s134, 8
        %s136 = scalar_lea.vmem %s0, %s135
        %s137 = smul.u32 64, %s9
      $region28: #{ssta_forward.7} parent=23 // pred_fallthru
        _
    $region24: #{ssta_forward.7} parent=5 // pred_fallthru
      _
    %p138 = scmp.le.s32.totalorder 1, %s9
    %p139 = scmp.lt.s32.totalorder %s9, 5
    %p140 = pnand %p138, %p139
    %p141 = pneg %p140
    // Predicated region
    $region29: #{ssta_forward.7} parent=5 // pred_check
      _
    $region30: #{ssta_forward.7} parent=5 // pred_check_branch
      %143 = sbr.rel (%p140) target = $region32
    $region31: #{ssta_forward.7} parent=5 // pred_region
      %s144 = ssub.s32 %s9, 1
      %s145 = smul.u32 64, %s14
      %p146 = scmp.lt.s32.totalorder %s145, 255
      %s147 = scalar_select %p146, %s145, 255
      %s148 = smul.addr %s147, 3
      %s149 = smul.addr %s148, 8
      %s150 = scalar_lea.vmem %s0, %s149
      %p151 = pneg %p35
      %p152 = pneg %p32
      %p153 = pneg %p56
      %p154 = pneg %p53
      %p155 = pneg %p77
      %p156 = pneg %p74
      %p157 = pneg %p103
      %p158 = pneg %p100
      %s159 = smul.u32 64, %s14
      %p160 = scmp.lt.s32.totalorder %s159, 255
      %s161 = scalar_select %p160, %s159, 255
      %s162 = smul.addr %s161, 8
      %s163 = scalar_lea.vmem %s3, %s162
      %s164 = smul.u32 64, %s14
      %p165 = scmp.lt.s32.totalorder %s164, 255
      %s166 = scalar_select %p165, %s164, 255
      %s167 = smul.addr %s166, 3
      %s168 = smul.addr %s167, 8
      %s169 = scalar_lea.vmem %s0, %s168
      %s170 = smul.u32 64, %s14
      %s171 = smul.u32 64, %s14
      %p172 = scmp.lt.s32.totalorder %s171, 255
      %s173 = scalar_select %p172, %s171, 255
      %s174 = smul.addr %s173, 8
      %s175 = scalar_lea.vmem %s3, %s174
      %s176 = smul.u32 64, %s14
      %v177 = vld [vmem:[%s169] sm:$0xff]
      %v178 = vld [vmem:[%s169 + $0x8] sm:$0xff]
      %v179 = vld [vmem:[%s169 + $0x10] sm:$0xff]
      %v180 = vld [vmem:[%s169 + $0x18] sm:$0xff]
      %v181 = vld [vmem:[%s169 + $0x20] sm:$0xff]
      %v182 = vld [vmem:[%s169 + $0x28] sm:$0xff]
      %v183 = vld [vmem:[%s169 + $0x30] sm:$0xff]
      %v184 = vld [vmem:[%s169 + $0x38] sm:$0xff]
      %v185 = vld [vmem:[%s169 + $0x40] sm:$0xff]
      %v186 = vld [vmem:[%s169 + $0x48] sm:$0xff]
      %v187 = vld [vmem:[%s169 + $0x50] sm:$0xff]
      %v188 = vld [vmem:[%s169 + $0x58] sm:$0xff]
      %v189 = vld [vmem:[%s169 + $0x60] sm:$0xff]
      %v190 = vld [vmem:[%s169 + $0x68] sm:$0xff]
      %v191 = vld [vmem:[%s169 + $0x70] sm:$0xff]
      %v192 = vld [vmem:[%s169 + $0x78] sm:$0xff]
      %v193 = vld [vmem:[%s169 + $0x80] sm:$0xff]
      %v194 = vld [vmem:[%s169 + $0x88] sm:$0xff]
      %v195 = vld [vmem:[%s169 + $0x90] sm:$0xff]
      %v196 = vld [vmem:[%s169 + $0x98] sm:$0xff]
      %v197 = vld [vmem:[%s169 + $0xa0] sm:$0xff]
      %v198 = vld [vmem:[%s169 + $0xa8] sm:$0xff]
      %v199 = vld [vmem:[%s169 + $0xb0] sm:$0xff]
      %v200 = vld [vmem:[%s169 + $0xb8] sm:$0xff]
      %v201 = vld [vmem:[%s169 + $0xc0] sm:$0xff]
      %v202 = vld [vmem:[%s169 + $0xc8] sm:$0xff]
      %v203 = vld [vmem:[%s169 + $0xd0] sm:$0xff]
      %v204 = vld [vmem:[%s169 + $0xd8] sm:$0xff]
      %v205 = vld [vmem:[%s169 + $0xe0] sm:$0xff]
      %v206 = vld [vmem:[%s169 + $0xe8] sm:$0xff]
      %v207 = vld [vmem:[%s169 + $0xf0] sm:$0xff]
      %v208 = vld [vmem:[%s169 + $0xf8] sm:$0xff]
      %v209 = vld [vmem:[%s169 + $0x100] sm:$0xff]
      %v210 = vld [vmem:[%s169 + $0x108] sm:$0xff]
      %v211 = vld [vmem:[%s169 + $0x110] sm:$0xff]
      %v212 = vld [vmem:[%s169 + $0x118] sm:$0xff]
      %v213 = vld [vmem:[%s169 + $0x120] sm:$0xff]
      %v214 = vld [vmem:[%s169 + $0x128] sm:$0xff]
      %v215 = vld [vmem:[%s169 + $0x130] sm:$0xff]
      %v216 = vld [vmem:[%s169 + $0x138] sm:$0xff]
      %v217 = vld [vmem:[%s169 + $0x140] sm:$0xff]
      %v218 = vld [vmem:[%s169 + $0x148] sm:$0xff]
      %v219 = vld [vmem:[%s169 + $0x150] sm:$0xff]
      %v220 = vld [vmem:[%s169 + $0x158] sm:$0xff]
      %v221 = vld [vmem:[%s169 + $0x160] sm:$0xff]
      %v222 = vld [vmem:[%s169 + $0x168] sm:$0xff]
      %v223 = vld [vmem:[%s169 + $0x170] sm:$0xff]
      %v224 = vld [vmem:[%s169 + $0x178] sm:$0xff]
      %v225 = vld [vmem:[%s169 + $0x180] sm:$0xff]
      %v226 = vld [vmem:[%s169 + $0x188] sm:$0xff]
      %v227 = vld [vmem:[%s169 + $0x190] sm:$0xff]
      %v228 = vld [vmem:[%s169 + $0x198] sm:$0xff]
      %v229 = vld [vmem:[%s169 + $0x1a0] sm:$0xff]
      %v230 = vld [vmem:[%s169 + $0x1a8] sm:$0xff]
      %v231 = vld [vmem:[%s169 + $0x1b0] sm:$0xff]
      %v232 = vld [vmem:[%s169 + $0x1b8] sm:$0xff]
      %v233 = vld [vmem:[%s169 + $0x1c0] sm:$0xff]
      %v234 = vld [vmem:[%s169 + $0x1c8] sm:$0xff]
      %v235 = vld [vmem:[%s169 + $0x1d0] sm:$0xff]
      %v236 = vld [vmem:[%s169 + $0x1d8] sm:$0xff]
      %v237 = vld [vmem:[%s169 + $0x1e0] sm:$0xff]
      %v238 = vld [vmem:[%s169 + $0x1e8] sm:$0xff]
      %v239 = vld [vmem:[%s169 + $0x1f0] sm:$0xff]
      %v240 = vld [vmem:[%s169 + $0x1f8] sm:$0xff]
      %v241 = vld [vmem:[%s169 + $0x200] sm:$0xff]
      %v242 = vld [vmem:[%s169 + $0x208] sm:$0xff]
      %v243 = vld [vmem:[%s169 + $0x210] sm:$0xff]
      %v244 = vld [vmem:[%s169 + $0x218] sm:$0xff]
      %v245 = vld [vmem:[%s169 + $0x220] sm:$0xff]
      %v246 = vld [vmem:[%s169 + $0x228] sm:$0xff]
      %v247 = vld [vmem:[%s169 + $0x230] sm:$0xff]
      %v248 = vld [vmem:[%s169 + $0x238] sm:$0xff]
      %v249 = vld [vmem:[%s169 + $0x240] sm:$0xff]
      %v250 = vld [vmem:[%s169 + $0x248] sm:$0xff]
      %v251 = vld [vmem:[%s169 + $0x250] sm:$0xff]
      %v252 = vld [vmem:[%s169 + $0x258] sm:$0xff]
      %v253 = vld [vmem:[%s169 + $0x260] sm:$0xff]
      %v254 = vld [vmem:[%s169 + $0x268] sm:$0xff]
      %v255 = vld [vmem:[%s169 + $0x270] sm:$0xff]
      %v256 = vld [vmem:[%s169 + $0x278] sm:$0xff]
      %v257 = vld [vmem:[%s169 + $0x280] sm:$0xff]
      %v258 = vld [vmem:[%s169 + $0x288] sm:$0xff]
      %v259 = vld [vmem:[%s169 + $0x290] sm:$0xff]
      %v260 = vld [vmem:[%s169 + $0x298] sm:$0xff]
      %v261 = vld [vmem:[%s169 + $0x2a0] sm:$0xff]
      %v262 = vld [vmem:[%s169 + $0x2a8] sm:$0xff]
      %v263 = vld [vmem:[%s169 + $0x2b0] sm:$0xff]
      %v264 = vld [vmem:[%s169 + $0x2b8] sm:$0xff]
      %v265 = vld [vmem:[%s169 + $0x2c0] sm:$0xff]
      %v266 = vld [vmem:[%s169 + $0x2c8] sm:$0xff]
      %v267 = vld [vmem:[%s169 + $0x2d0] sm:$0xff]
      %v268 = vld [vmem:[%s169 + $0x2d8] sm:$0xff]
      %v269 = vld [vmem:[%s169 + $0x2e0] sm:$0xff]
      %v270 = vld [vmem:[%s169 + $0x2e8] sm:$0xff]
      %v271 = vld [vmem:[%s169 + $0x2f0] sm:$0xff]
      %v272 = vld [vmem:[%s169 + $0x2f8] sm:$0xff]
      %v273 = vld [vmem:[%s169 + $0x300] sm:$0xff]
      %v274 = vld [vmem:[%s169 + $0x308] sm:$0xff]
      %v275 = vld [vmem:[%s169 + $0x310] sm:$0xff]
      %v276 = vld [vmem:[%s169 + $0x318] sm:$0xff]
      %v277 = vld [vmem:[%s169 + $0x320] sm:$0xff]
      %v278 = vld [vmem:[%s169 + $0x328] sm:$0xff]
      %v279 = vld [vmem:[%s169 + $0x330] sm:$0xff]
      %v280 = vld [vmem:[%s169 + $0x338] sm:$0xff]
      %v281 = vld [vmem:[%s169 + $0x340] sm:$0xff]
      %v282 = vld [vmem:[%s169 + $0x348] sm:$0xff]
      %v283 = vld [vmem:[%s169 + $0x350] sm:$0xff]
      %v284 = vld [vmem:[%s169 + $0x358] sm:$0xff]
      %v285 = vld [vmem:[%s169 + $0x360] sm:$0xff]
      %v286 = vld [vmem:[%s169 + $0x368] sm:$0xff]
      %v287 = vld [vmem:[%s169 + $0x370] sm:$0xff]
      %v288 = vld [vmem:[%s169 + $0x378] sm:$0xff]
      %v289 = vld [vmem:[%s169 + $0x380] sm:$0xff]
      %v290 = vld [vmem:[%s169 + $0x388] sm:$0xff]
      %v291 = vld [vmem:[%s169 + $0x390] sm:$0xff]
      %v292 = vld [vmem:[%s169 + $0x398] sm:$0xff]
      %v293 = vld [vmem:[%s169 + $0x3a0] sm:$0xff]
      %v294 = vld [vmem:[%s169 + $0x3a8] sm:$0xff]
      %v295 = vld [vmem:[%s169 + $0x3b0] sm:$0xff]
      %v296 = vld [vmem:[%s169 + $0x3b8] sm:$0xff]
      %v297 = vld [vmem:[%s169 + $0x3c0] sm:$0xff]
      %v298 = vld [vmem:[%s169 + $0x3c8] sm:$0xff]
      %v299 = vld [vmem:[%s169 + $0x3d0] sm:$0xff]
      %v300 = vld [vmem:[%s169 + $0x3d8] sm:$0xff]
      %v301 = vld [vmem:[%s169 + $0x3e0] sm:$0xff]
      %v302 = vld [vmem:[%s169 + $0x3e8] sm:$0xff]
      %v303 = vld [vmem:[%s169 + $0x3f0] sm:$0xff]
      %v304 = vld [vmem:[%s169 + $0x3f8] sm:$0xff]
      %v305 = vld [vmem:[%s169 + $0x400] sm:$0xff]
      %v306 = vld [vmem:[%s169 + $0x408] sm:$0xff]
      %v307 = vld [vmem:[%s169 + $0x410] sm:$0xff]
      %v308 = vld [vmem:[%s169 + $0x418] sm:$0xff]
      %v309 = vld [vmem:[%s169 + $0x420] sm:$0xff]
      %v310 = vld [vmem:[%s169 + $0x428] sm:$0xff]
      %v311 = vld [vmem:[%s169 + $0x430] sm:$0xff]
      %v312 = vld [vmem:[%s169 + $0x438] sm:$0xff]
      %v313 = vld [vmem:[%s169 + $0x440] sm:$0xff]
      %v314 = vld [vmem:[%s169 + $0x448] sm:$0xff]
      %v315 = vld [vmem:[%s169 + $0x450] sm:$0xff]
      %v316 = vld [vmem:[%s169 + $0x458] sm:$0xff]
      %v317 = vld [vmem:[%s169 + $0x460] sm:$0xff]
      %v318 = vld [vmem:[%s169 + $0x468] sm:$0xff]
      %v319 = vld [vmem:[%s169 + $0x470] sm:$0xff]
      %v320 = vld [vmem:[%s169 + $0x478] sm:$0xff]
      %v321 = vld [vmem:[%s169 + $0x480] sm:$0xff]
      %v322 = vld [vmem:[%s169 + $0x488] sm:$0xff]
      %v323 = vld [vmem:[%s169 + $0x490] sm:$0xff]
      %v324 = vld [vmem:[%s169 + $0x498] sm:$0xff]
      %v325 = vld [vmem:[%s169 + $0x4a0] sm:$0xff]
      %v326 = vld [vmem:[%s169 + $0x4a8] sm:$0xff]
      %v327 = vld [vmem:[%s169 + $0x4b0] sm:$0xff]
      %v328 = vld [vmem:[%s169 + $0x4b8] sm:$0xff]
      %v329 = vld [vmem:[%s169 + $0x4c0] sm:$0xff]
      %v330 = vld [vmem:[%s169 + $0x4c8] sm:$0xff]
      %v331 = vld [vmem:[%s169 + $0x4d0] sm:$0xff]
      %v332 = vld [vmem:[%s169 + $0x4d8] sm:$0xff]
      %v333 = vld [vmem:[%s169 + $0x4e0] sm:$0xff]
      %v334 = vld [vmem:[%s169 + $0x4e8] sm:$0xff]
      %v335 = vld [vmem:[%s169 + $0x4f0] sm:$0xff]
      %v336 = vld [vmem:[%s169 + $0x4f8] sm:$0xff]
      %v337 = vld [vmem:[%s169 + $0x500] sm:$0xff]
      %v338 = vld [vmem:[%s169 + $0x508] sm:$0xff]
      %v339 = vld [vmem:[%s169 + $0x510] sm:$0xff]
      %v340 = vld [vmem:[%s169 + $0x518] sm:$0xff]
      %v341 = vld [vmem:[%s169 + $0x520] sm:$0xff]
      %v342 = vld [vmem:[%s169 + $0x528] sm:$0xff]
      %v343 = vld [vmem:[%s169 + $0x530] sm:$0xff]
      %v344 = vld [vmem:[%s169 + $0x538] sm:$0xff]
      %v345 = vld [vmem:[%s169 + $0x540] sm:$0xff]
      %v346 = vld [vmem:[%s169 + $0x548] sm:$0xff]
      %v347 = vld [vmem:[%s169 + $0x550] sm:$0xff]
      %v348 = vld [vmem:[%s169 + $0x558] sm:$0xff]
      %v349 = vld [vmem:[%s169 + $0x560] sm:$0xff]
      %v350 = vld [vmem:[%s169 + $0x568] sm:$0xff]
      %v351 = vld [vmem:[%s169 + $0x570] sm:$0xff]
      %v352 = vld [vmem:[%s169 + $0x578] sm:$0xff]
      %v353 = vld [vmem:[%s169 + $0x580] sm:$0xff]
      %v354 = vld [vmem:[%s169 + $0x588] sm:$0xff]
      %v355 = vld [vmem:[%s169 + $0x590] sm:$0xff]
      %v356 = vld [vmem:[%s169 + $0x598] sm:$0xff]
      %v357 = vld [vmem:[%s169 + $0x5a0] sm:$0xff]
      %v358 = vld [vmem:[%s169 + $0x5a8] sm:$0xff]
      %v359 = vld [vmem:[%s169 + $0x5b0] sm:$0xff]
      %v360 = vld [vmem:[%s169 + $0x5b8] sm:$0xff]
      %v361 = vld [vmem:[%s169 + $0x5c0] sm:$0xff]
      %v362 = vld [vmem:[%s169 + $0x5c8] sm:$0xff]
      %v363 = vld [vmem:[%s169 + $0x5d0] sm:$0xff]
      %v364 = vld [vmem:[%s169 + $0x5d8] sm:$0xff]
      %v365 = vld [vmem:[%s169 + $0x5e0] sm:$0xff]
      %v366 = vld [vmem:[%s169 + $0x5e8] sm:$0xff]
      %v367 = vld [vmem:[%s169 + $0x5f0] sm:$0xff]
      %v368 = vld [vmem:[%s169 + $0x5f8] sm:$0xff]
      %v369 = vld [vmem:[%s1] sm:$0xff]
      %v370 = vld [vmem:[%s1 + $0x8] sm:$0xff]
      %v371 = vld [vmem:[%s1 + $0x10] sm:$0xff]
      %v372 = vld [vmem:[%s1 + $0x18] sm:$0xff]
      %v373 = vld [vmem:[%s1 + $0x20] sm:$0xff]
      %v374 = vld [vmem:[%s1 + $0x28] sm:$0xff]
      %v375 = vld [vmem:[%s1 + $0x30] sm:$0xff]
      %v376 = vld [vmem:[%s1 + $0x38] sm:$0xff]
      %v377 = vld [vmem:[%s1 + $0x40] sm:$0xff]
      %v378 = vld [vmem:[%s1 + $0x48] sm:$0xff]
      %v379 = vld [vmem:[%s1 + $0x50] sm:$0xff]
      %v380 = vld [vmem:[%s1 + $0x58] sm:$0xff]
      %v381 = vld [vmem:[%s1 + $0x60] sm:$0xff]
      %v382 = vld [vmem:[%s1 + $0x68] sm:$0xff]
      %v383 = vld [vmem:[%s1 + $0x70] sm:$0xff]
      %v384 = vld [vmem:[%s1 + $0x78] sm:$0xff]
      %v385 = vld [vmem:[%s1 + $0x80] sm:$0xff]
      %v386 = vld [vmem:[%s1 + $0x88] sm:$0xff]
      %v387 = vld [vmem:[%s1 + $0x90] sm:$0xff]
      %v388 = vld [vmem:[%s1 + $0x98] sm:$0xff]
      %v389 = vld [vmem:[%s1 + $0xa0] sm:$0xff]
      %v390 = vld [vmem:[%s1 + $0xa8] sm:$0xff]
      %v391 = vld [vmem:[%s1 + $0xb0] sm:$0xff]
      %v392 = vld [vmem:[%s1 + $0xb8] sm:$0xff]
      %v393 = vld [vmem:[%s1 + $0xc0] sm:$0xff]
      %v394 = vld [vmem:[%s1 + $0xc8] sm:$0xff]
      %v395 = vld [vmem:[%s1 + $0xd0] sm:$0xff]
      %v396 = vld [vmem:[%s1 + $0xd8] sm:$0xff]
      %v397 = vld [vmem:[%s1 + $0xe0] sm:$0xff]
      %v398 = vld [vmem:[%s1 + $0xe8] sm:$0xff]
      %v399 = vld [vmem:[%s1 + $0xf0] sm:$0xff]
      %v400 = vld [vmem:[%s1 + $0xf8] sm:$0xff]
      %v401 = vld [vmem:[%s1 + $0x100] sm:$0xff]
      %v402 = vld [vmem:[%s1 + $0x108] sm:$0xff]
      %v403 = vld [vmem:[%s1 + $0x110] sm:$0xff]
      %v404 = vld [vmem:[%s1 + $0x118] sm:$0xff]
      %v405 = vld [vmem:[%s1 + $0x120] sm:$0xff]
      %v406 = vld [vmem:[%s1 + $0x128] sm:$0xff]
      %v407 = vld [vmem:[%s1 + $0x130] sm:$0xff]
      %v408 = vld [vmem:[%s1 + $0x138] sm:$0xff]
      %v409 = vld [vmem:[%s1 + $0x140] sm:$0xff]
      %v410 = vld [vmem:[%s1 + $0x148] sm:$0xff]
      %v411 = vld [vmem:[%s1 + $0x150] sm:$0xff]
      %v412 = vld [vmem:[%s1 + $0x158] sm:$0xff]
      %v413 = vld [vmem:[%s1 + $0x160] sm:$0xff]
      %v414 = vld [vmem:[%s1 + $0x168] sm:$0xff]
      %v415 = vld [vmem:[%s1 + $0x170] sm:$0xff]
      %v416 = vld [vmem:[%s1 + $0x178] sm:$0xff]
      %v417 = vld [vmem:[%s2] sm:$0x1]
      %v419 = vlaneseq
      %v420 = vshrl.u32 %v419, 7
      %v421 = vsub.s32 0, %v420
      %v422 = vrot.slane %v417, %v421
      %424 = vmatprep.subr.mxu0 0.0
      %425 = vmatpush1.msra.mxu0 %v384
      %426 = vmatprep.subr.mxu0 0.0
      %427 = vmatpush1.msra.mxu0 %v383
      %428 = vmatprep.subr.mxu0 0.0
      %429 = vmatpush1.msra.mxu0 %v382
      %430 = vmatprep.subr.mxu0 0.0
      %431 = vmatpush1.msra.mxu0 %v381
      %432 = vmatprep.subr.mxu0 0.0
      %433 = vmatpush1.msra.mxu0 %v380
      %434 = vmatprep.subr.mxu0 0.0
      %435 = vmatpush1.msra.mxu0 %v379
      %436 = vmatprep.subr.mxu0 0.0
      %437 = vmatpush1.msra.mxu0 %v378
      %438 = vmatprep.subr.mxu0 0.0
      %439 = vmatpush1.msra.mxu0 %v377
      %440 = vmatprep.subr.mxu0 0.0
      %441 = vmatpush1.msra.mxu0 %v376
      %442 = vmatprep.subr.mxu0 0.0
      %443 = vmatpush1.msra.mxu0 %v375
      %444 = vmatprep.subr.mxu0 0.0
      %445 = vmatpush1.msra.mxu0 %v374
      %446 = vmatprep.subr.mxu0 0.0
      %447 = vmatpush1.msra.mxu0 %v373
      %448 = vmatprep.subr.mxu0 0.0
      %449 = vmatpush1.msra.mxu0 %v372
      %450 = vmatprep.subr.mxu0 0.0
      %451 = vmatpush1.msra.mxu0 %v371
      %452 = vmatprep.subr.mxu0 0.0
      %453 = vmatpush1.msra.mxu0 %v370
      %454 = vmatprep.subr.mxu0 0.0
      %455 = vmatpush1.msra.mxu0 %v369
      %456 = vmatprep.subr.mxu0 0.0
      %457 = vmatpush2.msra.mxu0 %v400
      %458 = vmatprep.subr.mxu0 0.0
      %459 = vmatpush2.msra.mxu0 %v399
      %460 = vmatprep.subr.mxu0 0.0
      %461 = vmatpush2.msra.mxu0 %v398
      %462 = vmatprep.subr.mxu0 0.0
      %463 = vmatpush2.msra.mxu0 %v397
      %464 = vmatprep.subr.mxu0 0.0
      %465 = vmatpush2.msra.mxu0 %v396
      %466 = vmatprep.subr.mxu0 0.0
      %467 = vmatpush2.msra.mxu0 %v395
      %468 = vmatprep.subr.mxu0 0.0
      %469 = vmatpush2.msra.mxu0 %v394
      %470 = vmatprep.subr.mxu0 0.0
      %471 = vmatpush2.msra.mxu0 %v393
      %472 = vmatprep.subr.mxu0 0.0
      %473 = vmatpush2.msra.mxu0 %v392
      %474 = vmatprep.subr.mxu0 0.0
      %475 = vmatpush2.msra.mxu0 %v391
      %476 = vmatprep.subr.mxu0 0.0
      %477 = vmatpush2.msra.mxu0 %v390
      %478 = vmatprep.subr.mxu0 0.0
      %479 = vmatpush2.msra.mxu0 %v389
      %480 = vmatprep.subr.mxu0 0.0
      %481 = vmatpush2.msra.mxu0 %v388
      %482 = vmatprep.subr.mxu0 0.0
      %483 = vmatpush2.msra.mxu0 %v387
      %484 = vmatprep.subr.mxu0 0.0
      %485 = vmatpush2.msra.mxu0 %v386
      %486 = vmatprep.subr.mxu0 0.0
      %487 = vmatpush2.msra.mxu0 %v385
      %488 = vmatprep.mubr.f32.mxu0 %v178
      %489 = vmatmul.mubr.f32.gmra.mxu0 %v177
      %v490 = vpop.f32.mrf.mxu0
      %v491 = vadd.f32 %v422, %v490
      %v492 = vpop.f32.mrf.mxu0
      %493 = vmatprep.mubr.f32.mxu0 %v181
      %494 = vmatmul.mubr.f32.gmra.mxu0 %v180
      %v495 = vpop.f32.mrf.mxu0
      %v496 = vadd.f32 %v422, %v495
      %v497 = vpop.f32.mrf.mxu0
      %498 = vmatprep.mubr.f32.mxu0 %v184
      %499 = vmatmul.mubr.f32.gmra.mxu0 %v183
      %v500 = vpop.f32.mrf.mxu0
      %v501 = vadd.f32 %v422, %v500
      %v502 = vpop.f32.mrf.mxu0
      %503 = vmatprep.mubr.f32.mxu0 %v187
      %504 = vmatmul.mubr.f32.gmra.mxu0 %v186
      %v505 = vpop.f32.mrf.mxu0
      %v506 = vadd.f32 %v422, %v505
      %v507 = vpop.f32.mrf.mxu0
      %508 = vmatprep.mubr.f32.mxu0 %v190
      %509 = vmatmul.mubr.f32.gmra.mxu0 %v189
      %v510 = vpop.f32.mrf.mxu0
      %v511 = vadd.f32 %v422, %v510
      %v512 = vpop.f32.mrf.mxu0
      %513 = vmatprep.mubr.f32.mxu0 %v193
      %514 = vmatmul.mubr.f32.gmra.mxu0 %v192
      %v515 = vpop.f32.mrf.mxu0
      %v516 = vadd.f32 %v422, %v515
      %v517 = vpop.f32.mrf.mxu0
      %518 = vmatprep.mubr.f32.mxu0 %v196
      %519 = vmatmul.mubr.f32.gmra.mxu0 %v195
      %v520 = vpop.f32.mrf.mxu0
      %v521 = vadd.f32 %v422, %v520
      %v522 = vpop.f32.mrf.mxu0
      %523 = vmatprep.mubr.f32.mxu0 %v199
      %524 = vmatmul.mubr.f32.gmra.mxu0 %v198
      %v525 = vpop.f32.mrf.mxu0
      %v526 = vadd.f32 %v422, %v525
      %v527 = vpop.f32.mrf.mxu0
      %528 = vmatprep.mubr.f32.mxu0 %v202
      %529 = vmatmul.mubr.f32.gmra.mxu0 %v201
      %v530 = vpop.f32.mrf.mxu0
      %v531 = vadd.f32 %v422, %v530
      %v532 = vpop.f32.mrf.mxu0
      %533 = vmatprep.mubr.f32.mxu0 %v205
      %534 = vmatmul.mubr.f32.gmra.mxu0 %v204
      %v535 = vpop.f32.mrf.mxu0
      %v536 = vadd.f32 %v422, %v535
      %v537 = vpop.f32.mrf.mxu0
      %538 = vmatprep.mubr.f32.mxu0 %v208
      %539 = vmatmul.mubr.f32.gmra.mxu0 %v207
      %v540 = vpop.f32.mrf.mxu0
      %v541 = vadd.f32 %v422, %v540
      %v542 = vpop.f32.mrf.mxu0
      %543 = vmatprep.mubr.f32.mxu0 %v211
      %544 = vmatmul.mubr.f32.gmra.mxu0 %v210
      %v545 = vpop.f32.mrf.mxu0
      %v546 = vadd.f32 %v422, %v545
      %v547 = vpop.f32.mrf.mxu0
      %548 = vmatprep.mubr.f32.mxu0 %v214
      %549 = vmatmul.mubr.f32.gmra.mxu0 %v213
      %v550 = vpop.f32.mrf.mxu0
      %v551 = vadd.f32 %v422, %v550
      %v552 = vpop.f32.mrf.mxu0
      %553 = vmatprep.mubr.f32.mxu0 %v217
      %554 = vmatmul.mubr.f32.gmra.mxu0 %v216
      %v555 = vpop.f32.mrf.mxu0
      %v556 = vadd.f32 %v422, %v555
      %v557 = vpop.f32.mrf.mxu0
      %558 = vmatprep.mubr.f32.mxu0 %v220
      %559 = vmatmul.mubr.f32.gmra.mxu0 %v219
      %v560 = vpop.f32.mrf.mxu0
      %v561 = vadd.f32 %v422, %v560
      %v562 = vpop.f32.mrf.mxu0
      %563 = vmatprep.mubr.f32.mxu0 %v223
      %564 = vmatmul.mubr.f32.gmra.mxu0 %v222
      %v565 = vpop.f32.mrf.mxu0
      %v566 = vadd.f32 %v422, %v565
      %v567 = vpop.f32.mrf.mxu0
      %568 = vmatprep.mubr.f32.mxu0 %v226
      %569 = vmatmul.mubr.f32.gmra.mxu0 %v225
      %v570 = vpop.f32.mrf.mxu0
      %v571 = vadd.f32 %v422, %v570
      %v572 = vpop.f32.mrf.mxu0
      %573 = vmatprep.mubr.f32.mxu0 %v229
      %574 = vmatmul.mubr.f32.gmra.mxu0 %v228
      %v575 = vpop.f32.mrf.mxu0
      %v576 = vadd.f32 %v422, %v575
      %v577 = vpop.f32.mrf.mxu0
      %578 = vmatprep.mubr.f32.mxu0 %v232
      %579 = vmatmul.mubr.f32.gmra.mxu0 %v231
      %v580 = vpop.f32.mrf.mxu0
      %v581 = vadd.f32 %v422, %v580
      %v582 = vpop.f32.mrf.mxu0
      %583 = vmatprep.mubr.f32.mxu0 %v235
      %584 = vmatmul.mubr.f32.gmra.mxu0 %v234
      %v585 = vpop.f32.mrf.mxu0
      %v586 = vadd.f32 %v422, %v585
      %v587 = vpop.f32.mrf.mxu0
      %588 = vmatprep.mubr.f32.mxu0 %v238
      %589 = vmatmul.mubr.f32.gmra.mxu0 %v237
      %v590 = vpop.f32.mrf.mxu0
      %v591 = vadd.f32 %v422, %v590
      %v592 = vpop.f32.mrf.mxu0
      %593 = vmatprep.mubr.f32.mxu0 %v241
      %594 = vmatmul.mubr.f32.gmra.mxu0 %v240
      %v595 = vpop.f32.mrf.mxu0
      %v596 = vadd.f32 %v422, %v595
      %v597 = vpop.f32.mrf.mxu0
      %598 = vmatprep.mubr.f32.mxu0 %v244
      %599 = vmatmul.mubr.f32.gmra.mxu0 %v243
      %v600 = vpop.f32.mrf.mxu0
      %v601 = vadd.f32 %v422, %v600
      %v602 = vpop.f32.mrf.mxu0
      %603 = vmatprep.mubr.f32.mxu0 %v247
      %604 = vmatmul.mubr.f32.gmra.mxu0 %v246
      %v605 = vpop.f32.mrf.mxu0
      %v606 = vadd.f32 %v422, %v605
      %v607 = vpop.f32.mrf.mxu0
      %608 = vmatprep.mubr.f32.mxu0 %v250
      %609 = vmatmul.mubr.f32.gmra.mxu0 %v249
      %v610 = vpop.f32.mrf.mxu0
      %v611 = vadd.f32 %v422, %v610
      %v612 = vpop.f32.mrf.mxu0
      %613 = vmatprep.mubr.f32.mxu0 %v253
      %614 = vmatmul.mubr.f32.gmra.mxu0 %v252
      %v615 = vpop.f32.mrf.mxu0
      %v616 = vadd.f32 %v422, %v615
      %v617 = vpop.f32.mrf.mxu0
      %618 = vmatprep.mubr.f32.mxu0 %v256
      %619 = vmatmul.mubr.f32.gmra.mxu0 %v255
      %v620 = vpop.f32.mrf.mxu0
      %v621 = vadd.f32 %v422, %v620
      %v622 = vpop.f32.mrf.mxu0
      %623 = vmatprep.mubr.f32.mxu0 %v259
      %624 = vmatmul.mubr.f32.gmra.mxu0 %v258
      %v625 = vpop.f32.mrf.mxu0
      %v626 = vadd.f32 %v422, %v625
      %v627 = vpop.f32.mrf.mxu0
      %628 = vmatprep.mubr.f32.mxu0 %v262
      %629 = vmatmul.mubr.f32.gmra.mxu0 %v261
      %v630 = vpop.f32.mrf.mxu0
      %v631 = vadd.f32 %v422, %v630
      %v632 = vpop.f32.mrf.mxu0
      %633 = vmatprep.mubr.f32.mxu0 %v265
      %634 = vmatmul.mubr.f32.gmra.mxu0 %v264
      %v635 = vpop.f32.mrf.mxu0
      %v636 = vadd.f32 %v422, %v635
      %v637 = vpop.f32.mrf.mxu0
      %638 = vmatprep.mubr.f32.mxu0 %v268
      %639 = vmatmul.mubr.f32.gmra.mxu0 %v267
      %v640 = vpop.f32.mrf.mxu0
      %v641 = vadd.f32 %v422, %v640
      %v642 = vpop.f32.mrf.mxu0
      %643 = vmatprep.mubr.f32.mxu0 %v271
      %644 = vmatmul.mubr.f32.gmra.mxu0 %v270
      %v645 = vpop.f32.mrf.mxu0
      %v646 = vadd.f32 %v422, %v645
      %v647 = vpop.f32.mrf.mxu0
      %648 = vmatprep.mubr.f32.mxu0 %v274
      %649 = vmatmul.mubr.f32.gmra.mxu0 %v273
      %v650 = vpop.f32.mrf.mxu0
      %v651 = vadd.f32 %v422, %v650
      %v652 = vpop.f32.mrf.mxu0
      %653 = vmatprep.mubr.f32.mxu0 %v277
      %654 = vmatmul.mubr.f32.gmra.mxu0 %v276
      %v655 = vpop.f32.mrf.mxu0
      %v656 = vadd.f32 %v422, %v655
      %v657 = vpop.f32.mrf.mxu0
      %658 = vmatprep.mubr.f32.mxu0 %v280
      %659 = vmatmul.mubr.f32.gmra.mxu0 %v279
      %v660 = vpop.f32.mrf.mxu0
      %v661 = vadd.f32 %v422, %v660
      %v662 = vpop.f32.mrf.mxu0
      %663 = vmatprep.mubr.f32.mxu0 %v283
      %664 = vmatmul.mubr.f32.gmra.mxu0 %v282
      %v665 = vpop.f32.mrf.mxu0
      %v666 = vadd.f32 %v422, %v665
      %v667 = vpop.f32.mrf.mxu0
      %668 = vmatprep.mubr.f32.mxu0 %v286
      %669 = vmatmul.mubr.f32.gmra.mxu0 %v285
      %v670 = vpop.f32.mrf.mxu0
      %v671 = vadd.f32 %v422, %v670
      %v672 = vpop.f32.mrf.mxu0
      %673 = vmatprep.mubr.f32.mxu0 %v289
      %674 = vmatmul.mubr.f32.gmra.mxu0 %v288
      %v675 = vpop.f32.mrf.mxu0
      %v676 = vadd.f32 %v422, %v675
      %v677 = vpop.f32.mrf.mxu0
      %678 = vmatprep.mubr.f32.mxu0 %v292
      %679 = vmatmul.mubr.f32.gmra.mxu0 %v291
      %v680 = vpop.f32.mrf.mxu0
      %v681 = vadd.f32 %v422, %v680
      %v682 = vpop.f32.mrf.mxu0
      %683 = vmatprep.mubr.f32.mxu0 %v295
      %684 = vmatmul.mubr.f32.gmra.mxu0 %v294
      %v685 = vpop.f32.mrf.mxu0
      %v686 = vadd.f32 %v422, %v685
      %v687 = vpop.f32.mrf.mxu0
      %688 = vmatprep.mubr.f32.mxu0 %v298
      %689 = vmatmul.mubr.f32.gmra.mxu0 %v297
      %v690 = vpop.f32.mrf.mxu0
      %v691 = vadd.f32 %v422, %v690
      %v692 = vpop.f32.mrf.mxu0
      %693 = vmatprep.mubr.f32.mxu0 %v301
      %694 = vmatmul.mubr.f32.gmra.mxu0 %v300
      %v695 = vpop.f32.mrf.mxu0
      %v696 = vadd.f32 %v422, %v695
      %v697 = vpop.f32.mrf.mxu0
      %698 = vmatprep.mubr.f32.mxu0 %v304
      %699 = vmatmul.mubr.f32.gmra.mxu0 %v303
      %v700 = vpop.f32.mrf.mxu0
      %v701 = vadd.f32 %v422, %v700
      %v702 = vpop.f32.mrf.mxu0
      %703 = vmatprep.mubr.f32.mxu0 %v307
      %704 = vmatmul.mubr.f32.gmra.mxu0 %v306
      %v705 = vpop.f32.mrf.mxu0
      %v706 = vadd.f32 %v422, %v705
      %v707 = vpop.f32.mrf.mxu0
      %708 = vmatprep.mubr.f32.mxu0 %v310
      %709 = vmatmul.mubr.f32.gmra.mxu0 %v309
      %v710 = vpop.f32.mrf.mxu0
      %v711 = vadd.f32 %v422, %v710
      %v712 = vpop.f32.mrf.mxu0
      %713 = vmatprep.mubr.f32.mxu0 %v313
      %714 = vmatmul.mubr.f32.gmra.mxu0 %v312
      %v715 = vpop.f32.mrf.mxu0
      %v716 = vadd.f32 %v422, %v715
      %v717 = vpop.f32.mrf.mxu0
      %718 = vmatprep.mubr.f32.mxu0 %v316
      %719 = vmatmul.mubr.f32.gmra.mxu0 %v315
      %v720 = vpop.f32.mrf.mxu0
      %v721 = vadd.f32 %v422, %v720
      %v722 = vpop.f32.mrf.mxu0
      %723 = vmatprep.mubr.f32.mxu0 %v319
      %724 = vmatmul.mubr.f32.gmra.mxu0 %v318
      %v725 = vpop.f32.mrf.mxu0
      %v726 = vadd.f32 %v422, %v725
      %v727 = vpop.f32.mrf.mxu0
      %728 = vmatprep.mubr.f32.mxu0 %v322
      %729 = vmatmul.mubr.f32.gmra.mxu0 %v321
      %v730 = vpop.f32.mrf.mxu0
      %v731 = vadd.f32 %v422, %v730
      %v732 = vpop.f32.mrf.mxu0
      %733 = vmatprep.mubr.f32.mxu0 %v325
      %734 = vmatmul.mubr.f32.gmra.mxu0 %v324
      %v735 = vpop.f32.mrf.mxu0
      %v736 = vadd.f32 %v422, %v735
      %v737 = vpop.f32.mrf.mxu0
      %738 = vmatprep.mubr.f32.mxu0 %v328
      %739 = vmatmul.mubr.f32.gmra.mxu0 %v327
      %v740 = vpop.f32.mrf.mxu0
      %v741 = vadd.f32 %v422, %v740
      %v742 = vpop.f32.mrf.mxu0
      %743 = vmatprep.mubr.f32.mxu0 %v331
      %744 = vmatmul.mubr.f32.gmra.mxu0 %v330
      %v745 = vpop.f32.mrf.mxu0
      %v746 = vadd.f32 %v422, %v745
      %v747 = vpop.f32.mrf.mxu0
      %748 = vmatprep.mubr.f32.mxu0 %v334
      %749 = vmatmul.mubr.f32.gmra.mxu0 %v333
      %v750 = vpop.f32.mrf.mxu0
      %v751 = vadd.f32 %v422, %v750
      %v752 = vpop.f32.mrf.mxu0
      %753 = vmatprep.mubr.f32.mxu0 %v337
      %754 = vmatmul.mubr.f32.gmra.mxu0 %v336
      %v755 = vpop.f32.mrf.mxu0
      %v756 = vadd.f32 %v422, %v755
      %v757 = vpop.f32.mrf.mxu0
      %758 = vmatprep.mubr.f32.mxu0 %v340
      %759 = vmatmul.mubr.f32.gmra.mxu0 %v339
      %v760 = vpop.f32.mrf.mxu0
      %v761 = vadd.f32 %v422, %v760
      %v762 = vpop.f32.mrf.mxu0
      %763 = vmatprep.mubr.f32.mxu0 %v343
      %764 = vmatmul.mubr.f32.gmra.mxu0 %v342
      %v765 = vpop.f32.mrf.mxu0
      %v766 = vadd.f32 %v422, %v765
      %v767 = vpop.f32.mrf.mxu0
      %768 = vmatprep.mubr.f32.mxu0 %v346
      %769 = vmatmul.mubr.f32.gmra.mxu0 %v345
      %v770 = vpop.f32.mrf.mxu0
      %v771 = vadd.f32 %v422, %v770
      %v772 = vpop.f32.mrf.mxu0
      %773 = vmatprep.mubr.f32.mxu0 %v349
      %774 = vmatmul.mubr.f32.gmra.mxu0 %v348
      %v775 = vpop.f32.mrf.mxu0
      %v776 = vadd.f32 %v422, %v775
      %v777 = vpop.f32.mrf.mxu0
      %778 = vmatprep.mubr.f32.mxu0 %v352
      %779 = vmatmul.mubr.f32.gmra.mxu0 %v351
      %v780 = vpop.f32.mrf.mxu0
      %v781 = vadd.f32 %v422, %v780
      %v782 = vpop.f32.mrf.mxu0
      %783 = vmatprep.mubr.f32.mxu0 %v355
      %784 = vmatmul.mubr.f32.gmra.mxu0 %v354
      %v785 = vpop.f32.mrf.mxu0
      %v786 = vadd.f32 %v422, %v785
      %v787 = vpop.f32.mrf.mxu0
      %788 = vmatprep.mubr.f32.mxu0 %v358
      %789 = vmatmul.mubr.f32.gmra.mxu0 %v357
      %v790 = vpop.f32.mrf.mxu0
      %v791 = vadd.f32 %v422, %v790
      %v792 = vpop.f32.mrf.mxu0
      %793 = vmatprep.mubr.f32.mxu0 %v361
      %794 = vmatmul.mubr.f32.gmra.mxu0 %v360
      %v795 = vpop.f32.mrf.mxu0
      %v796 = vadd.f32 %v422, %v795
      %v797 = vpop.f32.mrf.mxu0
      %798 = vmatprep.mubr.f32.mxu0 %v364
      %799 = vmatmul.mubr.f32.gmra.mxu0 %v363
      %v800 = vpop.f32.mrf.mxu0
      %v801 = vadd.f32 %v422, %v800
      %v802 = vpop.f32.mrf.mxu0
      %803 = vmatprep.mubr.f32.mxu0 %v367
      %804 = vmatmul.mubr.f32.gmra.mxu0 %v366
      %v805 = vpop.f32.mrf.mxu0
      %v806 = vadd.f32 %v422, %v805
      %v807 = vpop.f32.mrf.mxu0
      %808 = vdwg.mxu0
      %809 = vmatprep.subr.mxu0 0.0
      %810 = vmatpush1.msra.mxu0 %v416
      %811 = vmatprep.subr.mxu0 0.0
      %812 = vmatpush1.msra.mxu0 %v415
      %813 = vmatprep.subr.mxu0 0.0
      %814 = vmatpush1.msra.mxu0 %v414
      %815 = vmatprep.subr.mxu0 0.0
      %816 = vmatpush1.msra.mxu0 %v413
      %817 = vmatprep.subr.mxu0 0.0
      %818 = vmatpush1.msra.mxu0 %v412
      %819 = vmatprep.subr.mxu0 0.0
      %820 = vmatpush1.msra.mxu0 %v411
      %821 = vmatprep.subr.mxu0 0.0
      %822 = vmatpush1.msra.mxu0 %v410
      %823 = vmatprep.subr.mxu0 0.0
      %824 = vmatpush1.msra.mxu0 %v409
      %825 = vmatprep.subr.mxu0 0.0
      %826 = vmatpush1.msra.mxu0 %v408
      %827 = vmatprep.subr.mxu0 0.0
      %828 = vmatpush1.msra.mxu0 %v407
      %829 = vmatprep.subr.mxu0 0.0
      %830 = vmatpush1.msra.mxu0 %v406
      %831 = vmatprep.subr.mxu0 0.0
      %832 = vmatpush1.msra.mxu0 %v405
      %833 = vmatprep.subr.mxu0 0.0
      %834 = vmatpush1.msra.mxu0 %v404
      %835 = vmatprep.subr.mxu0 0.0
      %836 = vmatpush1.msra.mxu0 %v403
      %837 = vmatprep.subr.mxu0 0.0
      %838 = vmatpush1.msra.mxu0 %v402
      %839 = vmatprep.subr.mxu0 0.0
      %840 = vmatpush1.msra.mxu0 %v401
      %841 = vmatprep.subr.mxu0 0.0
      %842 = vmatpush2.msra.mxu0 0.0
      %843 = vmatprep.subr.mxu0 0.0
      %844 = vmatpush2.msra.mxu0 0.0
      %845 = vmatprep.subr.mxu0 0.0
      %846 = vmatpush2.msra.mxu0 0.0
      %847 = vmatprep.subr.mxu0 0.0
      %848 = vmatpush2.msra.mxu0 0.0
      %849 = vmatprep.subr.mxu0 0.0
      %850 = vmatpush2.msra.mxu0 0.0
      %851 = vmatprep.subr.mxu0 0.0
      %852 = vmatpush2.msra.mxu0 0.0
      %853 = vmatprep.subr.mxu0 0.0
      %854 = vmatpush2.msra.mxu0 0.0
      %855 = vmatprep.subr.mxu0 0.0
      %856 = vmatpush2.msra.mxu0 0.0
      %857 = vmatprep.subr.mxu0 0.0
      %858 = vmatpush2.msra.mxu0 0.0
      %859 = vmatprep.subr.mxu0 0.0
      %860 = vmatpush2.msra.mxu0 0.0
      %861 = vmatprep.subr.mxu0 0.0
      %862 = vmatpush2.msra.mxu0 0.0
      %863 = vmatprep.subr.mxu0 0.0
      %864 = vmatpush2.msra.mxu0 0.0
      %865 = vmatprep.subr.mxu0 0.0
      %866 = vmatpush2.msra.mxu0 0.0
      %867 = vmatprep.subr.mxu0 0.0
      %868 = vmatpush2.msra.mxu0 0.0
      %869 = vmatprep.subr.mxu0 0.0
      %870 = vmatpush2.msra.mxu0 0.0
      %871 = vmatprep.subr.mxu0 0.0
      %872 = vmatpush2.msra.mxu0 0.0
      %873 = vmatprep.mubr.f32.mxu0 0.0
      %874 = vmatmul.mubr.f32.gmra.mxu0 %v179
      %v875 = vpop.f32.mrf.mxu0
      %v876 = vadd.f32 %v491, %v875
      %v877 = vpop.f32.mrf.mxu0
      %878 = vmatprep.mubr.f32.mxu0 0.0
      %879 = vmatmul.mubr.f32.gmra.mxu0 %v182
      %v880 = vpop.f32.mrf.mxu0
      %v881 = vadd.f32 %v496, %v880
      %v882 = vpop.f32.mrf.mxu0
      %883 = vmatprep.mubr.f32.mxu0 0.0
      %884 = vmatmul.mubr.f32.gmra.mxu0 %v185
      %v885 = vpop.f32.mrf.mxu0
      %v886 = vadd.f32 %v501, %v885
      %v887 = vpop.f32.mrf.mxu0
      %888 = vmatprep.mubr.f32.mxu0 0.0
      %889 = vmatmul.mubr.f32.gmra.mxu0 %v188
      %v890 = vpop.f32.mrf.mxu0
      %v891 = vadd.f32 %v506, %v890
      %v892 = vpop.f32.mrf.mxu0
      %893 = vmatprep.mubr.f32.mxu0 0.0
      %894 = vmatmul.mubr.f32.gmra.mxu0 %v191
      %v895 = vpop.f32.mrf.mxu0
      %v896 = vadd.f32 %v511, %v895
      %v897 = vpop.f32.mrf.mxu0
      %898 = vmatprep.mubr.f32.mxu0 0.0
      %899 = vmatmul.mubr.f32.gmra.mxu0 %v194
      %v900 = vpop.f32.mrf.mxu0
      %v901 = vadd.f32 %v516, %v900
      %v902 = vpop.f32.mrf.mxu0
      %903 = vmatprep.mubr.f32.mxu0 0.0
      %904 = vmatmul.mubr.f32.gmra.mxu0 %v197
      %v905 = vpop.f32.mrf.mxu0
      %v906 = vadd.f32 %v521, %v905
      %v907 = vpop.f32.mrf.mxu0
      %908 = vmatprep.mubr.f32.mxu0 0.0
      %909 = vmatmul.mubr.f32.gmra.mxu0 %v200
      %v910 = vpop.f32.mrf.mxu0
      %v911 = vadd.f32 %v526, %v910
      %v912 = vpop.f32.mrf.mxu0
      %913 = vmatprep.mubr.f32.mxu0 0.0
      %914 = vmatmul.mubr.f32.gmra.mxu0 %v203
      %v915 = vpop.f32.mrf.mxu0
      %v916 = vadd.f32 %v531, %v915
      %v917 = vpop.f32.mrf.mxu0
      %918 = vmatprep.mubr.f32.mxu0 0.0
      %919 = vmatmul.mubr.f32.gmra.mxu0 %v206
      %v920 = vpop.f32.mrf.mxu0
      %v921 = vadd.f32 %v536, %v920
      %v922 = vpop.f32.mrf.mxu0
      %923 = vmatprep.mubr.f32.mxu0 0.0
      %924 = vmatmul.mubr.f32.gmra.mxu0 %v209
      %v925 = vpop.f32.mrf.mxu0
      %v926 = vadd.f32 %v541, %v925
      %v927 = vpop.f32.mrf.mxu0
      %928 = vmatprep.mubr.f32.mxu0 0.0
      %929 = vmatmul.mubr.f32.gmra.mxu0 %v212
      %v930 = vpop.f32.mrf.mxu0
      %v931 = vadd.f32 %v546, %v930
      %v932 = vpop.f32.mrf.mxu0
      %933 = vmatprep.mubr.f32.mxu0 0.0
      %934 = vmatmul.mubr.f32.gmra.mxu0 %v215
      %v935 = vpop.f32.mrf.mxu0
      %v936 = vadd.f32 %v551, %v935
      %v937 = vpop.f32.mrf.mxu0
      %938 = vmatprep.mubr.f32.mxu0 0.0
      %939 = vmatmul.mubr.f32.gmra.mxu0 %v218
      %v940 = vpop.f32.mrf.mxu0
      %v941 = vadd.f32 %v556, %v940
      %v942 = vpop.f32.mrf.mxu0
      %943 = vmatprep.mubr.f32.mxu0 0.0
      %944 = vmatmul.mubr.f32.gmra.mxu0 %v221
      %v945 = vpop.f32.mrf.mxu0
      %v946 = vadd.f32 %v561, %v945
      %v947 = vpop.f32.mrf.mxu0
      %948 = vmatprep.mubr.f32.mxu0 0.0
      %949 = vmatmul.mubr.f32.gmra.mxu0 %v224
      %v950 = vpop.f32.mrf.mxu0
      %v951 = vadd.f32 %v566, %v950
      %v952 = vpop.f32.mrf.mxu0
      %953 = vmatprep.mubr.f32.mxu0 0.0
      %954 = vmatmul.mubr.f32.gmra.mxu0 %v227
      %v955 = vpop.f32.mrf.mxu0
      %v956 = vadd.f32 %v571, %v955
      %v957 = vpop.f32.mrf.mxu0
      %958 = vmatprep.mubr.f32.mxu0 0.0
      %959 = vmatmul.mubr.f32.gmra.mxu0 %v230
      %v960 = vpop.f32.mrf.mxu0
      %v961 = vadd.f32 %v576, %v960
      %v962 = vpop.f32.mrf.mxu0
      %963 = vmatprep.mubr.f32.mxu0 0.0
      %964 = vmatmul.mubr.f32.gmra.mxu0 %v233
      %v965 = vpop.f32.mrf.mxu0
      %v966 = vadd.f32 %v581, %v965
      %v967 = vpop.f32.mrf.mxu0
      %968 = vmatprep.mubr.f32.mxu0 0.0
      %969 = vmatmul.mubr.f32.gmra.mxu0 %v236
      %v970 = vpop.f32.mrf.mxu0
      %v971 = vadd.f32 %v586, %v970
      %v972 = vpop.f32.mrf.mxu0
      %973 = vmatprep.mubr.f32.mxu0 0.0
      %974 = vmatmul.mubr.f32.gmra.mxu0 %v239
      %v975 = vpop.f32.mrf.mxu0
      %v976 = vadd.f32 %v591, %v975
      %v977 = vpop.f32.mrf.mxu0
      %978 = vmatprep.mubr.f32.mxu0 0.0
      %979 = vmatmul.mubr.f32.gmra.mxu0 %v242
      %v980 = vpop.f32.mrf.mxu0
      %v981 = vadd.f32 %v596, %v980
      %v982 = vpop.f32.mrf.mxu0
      %983 = vmatprep.mubr.f32.mxu0 0.0
      %984 = vmatmul.mubr.f32.gmra.mxu0 %v245
      %v985 = vpop.f32.mrf.mxu0
      %v986 = vadd.f32 %v601, %v985
      %v987 = vpop.f32.mrf.mxu0
      %988 = vmatprep.mubr.f32.mxu0 0.0
      %989 = vmatmul.mubr.f32.gmra.mxu0 %v248
      %v990 = vpop.f32.mrf.mxu0
      %v991 = vadd.f32 %v606, %v990
      %v992 = vpop.f32.mrf.mxu0
      %993 = vmatprep.mubr.f32.mxu0 0.0
      %994 = vmatmul.mubr.f32.gmra.mxu0 %v251
      %v995 = vpop.f32.mrf.mxu0
      %v996 = vadd.f32 %v611, %v995
      %v997 = vpop.f32.mrf.mxu0
      %998 = vmatprep.mubr.f32.mxu0 0.0
      %999 = vmatmul.mubr.f32.gmra.mxu0 %v254
      %v1000 = vpop.f32.mrf.mxu0
      %v1001 = vadd.f32 %v616, %v1000
      %v1002 = vpop.f32.mrf.mxu0
      %1003 = vmatprep.mubr.f32.mxu0 0.0
      %1004 = vmatmul.mubr.f32.gmra.mxu0 %v257
      %v1005 = vpop.f32.mrf.mxu0
      %v1006 = vadd.f32 %v621, %v1005
      %v1007 = vpop.f32.mrf.mxu0
      %1008 = vmatprep.mubr.f32.mxu0 0.0
      %1009 = vmatmul.mubr.f32.gmra.mxu0 %v260
      %v1010 = vpop.f32.mrf.mxu0
      %v1011 = vadd.f32 %v626, %v1010
      %v1012 = vpop.f32.mrf.mxu0
      %1013 = vmatprep.mubr.f32.mxu0 0.0
      %1014 = vmatmul.mubr.f32.gmra.mxu0 %v263
      %v1015 = vpop.f32.mrf.mxu0
      %v1016 = vadd.f32 %v631, %v1015
      %v1017 = vpop.f32.mrf.mxu0
      %1018 = vmatprep.mubr.f32.mxu0 0.0
      %1019 = vmatmul.mubr.f32.gmra.mxu0 %v266
      %v1020 = vpop.f32.mrf.mxu0
      %v1021 = vadd.f32 %v636, %v1020
      %v1022 = vpop.f32.mrf.mxu0
      %1023 = vmatprep.mubr.f32.mxu0 0.0
      %1024 = vmatmul.mubr.f32.gmra.mxu0 %v269
      %v1025 = vpop.f32.mrf.mxu0
      %v1026 = vadd.f32 %v641, %v1025
      %v1027 = vpop.f32.mrf.mxu0
      %1028 = vmatprep.mubr.f32.mxu0 0.0
      %1029 = vmatmul.mubr.f32.gmra.mxu0 %v272
      %v1030 = vpop.f32.mrf.mxu0
      %v1031 = vadd.f32 %v646, %v1030
      %v1032 = vpop.f32.mrf.mxu0
      %1033 = vmatprep.mubr.f32.mxu0 0.0
      %1034 = vmatmul.mubr.f32.gmra.mxu0 %v275
      %v1035 = vpop.f32.mrf.mxu0
      %v1036 = vadd.f32 %v651, %v1035
      %v1037 = vpop.f32.mrf.mxu0
      %1038 = vmatprep.mubr.f32.mxu0 0.0
      %1039 = vmatmul.mubr.f32.gmra.mxu0 %v278
      %v1040 = vpop.f32.mrf.mxu0
      %v1041 = vadd.f32 %v656, %v1040
      %v1042 = vpop.f32.mrf.mxu0
      %1043 = vmatprep.mubr.f32.mxu0 0.0
      %1044 = vmatmul.mubr.f32.gmra.mxu0 %v281
      %v1045 = vpop.f32.mrf.mxu0
      %v1046 = vadd.f32 %v661, %v1045
      %v1047 = vpop.f32.mrf.mxu0
      %1048 = vmatprep.mubr.f32.mxu0 0.0
      %1049 = vmatmul.mubr.f32.gmra.mxu0 %v284
      %v1050 = vpop.f32.mrf.mxu0
      %v1051 = vadd.f32 %v666, %v1050
      %v1052 = vpop.f32.mrf.mxu0
      %1053 = vmatprep.mubr.f32.mxu0 0.0
      %1054 = vmatmul.mubr.f32.gmra.mxu0 %v287
      %v1055 = vpop.f32.mrf.mxu0
      %v1056 = vadd.f32 %v671, %v1055
      %v1057 = vpop.f32.mrf.mxu0
      %1058 = vmatprep.mubr.f32.mxu0 0.0
      %1059 = vmatmul.mubr.f32.gmra.mxu0 %v290
      %v1060 = vpop.f32.mrf.mxu0
      %v1061 = vadd.f32 %v676, %v1060
      %v1062 = vpop.f32.mrf.mxu0
      %1063 = vmatprep.mubr.f32.mxu0 0.0
      %1064 = vmatmul.mubr.f32.gmra.mxu0 %v293
      %v1065 = vpop.f32.mrf.mxu0
      %v1066 = vadd.f32 %v681, %v1065
      %v1067 = vpop.f32.mrf.mxu0
      %1068 = vmatprep.mubr.f32.mxu0 0.0
      %1069 = vmatmul.mubr.f32.gmra.mxu0 %v296
      %v1070 = vpop.f32.mrf.mxu0
      %v1071 = vadd.f32 %v686, %v1070
      %v1072 = vpop.f32.mrf.mxu0
      %1073 = vmatprep.mubr.f32.mxu0 0.0
      %1074 = vmatmul.mubr.f32.gmra.mxu0 %v299
      %v1075 = vpop.f32.mrf.mxu0
      %v1076 = vadd.f32 %v691, %v1075
      %v1077 = vpop.f32.mrf.mxu0
      %1078 = vmatprep.mubr.f32.mxu0 0.0
      %1079 = vmatmul.mubr.f32.gmra.mxu0 %v302
      %v1080 = vpop.f32.mrf.mxu0
      %v1081 = vadd.f32 %v696, %v1080
      %v1082 = vpop.f32.mrf.mxu0
      %1083 = vmatprep.mubr.f32.mxu0 0.0
      %1084 = vmatmul.mubr.f32.gmra.mxu0 %v305
      %v1085 = vpop.f32.mrf.mxu0
      %v1086 = vadd.f32 %v701, %v1085
      %v1087 = vpop.f32.mrf.mxu0
      %1088 = vmatprep.mubr.f32.mxu0 0.0
      %1089 = vmatmul.mubr.f32.gmra.mxu0 %v308
      %v1090 = vpop.f32.mrf.mxu0
      %v1091 = vadd.f32 %v706, %v1090
      %v1092 = vpop.f32.mrf.mxu0
      %1093 = vmatprep.mubr.f32.mxu0 0.0
      %1094 = vmatmul.mubr.f32.gmra.mxu0 %v311
      %v1095 = vpop.f32.mrf.mxu0
      %v1096 = vadd.f32 %v711, %v1095
      %v1097 = vpop.f32.mrf.mxu0
      %1098 = vmatprep.mubr.f32.mxu0 0.0
      %1099 = vmatmul.mubr.f32.gmra.mxu0 %v314
      %v1100 = vpop.f32.mrf.mxu0
      %v1101 = vadd.f32 %v716, %v1100
      %v1102 = vpop.f32.mrf.mxu0
      %1103 = vmatprep.mubr.f32.mxu0 0.0
      %1104 = vmatmul.mubr.f32.gmra.mxu0 %v317
      %v1105 = vpop.f32.mrf.mxu0
      %v1106 = vadd.f32 %v721, %v1105
      %v1107 = vpop.f32.mrf.mxu0
      %1108 = vmatprep.mubr.f32.mxu0 0.0
      %1109 = vmatmul.mubr.f32.gmra.mxu0 %v320
      %v1110 = vpop.f32.mrf.mxu0
      %v1111 = vadd.f32 %v726, %v1110
      %v1112 = vpop.f32.mrf.mxu0
      %1113 = vmatprep.mubr.f32.mxu0 0.0
      %1114 = vmatmul.mubr.f32.gmra.mxu0 %v323
      %v1115 = vpop.f32.mrf.mxu0
      %v1116 = vadd.f32 %v731, %v1115
      %v1117 = vpop.f32.mrf.mxu0
      %1118 = vmatprep.mubr.f32.mxu0 0.0
      %1119 = vmatmul.mubr.f32.gmra.mxu0 %v326
      %v1120 = vpop.f32.mrf.mxu0
      %v1121 = vadd.f32 %v736, %v1120
      %v1122 = vpop.f32.mrf.mxu0
      %1123 = vmatprep.mubr.f32.mxu0 0.0
      %1124 = vmatmul.mubr.f32.gmra.mxu0 %v329
      %v1125 = vpop.f32.mrf.mxu0
      %v1126 = vadd.f32 %v741, %v1125
      %v1127 = vpop.f32.mrf.mxu0
      %1128 = vmatprep.mubr.f32.mxu0 0.0
      %1129 = vmatmul.mubr.f32.gmra.mxu0 %v332
      %v1130 = vpop.f32.mrf.mxu0
      %v1131 = vadd.f32 %v746, %v1130
      %v1132 = vpop.f32.mrf.mxu0
      %1133 = vmatprep.mubr.f32.mxu0 0.0
      %1134 = vmatmul.mubr.f32.gmra.mxu0 %v335
      %v1135 = vpop.f32.mrf.mxu0
      %v1136 = vadd.f32 %v751, %v1135
      %v1137 = vpop.f32.mrf.mxu0
      %1138 = vmatprep.mubr.f32.mxu0 0.0
      %1139 = vmatmul.mubr.f32.gmra.mxu0 %v338
      %v1140 = vpop.f32.mrf.mxu0
      %v1141 = vadd.f32 %v756, %v1140
      %v1142 = vpop.f32.mrf.mxu0
      %1143 = vmatprep.mubr.f32.mxu0 0.0
      %1144 = vmatmul.mubr.f32.gmra.mxu0 %v341
      %v1145 = vpop.f32.mrf.mxu0
      %v1146 = vadd.f32 %v761, %v1145
      %v1147 = vpop.f32.mrf.mxu0
      %1148 = vmatprep.mubr.f32.mxu0 0.0
      %1149 = vmatmul.mubr.f32.gmra.mxu0 %v344
      %v1150 = vpop.f32.mrf.mxu0
      %v1151 = vadd.f32 %v766, %v1150
      %v1152 = vpop.f32.mrf.mxu0
      %1153 = vmatprep.mubr.f32.mxu0 0.0
      %1154 = vmatmul.mubr.f32.gmra.mxu0 %v347
      %v1155 = vpop.f32.mrf.mxu0
      %v1156 = vadd.f32 %v771, %v1155
      %v1157 = vpop.f32.mrf.mxu0
      %1158 = vmatprep.mubr.f32.mxu0 0.0
      %1159 = vmatmul.mubr.f32.gmra.mxu0 %v350
      %v1160 = vpop.f32.mrf.mxu0
      %v1161 = vadd.f32 %v776, %v1160
      %v1162 = vpop.f32.mrf.mxu0
      %1163 = vmatprep.mubr.f32.mxu0 0.0
      %1164 = vmatmul.mubr.f32.gmra.mxu0 %v353
      %v1165 = vpop.f32.mrf.mxu0
      %v1166 = vadd.f32 %v781, %v1165
      %v1167 = vpop.f32.mrf.mxu0
      %1168 = vmatprep.mubr.f32.mxu0 0.0
      %1169 = vmatmul.mubr.f32.gmra.mxu0 %v356
      %v1170 = vpop.f32.mrf.mxu0
      %v1171 = vadd.f32 %v786, %v1170
      %v1172 = vpop.f32.mrf.mxu0
      %1173 = vmatprep.mubr.f32.mxu0 0.0
      %1174 = vmatmul.mubr.f32.gmra.mxu0 %v359
      %v1175 = vpop.f32.mrf.mxu0
      %v1176 = vadd.f32 %v791, %v1175
      %v1177 = vpop.f32.mrf.mxu0
      %1178 = vmatprep.mubr.f32.mxu0 0.0
      %1179 = vmatmul.mubr.f32.gmra.mxu0 %v362
      %v1180 = vpop.f32.mrf.mxu0
      %v1181 = vadd.f32 %v796, %v1180
      %v1182 = vpop.f32.mrf.mxu0
      %1183 = vmatprep.mubr.f32.mxu0 0.0
      %1184 = vmatmul.mubr.f32.gmra.mxu0 %v365
      %v1185 = vpop.f32.mrf.mxu0
      %v1186 = vadd.f32 %v801, %v1185
      %v1187 = vpop.f32.mrf.mxu0
      %1188 = vmatprep.mubr.f32.mxu0 0.0
      %1189 = vmatmul.mubr.f32.gmra.mxu0 %v368
      %v1190 = vpop.f32.mrf.mxu0
      %v1191 = vadd.f32 %v806, %v1190
      %v1192 = vpop.f32.mrf.mxu0
      %1193 = vdwg.mxu0
      %1194 = vst [vmem:[%s175] sm:$0xff] %v876
      %1195 = vst [vmem:[%s175 + $0x8] sm:$0xff] %v881
      %1196 = vst [vmem:[%s175 + $0x10] sm:$0xff] %v886
      %1197 = vst [vmem:[%s175 + $0x18] sm:$0xff] %v891
      %1198 = vst [vmem:[%s175 + $0x20] sm:$0xff] %v896
      %1199 = vst [vmem:[%s175 + $0x28] sm:$0xff] %v901
      %1200 = vst [vmem:[%s175 + $0x30] sm:$0xff] %v906
      %1201 = vst [vmem:[%s175 + $0x38] sm:$0xff] %v911
      %1202 = vst [vmem:[%s175 + $0x40] sm:$0xff] %v916
      %1203 = vst [vmem:[%s175 + $0x48] sm:$0xff] %v921
      %1204 = vst [vmem:[%s175 + $0x50] sm:$0xff] %v926
      %1205 = vst [vmem:[%s175 + $0x58] sm:$0xff] %v931
      %1206 = vst [vmem:[%s175 + $0x60] sm:$0xff] %v936
      %1207 = vst [vmem:[%s175 + $0x68] sm:$0xff] %v941
      %1208 = vst [vmem:[%s175 + $0x70] sm:$0xff] %v946
      %1209 = vst [vmem:[%s175 + $0x78] sm:$0xff] %v951
      %1210 = vst [vmem:[%s175 + $0x80] sm:$0xff] %v956
      %1211 = vst [vmem:[%s175 + $0x88] sm:$0xff] %v961
      %1212 = vst [vmem:[%s175 + $0x90] sm:$0xff] %v966
      %1213 = vst [vmem:[%s175 + $0x98] sm:$0xff] %v971
      %1214 = vst [vmem:[%s175 + $0xa0] sm:$0xff] %v976
      %1215 = vst [vmem:[%s175 + $0xa8] sm:$0xff] %v981
      %1216 = vst [vmem:[%s175 + $0xb0] sm:$0xff] %v986
      %1217 = vst [vmem:[%s175 + $0xb8] sm:$0xff] %v991
      %1218 = vst [vmem:[%s175 + $0xc0] sm:$0xff] %v996
      %1219 = vst [vmem:[%s175 + $0xc8] sm:$0xff] %v1001
      %1220 = vst [vmem:[%s175 + $0xd0] sm:$0xff] %v1006
      %1221 = vst [vmem:[%s175 + $0xd8] sm:$0xff] %v1011
      %1222 = vst [vmem:[%s175 + $0xe0] sm:$0xff] %v1016
      %1223 = vst [vmem:[%s175 + $0xe8] sm:$0xff] %v1021
      %1224 = vst [vmem:[%s175 + $0xf0] sm:$0xff] %v1026
      %1225 = vst [vmem:[%s175 + $0xf8] sm:$0xff] %v1031
      %1226 = vst [vmem:[%s175 + $0x100] sm:$0xff] %v1036
      %1227 = vst [vmem:[%s175 + $0x108] sm:$0xff] %v1041
      %1228 = vst [vmem:[%s175 + $0x110] sm:$0xff] %v1046
      %1229 = vst [vmem:[%s175 + $0x118] sm:$0xff] %v1051
      %1230 = vst [vmem:[%s175 + $0x120] sm:$0xff] %v1056
      %1231 = vst [vmem:[%s175 + $0x128] sm:$0xff] %v1061
      %1232 = vst [vmem:[%s175 + $0x130] sm:$0xff] %v1066
      %1233 = vst [vmem:[%s175 + $0x138] sm:$0xff] %v1071
      %1234 = vst [vmem:[%s175 + $0x140] sm:$0xff] %v1076
      %1235 = vst [vmem:[%s175 + $0x148] sm:$0xff] %v1081
      %1236 = vst [vmem:[%s175 + $0x150] sm:$0xff] %v1086
      %1237 = vst [vmem:[%s175 + $0x158] sm:$0xff] %v1091
      %1238 = vst [vmem:[%s175 + $0x160] sm:$0xff] %v1096
      %1239 = vst [vmem:[%s175 + $0x168] sm:$0xff] %v1101
      %1240 = vst [vmem:[%s175 + $0x170] sm:$0xff] %v1106
      %1241 = vst [vmem:[%s175 + $0x178] sm:$0xff] %v1111
      %1242 = vst [vmem:[%s175 + $0x180] sm:$0xff] %v1116
      %1243 = vst [vmem:[%s175 + $0x188] sm:$0xff] %v1121
      %1244 = vst [vmem:[%s175 + $0x190] sm:$0xff] %v1126
      %1245 = vst [vmem:[%s175 + $0x198] sm:$0xff] %v1131
      %1246 = vst [vmem:[%s175 + $0x1a0] sm:$0xff] %v1136
      %1247 = vst [vmem:[%s175 + $0x1a8] sm:$0xff] %v1141
      %1248 = vst [vmem:[%s175 + $0x1b0] sm:$0xff] %v1146
      %1249 = vst [vmem:[%s175 + $0x1b8] sm:$0xff] %v1151
      %1250 = vst [vmem:[%s175 + $0x1c0] sm:$0xff] %v1156
      %1251 = vst [vmem:[%s175 + $0x1c8] sm:$0xff] %v1161
      %1252 = vst [vmem:[%s175 + $0x1d0] sm:$0xff] %v1166
      %1253 = vst [vmem:[%s175 + $0x1d8] sm:$0xff] %v1171
      %1254 = vst [vmem:[%s175 + $0x1e0] sm:$0xff] %v1176
      %1255 = vst [vmem:[%s175 + $0x1e8] sm:$0xff] %v1181
      %1256 = vst [vmem:[%s175 + $0x1f0] sm:$0xff] %v1186
      %1257 = vst [vmem:[%s175 + $0x1f8] sm:$0xff] %v1191
      %s1258 = smul.u32 64, %s14
      %p1259 = scmp.lt.s32.totalorder %s1258, 255
      %s1260 = scalar_select %p1259, %s1258, 255
      %s1261 = smul.addr %s1260, 8
      %s1262 = scalar_lea.vmem %s3, %s1261
      // Predicated region
      $region33: #{ssta_forward.7} parent=31 // pred_check
        %p1263 = pneg %p100
      $region34: #{ssta_forward.7} parent=31 // pred_check_branch
        %1265 = sbr.rel (%p1263) target = $region36
      $region35: #{ssta_forward.7} parent=31 // pred_region
        %s1266 = smul.u32 64, %s14
      $region36: #{ssta_forward.7} parent=31 // pred_fallthru
        _
    $region32: #{ssta_forward.7} parent=5 // pred_fallthru
      _
    %p1267 = scmp.le.s32.totalorder 2, %s9
    // Predicated region
    $region37: #{ssta_forward.7} parent=5 // pred_check
      %p1268 = pneg %p1267
    $region38: #{ssta_forward.7} parent=5 // pred_check_branch
      %1270 = sbr.rel (%p1268) target = $region40
    $region39: #{ssta_forward.7} parent=5 // pred_region
      %s1271 = ssub.s32 %s9, 2
      // Predicated region
      $region41: #{ssta_forward.7} parent=39 // pred_check
        %p1272 = pneg %p106
      $region42: #{ssta_forward.7} parent=39 // pred_check_branch
        %1274 = sbr.rel (%p1272) target = $region44
      $region43: #{ssta_forward.7} parent=39 // pred_region
        %s1275 = smul.u32 64, %s15
        %p1276 = scmp.lt.s32.totalorder %s1275, 255
        %s1277 = scalar_select %p1276, %s1275, 255
        %s1278 = smul.addr %s1277, 8
        %s1279 = scalar_lea.vmem %s3, %s1278
      $region44: #{ssta_forward.7} parent=39 // pred_fallthru
        _
    $region40: #{ssta_forward.7} parent=5 // pred_fallthru
      _
  $region6: #{ssta_forward.7} parent=0 // loop_footer
    %s13 = sadd.s32 1, %s9
  $region7: #{ssta_forward.7} parent=0 // loop_footer_branch
    %8 = sbr.rel target = $region3
  $region8: #{ssta_forward.7} parent=0 // loop_exit
    _

// kernel: ssta_forward.9
$region0: #{ssta_forward.9}
  #allocation0 [shape = 'u32[]', space=smem, size = 0x4, offset = 0x4, fixed_abs, tag = 'smem constant byte address 0x4 - core index']
  #allocation1 [shape = 'u32[144,128]{1,0:T(1,128)}', space=vmem, size = 0x12000, scoped, tag = 'internal scratch']
  %s0 = inlined_call_operand.vmem [shape: f32[2048,896], index: 0, kind: input, shape index: {}]
  %s1 = inlined_call_operand.vmem [shape: f32[896,128], index: 1, kind: input, shape index: {}]
  %s2 = inlined_call_operand.vmem [shape: f32[2048,128], index: 2, kind: output, shape index: {}]
  %s3 = sld [smem:[#allocation0]]
  $region41: #{ssta_forward.9} parent=0
    _
  %s5 = ssub.s32 1, %s3
  %s6 = scalar_select 0, %s5, %s3
  loop: start=0, step=1, limit=6
  $region2: #{ssta_forward.9} parent=0 // loop_pre_header
    _
  $region3: #{ssta_forward.9} parent=0 // loop_header
    %s8 = sphi 0, %s12
    %p9 = scmp.ge.s32.totalorder %s8, 6
    %s18 = sphi 0, %s20
    %s21 = sphi 0, %s18
    %s22 = sphi 0, %s21
    %s38 = sphi 0, %s22
    %s42 = sphi 0, %s42
    %s44 = sphi 0, %s42
    %s45 = sphi 0, %s44
    %s59 = sphi 0, %s45
    %s65 = sphi 0, %s67
    %s68 = sphi 0, %s65
    %s69 = sphi 0, %s68
    %s85 = sphi 0, %s69
  $region4: #{ssta_forward.9} parent=0 // loop_header_branch
    %11 = sbr.rel (%p9) target = $region8
  $region5: #{ssta_forward.9} parent=0 // loop_body
    %s13 = ssub.s32 %s8, 1
    %s14 = ssub.s32 %s8, 2
    %s15 = sadd.s32 %s8, 1
    %s16 = ssub.s32 %s8, %s15
    %p17 = scmp.eq.s32.totalorder %s16, 0
    %s19 = sadd.s32 %s18, 1
    %s20 = scalar_select %p17, %s18, %s19
    %p23 = pneg %p17
    %p24 = scmp.eq.s32.totalorder %s8, 3
    %p25 = por %p23, %p24
    %p26 = scmp.ne.s32.totalorder %s18, %s21
    %p27 = scmp.eq.s32.totalorder %s8, 0
    %p28 = por %p26, %p27
    %p29 = scmp.ne.s32.totalorder %s18, %s21
    %p30 = scmp.eq.s32.totalorder %s13, 3
    %p31 = por %p29, %p30
    %p32 = scmp.ne.s32.totalorder %s21, %s22
    %p33 = scmp.eq.s32.totalorder %s13, 0
    %p34 = por %p32, %p33
    %p35 = scmp.ne.s32.totalorder %s21, %s22
    %p36 = scmp.eq.s32.totalorder %s14, 3
    %p37 = por %p35, %p36
    %p39 = scmp.ne.s32.totalorder %s22, %s38
    %p40 = scmp.eq.s32.totalorder %s14, 0
    %p41 = por %p39, %p40
    %s43 = sadd.s32 %s42, 1
    %p46 = scmp.eq.s32.totalorder %s8, 3
    %p47 = scmp.ne.s32.totalorder %s42, %s44
    %p48 = scmp.eq.s32.totalorder %s8, 0
    %p49 = por %p47, %p48
    %p50 = scmp.ne.s32.totalorder %s42, %s44
    %p51 = scmp.eq.s32.totalorder %s13, 3
    %p52 = por %p50, %p51
    %p53 = scmp.ne.s32.totalorder %s44, %s45
    %p54 = scmp.eq.s32.totalorder %s13, 0
    %p55 = por %p53, %p54
    %p56 = scmp.ne.s32.totalorder %s44, %s45
    %p57 = scmp.eq.s32.totalorder %s14, 3
    %p58 = por %p56, %p57
    %p60 = scmp.ne.s32.totalorder %s45, %s59
    %p61 = scmp.eq.s32.totalorder %s14, 0
    %p62 = por %p60, %p61
    %s63 = ssub.s32 %s8, %s15
    %p64 = scmp.eq.s32.totalorder %s63, 0
    %s66 = sadd.s32 %s65, 1
    %s67 = scalar_select %p64, %s65, %s66
    %p70 = pneg %p64
    %p71 = scmp.eq.s32.totalorder %s8, 3
    %p72 = por %p70, %p71
    %p73 = scmp.ne.s32.totalorder %s65, %s68
    %p74 = scmp.eq.s32.totalorder %s8, 0
    %p75 = por %p73, %p74
    %p76 = scmp.ne.s32.totalorder %s65, %s68
    %p77 = scmp.eq.s32.totalorder %s13, 3
    %p78 = por %p76, %p77
    %p79 = scmp.ne.s32.totalorder %s68, %s69
    %p80 = scmp.eq.s32.totalorder %s13, 0
    %p81 = por %p79, %p80
    %p82 = scmp.ne.s32.totalorder %s68, %s69
    %p83 = scmp.eq.s32.totalorder %s14, 3
    %p84 = por %p82, %p83
    %p86 = scmp.ne.s32.totalorder %s69, %s85
    %p87 = scmp.eq.s32.totalorder %s14, 0
    %p88 = por %p86, %p87
    %p89 = scmp.le.s32.totalorder 1, %s8
    %p90 = scmp.lt.s32.totalorder %s8, 5
    %p91 = pnand %p89, %p90
    %p92 = pneg %p91
    // Predicated region
    $region9: #{ssta_forward.9} parent=5 // pred_check
      _
    $region10: #{ssta_forward.9} parent=5 // pred_check_branch
      %94 = sbr.rel (%p91) target = $region12
    $region11: #{ssta_forward.9} parent=5 // pred_region
      %s95 = ssub.s32 %s8, 1
      // Predicated region
      $region13: #{ssta_forward.9} parent=11 // pred_check
        %p96 = pneg %p55
      $region14: #{ssta_forward.9} parent=11 // pred_check_branch
        %98 = sbr.rel (%p96) target = $region16
      $region15: #{ssta_forward.9} parent=11 // pred_region
        _
      $region16: #{ssta_forward.9} parent=11 // pred_fallthru
        _
    $region12: #{ssta_forward.9} parent=5 // pred_fallthru
      _
    %p99 = scmp.lt.s32.totalorder %s8, 4
    // Predicated region
    $region17: #{ssta_forward.9} parent=5 // pred_check
      %p100 = pneg %p99
    $region18: #{ssta_forward.9} parent=5 // pred_check_branch
      %102 = sbr.rel (%p100) target = $region20
    $region19: #{ssta_forward.9} parent=5 // pred_region
      // Predicated region
      $region21: #{ssta_forward.9} parent=19 // pred_check
        %p103 = pneg %p28
      $region22: #{ssta_forward.9} parent=19 // pred_check_branch
        %105 = sbr.rel (%p103) target = $region24
      $region23: #{ssta_forward.9} parent=19 // pred_region
        %s106 = smul.u32 64, %s8
        %p107 = scmp.lt.s32.totalorder %s106, 255
        %s108 = scalar_select %p107, %s106, 255
        %s109 = smul.addr %s108, 7
        %s110 = smul.addr %s109, 8
        %s111 = scalar_lea.vmem %s0, %s110
        %s112 = smul.u32 64, %s8
      $region24: #{ssta_forward.9} parent=19 // pred_fallthru
        _
    $region20: #{ssta_forward.9} parent=5 // pred_fallthru
      _
    %p113 = scmp.le.s32.totalorder 1, %s8
    %p114 = scmp.lt.s32.totalorder %s8, 5
    %p115 = pnand %p113, %p114
    %p116 = pneg %p115
    // Predicated region
    $region25: #{ssta_forward.9} parent=5 // pred_check
      _
    $region26: #{ssta_forward.9} parent=5 // pred_check_branch
      %118 = sbr.rel (%p115) target = $region28
    $region27: #{ssta_forward.9} parent=5 // pred_region
      %s119 = ssub.s32 %s8, 1
      %s120 = smul.u32 64, %s13
      %p121 = scmp.lt.s32.totalorder %s120, 255
      %s122 = scalar_select %p121, %s120, 255
      %s123 = smul.addr %s122, 7
      %s124 = smul.addr %s123, 8
      %s125 = scalar_lea.vmem %s0, %s124
      %p126 = pneg %p34
      %p127 = pneg %p31
      %p128 = pneg %p55
      %p129 = pneg %p52
      %p130 = pneg %p81
      %p131 = pneg %p78
      %s132 = smul.u32 64, %s13
      %p133 = scmp.lt.s32.totalorder %s132, 255
      %s134 = scalar_select %p133, %s132, 255
      %s135 = smul.addr %s134, 8
      %s136 = scalar_lea.vmem %s2, %s135
      %s137 = smul.u32 64, %s13
      %p138 = scmp.lt.s32.totalorder %s137, 255
      %s139 = scalar_select %p138, %s137, 255
      %s140 = smul.addr %s139, 7
      %s141 = smul.addr %s140, 8
      %s142 = scalar_lea.vmem %s0, %s141
      %s143 = smul.u32 64, %s13
      %s144 = smul.u32 64, %s13
      %p145 = scmp.lt.s32.totalorder %s144, 255
      %s146 = scalar_select %p145, %s144, 255
      %s147 = smul.addr %s146, 8
      %s148 = scalar_lea.vmem %s2, %s147
      %s149 = smul.u32 64, %s13
      %v150 = vld [vmem:[%s142] sm:$0xff]
      %v151 = vld [vmem:[%s142 + $0x8] sm:$0xff]
      %v152 = vld [vmem:[%s142 + $0x10] sm:$0xff]
      %v153 = vld [vmem:[%s142 + $0x18] sm:$0xff]
      %v154 = vld [vmem:[%s142 + $0x20] sm:$0xff]
      %v155 = vld [vmem:[%s142 + $0x28] sm:$0xff]
      %v156 = vld [vmem:[%s142 + $0x30] sm:$0xff]
      %v157 = vld [vmem:[%s142 + $0x38] sm:$0xff]
      %v158 = vld [vmem:[%s142 + $0x40] sm:$0xff]
      %v159 = vld [vmem:[%s142 + $0x48] sm:$0xff]
      %v160 = vld [vmem:[%s142 + $0x50] sm:$0xff]
      %v161 = vld [vmem:[%s142 + $0x58] sm:$0xff]
      %v162 = vld [vmem:[%s142 + $0x60] sm:$0xff]
      %v163 = vld [vmem:[%s142 + $0x68] sm:$0xff]
      %v164 = vld [vmem:[%s142 + $0x70] sm:$0xff]
      %v165 = vld [vmem:[%s142 + $0x78] sm:$0xff]
      %v166 = vld [vmem:[%s142 + $0x80] sm:$0xff]
      %v167 = vld [vmem:[%s142 + $0x88] sm:$0xff]
      %v168 = vld [vmem:[%s142 + $0x90] sm:$0xff]
      %v169 = vld [vmem:[%s142 + $0x98] sm:$0xff]
      %v170 = vld [vmem:[%s142 + $0xa0] sm:$0xff]
      %v171 = vld [vmem:[%s142 + $0xa8] sm:$0xff]
      %v172 = vld [vmem:[%s142 + $0xb0] sm:$0xff]
      %v173 = vld [vmem:[%s142 + $0xb8] sm:$0xff]
      %v174 = vld [vmem:[%s142 + $0xc0] sm:$0xff]
      %v175 = vld [vmem:[%s142 + $0xc8] sm:$0xff]
      %v176 = vld [vmem:[%s142 + $0xd0] sm:$0xff]
      %v177 = vld [vmem:[%s142 + $0xd8] sm:$0xff]
      %v178 = vld [vmem:[%s142 + $0xe0] sm:$0xff]
      %v179 = vld [vmem:[%s142 + $0xe8] sm:$0xff]
      %v180 = vld [vmem:[%s142 + $0xf0] sm:$0xff]
      %v181 = vld [vmem:[%s142 + $0xf8] sm:$0xff]
      %v182 = vld [vmem:[%s142 + $0x100] sm:$0xff]
      %v183 = vld [vmem:[%s142 + $0x108] sm:$0xff]
      %v184 = vld [vmem:[%s142 + $0x110] sm:$0xff]
      %v185 = vld [vmem:[%s142 + $0x118] sm:$0xff]
      %v186 = vld [vmem:[%s142 + $0x120] sm:$0xff]
      %v187 = vld [vmem:[%s142 + $0x128] sm:$0xff]
      %v188 = vld [vmem:[%s142 + $0x130] sm:$0xff]
      %v189 = vld [vmem:[%s142 + $0x138] sm:$0xff]
      %v190 = vld [vmem:[%s142 + $0x140] sm:$0xff]
      %v191 = vld [vmem:[%s142 + $0x148] sm:$0xff]
      %v192 = vld [vmem:[%s142 + $0x150] sm:$0xff]
      %v193 = vld [vmem:[%s142 + $0x158] sm:$0xff]
      %v194 = vld [vmem:[%s142 + $0x160] sm:$0xff]
      %v195 = vld [vmem:[%s142 + $0x168] sm:$0xff]
      %v196 = vld [vmem:[%s142 + $0x170] sm:$0xff]
      %v197 = vld [vmem:[%s142 + $0x178] sm:$0xff]
      %v198 = vld [vmem:[%s142 + $0x180] sm:$0xff]
      %v199 = vld [vmem:[%s142 + $0x188] sm:$0xff]
      %v200 = vld [vmem:[%s142 + $0x190] sm:$0xff]
      %v201 = vld [vmem:[%s142 + $0x198] sm:$0xff]
      %v202 = vld [vmem:[%s142 + $0x1a0] sm:$0xff]
      %v203 = vld [vmem:[%s142 + $0x1a8] sm:$0xff]
      %v204 = vld [vmem:[%s142 + $0x1b0] sm:$0xff]
      %v205 = vld [vmem:[%s142 + $0x1b8] sm:$0xff]
      %v206 = vld [vmem:[%s142 + $0x1c0] sm:$0xff]
      %v207 = vld [vmem:[%s142 + $0x1c8] sm:$0xff]
      %v208 = vld [vmem:[%s142 + $0x1d0] sm:$0xff]
      %v209 = vld [vmem:[%s142 + $0x1d8] sm:$0xff]
      %v210 = vld [vmem:[%s142 + $0x1e0] sm:$0xff]
      %v211 = vld [vmem:[%s142 + $0x1e8] sm:$0xff]
      %v212 = vld [vmem:[%s142 + $0x1f0] sm:$0xff]
      %v213 = vld [vmem:[%s142 + $0x1f8] sm:$0xff]
      %v214 = vld [vmem:[%s142 + $0x200] sm:$0xff]
      %v215 = vld [vmem:[%s142 + $0x208] sm:$0xff]
      %v216 = vld [vmem:[%s142 + $0x210] sm:$0xff]
      %v217 = vld [vmem:[%s142 + $0x218] sm:$0xff]
      %v218 = vld [vmem:[%s142 + $0x220] sm:$0xff]
      %v219 = vld [vmem:[%s142 + $0x228] sm:$0xff]
      %v220 = vld [vmem:[%s142 + $0x230] sm:$0xff]
      %v221 = vld [vmem:[%s142 + $0x238] sm:$0xff]
      %v222 = vld [vmem:[%s142 + $0x240] sm:$0xff]
      %v223 = vld [vmem:[%s142 + $0x248] sm:$0xff]
      %v224 = vld [vmem:[%s142 + $0x250] sm:$0xff]
      %v225 = vld [vmem:[%s142 + $0x258] sm:$0xff]
      %v226 = vld [vmem:[%s142 + $0x260] sm:$0xff]
      %v227 = vld [vmem:[%s142 + $0x268] sm:$0xff]
      %v228 = vld [vmem:[%s142 + $0x270] sm:$0xff]
      %v229 = vld [vmem:[%s142 + $0x278] sm:$0xff]
      %v230 = vld [vmem:[%s142 + $0x280] sm:$0xff]
      %v231 = vld [vmem:[%s142 + $0x288] sm:$0xff]
      %v232 = vld [vmem:[%s142 + $0x290] sm:$0xff]
      %v233 = vld [vmem:[%s142 + $0x298] sm:$0xff]
      %v234 = vld [vmem:[%s142 + $0x2a0] sm:$0xff]
      %v235 = vld [vmem:[%s142 + $0x2a8] sm:$0xff]
      %v236 = vld [vmem:[%s142 + $0x2b0] sm:$0xff]
      %v237 = vld [vmem:[%s142 + $0x2b8] sm:$0xff]
      %v238 = vld [vmem:[%s142 + $0x2c0] sm:$0xff]
      %v239 = vld [vmem:[%s142 + $0x2c8] sm:$0xff]
      %v240 = vld [vmem:[%s142 + $0x2d0] sm:$0xff]
      %v241 = vld [vmem:[%s142 + $0x2d8] sm:$0xff]
      %v242 = vld [vmem:[%s142 + $0x2e0] sm:$0xff]
      %v243 = vld [vmem:[%s142 + $0x2e8] sm:$0xff]
      %v244 = vld [vmem:[%s142 + $0x2f0] sm:$0xff]
      %v245 = vld [vmem:[%s142 + $0x2f8] sm:$0xff]
      %v246 = vld [vmem:[%s142 + $0x300] sm:$0xff]
      %v247 = vld [vmem:[%s142 + $0x308] sm:$0xff]
      %v248 = vld [vmem:[%s142 + $0x310] sm:$0xff]
      %v249 = vld [vmem:[%s142 + $0x318] sm:$0xff]
      %v250 = vld [vmem:[%s142 + $0x320] sm:$0xff]
      %v251 = vld [vmem:[%s142 + $0x328] sm:$0xff]
      %v252 = vld [vmem:[%s142 + $0x330] sm:$0xff]
      %v253 = vld [vmem:[%s142 + $0x338] sm:$0xff]
      %v254 = vld [vmem:[%s142 + $0x340] sm:$0xff]
      %v255 = vld [vmem:[%s142 + $0x348] sm:$0xff]
      %v256 = vld [vmem:[%s142 + $0x350] sm:$0xff]
      %v257 = vld [vmem:[%s142 + $0x358] sm:$0xff]
      %v258 = vld [vmem:[%s142 + $0x360] sm:$0xff]
      %v259 = vld [vmem:[%s142 + $0x368] sm:$0xff]
      %v260 = vld [vmem:[%s142 + $0x370] sm:$0xff]
      %v261 = vld [vmem:[%s142 + $0x378] sm:$0xff]
      %v262 = vld [vmem:[%s142 + $0x380] sm:$0xff]
      %v263 = vld [vmem:[%s142 + $0x388] sm:$0xff]
      %v264 = vld [vmem:[%s142 + $0x390] sm:$0xff]
      %v265 = vld [vmem:[%s142 + $0x398] sm:$0xff]
      %v266 = vld [vmem:[%s142 + $0x3a0] sm:$0xff]
      %v267 = vld [vmem:[%s142 + $0x3a8] sm:$0xff]
      %v268 = vld [vmem:[%s142 + $0x3b0] sm:$0xff]
      %v269 = vld [vmem:[%s142 + $0x3b8] sm:$0xff]
      %v270 = vld [vmem:[%s142 + $0x3c0] sm:$0xff]
      %v271 = vld [vmem:[%s142 + $0x3c8] sm:$0xff]
      %v272 = vld [vmem:[%s142 + $0x3d0] sm:$0xff]
      %v273 = vld [vmem:[%s142 + $0x3d8] sm:$0xff]
      %v274 = vld [vmem:[%s142 + $0x3e0] sm:$0xff]
      %v275 = vld [vmem:[%s142 + $0x3e8] sm:$0xff]
      %v276 = vld [vmem:[%s142 + $0x3f0] sm:$0xff]
      %v277 = vld [vmem:[%s142 + $0x3f8] sm:$0xff]
      %v278 = vld [vmem:[%s142 + $0x400] sm:$0xff]
      %v279 = vld [vmem:[%s142 + $0x408] sm:$0xff]
      %v280 = vld [vmem:[%s142 + $0x410] sm:$0xff]
      %v281 = vld [vmem:[%s142 + $0x418] sm:$0xff]
      %v282 = vld [vmem:[%s142 + $0x420] sm:$0xff]
      %v283 = vld [vmem:[%s142 + $0x428] sm:$0xff]
      %v284 = vld [vmem:[%s142 + $0x430] sm:$0xff]
      %v285 = vld [vmem:[%s142 + $0x438] sm:$0xff]
      %v286 = vld [vmem:[%s142 + $0x440] sm:$0xff]
      %v287 = vld [vmem:[%s142 + $0x448] sm:$0xff]
      %v288 = vld [vmem:[%s142 + $0x450] sm:$0xff]
      %v289 = vld [vmem:[%s142 + $0x458] sm:$0xff]
      %v290 = vld [vmem:[%s142 + $0x460] sm:$0xff]
      %v291 = vld [vmem:[%s142 + $0x468] sm:$0xff]
      %v292 = vld [vmem:[%s142 + $0x470] sm:$0xff]
      %v293 = vld [vmem:[%s142 + $0x478] sm:$0xff]
      %v294 = vld [vmem:[%s142 + $0x480] sm:$0xff]
      %v295 = vld [vmem:[%s142 + $0x488] sm:$0xff]
      %v296 = vld [vmem:[%s142 + $0x490] sm:$0xff]
      %v297 = vld [vmem:[%s142 + $0x498] sm:$0xff]
      %v298 = vld [vmem:[%s142 + $0x4a0] sm:$0xff]
      %v299 = vld [vmem:[%s142 + $0x4a8] sm:$0xff]
      %v300 = vld [vmem:[%s142 + $0x4b0] sm:$0xff]
      %v301 = vld [vmem:[%s142 + $0x4b8] sm:$0xff]
      %v302 = vld [vmem:[%s142 + $0x4c0] sm:$0xff]
      %v303 = vld [vmem:[%s142 + $0x4c8] sm:$0xff]
      %v304 = vld [vmem:[%s142 + $0x4d0] sm:$0xff]
      %v305 = vld [vmem:[%s142 + $0x4d8] sm:$0xff]
      %v306 = vld [vmem:[%s142 + $0x4e0] sm:$0xff]
      %v307 = vld [vmem:[%s142 + $0x4e8] sm:$0xff]
      %v308 = vld [vmem:[%s142 + $0x4f0] sm:$0xff]
      %v309 = vld [vmem:[%s142 + $0x4f8] sm:$0xff]
      %v310 = vld [vmem:[%s142 + $0x500] sm:$0xff]
      %v311 = vld [vmem:[%s142 + $0x508] sm:$0xff]
      %v312 = vld [vmem:[%s142 + $0x510] sm:$0xff]
      %v313 = vld [vmem:[%s142 + $0x518] sm:$0xff]
      %v314 = vld [vmem:[%s142 + $0x520] sm:$0xff]
      %v315 = vld [vmem:[%s142 + $0x528] sm:$0xff]
      %v316 = vld [vmem:[%s142 + $0x530] sm:$0xff]
      %v317 = vld [vmem:[%s142 + $0x538] sm:$0xff]
      %v318 = vld [vmem:[%s142 + $0x540] sm:$0xff]
      %v319 = vld [vmem:[%s142 + $0x548] sm:$0xff]
      %v320 = vld [vmem:[%s142 + $0x550] sm:$0xff]
      %v321 = vld [vmem:[%s142 + $0x558] sm:$0xff]
      %v322 = vld [vmem:[%s142 + $0x560] sm:$0xff]
      %v323 = vld [vmem:[%s142 + $0x568] sm:$0xff]
      %v324 = vld [vmem:[%s142 + $0x570] sm:$0xff]
      %v325 = vld [vmem:[%s142 + $0x578] sm:$0xff]
      %v326 = vld [vmem:[%s142 + $0x580] sm:$0xff]
      %v327 = vld [vmem:[%s142 + $0x588] sm:$0xff]
      %v328 = vld [vmem:[%s142 + $0x590] sm:$0xff]
      %v329 = vld [vmem:[%s142 + $0x598] sm:$0xff]
      %v330 = vld [vmem:[%s142 + $0x5a0] sm:$0xff]
      %v331 = vld [vmem:[%s142 + $0x5a8] sm:$0xff]
      %v332 = vld [vmem:[%s142 + $0x5b0] sm:$0xff]
      %v333 = vld [vmem:[%s142 + $0x5b8] sm:$0xff]
      %v334 = vld [vmem:[%s142 + $0x5c0] sm:$0xff]
      %v335 = vld [vmem:[%s142 + $0x5c8] sm:$0xff]
      %v336 = vld [vmem:[%s142 + $0x5d0] sm:$0xff]
      %v337 = vld [vmem:[%s142 + $0x5d8] sm:$0xff]
      %v338 = vld [vmem:[%s142 + $0x5e0] sm:$0xff]
      %v339 = vld [vmem:[%s142 + $0x5e8] sm:$0xff]
      %v340 = vld [vmem:[%s142 + $0x5f0] sm:$0xff]
      %v341 = vld [vmem:[%s142 + $0x5f8] sm:$0xff]
      %v342 = vld [vmem:[%s142 + $0x600] sm:$0xff]
      %v343 = vld [vmem:[%s142 + $0x608] sm:$0xff]
      %v344 = vld [vmem:[%s142 + $0x610] sm:$0xff]
      %v345 = vld [vmem:[%s142 + $0x618] sm:$0xff]
      %v346 = vld [vmem:[%s142 + $0x620] sm:$0xff]
      %v347 = vld [vmem:[%s142 + $0x628] sm:$0xff]
      %v348 = vld [vmem:[%s142 + $0x630] sm:$0xff]
      %v349 = vld [vmem:[%s142 + $0x638] sm:$0xff]
      %v350 = vld [vmem:[%s142 + $0x640] sm:$0xff]
      %v351 = vld [vmem:[%s142 + $0x648] sm:$0xff]
      %v352 = vld [vmem:[%s142 + $0x650] sm:$0xff]
      %v353 = vld [vmem:[%s142 + $0x658] sm:$0xff]
      %v354 = vld [vmem:[%s142 + $0x660] sm:$0xff]
      %v355 = vld [vmem:[%s142 + $0x668] sm:$0xff]
      %v356 = vld [vmem:[%s142 + $0x670] sm:$0xff]
      %v357 = vld [vmem:[%s142 + $0x678] sm:$0xff]
      %v358 = vld [vmem:[%s142 + $0x680] sm:$0xff]
      %v359 = vld [vmem:[%s142 + $0x688] sm:$0xff]
      %v360 = vld [vmem:[%s142 + $0x690] sm:$0xff]
      %v361 = vld [vmem:[%s142 + $0x698] sm:$0xff]
      %v362 = vld [vmem:[%s142 + $0x6a0] sm:$0xff]
      %v363 = vld [vmem:[%s142 + $0x6a8] sm:$0xff]
      %v364 = vld [vmem:[%s142 + $0x6b0] sm:$0xff]
      %v365 = vld [vmem:[%s142 + $0x6b8] sm:$0xff]
      %v366 = vld [vmem:[%s142 + $0x6c0] sm:$0xff]
      %v367 = vld [vmem:[%s142 + $0x6c8] sm:$0xff]
      %v368 = vld [vmem:[%s142 + $0x6d0] sm:$0xff]
      %v369 = vld [vmem:[%s142 + $0x6d8] sm:$0xff]
      %v370 = vld [vmem:[%s142 + $0x6e0] sm:$0xff]
      %v371 = vld [vmem:[%s142 + $0x6e8] sm:$0xff]
      %v372 = vld [vmem:[%s142 + $0x6f0] sm:$0xff]
      %v373 = vld [vmem:[%s142 + $0x6f8] sm:$0xff]
      %v374 = vld [vmem:[%s142 + $0x700] sm:$0xff]
      %v375 = vld [vmem:[%s142 + $0x708] sm:$0xff]
      %v376 = vld [vmem:[%s142 + $0x710] sm:$0xff]
      %v377 = vld [vmem:[%s142 + $0x718] sm:$0xff]
      %v378 = vld [vmem:[%s142 + $0x720] sm:$0xff]
      %v379 = vld [vmem:[%s142 + $0x728] sm:$0xff]
      %v380 = vld [vmem:[%s142 + $0x730] sm:$0xff]
      %v381 = vld [vmem:[%s142 + $0x738] sm:$0xff]
      %v382 = vld [vmem:[%s142 + $0x740] sm:$0xff]
      %v383 = vld [vmem:[%s142 + $0x748] sm:$0xff]
      %v384 = vld [vmem:[%s142 + $0x750] sm:$0xff]
      %v385 = vld [vmem:[%s142 + $0x758] sm:$0xff]
      %v386 = vld [vmem:[%s142 + $0x760] sm:$0xff]
      %v387 = vld [vmem:[%s142 + $0x768] sm:$0xff]
      %v388 = vld [vmem:[%s142 + $0x770] sm:$0xff]
      %v389 = vld [vmem:[%s142 + $0x778] sm:$0xff]
      %v390 = vld [vmem:[%s142 + $0x780] sm:$0xff]
      %v391 = vld [vmem:[%s142 + $0x788] sm:$0xff]
      %v392 = vld [vmem:[%s142 + $0x790] sm:$0xff]
      %v393 = vld [vmem:[%s142 + $0x798] sm:$0xff]
      %v394 = vld [vmem:[%s142 + $0x7a0] sm:$0xff]
      %v395 = vld [vmem:[%s142 + $0x7a8] sm:$0xff]
      %v396 = vld [vmem:[%s142 + $0x7b0] sm:$0xff]
      %v397 = vld [vmem:[%s142 + $0x7b8] sm:$0xff]
      %v398 = vld [vmem:[%s142 + $0x7c0] sm:$0xff]
      %v399 = vld [vmem:[%s142 + $0x7c8] sm:$0xff]
      %v400 = vld [vmem:[%s142 + $0x7d0] sm:$0xff]
      %v401 = vld [vmem:[%s142 + $0x7d8] sm:$0xff]
      %v402 = vld [vmem:[%s142 + $0x7e0] sm:$0xff]
      %v403 = vld [vmem:[%s142 + $0x7e8] sm:$0xff]
      %v404 = vld [vmem:[%s142 + $0x7f0] sm:$0xff]
      %v405 = vld [vmem:[%s142 + $0x7f8] sm:$0xff]
      %v406 = vld [vmem:[%s142 + $0x800] sm:$0xff]
      %v407 = vld [vmem:[%s142 + $0x808] sm:$0xff]
      %v408 = vld [vmem:[%s142 + $0x810] sm:$0xff]
      %v409 = vld [vmem:[%s142 + $0x818] sm:$0xff]
      %v410 = vld [vmem:[%s142 + $0x820] sm:$0xff]
      %v411 = vld [vmem:[%s142 + $0x828] sm:$0xff]
      %v412 = vld [vmem:[%s142 + $0x830] sm:$0xff]
      %v413 = vld [vmem:[%s142 + $0x838] sm:$0xff]
      %v414 = vld [vmem:[%s142 + $0x840] sm:$0xff]
      %v415 = vld [vmem:[%s142 + $0x848] sm:$0xff]
      %v416 = vld [vmem:[%s142 + $0x850] sm:$0xff]
      %v417 = vld [vmem:[%s142 + $0x858] sm:$0xff]
      %v418 = vld [vmem:[%s142 + $0x860] sm:$0xff]
      %v419 = vld [vmem:[%s142 + $0x868] sm:$0xff]
      %v420 = vld [vmem:[%s142 + $0x870] sm:$0xff]
      %v421 = vld [vmem:[%s142 + $0x878] sm:$0xff]
      %v422 = vld [vmem:[%s142 + $0x880] sm:$0xff]
      %v423 = vld [vmem:[%s142 + $0x888] sm:$0xff]
      %v424 = vld [vmem:[%s142 + $0x890] sm:$0xff]
      %v425 = vld [vmem:[%s142 + $0x898] sm:$0xff]
      %v426 = vld [vmem:[%s142 + $0x8a0] sm:$0xff]
      %v427 = vld [vmem:[%s142 + $0x8a8] sm:$0xff]
      %v428 = vld [vmem:[%s142 + $0x8b0] sm:$0xff]
      %v429 = vld [vmem:[%s142 + $0x8b8] sm:$0xff]
      %v430 = vld [vmem:[%s142 + $0x8c0] sm:$0xff]
      %v431 = vld [vmem:[%s142 + $0x8c8] sm:$0xff]
      %v432 = vld [vmem:[%s142 + $0x8d0] sm:$0xff]
      %v433 = vld [vmem:[%s142 + $0x8d8] sm:$0xff]
      %v434 = vld [vmem:[%s142 + $0x8e0] sm:$0xff]
      %v435 = vld [vmem:[%s142 + $0x8e8] sm:$0xff]
      %v436 = vld [vmem:[%s142 + $0x8f0] sm:$0xff]
      %v437 = vld [vmem:[%s142 + $0x8f8] sm:$0xff]
      %v438 = vld [vmem:[%s142 + $0x900] sm:$0xff]
      %v439 = vld [vmem:[%s142 + $0x908] sm:$0xff]
      %v440 = vld [vmem:[%s142 + $0x910] sm:$0xff]
      %v441 = vld [vmem:[%s142 + $0x918] sm:$0xff]
      %v442 = vld [vmem:[%s142 + $0x920] sm:$0xff]
      %v443 = vld [vmem:[%s142 + $0x928] sm:$0xff]
      %v444 = vld [vmem:[%s142 + $0x930] sm:$0xff]
      %v445 = vld [vmem:[%s142 + $0x938] sm:$0xff]
      %v446 = vld [vmem:[%s142 + $0x940] sm:$0xff]
      %v447 = vld [vmem:[%s142 + $0x948] sm:$0xff]
      %v448 = vld [vmem:[%s142 + $0x950] sm:$0xff]
      %v449 = vld [vmem:[%s142 + $0x958] sm:$0xff]
      %v450 = vld [vmem:[%s142 + $0x960] sm:$0xff]
      %v451 = vld [vmem:[%s142 + $0x968] sm:$0xff]
      %v452 = vld [vmem:[%s142 + $0x970] sm:$0xff]
      %v453 = vld [vmem:[%s142 + $0x978] sm:$0xff]
      %v454 = vld [vmem:[%s142 + $0x980] sm:$0xff]
      %v455 = vld [vmem:[%s142 + $0x988] sm:$0xff]
      %v456 = vld [vmem:[%s142 + $0x990] sm:$0xff]
      %v457 = vld [vmem:[%s142 + $0x998] sm:$0xff]
      %v458 = vld [vmem:[%s142 + $0x9a0] sm:$0xff]
      %v459 = vld [vmem:[%s142 + $0x9a8] sm:$0xff]
      %v460 = vld [vmem:[%s142 + $0x9b0] sm:$0xff]
      %v461 = vld [vmem:[%s142 + $0x9b8] sm:$0xff]
      %v462 = vld [vmem:[%s142 + $0x9c0] sm:$0xff]
      %v463 = vld [vmem:[%s142 + $0x9c8] sm:$0xff]
      %v464 = vld [vmem:[%s142 + $0x9d0] sm:$0xff]
      %v465 = vld [vmem:[%s142 + $0x9d8] sm:$0xff]
      %v466 = vld [vmem:[%s142 + $0x9e0] sm:$0xff]
      %v467 = vld [vmem:[%s142 + $0x9e8] sm:$0xff]
      %v468 = vld [vmem:[%s142 + $0x9f0] sm:$0xff]
      %v469 = vld [vmem:[%s142 + $0x9f8] sm:$0xff]
      %v470 = vld [vmem:[%s142 + $0xa00] sm:$0xff]
      %v471 = vld [vmem:[%s142 + $0xa08] sm:$0xff]
      %v472 = vld [vmem:[%s142 + $0xa10] sm:$0xff]
      %v473 = vld [vmem:[%s142 + $0xa18] sm:$0xff]
      %v474 = vld [vmem:[%s142 + $0xa20] sm:$0xff]
      %v475 = vld [vmem:[%s142 + $0xa28] sm:$0xff]
      %v476 = vld [vmem:[%s142 + $0xa30] sm:$0xff]
      %v477 = vld [vmem:[%s142 + $0xa38] sm:$0xff]
      %v478 = vld [vmem:[%s142 + $0xa40] sm:$0xff]
      %v479 = vld [vmem:[%s142 + $0xa48] sm:$0xff]
      %v480 = vld [vmem:[%s142 + $0xa50] sm:$0xff]
      %v481 = vld [vmem:[%s142 + $0xa58] sm:$0xff]
      %v482 = vld [vmem:[%s142 + $0xa60] sm:$0xff]
      %v483 = vld [vmem:[%s142 + $0xa68] sm:$0xff]
      %v484 = vld [vmem:[%s142 + $0xa70] sm:$0xff]
      %v485 = vld [vmem:[%s142 + $0xa78] sm:$0xff]
      %v486 = vld [vmem:[%s142 + $0xa80] sm:$0xff]
      %v487 = vld [vmem:[%s142 + $0xa88] sm:$0xff]
      %v488 = vld [vmem:[%s142 + $0xa90] sm:$0xff]
      %v489 = vld [vmem:[%s142 + $0xa98] sm:$0xff]
      %v490 = vld [vmem:[%s142 + $0xaa0] sm:$0xff]
      %v491 = vld [vmem:[%s142 + $0xaa8] sm:$0xff]
      %v492 = vld [vmem:[%s142 + $0xab0] sm:$0xff]
      %v493 = vld [vmem:[%s142 + $0xab8] sm:$0xff]
      %v494 = vld [vmem:[%s142 + $0xac0] sm:$0xff]
      %v495 = vld [vmem:[%s142 + $0xac8] sm:$0xff]
      %v496 = vld [vmem:[%s142 + $0xad0] sm:$0xff]
      %v497 = vld [vmem:[%s142 + $0xad8] sm:$0xff]
      %v498 = vld [vmem:[%s142 + $0xae0] sm:$0xff]
      %v499 = vld [vmem:[%s142 + $0xae8] sm:$0xff]
      %v500 = vld [vmem:[%s142 + $0xaf0] sm:$0xff]
      %v501 = vld [vmem:[%s142 + $0xaf8] sm:$0xff]
      %v502 = vld [vmem:[%s142 + $0xb00] sm:$0xff]
      %v503 = vld [vmem:[%s142 + $0xb08] sm:$0xff]
      %v504 = vld [vmem:[%s142 + $0xb10] sm:$0xff]
      %v505 = vld [vmem:[%s142 + $0xb18] sm:$0xff]
      %v506 = vld [vmem:[%s142 + $0xb20] sm:$0xff]
      %v507 = vld [vmem:[%s142 + $0xb28] sm:$0xff]
      %v508 = vld [vmem:[%s142 + $0xb30] sm:$0xff]
      %v509 = vld [vmem:[%s142 + $0xb38] sm:$0xff]
      %v510 = vld [vmem:[%s142 + $0xb40] sm:$0xff]
      %v511 = vld [vmem:[%s142 + $0xb48] sm:$0xff]
      %v512 = vld [vmem:[%s142 + $0xb50] sm:$0xff]
      %v513 = vld [vmem:[%s142 + $0xb58] sm:$0xff]
      %v514 = vld [vmem:[%s142 + $0xb60] sm:$0xff]
      %v515 = vld [vmem:[%s142 + $0xb68] sm:$0xff]
      %v516 = vld [vmem:[%s142 + $0xb70] sm:$0xff]
      %v517 = vld [vmem:[%s142 + $0xb78] sm:$0xff]
      %v518 = vld [vmem:[%s142 + $0xb80] sm:$0xff]
      %v519 = vld [vmem:[%s142 + $0xb88] sm:$0xff]
      %v520 = vld [vmem:[%s142 + $0xb90] sm:$0xff]
      %v521 = vld [vmem:[%s142 + $0xb98] sm:$0xff]
      %v522 = vld [vmem:[%s142 + $0xba0] sm:$0xff]
      %v523 = vld [vmem:[%s142 + $0xba8] sm:$0xff]
      %v524 = vld [vmem:[%s142 + $0xbb0] sm:$0xff]
      %v525 = vld [vmem:[%s142 + $0xbb8] sm:$0xff]
      %v526 = vld [vmem:[%s142 + $0xbc0] sm:$0xff]
      %v527 = vld [vmem:[%s142 + $0xbc8] sm:$0xff]
      %v528 = vld [vmem:[%s142 + $0xbd0] sm:$0xff]
      %v529 = vld [vmem:[%s142 + $0xbd8] sm:$0xff]
      %v530 = vld [vmem:[%s142 + $0xbe0] sm:$0xff]
      %v531 = vld [vmem:[%s142 + $0xbe8] sm:$0xff]
      %v532 = vld [vmem:[%s142 + $0xbf0] sm:$0xff]
      %v533 = vld [vmem:[%s142 + $0xbf8] sm:$0xff]
      %v534 = vld [vmem:[%s142 + $0xc00] sm:$0xff]
      %v535 = vld [vmem:[%s142 + $0xc08] sm:$0xff]
      %v536 = vld [vmem:[%s142 + $0xc10] sm:$0xff]
      %v537 = vld [vmem:[%s142 + $0xc18] sm:$0xff]
      %v538 = vld [vmem:[%s142 + $0xc20] sm:$0xff]
      %v539 = vld [vmem:[%s142 + $0xc28] sm:$0xff]
      %v540 = vld [vmem:[%s142 + $0xc30] sm:$0xff]
      %v541 = vld [vmem:[%s142 + $0xc38] sm:$0xff]
      %v542 = vld [vmem:[%s142 + $0xc40] sm:$0xff]
      %v543 = vld [vmem:[%s142 + $0xc48] sm:$0xff]
      %v544 = vld [vmem:[%s142 + $0xc50] sm:$0xff]
      %v545 = vld [vmem:[%s142 + $0xc58] sm:$0xff]
      %v546 = vld [vmem:[%s142 + $0xc60] sm:$0xff]
      %v547 = vld [vmem:[%s142 + $0xc68] sm:$0xff]
      %v548 = vld [vmem:[%s142 + $0xc70] sm:$0xff]
      %v549 = vld [vmem:[%s142 + $0xc78] sm:$0xff]
      %v550 = vld [vmem:[%s142 + $0xc80] sm:$0xff]
      %v551 = vld [vmem:[%s142 + $0xc88] sm:$0xff]
      %v552 = vld [vmem:[%s142 + $0xc90] sm:$0xff]
      %v553 = vld [vmem:[%s142 + $0xc98] sm:$0xff]
      %v554 = vld [vmem:[%s142 + $0xca0] sm:$0xff]
      %v555 = vld [vmem:[%s142 + $0xca8] sm:$0xff]
      %v556 = vld [vmem:[%s142 + $0xcb0] sm:$0xff]
      %v557 = vld [vmem:[%s142 + $0xcb8] sm:$0xff]
      %v558 = vld [vmem:[%s142 + $0xcc0] sm:$0xff]
      %v559 = vld [vmem:[%s142 + $0xcc8] sm:$0xff]
      %v560 = vld [vmem:[%s142 + $0xcd0] sm:$0xff]
      %v561 = vld [vmem:[%s142 + $0xcd8] sm:$0xff]
      %v562 = vld [vmem:[%s142 + $0xce0] sm:$0xff]
      %v563 = vld [vmem:[%s142 + $0xce8] sm:$0xff]
      %v564 = vld [vmem:[%s142 + $0xcf0] sm:$0xff]
      %v565 = vld [vmem:[%s142 + $0xcf8] sm:$0xff]
      %v566 = vld [vmem:[%s142 + $0xd00] sm:$0xff]
      %v567 = vld [vmem:[%s142 + $0xd08] sm:$0xff]
      %v568 = vld [vmem:[%s142 + $0xd10] sm:$0xff]
      %v569 = vld [vmem:[%s142 + $0xd18] sm:$0xff]
      %v570 = vld [vmem:[%s142 + $0xd20] sm:$0xff]
      %v571 = vld [vmem:[%s142 + $0xd28] sm:$0xff]
      %v572 = vld [vmem:[%s142 + $0xd30] sm:$0xff]
      %v573 = vld [vmem:[%s142 + $0xd38] sm:$0xff]
      %v574 = vld [vmem:[%s142 + $0xd40] sm:$0xff]
      %v575 = vld [vmem:[%s142 + $0xd48] sm:$0xff]
      %v576 = vld [vmem:[%s142 + $0xd50] sm:$0xff]
      %v577 = vld [vmem:[%s142 + $0xd58] sm:$0xff]
      %v578 = vld [vmem:[%s142 + $0xd60] sm:$0xff]
      %v579 = vld [vmem:[%s142 + $0xd68] sm:$0xff]
      %v580 = vld [vmem:[%s142 + $0xd70] sm:$0xff]
      %v581 = vld [vmem:[%s142 + $0xd78] sm:$0xff]
      %v582 = vld [vmem:[%s142 + $0xd80] sm:$0xff]
      %v583 = vld [vmem:[%s142 + $0xd88] sm:$0xff]
      %v584 = vld [vmem:[%s142 + $0xd90] sm:$0xff]
      %v585 = vld [vmem:[%s142 + $0xd98] sm:$0xff]
      %v586 = vld [vmem:[%s142 + $0xda0] sm:$0xff]
      %v587 = vld [vmem:[%s142 + $0xda8] sm:$0xff]
      %v588 = vld [vmem:[%s142 + $0xdb0] sm:$0xff]
      %v589 = vld [vmem:[%s142 + $0xdb8] sm:$0xff]
      %v590 = vld [vmem:[%s142 + $0xdc0] sm:$0xff]
      %v591 = vld [vmem:[%s142 + $0xdc8] sm:$0xff]
      %v592 = vld [vmem:[%s142 + $0xdd0] sm:$0xff]
      %v593 = vld [vmem:[%s142 + $0xdd8] sm:$0xff]
      %v594 = vld [vmem:[%s142 + $0xde0] sm:$0xff]
      %v595 = vld [vmem:[%s142 + $0xde8] sm:$0xff]
      %v596 = vld [vmem:[%s142 + $0xdf0] sm:$0xff]
      %v597 = vld [vmem:[%s142 + $0xdf8] sm:$0xff]
      %v598 = vld [vmem:[%s1] sm:$0xff]
      %v599 = vld [vmem:[%s1 + $0x8] sm:$0xff]
      %v600 = vld [vmem:[%s1 + $0x10] sm:$0xff]
      %v601 = vld [vmem:[%s1 + $0x18] sm:$0xff]
      %v602 = vld [vmem:[%s1 + $0x20] sm:$0xff]
      %v603 = vld [vmem:[%s1 + $0x28] sm:$0xff]
      %v604 = vld [vmem:[%s1 + $0x30] sm:$0xff]
      %v605 = vld [vmem:[%s1 + $0x38] sm:$0xff]
      %v606 = vld [vmem:[%s1 + $0x40] sm:$0xff]
      %v607 = vld [vmem:[%s1 + $0x48] sm:$0xff]
      %v608 = vld [vmem:[%s1 + $0x50] sm:$0xff]
      %v609 = vld [vmem:[%s1 + $0x58] sm:$0xff]
      %v610 = vld [vmem:[%s1 + $0x60] sm:$0xff]
      %v611 = vld [vmem:[%s1 + $0x68] sm:$0xff]
      %v612 = vld [vmem:[%s1 + $0x70] sm:$0xff]
      %v613 = vld [vmem:[%s1 + $0x78] sm:$0xff]
      %v614 = vld [vmem:[%s1 + $0x80] sm:$0xff]
      %v615 = vld [vmem:[%s1 + $0x88] sm:$0xff]
      %v616 = vld [vmem:[%s1 + $0x90] sm:$0xff]
      %v617 = vld [vmem:[%s1 + $0x98] sm:$0xff]
      %v618 = vld [vmem:[%s1 + $0xa0] sm:$0xff]
      %v619 = vld [vmem:[%s1 + $0xa8] sm:$0xff]
      %v620 = vld [vmem:[%s1 + $0xb0] sm:$0xff]
      %v621 = vld [vmem:[%s1 + $0xb8] sm:$0xff]
      %v622 = vld [vmem:[%s1 + $0xc0] sm:$0xff]
      %v623 = vld [vmem:[%s1 + $0xc8] sm:$0xff]
      %v624 = vld [vmem:[%s1 + $0xd0] sm:$0xff]
      %v625 = vld [vmem:[%s1 + $0xd8] sm:$0xff]
      %v626 = vld [vmem:[%s1 + $0xe0] sm:$0xff]
      %v627 = vld [vmem:[%s1 + $0xe8] sm:$0xff]
      %v628 = vld [vmem:[%s1 + $0xf0] sm:$0xff]
      %v629 = vld [vmem:[%s1 + $0xf8] sm:$0xff]
      %v630 = vld [vmem:[%s1 + $0x100] sm:$0xff]
      %v631 = vld [vmem:[%s1 + $0x108] sm:$0xff]
      %v632 = vld [vmem:[%s1 + $0x110] sm:$0xff]
      %v633 = vld [vmem:[%s1 + $0x118] sm:$0xff]
      %v634 = vld [vmem:[%s1 + $0x120] sm:$0xff]
      %v635 = vld [vmem:[%s1 + $0x128] sm:$0xff]
      %v636 = vld [vmem:[%s1 + $0x130] sm:$0xff]
      %v637 = vld [vmem:[%s1 + $0x138] sm:$0xff]
      %v638 = vld [vmem:[%s1 + $0x140] sm:$0xff]
      %v639 = vld [vmem:[%s1 + $0x148] sm:$0xff]
      %v640 = vld [vmem:[%s1 + $0x150] sm:$0xff]
      %v641 = vld [vmem:[%s1 + $0x158] sm:$0xff]
      %v642 = vld [vmem:[%s1 + $0x160] sm:$0xff]
      %v643 = vld [vmem:[%s1 + $0x168] sm:$0xff]
      %v644 = vld [vmem:[%s1 + $0x170] sm:$0xff]
      %v645 = vld [vmem:[%s1 + $0x178] sm:$0xff]
      %v646 = vld [vmem:[%s1 + $0x180] sm:$0xff]
      %v647 = vld [vmem:[%s1 + $0x188] sm:$0xff]
      %v648 = vld [vmem:[%s1 + $0x190] sm:$0xff]
      %v649 = vld [vmem:[%s1 + $0x198] sm:$0xff]
      %v650 = vld [vmem:[%s1 + $0x1a0] sm:$0xff]
      %v651 = vld [vmem:[%s1 + $0x1a8] sm:$0xff]
      %v652 = vld [vmem:[%s1 + $0x1b0] sm:$0xff]
      %v653 = vld [vmem:[%s1 + $0x1b8] sm:$0xff]
      %v654 = vld [vmem:[%s1 + $0x1c0] sm:$0xff]
      %v655 = vld [vmem:[%s1 + $0x1c8] sm:$0xff]
      %v656 = vld [vmem:[%s1 + $0x1d0] sm:$0xff]
      %v657 = vld [vmem:[%s1 + $0x1d8] sm:$0xff]
      %v658 = vld [vmem:[%s1 + $0x1e0] sm:$0xff]
      %v659 = vld [vmem:[%s1 + $0x1e8] sm:$0xff]
      %v660 = vld [vmem:[%s1 + $0x1f0] sm:$0xff]
      %v661 = vld [vmem:[%s1 + $0x1f8] sm:$0xff]
      %v662 = vld [vmem:[%s1 + $0x200] sm:$0xff]
      %v663 = vld [vmem:[%s1 + $0x208] sm:$0xff]
      %v664 = vld [vmem:[%s1 + $0x210] sm:$0xff]
      %v665 = vld [vmem:[%s1 + $0x218] sm:$0xff]
      %v666 = vld [vmem:[%s1 + $0x220] sm:$0xff]
      %v667 = vld [vmem:[%s1 + $0x228] sm:$0xff]
      %v668 = vld [vmem:[%s1 + $0x230] sm:$0xff]
      %v669 = vld [vmem:[%s1 + $0x238] sm:$0xff]
      %v670 = vld [vmem:[%s1 + $0x240] sm:$0xff]
      %v671 = vld [vmem:[%s1 + $0x248] sm:$0xff]
      %v672 = vld [vmem:[%s1 + $0x250] sm:$0xff]
      %v673 = vld [vmem:[%s1 + $0x258] sm:$0xff]
      %v674 = vld [vmem:[%s1 + $0x260] sm:$0xff]
      %v675 = vld [vmem:[%s1 + $0x268] sm:$0xff]
      %v676 = vld [vmem:[%s1 + $0x270] sm:$0xff]
      %v677 = vld [vmem:[%s1 + $0x278] sm:$0xff]
      %v678 = vld [vmem:[%s1 + $0x280] sm:$0xff]
      %v679 = vld [vmem:[%s1 + $0x288] sm:$0xff]
      %v680 = vld [vmem:[%s1 + $0x290] sm:$0xff]
      %v681 = vld [vmem:[%s1 + $0x298] sm:$0xff]
      %v682 = vld [vmem:[%s1 + $0x2a0] sm:$0xff]
      %v683 = vld [vmem:[%s1 + $0x2a8] sm:$0xff]
      %v684 = vld [vmem:[%s1 + $0x2b0] sm:$0xff]
      %v685 = vld [vmem:[%s1 + $0x2b8] sm:$0xff]
      %v686 = vld [vmem:[%s1 + $0x2c0] sm:$0xff]
      %v687 = vld [vmem:[%s1 + $0x2c8] sm:$0xff]
      %v688 = vld [vmem:[%s1 + $0x2d0] sm:$0xff]
      %v689 = vld [vmem:[%s1 + $0x2d8] sm:$0xff]
      %v690 = vld [vmem:[%s1 + $0x2e0] sm:$0xff]
      %v691 = vld [vmem:[%s1 + $0x2e8] sm:$0xff]
      %v692 = vld [vmem:[%s1 + $0x2f0] sm:$0xff]
      %v693 = vld [vmem:[%s1 + $0x2f8] sm:$0xff]
      %v694 = vld [vmem:[%s1 + $0x300] sm:$0xff]
      %v695 = vld [vmem:[%s1 + $0x308] sm:$0xff]
      %v696 = vld [vmem:[%s1 + $0x310] sm:$0xff]
      %v697 = vld [vmem:[%s1 + $0x318] sm:$0xff]
      %v698 = vld [vmem:[%s1 + $0x320] sm:$0xff]
      %v699 = vld [vmem:[%s1 + $0x328] sm:$0xff]
      %v700 = vld [vmem:[%s1 + $0x330] sm:$0xff]
      %v701 = vld [vmem:[%s1 + $0x338] sm:$0xff]
      %v702 = vld [vmem:[%s1 + $0x340] sm:$0xff]
      %v703 = vld [vmem:[%s1 + $0x348] sm:$0xff]
      %v704 = vld [vmem:[%s1 + $0x350] sm:$0xff]
      %v705 = vld [vmem:[%s1 + $0x358] sm:$0xff]
      %v706 = vld [vmem:[%s1 + $0x360] sm:$0xff]
      %v707 = vld [vmem:[%s1 + $0x368] sm:$0xff]
      %v708 = vld [vmem:[%s1 + $0x370] sm:$0xff]
      %v709 = vld [vmem:[%s1 + $0x378] sm:$0xff]
      %710 = vmatprep.subr.mxu0 0.0
      %711 = vmatpush1.msra.mxu0 %v613
      %712 = vmatprep.subr.mxu0 0.0
      %713 = vmatpush1.msra.mxu0 %v612
      %714 = vmatprep.subr.mxu0 0.0
      %715 = vmatpush1.msra.mxu0 %v611
      %716 = vmatprep.subr.mxu0 0.0
      %717 = vmatpush1.msra.mxu0 %v610
      %718 = vmatprep.subr.mxu0 0.0
      %719 = vmatpush1.msra.mxu0 %v609
      %720 = vmatprep.subr.mxu0 0.0
      %721 = vmatpush1.msra.mxu0 %v608
      %722 = vmatprep.subr.mxu0 0.0
      %723 = vmatpush1.msra.mxu0 %v607
      %724 = vmatprep.subr.mxu0 0.0
      %725 = vmatpush1.msra.mxu0 %v606
      %726 = vmatprep.subr.mxu0 0.0
      %727 = vmatpush1.msra.mxu0 %v605
      %728 = vmatprep.subr.mxu0 0.0
      %729 = vmatpush1.msra.mxu0 %v604
      %730 = vmatprep.subr.mxu0 0.0
      %731 = vmatpush1.msra.mxu0 %v603
      %732 = vmatprep.subr.mxu0 0.0
      %733 = vmatpush1.msra.mxu0 %v602
      %734 = vmatprep.subr.mxu0 0.0
      %735 = vmatpush1.msra.mxu0 %v601
      %736 = vmatprep.subr.mxu0 0.0
      %737 = vmatpush1.msra.mxu0 %v600
      %738 = vmatprep.subr.mxu0 0.0
      %739 = vmatpush1.msra.mxu0 %v599
      %740 = vmatprep.subr.mxu0 0.0
      %741 = vmatpush1.msra.mxu0 %v598
      %742 = vmatprep.subr.mxu0 0.0
      %743 = vmatpush2.msra.mxu0 %v629
      %744 = vmatprep.subr.mxu0 0.0
      %745 = vmatpush2.msra.mxu0 %v628
      %746 = vmatprep.subr.mxu0 0.0
      %747 = vmatpush2.msra.mxu0 %v627
      %748 = vmatprep.subr.mxu0 0.0
      %749 = vmatpush2.msra.mxu0 %v626
      %750 = vmatprep.subr.mxu0 0.0
      %751 = vmatpush2.msra.mxu0 %v625
      %752 = vmatprep.subr.mxu0 0.0
      %753 = vmatpush2.msra.mxu0 %v624
      %754 = vmatprep.subr.mxu0 0.0
      %755 = vmatpush2.msra.mxu0 %v623
      %756 = vmatprep.subr.mxu0 0.0
      %757 = vmatpush2.msra.mxu0 %v622
      %758 = vmatprep.subr.mxu0 0.0
      %759 = vmatpush2.msra.mxu0 %v621
      %760 = vmatprep.subr.mxu0 0.0
      %761 = vmatpush2.msra.mxu0 %v620
      %762 = vmatprep.subr.mxu0 0.0
      %763 = vmatpush2.msra.mxu0 %v619
      %764 = vmatprep.subr.mxu0 0.0
      %765 = vmatpush2.msra.mxu0 %v618
      %766 = vmatprep.subr.mxu0 0.0
      %767 = vmatpush2.msra.mxu0 %v617
      %768 = vmatprep.subr.mxu0 0.0
      %769 = vmatpush2.msra.mxu0 %v616
      %770 = vmatprep.subr.mxu0 0.0
      %771 = vmatpush2.msra.mxu0 %v615
      %772 = vmatprep.subr.mxu0 0.0
      %773 = vmatpush2.msra.mxu0 %v614
      %774 = vmatprep.mubr.f32.mxu0 %v151
      %775 = vmatmul.mubr.f32.gmra.mxu0 %v150
      %v776 = vpop.f32.mrf.mxu0
      %v777 = vadd.f32 0.0, %v776
      %v778 = vpop.f32.mrf.mxu0
      %779 = vmatprep.mubr.f32.mxu0 %v158
      %780 = vmatmul.mubr.f32.gmra.mxu0 %v157
      %v781 = vpop.f32.mrf.mxu0
      %v782 = vadd.f32 0.0, %v781
      %v783 = vpop.f32.mrf.mxu0
      %784 = vmatprep.mubr.f32.mxu0 %v165
      %785 = vmatmul.mubr.f32.gmra.mxu0 %v164
      %v786 = vpop.f32.mrf.mxu0
      %v787 = vadd.f32 0.0, %v786
      %v788 = vpop.f32.mrf.mxu0
      %789 = vmatprep.mubr.f32.mxu0 %v172
      %790 = vmatmul.mubr.f32.gmra.mxu0 %v171
      %v791 = vpop.f32.mrf.mxu0
      %v792 = vadd.f32 0.0, %v791
      %v793 = vpop.f32.mrf.mxu0
      %794 = vmatprep.mubr.f32.mxu0 %v179
      %795 = vmatmul.mubr.f32.gmra.mxu0 %v178
      %v796 = vpop.f32.mrf.mxu0
      %v797 = vadd.f32 0.0, %v796
      %v798 = vpop.f32.mrf.mxu0
      %799 = vmatprep.mubr.f32.mxu0 %v186
      %800 = vmatmul.mubr.f32.gmra.mxu0 %v185
      %v801 = vpop.f32.mrf.mxu0
      %v802 = vadd.f32 0.0, %v801
      %v803 = vpop.f32.mrf.mxu0
      %804 = vmatprep.mubr.f32.mxu0 %v193
      %805 = vmatmul.mubr.f32.gmra.mxu0 %v192
      %v806 = vpop.f32.mrf.mxu0
      %v807 = vadd.f32 0.0, %v806
      %v808 = vpop.f32.mrf.mxu0
      %809 = vmatprep.mubr.f32.mxu0 %v200
      %810 = vmatmul.mubr.f32.gmra.mxu0 %v199
      %v811 = vpop.f32.mrf.mxu0
      %v812 = vadd.f32 0.0, %v811
      %v813 = vpop.f32.mrf.mxu0
      %814 = vmatprep.mubr.f32.mxu0 %v207
      %815 = vmatmul.mubr.f32.gmra.mxu0 %v206
      %v816 = vpop.f32.mrf.mxu0
      %v817 = vadd.f32 0.0, %v816
      %v818 = vpop.f32.mrf.mxu0
      %819 = vmatprep.mubr.f32.mxu0 %v214
      %820 = vmatmul.mubr.f32.gmra.mxu0 %v213
      %v821 = vpop.f32.mrf.mxu0
      %v822 = vadd.f32 0.0, %v821
      %v823 = vpop.f32.mrf.mxu0
      %824 = vmatprep.mubr.f32.mxu0 %v221
      %825 = vmatmul.mubr.f32.gmra.mxu0 %v220
      %v826 = vpop.f32.mrf.mxu0
      %v827 = vadd.f32 0.0, %v826
      %v828 = vpop.f32.mrf.mxu0
      %829 = vmatprep.mubr.f32.mxu0 %v228
      %830 = vmatmul.mubr.f32.gmra.mxu0 %v227
      %v831 = vpop.f32.mrf.mxu0
      %v832 = vadd.f32 0.0, %v831
      %v833 = vpop.f32.mrf.mxu0
      %834 = vmatprep.mubr.f32.mxu0 %v235
      %835 = vmatmul.mubr.f32.gmra.mxu0 %v234
      %v836 = vpop.f32.mrf.mxu0
      %v837 = vadd.f32 0.0, %v836
      %v838 = vpop.f32.mrf.mxu0
      %839 = vmatprep.mubr.f32.mxu0 %v242
      %840 = vmatmul.mubr.f32.gmra.mxu0 %v241
      %v841 = vpop.f32.mrf.mxu0
      %v842 = vadd.f32 0.0, %v841
      %v843 = vpop.f32.mrf.mxu0
      %844 = vmatprep.mubr.f32.mxu0 %v249
      %845 = vmatmul.mubr.f32.gmra.mxu0 %v248
      %v846 = vpop.f32.mrf.mxu0
      %v847 = vadd.f32 0.0, %v846
      %v848 = vpop.f32.mrf.mxu0
      %849 = vmatprep.mubr.f32.mxu0 %v256
      %850 = vmatmul.mubr.f32.gmra.mxu0 %v255
      %v851 = vpop.f32.mrf.mxu0
      %v852 = vadd.f32 0.0, %v851
      %v853 = vpop.f32.mrf.mxu0
      %854 = vmatprep.mubr.f32.mxu0 %v263
      %855 = vmatmul.mubr.f32.gmra.mxu0 %v262
      %v856 = vpop.f32.mrf.mxu0
      %v857 = vadd.f32 0.0, %v856
      %v858 = vpop.f32.mrf.mxu0
      %859 = vmatprep.mubr.f32.mxu0 %v270
      %860 = vmatmul.mubr.f32.gmra.mxu0 %v269
      %v861 = vpop.f32.mrf.mxu0
      %v862 = vadd.f32 0.0, %v861
      %v863 = vpop.f32.mrf.mxu0
      %864 = vmatprep.mubr.f32.mxu0 %v277
      %865 = vmatmul.mubr.f32.gmra.mxu0 %v276
      %v866 = vpop.f32.mrf.mxu0
      %v867 = vadd.f32 0.0, %v866
      %v868 = vpop.f32.mrf.mxu0
      %869 = vmatprep.mubr.f32.mxu0 %v284
      %870 = vmatmul.mubr.f32.gmra.mxu0 %v283
      %v871 = vpop.f32.mrf.mxu0
      %v872 = vadd.f32 0.0, %v871
      %v873 = vpop.f32.mrf.mxu0
      %874 = vmatprep.mubr.f32.mxu0 %v291
      %875 = vmatmul.mubr.f32.gmra.mxu0 %v290
      %v876 = vpop.f32.mrf.mxu0
      %v877 = vadd.f32 0.0, %v876
      %v878 = vpop.f32.mrf.mxu0
      %879 = vmatprep.mubr.f32.mxu0 %v298
      %880 = vmatmul.mubr.f32.gmra.mxu0 %v297
      %v881 = vpop.f32.mrf.mxu0
      %v882 = vadd.f32 0.0, %v881
      %v883 = vpop.f32.mrf.mxu0
      %884 = vmatprep.mubr.f32.mxu0 %v305
      %885 = vmatmul.mubr.f32.gmra.mxu0 %v304
      %v886 = vpop.f32.mrf.mxu0
      %v887 = vadd.f32 0.0, %v886
      %v888 = vpop.f32.mrf.mxu0
      %889 = vmatprep.mubr.f32.mxu0 %v312
      %890 = vmatmul.mubr.f32.gmra.mxu0 %v311
      %v891 = vpop.f32.mrf.mxu0
      %v892 = vadd.f32 0.0, %v891
      %v893 = vpop.f32.mrf.mxu0
      %894 = vmatprep.mubr.f32.mxu0 %v319
      %895 = vmatmul.mubr.f32.gmra.mxu0 %v318
      %v896 = vpop.f32.mrf.mxu0
      %v897 = vadd.f32 0.0, %v896
      %v898 = vpop.f32.mrf.mxu0
      %899 = vmatprep.mubr.f32.mxu0 %v326
      %900 = vmatmul.mubr.f32.gmra.mxu0 %v325
      %v901 = vpop.f32.mrf.mxu0
      %v902 = vadd.f32 0.0, %v901
      %v903 = vpop.f32.mrf.mxu0
      %904 = vmatprep.mubr.f32.mxu0 %v333
      %905 = vmatmul.mubr.f32.gmra.mxu0 %v332
      %v906 = vpop.f32.mrf.mxu0
      %v907 = vadd.f32 0.0, %v906
      %v908 = vpop.f32.mrf.mxu0
      %909 = vmatprep.mubr.f32.mxu0 %v340
      %910 = vmatmul.mubr.f32.gmra.mxu0 %v339
      %v911 = vpop.f32.mrf.mxu0
      %v912 = vadd.f32 0.0, %v911
      %v913 = vpop.f32.mrf.mxu0
      %914 = vmatprep.mubr.f32.mxu0 %v347
      %915 = vmatmul.mubr.f32.gmra.mxu0 %v346
      %v916 = vpop.f32.mrf.mxu0
      %v917 = vadd.f32 0.0, %v916
      %v918 = vpop.f32.mrf.mxu0
      %919 = vmatprep.mubr.f32.mxu0 %v354
      %920 = vmatmul.mubr.f32.gmra.mxu0 %v353
      %v921 = vpop.f32.mrf.mxu0
      %v922 = vadd.f32 0.0, %v921
      %v923 = vpop.f32.mrf.mxu0
      %924 = vmatprep.mubr.f32.mxu0 %v361
      %925 = vmatmul.mubr.f32.gmra.mxu0 %v360
      %v926 = vpop.f32.mrf.mxu0
      %v927 = vadd.f32 0.0, %v926
      %v928 = vpop.f32.mrf.mxu0
      %929 = vmatprep.mubr.f32.mxu0 %v368
      %930 = vmatmul.mubr.f32.gmra.mxu0 %v367
      %v931 = vpop.f32.mrf.mxu0
      %v932 = vadd.f32 0.0, %v931
      %v933 = vpop.f32.mrf.mxu0
      %934 = vmatprep.mubr.f32.mxu0 %v375
      %935 = vmatmul.mubr.f32.gmra.mxu0 %v374
      %v936 = vpop.f32.mrf.mxu0
      %v937 = vadd.f32 0.0, %v936
      %v938 = vpop.f32.mrf.mxu0
      %939 = vmatprep.mubr.f32.mxu0 %v382
      %940 = vmatmul.mubr.f32.gmra.mxu0 %v381
      %v941 = vpop.f32.mrf.mxu0
      %v942 = vadd.f32 0.0, %v941
      %v943 = vpop.f32.mrf.mxu0
      %944 = vmatprep.mubr.f32.mxu0 %v389
      %945 = vmatmul.mubr.f32.gmra.mxu0 %v388
      %v946 = vpop.f32.mrf.mxu0
      %v947 = vadd.f32 0.0, %v946
      %v948 = vpop.f32.mrf.mxu0
      %949 = vmatprep.mubr.f32.mxu0 %v396
      %950 = vmatmul.mubr.f32.gmra.mxu0 %v395
      %v951 = vpop.f32.mrf.mxu0
      %v952 = vadd.f32 0.0, %v951
      %v953 = vpop.f32.mrf.mxu0
      %954 = vmatprep.mubr.f32.mxu0 %v403
      %955 = vmatmul.mubr.f32.gmra.mxu0 %v402
      %v956 = vpop.f32.mrf.mxu0
      %v957 = vadd.f32 0.0, %v956
      %v958 = vpop.f32.mrf.mxu0
      %959 = vmatprep.mubr.f32.mxu0 %v410
      %960 = vmatmul.mubr.f32.gmra.mxu0 %v409
      %v961 = vpop.f32.mrf.mxu0
      %v962 = vadd.f32 0.0, %v961
      %v963 = vpop.f32.mrf.mxu0
      %964 = vmatprep.mubr.f32.mxu0 %v417
      %965 = vmatmul.mubr.f32.gmra.mxu0 %v416
      %v966 = vpop.f32.mrf.mxu0
      %v967 = vadd.f32 0.0, %v966
      %v968 = vpop.f32.mrf.mxu0
      %969 = vmatprep.mubr.f32.mxu0 %v424
      %970 = vmatmul.mubr.f32.gmra.mxu0 %v423
      %v971 = vpop.f32.mrf.mxu0
      %v972 = vadd.f32 0.0, %v971
      %v973 = vpop.f32.mrf.mxu0
      %974 = vmatprep.mubr.f32.mxu0 %v431
      %975 = vmatmul.mubr.f32.gmra.mxu0 %v430
      %v976 = vpop.f32.mrf.mxu0
      %v977 = vadd.f32 0.0, %v976
      %v978 = vpop.f32.mrf.mxu0
      %979 = vmatprep.mubr.f32.mxu0 %v438
      %980 = vmatmul.mubr.f32.gmra.mxu0 %v437
      %v981 = vpop.f32.mrf.mxu0
      %v982 = vadd.f32 0.0, %v981
      %v983 = vpop.f32.mrf.mxu0
      %984 = vmatprep.mubr.f32.mxu0 %v445
      %985 = vmatmul.mubr.f32.gmra.mxu0 %v444
      %v986 = vpop.f32.mrf.mxu0
      %v987 = vadd.f32 0.0, %v986
      %v988 = vpop.f32.mrf.mxu0
      %989 = vmatprep.mubr.f32.mxu0 %v452
      %990 = vmatmul.mubr.f32.gmra.mxu0 %v451
      %v991 = vpop.f32.mrf.mxu0
      %v992 = vadd.f32 0.0, %v991
      %v993 = vpop.f32.mrf.mxu0
      %994 = vmatprep.mubr.f32.mxu0 %v459
      %995 = vmatmul.mubr.f32.gmra.mxu0 %v458
      %v996 = vpop.f32.mrf.mxu0
      %v997 = vadd.f32 0.0, %v996
      %v998 = vpop.f32.mrf.mxu0
      %999 = vmatprep.mubr.f32.mxu0 %v466
      %1000 = vmatmul.mubr.f32.gmra.mxu0 %v465
      %v1001 = vpop.f32.mrf.mxu0
      %v1002 = vadd.f32 0.0, %v1001
      %v1003 = vpop.f32.mrf.mxu0
      %1004 = vmatprep.mubr.f32.mxu0 %v473
      %1005 = vmatmul.mubr.f32.gmra.mxu0 %v472
      %v1006 = vpop.f32.mrf.mxu0
      %v1007 = vadd.f32 0.0, %v1006
      %v1008 = vpop.f32.mrf.mxu0
      %1009 = vmatprep.mubr.f32.mxu0 %v480
      %1010 = vmatmul.mubr.f32.gmra.mxu0 %v479
      %v1011 = vpop.f32.mrf.mxu0
      %v1012 = vadd.f32 0.0, %v1011
      %v1013 = vpop.f32.mrf.mxu0
      %1014 = vmatprep.mubr.f32.mxu0 %v487
      %1015 = vmatmul.mubr.f32.gmra.mxu0 %v486
      %v1016 = vpop.f32.mrf.mxu0
      %v1017 = vadd.f32 0.0, %v1016
      %v1018 = vpop.f32.mrf.mxu0
      %1019 = vmatprep.mubr.f32.mxu0 %v494
      %1020 = vmatmul.mubr.f32.gmra.mxu0 %v493
      %v1021 = vpop.f32.mrf.mxu0
      %v1022 = vadd.f32 0.0, %v1021
      %v1023 = vpop.f32.mrf.mxu0
      %1024 = vmatprep.mubr.f32.mxu0 %v501
      %1025 = vmatmul.mubr.f32.gmra.mxu0 %v500
      %v1026 = vpop.f32.mrf.mxu0
      %v1027 = vadd.f32 0.0, %v1026
      %v1028 = vpop.f32.mrf.mxu0
      %1029 = vmatprep.mubr.f32.mxu0 %v508
      %1030 = vmatmul.mubr.f32.gmra.mxu0 %v507
      %v1031 = vpop.f32.mrf.mxu0
      %v1032 = vadd.f32 0.0, %v1031
      %v1033 = vpop.f32.mrf.mxu0
      %1034 = vmatprep.mubr.f32.mxu0 %v515
      %1035 = vmatmul.mubr.f32.gmra.mxu0 %v514
      %v1036 = vpop.f32.mrf.mxu0
      %v1037 = vadd.f32 0.0, %v1036
      %v1038 = vpop.f32.mrf.mxu0
      %1039 = vmatprep.mubr.f32.mxu0 %v522
      %1040 = vmatmul.mubr.f32.gmra.mxu0 %v521
      %v1041 = vpop.f32.mrf.mxu0
      %v1042 = vadd.f32 0.0, %v1041
      %v1043 = vpop.f32.mrf.mxu0
      %1044 = vmatprep.mubr.f32.mxu0 %v529
      %1045 = vmatmul.mubr.f32.gmra.mxu0 %v528
      %v1046 = vpop.f32.mrf.mxu0
      %v1047 = vadd.f32 0.0, %v1046
      %v1048 = vpop.f32.mrf.mxu0
      %1049 = vmatprep.mubr.f32.mxu0 %v536
      %1050 = vmatmul.mubr.f32.gmra.mxu0 %v535
      %v1051 = vpop.f32.mrf.mxu0
      %v1052 = vadd.f32 0.0, %v1051
      %v1053 = vpop.f32.mrf.mxu0
      %1054 = vmatprep.mubr.f32.mxu0 %v543
      %1055 = vmatmul.mubr.f32.gmra.mxu0 %v542
      %v1056 = vpop.f32.mrf.mxu0
      %v1057 = vadd.f32 0.0, %v1056
      %v1058 = vpop.f32.mrf.mxu0
      %1059 = vmatprep.mubr.f32.mxu0 %v550
      %1060 = vmatmul.mubr.f32.gmra.mxu0 %v549
      %v1061 = vpop.f32.mrf.mxu0
      %v1062 = vadd.f32 0.0, %v1061
      %v1063 = vpop.f32.mrf.mxu0
      %1064 = vmatprep.mubr.f32.mxu0 %v557
      %1065 = vmatmul.mubr.f32.gmra.mxu0 %v556
      %v1066 = vpop.f32.mrf.mxu0
      %v1067 = vadd.f32 0.0, %v1066
      %v1068 = vpop.f32.mrf.mxu0
      %1069 = vmatprep.mubr.f32.mxu0 %v564
      %1070 = vmatmul.mubr.f32.gmra.mxu0 %v563
      %v1071 = vpop.f32.mrf.mxu0
      %v1072 = vadd.f32 0.0, %v1071
      %v1073 = vpop.f32.mrf.mxu0
      %1074 = vmatprep.mubr.f32.mxu0 %v571
      %1075 = vmatmul.mubr.f32.gmra.mxu0 %v570
      %v1076 = vpop.f32.mrf.mxu0
      %v1077 = vadd.f32 0.0, %v1076
      %v1078 = vpop.f32.mrf.mxu0
      %1079 = vmatprep.mubr.f32.mxu0 %v578
      %1080 = vmatmul.mubr.f32.gmra.mxu0 %v577
      %v1081 = vpop.f32.mrf.mxu0
      %v1082 = vadd.f32 0.0, %v1081
      %v1083 = vpop.f32.mrf.mxu0
      %1084 = vmatprep.mubr.f32.mxu0 %v585
      %1085 = vmatmul.mubr.f32.gmra.mxu0 %v584
      %v1086 = vpop.f32.mrf.mxu0
      %v1087 = vadd.f32 0.0, %v1086
      %v1088 = vpop.f32.mrf.mxu0
      %1089 = vmatprep.mubr.f32.mxu0 %v592
      %1090 = vmatmul.mubr.f32.gmra.mxu0 %v591
      %v1091 = vpop.f32.mrf.mxu0
      %v1092 = vadd.f32 0.0, %v1091
      %v1093 = vpop.f32.mrf.mxu0
      %1094 = vdwg.mxu0
      %1095 = vmatprep.subr.mxu0 0.0
      %1096 = vmatpush1.msra.mxu0 %v645
      %1097 = vmatprep.subr.mxu0 0.0
      %1098 = vmatpush1.msra.mxu0 %v644
      %1099 = vmatprep.subr.mxu0 0.0
      %1100 = vmatpush1.msra.mxu0 %v643
      %1101 = vmatprep.subr.mxu0 0.0
      %1102 = vmatpush1.msra.mxu0 %v642
      %1103 = vmatprep.subr.mxu0 0.0
      %1104 = vmatpush1.msra.mxu0 %v641
      %1105 = vmatprep.subr.mxu0 0.0
      %1106 = vmatpush1.msra.mxu0 %v640
      %1107 = vmatprep.subr.mxu0 0.0
      %1108 = vmatpush1.msra.mxu0 %v639
      %1109 = vmatprep.subr.mxu0 0.0
      %1110 = vmatpush1.msra.mxu0 %v638
      %1111 = vmatprep.subr.mxu0 0.0
      %1112 = vmatpush1.msra.mxu0 %v637
      %1113 = vmatprep.subr.mxu0 0.0
      %1114 = vmatpush1.msra.mxu0 %v636
      %1115 = vmatprep.subr.mxu0 0.0
      %1116 = vmatpush1.msra.mxu0 %v635
      %1117 = vmatprep.subr.mxu0 0.0
      %1118 = vmatpush1.msra.mxu0 %v634
      %1119 = vmatprep.subr.mxu0 0.0
      %1120 = vmatpush1.msra.mxu0 %v633
      %1121 = vmatprep.subr.mxu0 0.0
      %1122 = vmatpush1.msra.mxu0 %v632
      %1123 = vmatprep.subr.mxu0 0.0
      %1124 = vmatpush1.msra.mxu0 %v631
      %1125 = vmatprep.subr.mxu0 0.0
      %1126 = vmatpush1.msra.mxu0 %v630
      %1127 = vmatprep.subr.mxu0 0.0
      %1128 = vmatpush2.msra.mxu0 %v661
      %1129 = vmatprep.subr.mxu0 0.0
      %1130 = vmatpush2.msra.mxu0 %v660
      %1131 = vmatprep.subr.mxu0 0.0
      %1132 = vmatpush2.msra.mxu0 %v659
      %1133 = vmatprep.subr.mxu0 0.0
      %1134 = vmatpush2.msra.mxu0 %v658
      %1135 = vmatprep.subr.mxu0 0.0
      %1136 = vmatpush2.msra.mxu0 %v657
      %1137 = vmatprep.subr.mxu0 0.0
      %1138 = vmatpush2.msra.mxu0 %v656
      %1139 = vmatprep.subr.mxu0 0.0
      %1140 = vmatpush2.msra.mxu0 %v655
      %1141 = vmatprep.subr.mxu0 0.0
      %1142 = vmatpush2.msra.mxu0 %v654
      %1143 = vmatprep.subr.mxu0 0.0
      %1144 = vmatpush2.msra.mxu0 %v653
      %1145 = vmatprep.subr.mxu0 0.0
      %1146 = vmatpush2.msra.mxu0 %v652
      %1147 = vmatprep.subr.mxu0 0.0
      %1148 = vmatpush2.msra.mxu0 %v651
      %1149 = vmatprep.subr.mxu0 0.0
      %1150 = vmatpush2.msra.mxu0 %v650
      %1151 = vmatprep.subr.mxu0 0.0
      %1152 = vmatpush2.msra.mxu0 %v649
      %1153 = vmatprep.subr.mxu0 0.0
      %1154 = vmatpush2.msra.mxu0 %v648
      %1155 = vmatprep.subr.mxu0 0.0
      %1156 = vmatpush2.msra.mxu0 %v647
      %1157 = vmatprep.subr.mxu0 0.0
      %1158 = vmatpush2.msra.mxu0 %v646
      %1159 = vmatprep.mubr.f32.mxu0 %v153
      %1160 = vmatmul.mubr.f32.gmra.mxu0 %v152
      %v1161 = vpop.f32.mrf.mxu0
      %v1162 = vadd.f32 %v777, %v1161
      %v1163 = vpop.f32.mrf.mxu0
      %1164 = vmatprep.mubr.f32.mxu0 %v160
      %1165 = vmatmul.mubr.f32.gmra.mxu0 %v159
      %v1166 = vpop.f32.mrf.mxu0
      %v1167 = vadd.f32 %v782, %v1166
      %v1168 = vpop.f32.mrf.mxu0
      %1169 = vmatprep.mubr.f32.mxu0 %v167
      %1170 = vmatmul.mubr.f32.gmra.mxu0 %v166
      %v1171 = vpop.f32.mrf.mxu0
      %v1172 = vadd.f32 %v787, %v1171
      %v1173 = vpop.f32.mrf.mxu0
      %1174 = vmatprep.mubr.f32.mxu0 %v174
      %1175 = vmatmul.mubr.f32.gmra.mxu0 %v173
      %v1176 = vpop.f32.mrf.mxu0
      %v1177 = vadd.f32 %v792, %v1176
      %v1178 = vpop.f32.mrf.mxu0
      %1179 = vmatprep.mubr.f32.mxu0 %v181
      %1180 = vmatmul.mubr.f32.gmra.mxu0 %v180
      %v1181 = vpop.f32.mrf.mxu0
      %v1182 = vadd.f32 %v797, %v1181
      %v1183 = vpop.f32.mrf.mxu0
      %1184 = vmatprep.mubr.f32.mxu0 %v188
      %1185 = vmatmul.mubr.f32.gmra.mxu0 %v187
      %v1186 = vpop.f32.mrf.mxu0
      %v1187 = vadd.f32 %v802, %v1186
      %v1188 = vpop.f32.mrf.mxu0
      %1189 = vmatprep.mubr.f32.mxu0 %v195
      %1190 = vmatmul.mubr.f32.gmra.mxu0 %v194
      %v1191 = vpop.f32.mrf.mxu0
      %v1192 = vadd.f32 %v807, %v1191
      %v1193 = vpop.f32.mrf.mxu0
      %1194 = vmatprep.mubr.f32.mxu0 %v202
      %1195 = vmatmul.mubr.f32.gmra.mxu0 %v201
      %v1196 = vpop.f32.mrf.mxu0
      %v1197 = vadd.f32 %v812, %v1196
      %v1198 = vpop.f32.mrf.mxu0
      %1199 = vmatprep.mubr.f32.mxu0 %v209
      %1200 = vmatmul.mubr.f32.gmra.mxu0 %v208
      %v1201 = vpop.f32.mrf.mxu0
      %v1202 = vadd.f32 %v817, %v1201
      %v1203 = vpop.f32.mrf.mxu0
      %1204 = vmatprep.mubr.f32.mxu0 %v216
      %1205 = vmatmul.mubr.f32.gmra.mxu0 %v215
      %v1206 = vpop.f32.mrf.mxu0
      %v1207 = vadd.f32 %v822, %v1206
      %v1208 = vpop.f32.mrf.mxu0
      %1209 = vmatprep.mubr.f32.mxu0 %v223
      %1210 = vmatmul.mubr.f32.gmra.mxu0 %v222
      %v1211 = vpop.f32.mrf.mxu0
      %v1212 = vadd.f32 %v827, %v1211
      %v1213 = vpop.f32.mrf.mxu0
      %1214 = vmatprep.mubr.f32.mxu0 %v230
      %1215 = vmatmul.mubr.f32.gmra.mxu0 %v229
      %v1216 = vpop.f32.mrf.mxu0
      %v1217 = vadd.f32 %v832, %v1216
      %v1218 = vpop.f32.mrf.mxu0
      %1219 = vmatprep.mubr.f32.mxu0 %v237
      %1220 = vmatmul.mubr.f32.gmra.mxu0 %v236
      %v1221 = vpop.f32.mrf.mxu0
      %v1222 = vadd.f32 %v837, %v1221
      %v1223 = vpop.f32.mrf.mxu0
      %1224 = vmatprep.mubr.f32.mxu0 %v244
      %1225 = vmatmul.mubr.f32.gmra.mxu0 %v243
      %v1226 = vpop.f32.mrf.mxu0
      %v1227 = vadd.f32 %v842, %v1226
      %v1228 = vpop.f32.mrf.mxu0
      %1229 = vmatprep.mubr.f32.mxu0 %v251
      %1230 = vmatmul.mubr.f32.gmra.mxu0 %v250
      %v1231 = vpop.f32.mrf.mxu0
      %v1232 = vadd.f32 %v847, %v1231
      %v1233 = vpop.f32.mrf.mxu0
      %1234 = vmatprep.mubr.f32.mxu0 %v258
      %1235 = vmatmul.mubr.f32.gmra.mxu0 %v257
      %v1236 = vpop.f32.mrf.mxu0
      %v1237 = vadd.f32 %v852, %v1236
      %v1238 = vpop.f32.mrf.mxu0
      %1239 = vmatprep.mubr.f32.mxu0 %v265
      %1240 = vmatmul.mubr.f32.gmra.mxu0 %v264
      %v1241 = vpop.f32.mrf.mxu0
      %v1242 = vadd.f32 %v857, %v1241
      %v1243 = vpop.f32.mrf.mxu0
      %1244 = vmatprep.mubr.f32.mxu0 %v272
      %1245 = vmatmul.mubr.f32.gmra.mxu0 %v271
      %v1246 = vpop.f32.mrf.mxu0
      %v1247 = vadd.f32 %v862, %v1246
      %v1248 = vpop.f32.mrf.mxu0
      %1249 = vmatprep.mubr.f32.mxu0 %v279
      %1250 = vmatmul.mubr.f32.gmra.mxu0 %v278
      %v1251 = vpop.f32.mrf.mxu0
      %v1252 = vadd.f32 %v867, %v1251
      %v1253 = vpop.f32.mrf.mxu0
      %1254 = vmatprep.mubr.f32.mxu0 %v286
      %1255 = vmatmul.mubr.f32.gmra.mxu0 %v285
      %v1256 = vpop.f32.mrf.mxu0
      %v1257 = vadd.f32 %v872, %v1256
      %v1258 = vpop.f32.mrf.mxu0
      %1259 = vmatprep.mubr.f32.mxu0 %v293
      %1260 = vmatmul.mubr.f32.gmra.mxu0 %v292
      %v1261 = vpop.f32.mrf.mxu0
      %v1262 = vadd.f32 %v877, %v1261
      %v1263 = vpop.f32.mrf.mxu0
      %1264 = vmatprep.mubr.f32.mxu0 %v300
      %1265 = vmatmul.mubr.f32.gmra.mxu0 %v299
      %v1266 = vpop.f32.mrf.mxu0
      %v1267 = vadd.f32 %v882, %v1266
      %v1268 = vpop.f32.mrf.mxu0
      %1269 = vmatprep.mubr.f32.mxu0 %v307
      %1270 = vmatmul.mubr.f32.gmra.mxu0 %v306
      %v1271 = vpop.f32.mrf.mxu0
      %v1272 = vadd.f32 %v887, %v1271
      %v1273 = vpop.f32.mrf.mxu0
      %1274 = vmatprep.mubr.f32.mxu0 %v314
      %1275 = vmatmul.mubr.f32.gmra.mxu0 %v313
      %v1276 = vpop.f32.mrf.mxu0
      %v1277 = vadd.f32 %v892, %v1276
      %v1278 = vpop.f32.mrf.mxu0
      %1279 = vmatprep.mubr.f32.mxu0 %v321
      %1280 = vmatmul.mubr.f32.gmra.mxu0 %v320
      %v1281 = vpop.f32.mrf.mxu0
      %v1282 = vadd.f32 %v897, %v1281
      %v1283 = vpop.f32.mrf.mxu0
      %1284 = vmatprep.mubr.f32.mxu0 %v328
      %1285 = vmatmul.mubr.f32.gmra.mxu0 %v327
      %v1286 = vpop.f32.mrf.mxu0
      %v1287 = vadd.f32 %v902, %v1286
      %v1288 = vpop.f32.mrf.mxu0
      %1289 = vmatprep.mubr.f32.mxu0 %v335
      %1290 = vmatmul.mubr.f32.gmra.mxu0 %v334
      %v1291 = vpop.f32.mrf.mxu0
      %v1292 = vadd.f32 %v907, %v1291
      %v1293 = vpop.f32.mrf.mxu0
      %1294 = vmatprep.mubr.f32.mxu0 %v342
      %1295 = vmatmul.mubr.f32.gmra.mxu0 %v341
      %v1296 = vpop.f32.mrf.mxu0
      %v1297 = vadd.f32 %v912, %v1296
      %v1298 = vpop.f32.mrf.mxu0
      %1299 = vmatprep.mubr.f32.mxu0 %v349
      %1300 = vmatmul.mubr.f32.gmra.mxu0 %v348
      %v1301 = vpop.f32.mrf.mxu0
      %v1302 = vadd.f32 %v917, %v1301
      %v1303 = vpop.f32.mrf.mxu0
      %1304 = vmatprep.mubr.f32.mxu0 %v356
      %1305 = vmatmul.mubr.f32.gmra.mxu0 %v355
      %v1306 = vpop.f32.mrf.mxu0
      %v1307 = vadd.f32 %v922, %v1306
      %v1308 = vpop.f32.mrf.mxu0
      %1309 = vmatprep.mubr.f32.mxu0 %v363
      %1310 = vmatmul.mubr.f32.gmra.mxu0 %v362
      %v1311 = vpop.f32.mrf.mxu0
      %v1312 = vadd.f32 %v927, %v1311
      %v1313 = vpop.f32.mrf.mxu0
      %1314 = vmatprep.mubr.f32.mxu0 %v370
      %1315 = vmatmul.mubr.f32.gmra.mxu0 %v369
      %v1316 = vpop.f32.mrf.mxu0
      %v1317 = vadd.f32 %v932, %v1316
      %v1318 = vpop.f32.mrf.mxu0
      %1319 = vmatprep.mubr.f32.mxu0 %v377
      %1320 = vmatmul.mubr.f32.gmra.mxu0 %v376
      %v1321 = vpop.f32.mrf.mxu0
      %v1322 = vadd.f32 %v937, %v1321
      %v1323 = vpop.f32.mrf.mxu0
      %1324 = vmatprep.mubr.f32.mxu0 %v384
      %1325 = vmatmul.mubr.f32.gmra.mxu0 %v383
      %v1326 = vpop.f32.mrf.mxu0
      %v1327 = vadd.f32 %v942, %v1326
      %v1328 = vpop.f32.mrf.mxu0
      %1329 = vmatprep.mubr.f32.mxu0 %v391
      %1330 = vmatmul.mubr.f32.gmra.mxu0 %v390
      %v1331 = vpop.f32.mrf.mxu0
      %v1332 = vadd.f32 %v947, %v1331
      %v1333 = vpop.f32.mrf.mxu0
      %1334 = vmatprep.mubr.f32.mxu0 %v398
      %1335 = vmatmul.mubr.f32.gmra.mxu0 %v397
      %v1336 = vpop.f32.mrf.mxu0
      %v1337 = vadd.f32 %v952, %v1336
      %v1338 = vpop.f32.mrf.mxu0
      %1339 = vmatprep.mubr.f32.mxu0 %v405
      %1340 = vmatmul.mubr.f32.gmra.mxu0 %v404
      %v1341 = vpop.f32.mrf.mxu0
      %v1342 = vadd.f32 %v957, %v1341
      %v1343 = vpop.f32.mrf.mxu0
      %1344 = vmatprep.mubr.f32.mxu0 %v412
      %1345 = vmatmul.mubr.f32.gmra.mxu0 %v411
      %v1346 = vpop.f32.mrf.mxu0
      %v1347 = vadd.f32 %v962, %v1346
      %v1348 = vpop.f32.mrf.mxu0
      %1349 = vmatprep.mubr.f32.mxu0 %v419
      %1350 = vmatmul.mubr.f32.gmra.mxu0 %v418
      %v1351 = vpop.f32.mrf.mxu0
      %v1352 = vadd.f32 %v967, %v1351
      %v1353 = vpop.f32.mrf.mxu0
      %1354 = vmatprep.mubr.f32.mxu0 %v426
      %1355 = vmatmul.mubr.f32.gmra.mxu0 %v425
      %v1356 = vpop.f32.mrf.mxu0
      %v1357 = vadd.f32 %v972, %v1356
      %v1358 = vpop.f32.mrf.mxu0
      %1359 = vmatprep.mubr.f32.mxu0 %v433
      %1360 = vmatmul.mubr.f32.gmra.mxu0 %v432
      %v1361 = vpop.f32.mrf.mxu0
      %v1362 = vadd.f32 %v977, %v1361
      %v1363 = vpop.f32.mrf.mxu0
      %1364 = vmatprep.mubr.f32.mxu0 %v440
      %1365 = vmatmul.mubr.f32.gmra.mxu0 %v439
      %v1366 = vpop.f32.mrf.mxu0
      %v1367 = vadd.f32 %v982, %v1366
      %v1368 = vpop.f32.mrf.mxu0
      %1369 = vmatprep.mubr.f32.mxu0 %v447
      %1370 = vmatmul.mubr.f32.gmra.mxu0 %v446
      %v1371 = vpop.f32.mrf.mxu0
      %v1372 = vadd.f32 %v987, %v1371
      %v1373 = vpop.f32.mrf.mxu0
      %1374 = vmatprep.mubr.f32.mxu0 %v454
      %1375 = vmatmul.mubr.f32.gmra.mxu0 %v453
      %v1376 = vpop.f32.mrf.mxu0
      %v1377 = vadd.f32 %v992, %v1376
      %v1378 = vpop.f32.mrf.mxu0
      %1379 = vmatprep.mubr.f32.mxu0 %v461
      %1380 = vmatmul.mubr.f32.gmra.mxu0 %v460
      %v1381 = vpop.f32.mrf.mxu0
      %v1382 = vadd.f32 %v997, %v1381
      %v1383 = vpop.f32.mrf.mxu0
      %1384 = vmatprep.mubr.f32.mxu0 %v468
      %1385 = vmatmul.mubr.f32.gmra.mxu0 %v467
      %v1386 = vpop.f32.mrf.mxu0
      %v1387 = vadd.f32 %v1002, %v1386
      %v1388 = vpop.f32.mrf.mxu0
      %1389 = vmatprep.mubr.f32.mxu0 %v475
      %1390 = vmatmul.mubr.f32.gmra.mxu0 %v474
      %v1391 = vpop.f32.mrf.mxu0
      %v1392 = vadd.f32 %v1007, %v1391
      %v1393 = vpop.f32.mrf.mxu0
      %1394 = vmatprep.mubr.f32.mxu0 %v482
      %1395 = vmatmul.mubr.f32.gmra.mxu0 %v481
      %v1396 = vpop.f32.mrf.mxu0
      %v1397 = vadd.f32 %v1012, %v1396
      %v1398 = vpop.f32.mrf.mxu0
      %1399 = vmatprep.mubr.f32.mxu0 %v489
      %1400 = vmatmul.mubr.f32.gmra.mxu0 %v488
      %v1401 = vpop.f32.mrf.mxu0
      %v1402 = vadd.f32 %v1017, %v1401
      %v1403 = vpop.f32.mrf.mxu0
      %1404 = vmatprep.mubr.f32.mxu0 %v496
      %1405 = vmatmul.mubr.f32.gmra.mxu0 %v495
      %v1406 = vpop.f32.mrf.mxu0
      %v1407 = vadd.f32 %v1022, %v1406
      %v1408 = vpop.f32.mrf.mxu0
      %1409 = vmatprep.mubr.f32.mxu0 %v503
      %1410 = vmatmul.mubr.f32.gmra.mxu0 %v502
      %v1411 = vpop.f32.mrf.mxu0
      %v1412 = vadd.f32 %v1027, %v1411
      %v1413 = vpop.f32.mrf.mxu0
      %1414 = vmatprep.mubr.f32.mxu0 %v510
      %1415 = vmatmul.mubr.f32.gmra.mxu0 %v509
      %v1416 = vpop.f32.mrf.mxu0
      %v1417 = vadd.f32 %v1032, %v1416
      %v1418 = vpop.f32.mrf.mxu0
      %1419 = vmatprep.mubr.f32.mxu0 %v517
      %1420 = vmatmul.mubr.f32.gmra.mxu0 %v516
      %v1421 = vpop.f32.mrf.mxu0
      %v1422 = vadd.f32 %v1037, %v1421
      %v1423 = vpop.f32.mrf.mxu0
      %1424 = vmatprep.mubr.f32.mxu0 %v524
      %1425 = vmatmul.mubr.f32.gmra.mxu0 %v523
      %v1426 = vpop.f32.mrf.mxu0
      %v1427 = vadd.f32 %v1042, %v1426
      %v1428 = vpop.f32.mrf.mxu0
      %1429 = vmatprep.mubr.f32.mxu0 %v531
      %1430 = vmatmul.mubr.f32.gmra.mxu0 %v530
      %v1431 = vpop.f32.mrf.mxu0
      %v1432 = vadd.f32 %v1047, %v1431
      %v1433 = vpop.f32.mrf.mxu0
      %1434 = vmatprep.mubr.f32.mxu0 %v538
      %1435 = vmatmul.mubr.f32.gmra.mxu0 %v537
      %v1436 = vpop.f32.mrf.mxu0
      %v1437 = vadd.f32 %v1052, %v1436
      %v1438 = vpop.f32.mrf.mxu0
      %1439 = vmatprep.mubr.f32.mxu0 %v545
      %1440 = vmatmul.mubr.f32.gmra.mxu0 %v544
      %v1441 = vpop.f32.mrf.mxu0
      %v1442 = vadd.f32 %v1057, %v1441
      %v1443 = vpop.f32.mrf.mxu0
      %1444 = vmatprep.mubr.f32.mxu0 %v552
      %1445 = vmatmul.mubr.f32.gmra.mxu0 %v551
      %v1446 = vpop.f32.mrf.mxu0
      %v1447 = vadd.f32 %v1062, %v1446
      %v1448 = vpop.f32.mrf.mxu0
      %1449 = vmatprep.mubr.f32.mxu0 %v559
      %1450 = vmatmul.mubr.f32.gmra.mxu0 %v558
      %v1451 = vpop.f32.mrf.mxu0
      %v1452 = vadd.f32 %v1067, %v1451
      %v1453 = vpop.f32.mrf.mxu0
      %1454 = vmatprep.mubr.f32.mxu0 %v566
      %1455 = vmatmul.mubr.f32.gmra.mxu0 %v565
      %v1456 = vpop.f32.mrf.mxu0
      %v1457 = vadd.f32 %v1072, %v1456
      %v1458 = vpop.f32.mrf.mxu0
      %1459 = vmatprep.mubr.f32.mxu0 %v573
      %1460 = vmatmul.mubr.f32.gmra.mxu0 %v572
      %v1461 = vpop.f32.mrf.mxu0
      %v1462 = vadd.f32 %v1077, %v1461
      %v1463 = vpop.f32.mrf.mxu0
      %1464 = vmatprep.mubr.f32.mxu0 %v580
      %1465 = vmatmul.mubr.f32.gmra.mxu0 %v579
      %v1466 = vpop.f32.mrf.mxu0
      %v1467 = vadd.f32 %v1082, %v1466
      %v1468 = vpop.f32.mrf.mxu0
      %1469 = vmatprep.mubr.f32.mxu0 %v587
      %1470 = vmatmul.mubr.f32.gmra.mxu0 %v586
      %v1471 = vpop.f32.mrf.mxu0
      %v1472 = vadd.f32 %v1087, %v1471
      %v1473 = vpop.f32.mrf.mxu0
      %1474 = vmatprep.mubr.f32.mxu0 %v594
      %1475 = vmatmul.mubr.f32.gmra.mxu0 %v593
      %v1476 = vpop.f32.mrf.mxu0
      %v1477 = vadd.f32 %v1092, %v1476
      %v1478 = vpop.f32.mrf.mxu0
      %1479 = vdwg.mxu0
      %1480 = vmatprep.subr.mxu0 0.0
      %1481 = vmatpush1.msra.mxu0 %v677
      %1482 = vmatprep.subr.mxu0 0.0
      %1483 = vmatpush1.msra.mxu0 %v676
      %1484 = vmatprep.subr.mxu0 0.0
      %1485 = vmatpush1.msra.mxu0 %v675
      %1486 = vmatprep.subr.mxu0 0.0
      %1487 = vmatpush1.msra.mxu0 %v674
      %1488 = vmatprep.subr.mxu0 0.0
      %1489 = vmatpush1.msra.mxu0 %v673
      %1490 = vmatprep.subr.mxu0 0.0
      %1491 = vmatpush1.msra.mxu0 %v672
      %1492 = vmatprep.subr.mxu0 0.0
      %1493 = vmatpush1.msra.mxu0 %v671
      %1494 = vmatprep.subr.mxu0 0.0
      %1495 = vmatpush1.msra.mxu0 %v670
      %1496 = vmatprep.subr.mxu0 0.0
      %1497 = vmatpush1.msra.mxu0 %v669
      %1498 = vmatprep.subr.mxu0 0.0
      %1499 = vmatpush1.msra.mxu0 %v668
      %1500 = vmatprep.subr.mxu0 0.0
      %1501 = vmatpush1.msra.mxu0 %v667
      %1502 = vmatprep.subr.mxu0 0.0
      %1503 = vmatpush1.msra.mxu0 %v666
      %1504 = vmatprep.subr.mxu0 0.0
      %1505 = vmatpush1.msra.mxu0 %v665
      %1506 = vmatprep.subr.mxu0 0.0
      %1507 = vmatpush1.msra.mxu0 %v664
      %1508 = vmatprep.subr.mxu0 0.0
      %1509 = vmatpush1.msra.mxu0 %v663
      %1510 = vmatprep.subr.mxu0 0.0
      %1511 = vmatpush1.msra.mxu0 %v662
      %1512 = vmatprep.subr.mxu0 0.0
      %1513 = vmatpush2.msra.mxu0 %v693
      %1514 = vmatprep.subr.mxu0 0.0
      %1515 = vmatpush2.msra.mxu0 %v692
      %1516 = vmatprep.subr.mxu0 0.0
      %1517 = vmatpush2.msra.mxu0 %v691
      %1518 = vmatprep.subr.mxu0 0.0
      %1519 = vmatpush2.msra.mxu0 %v690
      %1520 = vmatprep.subr.mxu0 0.0
      %1521 = vmatpush2.msra.mxu0 %v689
      %1522 = vmatprep.subr.mxu0 0.0
      %1523 = vmatpush2.msra.mxu0 %v688
      %1524 = vmatprep.subr.mxu0 0.0
      %1525 = vmatpush2.msra.mxu0 %v687
      %1526 = vmatprep.subr.mxu0 0.0
      %1527 = vmatpush2.msra.mxu0 %v686
      %1528 = vmatprep.subr.mxu0 0.0
      %1529 = vmatpush2.msra.mxu0 %v685
      %1530 = vmatprep.subr.mxu0 0.0
      %1531 = vmatpush2.msra.mxu0 %v684
      %1532 = vmatprep.subr.mxu0 0.0
      %1533 = vmatpush2.msra.mxu0 %v683
      %1534 = vmatprep.subr.mxu0 0.0
      %1535 = vmatpush2.msra.mxu0 %v682
      %1536 = vmatprep.subr.mxu0 0.0
      %1537 = vmatpush2.msra.mxu0 %v681
      %1538 = vmatprep.subr.mxu0 0.0
      %1539 = vmatpush2.msra.mxu0 %v680
      %1540 = vmatprep.subr.mxu0 0.0
      %1541 = vmatpush2.msra.mxu0 %v679
      %1542 = vmatprep.subr.mxu0 0.0
      %1543 = vmatpush2.msra.mxu0 %v678
      %1544 = vmatprep.mubr.f32.mxu0 %v155
      %1545 = vmatmul.mubr.f32.gmra.mxu0 %v154
      %v1546 = vpop.f32.mrf.mxu0
      %v1547 = vadd.f32 %v1162, %v1546
      %v1548 = vpop.f32.mrf.mxu0
      %1549 = vmatprep.mubr.f32.mxu0 %v162
      %1550 = vmatmul.mubr.f32.gmra.mxu0 %v161
      %v1551 = vpop.f32.mrf.mxu0
      %v1552 = vadd.f32 %v1167, %v1551
      %v1553 = vpop.f32.mrf.mxu0
      %1554 = vmatprep.mubr.f32.mxu0 %v169
      %1555 = vmatmul.mubr.f32.gmra.mxu0 %v168
      %v1556 = vpop.f32.mrf.mxu0
      %v1557 = vadd.f32 %v1172, %v1556
      %v1558 = vpop.f32.mrf.mxu0
      %1559 = vmatprep.mubr.f32.mxu0 %v176
      %1560 = vmatmul.mubr.f32.gmra.mxu0 %v175
      %v1561 = vpop.f32.mrf.mxu0
      %v1562 = vadd.f32 %v1177, %v1561
      %v1563 = vpop.f32.mrf.mxu0
      %1564 = vmatprep.mubr.f32.mxu0 %v183
      %1565 = vmatmul.mubr.f32.gmra.mxu0 %v182
      %v1566 = vpop.f32.mrf.mxu0
      %v1567 = vadd.f32 %v1182, %v1566
      %v1568 = vpop.f32.mrf.mxu0
      %1569 = vmatprep.mubr.f32.mxu0 %v190
      %1570 = vmatmul.mubr.f32.gmra.mxu0 %v189
      %v1571 = vpop.f32.mrf.mxu0
      %v1572 = vadd.f32 %v1187, %v1571
      %v1573 = vpop.f32.mrf.mxu0
      %1574 = vmatprep.mubr.f32.mxu0 %v197
      %1575 = vmatmul.mubr.f32.gmra.mxu0 %v196
      %v1576 = vpop.f32.mrf.mxu0
      %v1577 = vadd.f32 %v1192, %v1576
      %v1578 = vpop.f32.mrf.mxu0
      %1579 = vmatprep.mubr.f32.mxu0 %v204
      %1580 = vmatmul.mubr.f32.gmra.mxu0 %v203
      %v1581 = vpop.f32.mrf.mxu0
      %v1582 = vadd.f32 %v1197, %v1581
      %v1583 = vpop.f32.mrf.mxu0
      %1584 = vmatprep.mubr.f32.mxu0 %v211
      %1585 = vmatmul.mubr.f32.gmra.mxu0 %v210
      %v1586 = vpop.f32.mrf.mxu0
      %v1587 = vadd.f32 %v1202, %v1586
      %v1588 = vpop.f32.mrf.mxu0
      %1589 = vmatprep.mubr.f32.mxu0 %v218
      %1590 = vmatmul.mubr.f32.gmra.mxu0 %v217
      %v1591 = vpop.f32.mrf.mxu0
      %v1592 = vadd.f32 %v1207, %v1591
      %v1593 = vpop.f32.mrf.mxu0
      %1594 = vmatprep.mubr.f32.mxu0 %v225
      %1595 = vmatmul.mubr.f32.gmra.mxu0 %v224
      %v1596 = vpop.f32.mrf.mxu0
      %v1597 = vadd.f32 %v1212, %v1596
      %v1598 = vpop.f32.mrf.mxu0
      %1599 = vmatprep.mubr.f32.mxu0 %v232
      %1600 = vmatmul.mubr.f32.gmra.mxu0 %v231
      %v1601 = vpop.f32.mrf.mxu0
      %v1602 = vadd.f32 %v1217, %v1601
      %v1603 = vpop.f32.mrf.mxu0
      %1604 = vmatprep.mubr.f32.mxu0 %v239
      %1605 = vmatmul.mubr.f32.gmra.mxu0 %v238
      %v1606 = vpop.f32.mrf.mxu0
      %v1607 = vadd.f32 %v1222, %v1606
      %v1608 = vpop.f32.mrf.mxu0
      %1609 = vmatprep.mubr.f32.mxu0 %v246
      %1610 = vmatmul.mubr.f32.gmra.mxu0 %v245
      %v1611 = vpop.f32.mrf.mxu0
      %v1612 = vadd.f32 %v1227, %v1611
      %v1613 = vpop.f32.mrf.mxu0
      %1614 = vmatprep.mubr.f32.mxu0 %v253
      %1615 = vmatmul.mubr.f32.gmra.mxu0 %v252
      %v1616 = vpop.f32.mrf.mxu0
      %v1617 = vadd.f32 %v1232, %v1616
      %v1618 = vpop.f32.mrf.mxu0
      %1619 = vmatprep.mubr.f32.mxu0 %v260
      %1620 = vmatmul.mubr.f32.gmra.mxu0 %v259
      %v1621 = vpop.f32.mrf.mxu0
      %v1622 = vadd.f32 %v1237, %v1621
      %v1623 = vpop.f32.mrf.mxu0
      %1624 = vmatprep.mubr.f32.mxu0 %v267
      %1625 = vmatmul.mubr.f32.gmra.mxu0 %v266
      %v1626 = vpop.f32.mrf.mxu0
      %v1627 = vadd.f32 %v1242, %v1626
      %v1628 = vpop.f32.mrf.mxu0
      %1629 = vmatprep.mubr.f32.mxu0 %v274
      %1630 = vmatmul.mubr.f32.gmra.mxu0 %v273
      %v1631 = vpop.f32.mrf.mxu0
      %v1632 = vadd.f32 %v1247, %v1631
      %v1633 = vpop.f32.mrf.mxu0
      %1634 = vmatprep.mubr.f32.mxu0 %v281
      %1635 = vmatmul.mubr.f32.gmra.mxu0 %v280
      %v1636 = vpop.f32.mrf.mxu0
      %v1637 = vadd.f32 %v1252, %v1636
      %v1638 = vpop.f32.mrf.mxu0
      %1639 = vmatprep.mubr.f32.mxu0 %v288
      %1640 = vmatmul.mubr.f32.gmra.mxu0 %v287
      %v1641 = vpop.f32.mrf.mxu0
      %v1642 = vadd.f32 %v1257, %v1641
      %v1643 = vpop.f32.mrf.mxu0
      %1644 = vmatprep.mubr.f32.mxu0 %v295
      %1645 = vmatmul.mubr.f32.gmra.mxu0 %v294
      %v1646 = vpop.f32.mrf.mxu0
      %v1647 = vadd.f32 %v1262, %v1646
      %v1648 = vpop.f32.mrf.mxu0
      %1649 = vmatprep.mubr.f32.mxu0 %v302
      %1650 = vmatmul.mubr.f32.gmra.mxu0 %v301
      %v1651 = vpop.f32.mrf.mxu0
      %v1652 = vadd.f32 %v1267, %v1651
      %v1653 = vpop.f32.mrf.mxu0
      %1654 = vmatprep.mubr.f32.mxu0 %v309
      %1655 = vmatmul.mubr.f32.gmra.mxu0 %v308
      %v1656 = vpop.f32.mrf.mxu0
      %v1657 = vadd.f32 %v1272, %v1656
      %v1658 = vpop.f32.mrf.mxu0
      %1659 = vmatprep.mubr.f32.mxu0 %v316
      %1660 = vmatmul.mubr.f32.gmra.mxu0 %v315
      %v1661 = vpop.f32.mrf.mxu0
      %v1662 = vadd.f32 %v1277, %v1661
      %v1663 = vpop.f32.mrf.mxu0
      %1664 = vmatprep.mubr.f32.mxu0 %v323
      %1665 = vmatmul.mubr.f32.gmra.mxu0 %v322
      %v1666 = vpop.f32.mrf.mxu0
      %v1667 = vadd.f32 %v1282, %v1666
      %v1668 = vpop.f32.mrf.mxu0
      %1669 = vmatprep.mubr.f32.mxu0 %v330
      %1670 = vmatmul.mubr.f32.gmra.mxu0 %v329
      %v1671 = vpop.f32.mrf.mxu0
      %v1672 = vadd.f32 %v1287, %v1671
      %v1673 = vpop.f32.mrf.mxu0
      %1674 = vmatprep.mubr.f32.mxu0 %v337
      %1675 = vmatmul.mubr.f32.gmra.mxu0 %v336
      %v1676 = vpop.f32.mrf.mxu0
      %v1677 = vadd.f32 %v1292, %v1676
      %v1678 = vpop.f32.mrf.mxu0
      %1679 = vmatprep.mubr.f32.mxu0 %v344
      %1680 = vmatmul.mubr.f32.gmra.mxu0 %v343
      %v1681 = vpop.f32.mrf.mxu0
      %v1682 = vadd.f32 %v1297, %v1681
      %v1683 = vpop.f32.mrf.mxu0
      %1684 = vmatprep.mubr.f32.mxu0 %v351
      %1685 = vmatmul.mubr.f32.gmra.mxu0 %v350
      %v1686 = vpop.f32.mrf.mxu0
      %v1687 = vadd.f32 %v1302, %v1686
      %v1688 = vpop.f32.mrf.mxu0
      %1689 = vmatprep.mubr.f32.mxu0 %v358
      %1690 = vmatmul.mubr.f32.gmra.mxu0 %v357
      %v1691 = vpop.f32.mrf.mxu0
      %v1692 = vadd.f32 %v1307, %v1691
      %v1693 = vpop.f32.mrf.mxu0
      %1694 = vmatprep.mubr.f32.mxu0 %v365
      %1695 = vmatmul.mubr.f32.gmra.mxu0 %v364
      %v1696 = vpop.f32.mrf.mxu0
      %v1697 = vadd.f32 %v1312, %v1696
      %v1698 = vpop.f32.mrf.mxu0
      %1699 = vmatprep.mubr.f32.mxu0 %v372
      %1700 = vmatmul.mubr.f32.gmra.mxu0 %v371
      %v1701 = vpop.f32.mrf.mxu0
      %v1702 = vadd.f32 %v1317, %v1701
      %v1703 = vpop.f32.mrf.mxu0
      %1704 = vmatprep.mubr.f32.mxu0 %v379
      %1705 = vmatmul.mubr.f32.gmra.mxu0 %v378
      %v1706 = vpop.f32.mrf.mxu0
      %v1707 = vadd.f32 %v1322, %v1706
      %v1708 = vpop.f32.mrf.mxu0
      %1709 = vmatprep.mubr.f32.mxu0 %v386
      %1710 = vmatmul.mubr.f32.gmra.mxu0 %v385
      %v1711 = vpop.f32.mrf.mxu0
      %v1712 = vadd.f32 %v1327, %v1711
      %v1713 = vpop.f32.mrf.mxu0
      %1714 = vmatprep.mubr.f32.mxu0 %v393
      %1715 = vmatmul.mubr.f32.gmra.mxu0 %v392
      %v1716 = vpop.f32.mrf.mxu0
      %v1717 = vadd.f32 %v1332, %v1716
      %v1718 = vpop.f32.mrf.mxu0
      %1719 = vmatprep.mubr.f32.mxu0 %v400
      %1720 = vmatmul.mubr.f32.gmra.mxu0 %v399
      %v1721 = vpop.f32.mrf.mxu0
      %v1722 = vadd.f32 %v1337, %v1721
      %v1723 = vpop.f32.mrf.mxu0
      %1724 = vmatprep.mubr.f32.mxu0 %v407
      %1725 = vmatmul.mubr.f32.gmra.mxu0 %v406
      %v1726 = vpop.f32.mrf.mxu0
      %v1727 = vadd.f32 %v1342, %v1726
      %v1728 = vpop.f32.mrf.mxu0
      %1729 = vmatprep.mubr.f32.mxu0 %v414
      %1730 = vmatmul.mubr.f32.gmra.mxu0 %v413
      %v1731 = vpop.f32.mrf.mxu0
      %v1732 = vadd.f32 %v1347, %v1731
      %v1733 = vpop.f32.mrf.mxu0
      %1734 = vmatprep.mubr.f32.mxu0 %v421
      %1735 = vmatmul.mubr.f32.gmra.mxu0 %v420
      %v1736 = vpop.f32.mrf.mxu0
      %v1737 = vadd.f32 %v1352, %v1736
      %v1738 = vpop.f32.mrf.mxu0
      %1739 = vmatprep.mubr.f32.mxu0 %v428
      %1740 = vmatmul.mubr.f32.gmra.mxu0 %v427
      %v1741 = vpop.f32.mrf.mxu0
      %v1742 = vadd.f32 %v1357, %v1741
      %v1743 = vpop.f32.mrf.mxu0
      %1744 = vmatprep.mubr.f32.mxu0 %v435
      %1745 = vmatmul.mubr.f32.gmra.mxu0 %v434
      %v1746 = vpop.f32.mrf.mxu0
      %v1747 = vadd.f32 %v1362, %v1746
      %v1748 = vpop.f32.mrf.mxu0
      %1749 = vmatprep.mubr.f32.mxu0 %v442
      %1750 = vmatmul.mubr.f32.gmra.mxu0 %v441
      %v1751 = vpop.f32.mrf.mxu0
      %v1752 = vadd.f32 %v1367, %v1751
      %v1753 = vpop.f32.mrf.mxu0
      %1754 = vmatprep.mubr.f32.mxu0 %v449
      %1755 = vmatmul.mubr.f32.gmra.mxu0 %v448
      %v1756 = vpop.f32.mrf.mxu0
      %v1757 = vadd.f32 %v1372, %v1756
      %v1758 = vpop.f32.mrf.mxu0
      %1759 = vmatprep.mubr.f32.mxu0 %v456
      %1760 = vmatmul.mubr.f32.gmra.mxu0 %v455
      %v1761 = vpop.f32.mrf.mxu0
      %v1762 = vadd.f32 %v1377, %v1761
      %v1763 = vpop.f32.mrf.mxu0
      %1764 = vmatprep.mubr.f32.mxu0 %v463
      %1765 = vmatmul.mubr.f32.gmra.mxu0 %v462
      %v1766 = vpop.f32.mrf.mxu0
      %v1767 = vadd.f32 %v1382, %v1766
      %v1768 = vpop.f32.mrf.mxu0
      %1769 = vmatprep.mubr.f32.mxu0 %v470
      %1770 = vmatmul.mubr.f32.gmra.mxu0 %v469
      %v1771 = vpop.f32.mrf.mxu0
      %v1772 = vadd.f32 %v1387, %v1771
      %v1773 = vpop.f32.mrf.mxu0
      %1774 = vmatprep.mubr.f32.mxu0 %v477
      %1775 = vmatmul.mubr.f32.gmra.mxu0 %v476
      %v1776 = vpop.f32.mrf.mxu0
      %v1777 = vadd.f32 %v1392, %v1776
      %v1778 = vpop.f32.mrf.mxu0
      %1779 = vmatprep.mubr.f32.mxu0 %v484
      %1780 = vmatmul.mubr.f32.gmra.mxu0 %v483
      %v1781 = vpop.f32.mrf.mxu0
      %v1782 = vadd.f32 %v1397, %v1781
      %v1783 = vpop.f32.mrf.mxu0
      %1784 = vmatprep.mubr.f32.mxu0 %v491
      %1785 = vmatmul.mubr.f32.gmra.mxu0 %v490
      %v1786 = vpop.f32.mrf.mxu0
      %v1787 = vadd.f32 %v1402, %v1786
      %v1788 = vpop.f32.mrf.mxu0
      %1789 = vmatprep.mubr.f32.mxu0 %v498
      %1790 = vmatmul.mubr.f32.gmra.mxu0 %v497
      %v1791 = vpop.f32.mrf.mxu0
      %v1792 = vadd.f32 %v1407, %v1791
      %v1793 = vpop.f32.mrf.mxu0
      %1794 = vmatprep.mubr.f32.mxu0 %v505
      %1795 = vmatmul.mubr.f32.gmra.mxu0 %v504
      %v1796 = vpop.f32.mrf.mxu0
      %v1797 = vadd.f32 %v1412, %v1796
      %v1798 = vpop.f32.mrf.mxu0
      %1799 = vmatprep.mubr.f32.mxu0 %v512
      %1800 = vmatmul.mubr.f32.gmra.mxu0 %v511
      %v1801 = vpop.f32.mrf.mxu0
      %v1802 = vadd.f32 %v1417, %v1801
      %v1803 = vpop.f32.mrf.mxu0
      %1804 = vmatprep.mubr.f32.mxu0 %v519
      %1805 = vmatmul.mubr.f32.gmra.mxu0 %v518
      %v1806 = vpop.f32.mrf.mxu0
      %v1807 = vadd.f32 %v1422, %v1806
      %v1808 = vpop.f32.mrf.mxu0
      %1809 = vmatprep.mubr.f32.mxu0 %v526
      %1810 = vmatmul.mubr.f32.gmra.mxu0 %v525
      %v1811 = vpop.f32.mrf.mxu0
      %v1812 = vadd.f32 %v1427, %v1811
      %v1813 = vpop.f32.mrf.mxu0
      %1814 = vmatprep.mubr.f32.mxu0 %v533
      %1815 = vmatmul.mubr.f32.gmra.mxu0 %v532
      %v1816 = vpop.f32.mrf.mxu0
      %v1817 = vadd.f32 %v1432, %v1816
      %v1818 = vpop.f32.mrf.mxu0
      %1819 = vmatprep.mubr.f32.mxu0 %v540
      %1820 = vmatmul.mubr.f32.gmra.mxu0 %v539
      %v1821 = vpop.f32.mrf.mxu0
      %v1822 = vadd.f32 %v1437, %v1821
      %v1823 = vpop.f32.mrf.mxu0
      %1824 = vmatprep.mubr.f32.mxu0 %v547
      %1825 = vmatmul.mubr.f32.gmra.mxu0 %v546
      %v1826 = vpop.f32.mrf.mxu0
      %v1827 = vadd.f32 %v1442, %v1826
      %v1828 = vpop.f32.mrf.mxu0
      %1829 = vmatprep.mubr.f32.mxu0 %v554
      %1830 = vmatmul.mubr.f32.gmra.mxu0 %v553
      %v1831 = vpop.f32.mrf.mxu0
      %v1832 = vadd.f32 %v1447, %v1831
      %v1833 = vpop.f32.mrf.mxu0
      %1834 = vmatprep.mubr.f32.mxu0 %v561
      %1835 = vmatmul.mubr.f32.gmra.mxu0 %v560
      %v1836 = vpop.f32.mrf.mxu0
      %v1837 = vadd.f32 %v1452, %v1836
      %v1838 = vpop.f32.mrf.mxu0
      %1839 = vmatprep.mubr.f32.mxu0 %v568
      %1840 = vmatmul.mubr.f32.gmra.mxu0 %v567
      %v1841 = vpop.f32.mrf.mxu0
      %v1842 = vadd.f32 %v1457, %v1841
      %v1843 = vpop.f32.mrf.mxu0
      %1844 = vmatprep.mubr.f32.mxu0 %v575
      %1845 = vmatmul.mubr.f32.gmra.mxu0 %v574
      %v1846 = vpop.f32.mrf.mxu0
      %v1847 = vadd.f32 %v1462, %v1846
      %v1848 = vpop.f32.mrf.mxu0
      %1849 = vmatprep.mubr.f32.mxu0 %v582
      %1850 = vmatmul.mubr.f32.gmra.mxu0 %v581
      %v1851 = vpop.f32.mrf.mxu0
      %v1852 = vadd.f32 %v1467, %v1851
      %v1853 = vpop.f32.mrf.mxu0
      %1854 = vmatprep.mubr.f32.mxu0 %v589
      %1855 = vmatmul.mubr.f32.gmra.mxu0 %v588
      %v1856 = vpop.f32.mrf.mxu0
      %v1857 = vadd.f32 %v1472, %v1856
      %v1858 = vpop.f32.mrf.mxu0
      %1859 = vmatprep.mubr.f32.mxu0 %v596
      %1860 = vmatmul.mubr.f32.gmra.mxu0 %v595
      %v1861 = vpop.f32.mrf.mxu0
      %v1862 = vadd.f32 %v1477, %v1861
      %v1863 = vpop.f32.mrf.mxu0
      %1864 = vdwg.mxu0
      %1865 = vmatprep.subr.mxu0 0.0
      %1866 = vmatpush1.msra.mxu0 %v709
      %1867 = vmatprep.subr.mxu0 0.0
      %1868 = vmatpush1.msra.mxu0 %v708
      %1869 = vmatprep.subr.mxu0 0.0
      %1870 = vmatpush1.msra.mxu0 %v707
      %1871 = vmatprep.subr.mxu0 0.0
      %1872 = vmatpush1.msra.mxu0 %v706
      %1873 = vmatprep.subr.mxu0 0.0
      %1874 = vmatpush1.msra.mxu0 %v705
      %1875 = vmatprep.subr.mxu0 0.0
      %1876 = vmatpush1.msra.mxu0 %v704
      %1877 = vmatprep.subr.mxu0 0.0
      %1878 = vmatpush1.msra.mxu0 %v703
      %1879 = vmatprep.subr.mxu0 0.0
      %1880 = vmatpush1.msra.mxu0 %v702
      %1881 = vmatprep.subr.mxu0 0.0
      %1882 = vmatpush1.msra.mxu0 %v701
      %1883 = vmatprep.subr.mxu0 0.0
      %1884 = vmatpush1.msra.mxu0 %v700
      %1885 = vmatprep.subr.mxu0 0.0
      %1886 = vmatpush1.msra.mxu0 %v699
      %1887 = vmatprep.subr.mxu0 0.0
      %1888 = vmatpush1.msra.mxu0 %v698
      %1889 = vmatprep.subr.mxu0 0.0
      %1890 = vmatpush1.msra.mxu0 %v697
      %1891 = vmatprep.subr.mxu0 0.0
      %1892 = vmatpush1.msra.mxu0 %v696
      %1893 = vmatprep.subr.mxu0 0.0
      %1894 = vmatpush1.msra.mxu0 %v695
      %1895 = vmatprep.subr.mxu0 0.0
      %1896 = vmatpush1.msra.mxu0 %v694
      %1897 = vmatprep.subr.mxu0 0.0
      %1898 = vmatpush2.msra.mxu0 0.0
      %1899 = vmatprep.subr.mxu0 0.0
      %1900 = vmatpush2.msra.mxu0 0.0
      %1901 = vmatprep.subr.mxu0 0.0
      %1902 = vmatpush2.msra.mxu0 0.0
      %1903 = vmatprep.subr.mxu0 0.0
      %1904 = vmatpush2.msra.mxu0 0.0
      %1905 = vmatprep.subr.mxu0 0.0
      %1906 = vmatpush2.msra.mxu0 0.0
      %1907 = vmatprep.subr.mxu0 0.0
      %1908 = vmatpush2.msra.mxu0 0.0
      %1909 = vmatprep.subr.mxu0 0.0
      %1910 = vmatpush2.msra.mxu0 0.0
      %1911 = vmatprep.subr.mxu0 0.0
      %1912 = vmatpush2.msra.mxu0 0.0
      %1913 = vmatprep.subr.mxu0 0.0
      %1914 = vmatpush2.msra.mxu0 0.0
      %1915 = vmatprep.subr.mxu0 0.0
      %1916 = vmatpush2.msra.mxu0 0.0
      %1917 = vmatprep.subr.mxu0 0.0
      %1918 = vmatpush2.msra.mxu0 0.0
      %1919 = vmatprep.subr.mxu0 0.0
      %1920 = vmatpush2.msra.mxu0 0.0
      %1921 = vmatprep.subr.mxu0 0.0
      %1922 = vmatpush2.msra.mxu0 0.0
      %1923 = vmatprep.subr.mxu0 0.0
      %1924 = vmatpush2.msra.mxu0 0.0
      %1925 = vmatprep.subr.mxu0 0.0
      %1926 = vmatpush2.msra.mxu0 0.0
      %1927 = vmatprep.subr.mxu0 0.0
      %1928 = vmatpush2.msra.mxu0 0.0
      %1929 = vmatprep.mubr.f32.mxu0 0.0
      %1930 = vmatmul.mubr.f32.gmra.mxu0 %v156
      %v1931 = vpop.f32.mrf.mxu0
      %v1932 = vadd.f32 %v1547, %v1931
      %v1933 = vpop.f32.mrf.mxu0
      %1934 = vmatprep.mubr.f32.mxu0 0.0
      %1935 = vmatmul.mubr.f32.gmra.mxu0 %v163
      %v1936 = vpop.f32.mrf.mxu0
      %v1937 = vadd.f32 %v1552, %v1936
      %v1938 = vpop.f32.mrf.mxu0
      %1939 = vmatprep.mubr.f32.mxu0 0.0
      %1940 = vmatmul.mubr.f32.gmra.mxu0 %v170
      %v1941 = vpop.f32.mrf.mxu0
      %v1942 = vadd.f32 %v1557, %v1941
      %v1943 = vpop.f32.mrf.mxu0
      %1944 = vmatprep.mubr.f32.mxu0 0.0
      %1945 = vmatmul.mubr.f32.gmra.mxu0 %v177
      %v1946 = vpop.f32.mrf.mxu0
      %v1947 = vadd.f32 %v1562, %v1946
      %v1948 = vpop.f32.mrf.mxu0
      %1949 = vmatprep.mubr.f32.mxu0 0.0
      %1950 = vmatmul.mubr.f32.gmra.mxu0 %v184
      %v1951 = vpop.f32.mrf.mxu0
      %v1952 = vadd.f32 %v1567, %v1951
      %v1953 = vpop.f32.mrf.mxu0
      %1954 = vmatprep.mubr.f32.mxu0 0.0
      %1955 = vmatmul.mubr.f32.gmra.mxu0 %v191
      %v1956 = vpop.f32.mrf.mxu0
      %v1957 = vadd.f32 %v1572, %v1956
      %v1958 = vpop.f32.mrf.mxu0
      %1959 = vmatprep.mubr.f32.mxu0 0.0
      %1960 = vmatmul.mubr.f32.gmra.mxu0 %v198
      %v1961 = vpop.f32.mrf.mxu0
      %v1962 = vadd.f32 %v1577, %v1961
      %v1963 = vpop.f32.mrf.mxu0
      %1964 = vmatprep.mubr.f32.mxu0 0.0
      %1965 = vmatmul.mubr.f32.gmra.mxu0 %v205
      %v1966 = vpop.f32.mrf.mxu0
      %v1967 = vadd.f32 %v1582, %v1966
      %v1968 = vpop.f32.mrf.mxu0
      %1969 = vmatprep.mubr.f32.mxu0 0.0
      %1970 = vmatmul.mubr.f32.gmra.mxu0 %v212
      %v1971 = vpop.f32.mrf.mxu0
      %v1972 = vadd.f32 %v1587, %v1971
      %v1973 = vpop.f32.mrf.mxu0
      %1974 = vmatprep.mubr.f32.mxu0 0.0
      %1975 = vmatmul.mubr.f32.gmra.mxu0 %v219
      %v1976 = vpop.f32.mrf.mxu0
      %v1977 = vadd.f32 %v1592, %v1976
      %v1978 = vpop.f32.mrf.mxu0
      %1979 = vmatprep.mubr.f32.mxu0 0.0
      %1980 = vmatmul.mubr.f32.gmra.mxu0 %v226
      %v1981 = vpop.f32.mrf.mxu0
      %v1982 = vadd.f32 %v1597, %v1981
      %v1983 = vpop.f32.mrf.mxu0
      %1984 = vmatprep.mubr.f32.mxu0 0.0
      %1985 = vmatmul.mubr.f32.gmra.mxu0 %v233
      %v1986 = vpop.f32.mrf.mxu0
      %v1987 = vadd.f32 %v1602, %v1986
      %v1988 = vpop.f32.mrf.mxu0
      %1989 = vmatprep.mubr.f32.mxu0 0.0
      %1990 = vmatmul.mubr.f32.gmra.mxu0 %v240
      %v1991 = vpop.f32.mrf.mxu0
      %v1992 = vadd.f32 %v1607, %v1991
      %v1993 = vpop.f32.mrf.mxu0
      %1994 = vmatprep.mubr.f32.mxu0 0.0
      %1995 = vmatmul.mubr.f32.gmra.mxu0 %v247
      %v1996 = vpop.f32.mrf.mxu0
      %v1997 = vadd.f32 %v1612, %v1996
      %v1998 = vpop.f32.mrf.mxu0
      %1999 = vmatprep.mubr.f32.mxu0 0.0
      %2000 = vmatmul.mubr.f32.gmra.mxu0 %v254
      %v2001 = vpop.f32.mrf.mxu0
      %v2002 = vadd.f32 %v1617, %v2001
      %v2003 = vpop.f32.mrf.mxu0
      %2004 = vmatprep.mubr.f32.mxu0 0.0
      %2005 = vmatmul.mubr.f32.gmra.mxu0 %v261
      %v2006 = vpop.f32.mrf.mxu0
      %v2007 = vadd.f32 %v1622, %v2006
      %v2008 = vpop.f32.mrf.mxu0
      %2009 = vmatprep.mubr.f32.mxu0 0.0
      %2010 = vmatmul.mubr.f32.gmra.mxu0 %v268
      %v2011 = vpop.f32.mrf.mxu0
      %v2012 = vadd.f32 %v1627, %v2011
      %v2013 = vpop.f32.mrf.mxu0
      %2014 = vmatprep.mubr.f32.mxu0 0.0
      %2015 = vmatmul.mubr.f32.gmra.mxu0 %v275
      %v2016 = vpop.f32.mrf.mxu0
      %v2017 = vadd.f32 %v1632, %v2016
      %v2018 = vpop.f32.mrf.mxu0
      %2019 = vmatprep.mubr.f32.mxu0 0.0
      %2020 = vmatmul.mubr.f32.gmra.mxu0 %v282
      %v2021 = vpop.f32.mrf.mxu0
      %v2022 = vadd.f32 %v1637, %v2021
      %v2023 = vpop.f32.mrf.mxu0
      %2024 = vmatprep.mubr.f32.mxu0 0.0
      %2025 = vmatmul.mubr.f32.gmra.mxu0 %v289
      %v2026 = vpop.f32.mrf.mxu0
      %v2027 = vadd.f32 %v1642, %v2026
      %v2028 = vpop.f32.mrf.mxu0
      %2029 = vmatprep.mubr.f32.mxu0 0.0
      %2030 = vmatmul.mubr.f32.gmra.mxu0 %v296
      %v2031 = vpop.f32.mrf.mxu0
      %v2032 = vadd.f32 %v1647, %v2031
      %v2033 = vpop.f32.mrf.mxu0
      %2034 = vmatprep.mubr.f32.mxu0 0.0
      %2035 = vmatmul.mubr.f32.gmra.mxu0 %v303
      %v2036 = vpop.f32.mrf.mxu0
      %v2037 = vadd.f32 %v1652, %v2036
      %v2038 = vpop.f32.mrf.mxu0
      %2039 = vmatprep.mubr.f32.mxu0 0.0
      %2040 = vmatmul.mubr.f32.gmra.mxu0 %v310
      %v2041 = vpop.f32.mrf.mxu0
      %v2042 = vadd.f32 %v1657, %v2041
      %v2043 = vpop.f32.mrf.mxu0
      %2044 = vmatprep.mubr.f32.mxu0 0.0
      %2045 = vmatmul.mubr.f32.gmra.mxu0 %v317
      %v2046 = vpop.f32.mrf.mxu0
      %v2047 = vadd.f32 %v1662, %v2046
      %v2048 = vpop.f32.mrf.mxu0
      %2049 = vmatprep.mubr.f32.mxu0 0.0
      %2050 = vmatmul.mubr.f32.gmra.mxu0 %v324
      %v2051 = vpop.f32.mrf.mxu0
      %v2052 = vadd.f32 %v1667, %v2051
      %v2053 = vpop.f32.mrf.mxu0
      %2054 = vmatprep.mubr.f32.mxu0 0.0
      %2055 = vmatmul.mubr.f32.gmra.mxu0 %v331
      %v2056 = vpop.f32.mrf.mxu0
      %v2057 = vadd.f32 %v1672, %v2056
      %v2058 = vpop.f32.mrf.mxu0
      %2059 = vmatprep.mubr.f32.mxu0 0.0
      %2060 = vmatmul.mubr.f32.gmra.mxu0 %v338
      %v2061 = vpop.f32.mrf.mxu0
      %v2062 = vadd.f32 %v1677, %v2061
      %v2063 = vpop.f32.mrf.mxu0
      %2064 = vmatprep.mubr.f32.mxu0 0.0
      %2065 = vmatmul.mubr.f32.gmra.mxu0 %v345
      %v2066 = vpop.f32.mrf.mxu0
      %v2067 = vadd.f32 %v1682, %v2066
      %v2068 = vpop.f32.mrf.mxu0
      %2069 = vmatprep.mubr.f32.mxu0 0.0
      %2070 = vmatmul.mubr.f32.gmra.mxu0 %v352
      %v2071 = vpop.f32.mrf.mxu0
      %v2072 = vadd.f32 %v1687, %v2071
      %v2073 = vpop.f32.mrf.mxu0
      %2074 = vmatprep.mubr.f32.mxu0 0.0
      %2075 = vmatmul.mubr.f32.gmra.mxu0 %v359
      %v2076 = vpop.f32.mrf.mxu0
      %v2077 = vadd.f32 %v1692, %v2076
      %v2078 = vpop.f32.mrf.mxu0
      %2079 = vmatprep.mubr.f32.mxu0 0.0
      %2080 = vmatmul.mubr.f32.gmra.mxu0 %v366
      %v2081 = vpop.f32.mrf.mxu0
      %v2082 = vadd.f32 %v1697, %v2081
      %v2083 = vpop.f32.mrf.mxu0
      %2084 = vmatprep.mubr.f32.mxu0 0.0
      %2085 = vmatmul.mubr.f32.gmra.mxu0 %v373
      %v2086 = vpop.f32.mrf.mxu0
      %v2087 = vadd.f32 %v1702, %v2086
      %v2088 = vpop.f32.mrf.mxu0
      %2089 = vmatprep.mubr.f32.mxu0 0.0
      %2090 = vmatmul.mubr.f32.gmra.mxu0 %v380
      %v2091 = vpop.f32.mrf.mxu0
      %v2092 = vadd.f32 %v1707, %v2091
      %v2093 = vpop.f32.mrf.mxu0
      %2094 = vmatprep.mubr.f32.mxu0 0.0
      %2095 = vmatmul.mubr.f32.gmra.mxu0 %v387
      %v2096 = vpop.f32.mrf.mxu0
      %v2097 = vadd.f32 %v1712, %v2096
      %v2098 = vpop.f32.mrf.mxu0
      %2099 = vmatprep.mubr.f32.mxu0 0.0
      %2100 = vmatmul.mubr.f32.gmra.mxu0 %v394
      %v2101 = vpop.f32.mrf.mxu0
      %v2102 = vadd.f32 %v1717, %v2101
      %v2103 = vpop.f32.mrf.mxu0
      %2104 = vmatprep.mubr.f32.mxu0 0.0
      %2105 = vmatmul.mubr.f32.gmra.mxu0 %v401
      %v2106 = vpop.f32.mrf.mxu0
      %v2107 = vadd.f32 %v1722, %v2106
      %v2108 = vpop.f32.mrf.mxu0
      %2109 = vmatprep.mubr.f32.mxu0 0.0
      %2110 = vmatmul.mubr.f32.gmra.mxu0 %v408
      %v2111 = vpop.f32.mrf.mxu0
      %v2112 = vadd.f32 %v1727, %v2111
      %v2113 = vpop.f32.mrf.mxu0
      %2114 = vmatprep.mubr.f32.mxu0 0.0
      %2115 = vmatmul.mubr.f32.gmra.mxu0 %v415
      %v2116 = vpop.f32.mrf.mxu0
      %v2117 = vadd.f32 %v1732, %v2116
      %v2118 = vpop.f32.mrf.mxu0
      %2119 = vmatprep.mubr.f32.mxu0 0.0
      %2120 = vmatmul.mubr.f32.gmra.mxu0 %v422
      %v2121 = vpop.f32.mrf.mxu0
      %v2122 = vadd.f32 %v1737, %v2121
      %v2123 = vpop.f32.mrf.mxu0
      %2124 = vmatprep.mubr.f32.mxu0 0.0
      %2125 = vmatmul.mubr.f32.gmra.mxu0 %v429
      %v2126 = vpop.f32.mrf.mxu0
      %v2127 = vadd.f32 %v1742, %v2126
      %v2128 = vpop.f32.mrf.mxu0
      %2129 = vmatprep.mubr.f32.mxu0 0.0
      %2130 = vmatmul.mubr.f32.gmra.mxu0 %v436
      %v2131 = vpop.f32.mrf.mxu0
      %v2132 = vadd.f32 %v1747, %v2131
      %v2133 = vpop.f32.mrf.mxu0
      %2134 = vmatprep.mubr.f32.mxu0 0.0
      %2135 = vmatmul.mubr.f32.gmra.mxu0 %v443
      %v2136 = vpop.f32.mrf.mxu0
      %v2137 = vadd.f32 %v1752, %v2136
      %v2138 = vpop.f32.mrf.mxu0
      %2139 = vmatprep.mubr.f32.mxu0 0.0
      %2140 = vmatmul.mubr.f32.gmra.mxu0 %v450
      %v2141 = vpop.f32.mrf.mxu0
      %v2142 = vadd.f32 %v1757, %v2141
      %v2143 = vpop.f32.mrf.mxu0
      %2144 = vmatprep.mubr.f32.mxu0 0.0
      %2145 = vmatmul.mubr.f32.gmra.mxu0 %v457
      %v2146 = vpop.f32.mrf.mxu0
      %v2147 = vadd.f32 %v1762, %v2146
      %v2148 = vpop.f32.mrf.mxu0
      %2149 = vmatprep.mubr.f32.mxu0 0.0
      %2150 = vmatmul.mubr.f32.gmra.mxu0 %v464
      %v2151 = vpop.f32.mrf.mxu0
      %v2152 = vadd.f32 %v1767, %v2151
      %v2153 = vpop.f32.mrf.mxu0
      %2154 = vmatprep.mubr.f32.mxu0 0.0
      %2155 = vmatmul.mubr.f32.gmra.mxu0 %v471
      %v2156 = vpop.f32.mrf.mxu0
      %v2157 = vadd.f32 %v1772, %v2156
      %v2158 = vpop.f32.mrf.mxu0
      %2159 = vmatprep.mubr.f32.mxu0 0.0
      %2160 = vmatmul.mubr.f32.gmra.mxu0 %v478
      %v2161 = vpop.f32.mrf.mxu0
      %v2162 = vadd.f32 %v1777, %v2161
      %v2163 = vpop.f32.mrf.mxu0
      %2164 = vmatprep.mubr.f32.mxu0 0.0
      %2165 = vmatmul.mubr.f32.gmra.mxu0 %v485
      %v2166 = vpop.f32.mrf.mxu0
      %v2167 = vadd.f32 %v1782, %v2166
      %v2168 = vpop.f32.mrf.mxu0
      %2169 = vmatprep.mubr.f32.mxu0 0.0
      %2170 = vmatmul.mubr.f32.gmra.mxu0 %v492
      %v2171 = vpop.f32.mrf.mxu0
      %v2172 = vadd.f32 %v1787, %v2171
      %v2173 = vpop.f32.mrf.mxu0
      %2174 = vmatprep.mubr.f32.mxu0 0.0
      %2175 = vmatmul.mubr.f32.gmra.mxu0 %v499
      %v2176 = vpop.f32.mrf.mxu0
      %v2177 = vadd.f32 %v1792, %v2176
      %v2178 = vpop.f32.mrf.mxu0
      %2179 = vmatprep.mubr.f32.mxu0 0.0
      %2180 = vmatmul.mubr.f32.gmra.mxu0 %v506
      %v2181 = vpop.f32.mrf.mxu0
      %v2182 = vadd.f32 %v1797, %v2181
      %v2183 = vpop.f32.mrf.mxu0
      %2184 = vmatprep.mubr.f32.mxu0 0.0
      %2185 = vmatmul.mubr.f32.gmra.mxu0 %v513
      %v2186 = vpop.f32.mrf.mxu0
      %v2187 = vadd.f32 %v1802, %v2186
      %v2188 = vpop.f32.mrf.mxu0
      %2189 = vmatprep.mubr.f32.mxu0 0.0
      %2190 = vmatmul.mubr.f32.gmra.mxu0 %v520
      %v2191 = vpop.f32.mrf.mxu0
      %v2192 = vadd.f32 %v1807, %v2191
      %v2193 = vpop.f32.mrf.mxu0
      %2194 = vmatprep.mubr.f32.mxu0 0.0
      %2195 = vmatmul.mubr.f32.gmra.mxu0 %v527
      %v2196 = vpop.f32.mrf.mxu0
      %v2197 = vadd.f32 %v1812, %v2196
      %v2198 = vpop.f32.mrf.mxu0
      %2199 = vmatprep.mubr.f32.mxu0 0.0
      %2200 = vmatmul.mubr.f32.gmra.mxu0 %v534
      %v2201 = vpop.f32.mrf.mxu0
      %v2202 = vadd.f32 %v1817, %v2201
      %v2203 = vpop.f32.mrf.mxu0
      %2204 = vmatprep.mubr.f32.mxu0 0.0
      %2205 = vmatmul.mubr.f32.gmra.mxu0 %v541
      %v2206 = vpop.f32.mrf.mxu0
      %v2207 = vadd.f32 %v1822, %v2206
      %v2208 = vpop.f32.mrf.mxu0
      %2209 = vmatprep.mubr.f32.mxu0 0.0
      %2210 = vmatmul.mubr.f32.gmra.mxu0 %v548
      %v2211 = vpop.f32.mrf.mxu0
      %v2212 = vadd.f32 %v1827, %v2211
      %v2213 = vpop.f32.mrf.mxu0
      %2214 = vmatprep.mubr.f32.mxu0 0.0
      %2215 = vmatmul.mubr.f32.gmra.mxu0 %v555
      %v2216 = vpop.f32.mrf.mxu0
      %v2217 = vadd.f32 %v1832, %v2216
      %v2218 = vpop.f32.mrf.mxu0
      %2219 = vmatprep.mubr.f32.mxu0 0.0
      %2220 = vmatmul.mubr.f32.gmra.mxu0 %v562
      %v2221 = vpop.f32.mrf.mxu0
      %v2222 = vadd.f32 %v1837, %v2221
      %v2223 = vpop.f32.mrf.mxu0
      %2224 = vmatprep.mubr.f32.mxu0 0.0
      %2225 = vmatmul.mubr.f32.gmra.mxu0 %v569
      %v2226 = vpop.f32.mrf.mxu0
      %v2227 = vadd.f32 %v1842, %v2226
      %v2228 = vpop.f32.mrf.mxu0
      %2229 = vmatprep.mubr.f32.mxu0 0.0
      %2230 = vmatmul.mubr.f32.gmra.mxu0 %v576
      %v2231 = vpop.f32.mrf.mxu0
      %v2232 = vadd.f32 %v1847, %v2231
      %v2233 = vpop.f32.mrf.mxu0
      %2234 = vmatprep.mubr.f32.mxu0 0.0
      %2235 = vmatmul.mubr.f32.gmra.mxu0 %v583
      %v2236 = vpop.f32.mrf.mxu0
      %v2237 = vadd.f32 %v1852, %v2236
      %v2238 = vpop.f32.mrf.mxu0
      %2239 = vmatprep.mubr.f32.mxu0 0.0
      %2240 = vmatmul.mubr.f32.gmra.mxu0 %v590
      %v2241 = vpop.f32.mrf.mxu0
      %v2242 = vadd.f32 %v1857, %v2241
      %v2243 = vpop.f32.mrf.mxu0
      %2244 = vmatprep.mubr.f32.mxu0 0.0
      %2245 = vmatmul.mubr.f32.gmra.mxu0 %v597
      %v2246 = vpop.f32.mrf.mxu0
      %v2247 = vadd.f32 %v1862, %v2246
      %v2248 = vpop.f32.mrf.mxu0
      %2249 = vdwg.mxu0
      %v2250 = vsub.f32 0.0, %v1932
      %v2251 = vsub.f32 0.0, %v1937
      %v2252 = vsub.f32 0.0, %v1942
      %v2253 = vsub.f32 0.0, %v1947
      %v2254 = vsub.f32 0.0, %v1952
      %v2255 = vsub.f32 0.0, %v1957
      %v2256 = vsub.f32 0.0, %v1962
      %v2257 = vsub.f32 0.0, %v1967
      %v2258 = vsub.f32 0.0, %v1972
      %v2259 = vsub.f32 0.0, %v1977
      %v2260 = vsub.f32 0.0, %v1982
      %v2261 = vsub.f32 0.0, %v1987
      %v2262 = vsub.f32 0.0, %v1992
      %v2263 = vsub.f32 0.0, %v1997
      %v2264 = vsub.f32 0.0, %v2002
      %v2265 = vsub.f32 0.0, %v2007
      %v2266 = vsub.f32 0.0, %v2012
      %v2267 = vsub.f32 0.0, %v2017
      %v2268 = vsub.f32 0.0, %v2022
      %v2269 = vsub.f32 0.0, %v2027
      %v2270 = vsub.f32 0.0, %v2032
      %v2271 = vsub.f32 0.0, %v2037
      %v2272 = vsub.f32 0.0, %v2042
      %v2273 = vsub.f32 0.0, %v2047
      %v2274 = vsub.f32 0.0, %v2052
      %v2275 = vsub.f32 0.0, %v2057
      %v2276 = vsub.f32 0.0, %v2062
      %v2277 = vsub.f32 0.0, %v2067
      %v2278 = vsub.f32 0.0, %v2072
      %v2279 = vsub.f32 0.0, %v2077
      %v2280 = vsub.f32 0.0, %v2082
      %v2281 = vsub.f32 0.0, %v2087
      %v2282 = vsub.f32 0.0, %v2092
      %v2283 = vsub.f32 0.0, %v2097
      %v2284 = vsub.f32 0.0, %v2102
      %v2285 = vsub.f32 0.0, %v2107
      %v2286 = vsub.f32 0.0, %v2112
      %v2287 = vsub.f32 0.0, %v2117
      %v2288 = vsub.f32 0.0, %v2122
      %v2289 = vsub.f32 0.0, %v2127
      %v2290 = vsub.f32 0.0, %v2132
      %v2291 = vsub.f32 0.0, %v2137
      %v2292 = vsub.f32 0.0, %v2142
      %v2293 = vsub.f32 0.0, %v2147
      %v2294 = vsub.f32 0.0, %v2152
      %v2295 = vsub.f32 0.0, %v2157
      %v2296 = vsub.f32 0.0, %v2162
      %v2297 = vsub.f32 0.0, %v2167
      %v2298 = vsub.f32 0.0, %v2172
      %v2299 = vsub.f32 0.0, %v2177
      %v2300 = vsub.f32 0.0, %v2182
      %v2301 = vsub.f32 0.0, %v2187
      %v2302 = vsub.f32 0.0, %v2192
      %v2303 = vsub.f32 0.0, %v2197
      %v2304 = vsub.f32 0.0, %v2202
      %v2305 = vsub.f32 0.0, %v2207
      %v2306 = vsub.f32 0.0, %v2212
      %v2307 = vsub.f32 0.0, %v2217
      %v2308 = vsub.f32 0.0, %v2222
      %v2309 = vsub.f32 0.0, %v2227
      %v2310 = vsub.f32 0.0, %v2232
      %v2311 = vsub.f32 0.0, %v2237
      %v2312 = vsub.f32 0.0, %v2242
      %v2313 = vsub.f32 0.0, %v2247
      %v2314 = vmul.f32 %v2250, 1.442695
      %v2315 = vpow.pop %v2314
      %v2316 = vmul.f32 %v2251, 1.442695
      %v2317 = vpow.pop %v2316
      %v2318 = vmul.f32 %v2252, 1.442695
      %v2319 = vpow.pop %v2318
      %v2320 = vmul.f32 %v2253, 1.442695
      %v2321 = vpow.pop %v2320
      %v2322 = vmul.f32 %v2254, 1.442695
      %v2323 = vpow.pop %v2322
      %v2324 = vmul.f32 %v2255, 1.442695
      %v2325 = vpow.pop %v2324
      %v2326 = vmul.f32 %v2256, 1.442695
      %v2327 = vpow.pop %v2326
      %v2328 = vmul.f32 %v2257, 1.442695
      %v2329 = vpow.pop %v2328
      %v2330 = vmul.f32 %v2258, 1.442695
      %v2331 = vpow.pop %v2330
      %v2332 = vmul.f32 %v2259, 1.442695
      %v2333 = vpow.pop %v2332
      %v2334 = vmul.f32 %v2260, 1.442695
      %v2335 = vpow.pop %v2334
      %v2336 = vmul.f32 %v2261, 1.442695
      %v2337 = vpow.pop %v2336
      %v2338 = vmul.f32 %v2262, 1.442695
      %v2339 = vpow.pop %v2338
      %v2340 = vmul.f32 %v2263, 1.442695
      %v2341 = vpow.pop %v2340
      %v2342 = vmul.f32 %v2264, 1.442695
      %v2343 = vpow.pop %v2342
      %v2344 = vmul.f32 %v2265, 1.442695
      %v2345 = vpow.pop %v2344
      %v2346 = vmul.f32 %v2266, 1.442695
      %v2347 = vpow.pop %v2346
      %v2348 = vmul.f32 %v2267, 1.442695
      %v2349 = vpow.pop %v2348
      %v2350 = vmul.f32 %v2268, 1.442695
      %v2351 = vpow.pop %v2350
      %v2352 = vmul.f32 %v2269, 1.442695
      %v2353 = vpow.pop %v2352
      %v2354 = vmul.f32 %v2270, 1.442695
      %v2355 = vpow.pop %v2354
      %v2356 = vmul.f32 %v2271, 1.442695
      %v2357 = vpow.pop %v2356
      %v2358 = vmul.f32 %v2272, 1.442695
      %v2359 = vpow.pop %v2358
      %v2360 = vmul.f32 %v2273, 1.442695
      %v2361 = vpow.pop %v2360
      %v2362 = vmul.f32 %v2274, 1.442695
      %v2363 = vpow.pop %v2362
      %v2364 = vmul.f32 %v2275, 1.442695
      %v2365 = vpow.pop %v2364
      %v2366 = vmul.f32 %v2276, 1.442695
      %v2367 = vpow.pop %v2366
      %v2368 = vmul.f32 %v2277, 1.442695
      %v2369 = vpow.pop %v2368
      %v2370 = vmul.f32 %v2278, 1.442695
      %v2371 = vpow.pop %v2370
      %v2372 = vmul.f32 %v2279, 1.442695
      %v2373 = vpow.pop %v2372
      %v2374 = vmul.f32 %v2280, 1.442695
      %v2375 = vpow.pop %v2374
      %v2376 = vmul.f32 %v2281, 1.442695
      %v2377 = vpow.pop %v2376
      %v2378 = vmul.f32 %v2282, 1.442695
      %v2379 = vpow.pop %v2378
      %v2380 = vmul.f32 %v2283, 1.442695
      %v2381 = vpow.pop %v2380
      %v2382 = vmul.f32 %v2284, 1.442695
      %v2383 = vpow.pop %v2382
      %v2384 = vmul.f32 %v2285, 1.442695
      %v2385 = vpow.pop %v2384
      %v2386 = vmul.f32 %v2286, 1.442695
      %v2387 = vpow.pop %v2386
      %v2388 = vmul.f32 %v2287, 1.442695
      %v2389 = vpow.pop %v2388
      %v2390 = vmul.f32 %v2288, 1.442695
      %v2391 = vpow.pop %v2390
      %v2392 = vmul.f32 %v2289, 1.442695
      %v2393 = vpow.pop %v2392
      %v2394 = vmul.f32 %v2290, 1.442695
      %v2395 = vpow.pop %v2394
      %v2396 = vmul.f32 %v2291, 1.442695
      %v2397 = vpow.pop %v2396
      %v2398 = vmul.f32 %v2292, 1.442695
      %v2399 = vpow.pop %v2398
      %v2400 = vmul.f32 %v2293, 1.442695
      %v2401 = vpow.pop %v2400
      %v2402 = vmul.f32 %v2294, 1.442695
      %v2403 = vpow.pop %v2402
      %v2404 = vmul.f32 %v2295, 1.442695
      %v2405 = vpow.pop %v2404
      %v2406 = vmul.f32 %v2296, 1.442695
      %v2407 = vpow.pop %v2406
      %v2408 = vmul.f32 %v2297, 1.442695
      %v2409 = vpow.pop %v2408
      %v2410 = vmul.f32 %v2298, 1.442695
      %v2411 = vpow.pop %v2410
      %v2412 = vmul.f32 %v2299, 1.442695
      %v2413 = vpow.pop %v2412
      %v2414 = vmul.f32 %v2300, 1.442695
      %v2415 = vpow.pop %v2414
      %v2416 = vmul.f32 %v2301, 1.442695
      %v2417 = vpow.pop %v2416
      %v2418 = vmul.f32 %v2302, 1.442695
      %v2419 = vpow.pop %v2418
      %v2420 = vmul.f32 %v2303, 1.442695
      %v2421 = vpow.pop %v2420
      %v2422 = vmul.f32 %v2304, 1.442695
      %v2423 = vpow.pop %v2422
      %v2424 = vmul.f32 %v2305, 1.442695
      %v2425 = vpow.pop %v2424
      %v2426 = vmul.f32 %v2306, 1.442695
      %v2427 = vpow.pop %v2426
      %v2428 = vmul.f32 %v2307, 1.442695
      %v2429 = vpow.pop %v2428
      %v2430 = vmul.f32 %v2308, 1.442695
      %v2431 = vpow.pop %v2430
      %v2432 = vmul.f32 %v2309, 1.442695
      %v2433 = vpow.pop %v2432
      %v2434 = vmul.f32 %v2310, 1.442695
      %v2435 = vpow.pop %v2434
      %v2436 = vmul.f32 %v2311, 1.442695
      %v2437 = vpow.pop %v2436
      %v2438 = vmul.f32 %v2312, 1.442695
      %v2439 = vpow.pop %v2438
      %v2440 = vmul.f32 %v2313, 1.442695
      %v2441 = vpow.pop %v2440
      %v2442 = vadd.f32 %v2315, 1.0
      %v2443 = vadd.f32 %v2317, 1.0
      %v2444 = vadd.f32 %v2319, 1.0
      %v2445 = vadd.f32 %v2321, 1.0
      %v2446 = vadd.f32 %v2323, 1.0
      %v2447 = vadd.f32 %v2325, 1.0
      %v2448 = vadd.f32 %v2327, 1.0
      %v2449 = vadd.f32 %v2329, 1.0
      %v2450 = vadd.f32 %v2331, 1.0
      %v2451 = vadd.f32 %v2333, 1.0
      %v2452 = vadd.f32 %v2335, 1.0
      %v2453 = vadd.f32 %v2337, 1.0
      %v2454 = vadd.f32 %v2339, 1.0
      %v2455 = vadd.f32 %v2341, 1.0
      %v2456 = vadd.f32 %v2343, 1.0
      %v2457 = vadd.f32 %v2345, 1.0
      %v2458 = vadd.f32 %v2347, 1.0
      %v2459 = vadd.f32 %v2349, 1.0
      %v2460 = vadd.f32 %v2351, 1.0
      %v2461 = vadd.f32 %v2353, 1.0
      %v2462 = vadd.f32 %v2355, 1.0
      %v2463 = vadd.f32 %v2357, 1.0
      %v2464 = vadd.f32 %v2359, 1.0
      %v2465 = vadd.f32 %v2361, 1.0
      %v2466 = vadd.f32 %v2363, 1.0
      %v2467 = vadd.f32 %v2365, 1.0
      %v2468 = vadd.f32 %v2367, 1.0
      %v2469 = vadd.f32 %v2369, 1.0
      %v2470 = vadd.f32 %v2371, 1.0
      %v2471 = vadd.f32 %v2373, 1.0
      %v2472 = vadd.f32 %v2375, 1.0
      %v2473 = vadd.f32 %v2377, 1.0
      %v2474 = vadd.f32 %v2379, 1.0
      %v2475 = vadd.f32 %v2381, 1.0
      %v2476 = vadd.f32 %v2383, 1.0
      %v2477 = vadd.f32 %v2385, 1.0
      %v2478 = vadd.f32 %v2387, 1.0
      %v2479 = vadd.f32 %v2389, 1.0
      %v2480 = vadd.f32 %v2391, 1.0
      %v2481 = vadd.f32 %v2393, 1.0
      %v2482 = vadd.f32 %v2395, 1.0
      %v2483 = vadd.f32 %v2397, 1.0
      %v2484 = vadd.f32 %v2399, 1.0
      %v2485 = vadd.f32 %v2401, 1.0
      %v2486 = vadd.f32 %v2403, 1.0
      %v2487 = vadd.f32 %v2405, 1.0
      %v2488 = vadd.f32 %v2407, 1.0
      %v2489 = vadd.f32 %v2409, 1.0
      %v2490 = vadd.f32 %v2411, 1.0
      %v2491 = vadd.f32 %v2413, 1.0
      %v2492 = vadd.f32 %v2415, 1.0
      %v2493 = vadd.f32 %v2417, 1.0
      %v2494 = vadd.f32 %v2419, 1.0
      %v2495 = vadd.f32 %v2421, 1.0
      %v2496 = vadd.f32 %v2423, 1.0
      %v2497 = vadd.f32 %v2425, 1.0
      %v2498 = vadd.f32 %v2427, 1.0
      %v2499 = vadd.f32 %v2429, 1.0
      %v2500 = vadd.f32 %v2431, 1.0
      %v2501 = vadd.f32 %v2433, 1.0
      %v2502 = vadd.f32 %v2435, 1.0
      %v2503 = vadd.f32 %v2437, 1.0
      %v2504 = vadd.f32 %v2439, 1.0
      %v2505 = vadd.f32 %v2441, 1.0
      %v2506 = vrcp.pop %v2442
      %v2507 = vmul.f32 1.0, %v2506
      %v2508 = vrcp.pop %v2443
      %v2509 = vmul.f32 1.0, %v2508
      %v2510 = vrcp.pop %v2444
      %v2511 = vmul.f32 1.0, %v2510
      %v2512 = vrcp.pop %v2445
      %v2513 = vmul.f32 1.0, %v2512
      %v2514 = vrcp.pop %v2446
      %v2515 = vmul.f32 1.0, %v2514
      %v2516 = vrcp.pop %v2447
      %v2517 = vmul.f32 1.0, %v2516
      %v2518 = vrcp.pop %v2448
      %v2519 = vmul.f32 1.0, %v2518
      %v2520 = vrcp.pop %v2449
      %v2521 = vmul.f32 1.0, %v2520
      %v2522 = vrcp.pop %v2450
      %v2523 = vmul.f32 1.0, %v2522
      %v2524 = vrcp.pop %v2451
      %v2525 = vmul.f32 1.0, %v2524
      %v2526 = vrcp.pop %v2452
      %v2527 = vmul.f32 1.0, %v2526
      %v2528 = vrcp.pop %v2453
      %v2529 = vmul.f32 1.0, %v2528
      %v2530 = vrcp.pop %v2454
      %v2531 = vmul.f32 1.0, %v2530
      %v2532 = vrcp.pop %v2455
      %v2533 = vmul.f32 1.0, %v2532
      %v2534 = vrcp.pop %v2456
      %v2535 = vmul.f32 1.0, %v2534
      %v2536 = vrcp.pop %v2457
      %v2537 = vmul.f32 1.0, %v2536
      %v2538 = vrcp.pop %v2458
      %v2539 = vmul.f32 1.0, %v2538
      %v2540 = vrcp.pop %v2459
      %v2541 = vmul.f32 1.0, %v2540
      %v2542 = vrcp.pop %v2460
      %v2543 = vmul.f32 1.0, %v2542
      %v2544 = vrcp.pop %v2461
      %v2545 = vmul.f32 1.0, %v2544
      %v2546 = vrcp.pop %v2462
      %v2547 = vmul.f32 1.0, %v2546
      %v2548 = vrcp.pop %v2463
      %v2549 = vmul.f32 1.0, %v2548
      %v2550 = vrcp.pop %v2464
      %v2551 = vmul.f32 1.0, %v2550
      %v2552 = vrcp.pop %v2465
      %v2553 = vmul.f32 1.0, %v2552
      %v2554 = vrcp.pop %v2466
      %v2555 = vmul.f32 1.0, %v2554
      %v2556 = vrcp.pop %v2467
      %v2557 = vmul.f32 1.0, %v2556
      %v2558 = vrcp.pop %v2468
      %v2559 = vmul.f32 1.0, %v2558
      %v2560 = vrcp.pop %v2469
      %v2561 = vmul.f32 1.0, %v2560
      %v2562 = vrcp.pop %v2470
      %v2563 = vmul.f32 1.0, %v2562
      %v2564 = vrcp.pop %v2471
      %v2565 = vmul.f32 1.0, %v2564
      %v2566 = vrcp.pop %v2472
      %v2567 = vmul.f32 1.0, %v2566
      %v2568 = vrcp.pop %v2473
      %v2569 = vmul.f32 1.0, %v2568
      %v2570 = vrcp.pop %v2474
      %v2571 = vmul.f32 1.0, %v2570
      %v2572 = vrcp.pop %v2475
      %v2573 = vmul.f32 1.0, %v2572
      %v2574 = vrcp.pop %v2476
      %v2575 = vmul.f32 1.0, %v2574
      %v2576 = vrcp.pop %v2477
      %v2577 = vmul.f32 1.0, %v2576
      %v2578 = vrcp.pop %v2478
      %v2579 = vmul.f32 1.0, %v2578
      %v2580 = vrcp.pop %v2479
      %v2581 = vmul.f32 1.0, %v2580
      %v2582 = vrcp.pop %v2480
      %v2583 = vmul.f32 1.0, %v2582
      %v2584 = vrcp.pop %v2481
      %v2585 = vmul.f32 1.0, %v2584
      %v2586 = vrcp.pop %v2482
      %v2587 = vmul.f32 1.0, %v2586
      %v2588 = vrcp.pop %v2483
      %v2589 = vmul.f32 1.0, %v2588
      %v2590 = vrcp.pop %v2484
      %v2591 = vmul.f32 1.0, %v2590
      %v2592 = vrcp.pop %v2485
      %v2593 = vmul.f32 1.0, %v2592
      %v2594 = vrcp.pop %v2486
      %v2595 = vmul.f32 1.0, %v2594
      %v2596 = vrcp.pop %v2487
      %v2597 = vmul.f32 1.0, %v2596
      %v2598 = vrcp.pop %v2488
      %v2599 = vmul.f32 1.0, %v2598
      %v2600 = vrcp.pop %v2489
      %v2601 = vmul.f32 1.0, %v2600
      %v2602 = vrcp.pop %v2490
      %v2603 = vmul.f32 1.0, %v2602
      %v2604 = vrcp.pop %v2491
      %v2605 = vmul.f32 1.0, %v2604
      %v2606 = vrcp.pop %v2492
      %v2607 = vmul.f32 1.0, %v2606
      %v2608 = vrcp.pop %v2493
      %v2609 = vmul.f32 1.0, %v2608
      %v2610 = vrcp.pop %v2494
      %v2611 = vmul.f32 1.0, %v2610
      %v2612 = vrcp.pop %v2495
      %v2613 = vmul.f32 1.0, %v2612
      %v2614 = vrcp.pop %v2496
      %v2615 = vmul.f32 1.0, %v2614
      %v2616 = vrcp.pop %v2497
      %v2617 = vmul.f32 1.0, %v2616
      %v2618 = vrcp.pop %v2498
      %v2619 = vmul.f32 1.0, %v2618
      %v2620 = vrcp.pop %v2499
      %v2621 = vmul.f32 1.0, %v2620
      %v2622 = vrcp.pop %v2500
      %v2623 = vmul.f32 1.0, %v2622
      %v2624 = vrcp.pop %v2501
      %v2625 = vmul.f32 1.0, %v2624
      %v2626 = vrcp.pop %v2502
      %v2627 = vmul.f32 1.0, %v2626
      %v2628 = vrcp.pop %v2503
      %v2629 = vmul.f32 1.0, %v2628
      %v2630 = vrcp.pop %v2504
      %v2631 = vmul.f32 1.0, %v2630
      %v2632 = vrcp.pop %v2505
      %v2633 = vmul.f32 1.0, %v2632
      %2634 = vst [vmem:[%s148] sm:$0xff] %v2507
      %2635 = vst [vmem:[%s148 + $0x8] sm:$0xff] %v2509
      %2636 = vst [vmem:[%s148 + $0x10] sm:$0xff] %v2511
      %2637 = vst [vmem:[%s148 + $0x18] sm:$0xff] %v2513
      %2638 = vst [vmem:[%s148 + $0x20] sm:$0xff] %v2515
      %2639 = vst [vmem:[%s148 + $0x28] sm:$0xff] %v2517
      %2640 = vst [vmem:[%s148 + $0x30] sm:$0xff] %v2519
      %2641 = vst [vmem:[%s148 + $0x38] sm:$0xff] %v2521
      %2642 = vst [vmem:[%s148 + $0x40] sm:$0xff] %v2523
      %2643 = vst [vmem:[%s148 + $0x48] sm:$0xff] %v2525
      %2644 = vst [vmem:[%s148 + $0x50] sm:$0xff] %v2527
      %2645 = vst [vmem:[%s148 + $0x58] sm:$0xff] %v2529
      %2646 = vst [vmem:[%s148 + $0x60] sm:$0xff] %v2531
      %2647 = vst [vmem:[%s148 + $0x68] sm:$0xff] %v2533
      %2648 = vst [vmem:[%s148 + $0x70] sm:$0xff] %v2535
      %2649 = vst [vmem:[%s148 + $0x78] sm:$0xff] %v2537
      %2650 = vst [vmem:[%s148 + $0x80] sm:$0xff] %v2539
      %2651 = vst [vmem:[%s148 + $0x88] sm:$0xff] %v2541
      %2652 = vst [vmem:[%s148 + $0x90] sm:$0xff] %v2543
      %2653 = vst [vmem:[%s148 + $0x98] sm:$0xff] %v2545
      %2654 = vst [vmem:[%s148 + $0xa0] sm:$0xff] %v2547
      %2655 = vst [vmem:[%s148 + $0xa8] sm:$0xff] %v2549
      %2656 = vst [vmem:[%s148 + $0xb0] sm:$0xff] %v2551
      %2657 = vst [vmem:[%s148 + $0xb8] sm:$0xff] %v2553
      %2658 = vst [vmem:[%s148 + $0xc0] sm:$0xff] %v2555
      %2659 = vst [vmem:[%s148 + $0xc8] sm:$0xff] %v2557
      %2660 = vst [vmem:[%s148 + $0xd0] sm:$0xff] %v2559
      %2661 = vst [vmem:[%s148 + $0xd8] sm:$0xff] %v2561
      %2662 = vst [vmem:[%s148 + $0xe0] sm:$0xff] %v2563
      %2663 = vst [vmem:[%s148 + $0xe8] sm:$0xff] %v2565
      %2664 = vst [vmem:[%s148 + $0xf0] sm:$0xff] %v2567
      %2665 = vst [vmem:[%s148 + $0xf8] sm:$0xff] %v2569
      %2666 = vst [vmem:[%s148 + $0x100] sm:$0xff] %v2571
      %2667 = vst [vmem:[%s148 + $0x108] sm:$0xff] %v2573
      %2668 = vst [vmem:[%s148 + $0x110] sm:$0xff] %v2575
      %2669 = vst [vmem:[%s148 + $0x118] sm:$0xff] %v2577
      %2670 = vst [vmem:[%s148 + $0x120] sm:$0xff] %v2579
      %2671 = vst [vmem:[%s148 + $0x128] sm:$0xff] %v2581
      %2672 = vst [vmem:[%s148 + $0x130] sm:$0xff] %v2583
      %2673 = vst [vmem:[%s148 + $0x138] sm:$0xff] %v2585
      %2674 = vst [vmem:[%s148 + $0x140] sm:$0xff] %v2587
      %2675 = vst [vmem:[%s148 + $0x148] sm:$0xff] %v2589
      %2676 = vst [vmem:[%s148 + $0x150] sm:$0xff] %v2591
      %2677 = vst [vmem:[%s148 + $0x158] sm:$0xff] %v2593
      %2678 = vst [vmem:[%s148 + $0x160] sm:$0xff] %v2595
      %2679 = vst [vmem:[%s148 + $0x168] sm:$0xff] %v2597
      %2680 = vst [vmem:[%s148 + $0x170] sm:$0xff] %v2599
      %2681 = vst [vmem:[%s148 + $0x178] sm:$0xff] %v2601
      %2682 = vst [vmem:[%s148 + $0x180] sm:$0xff] %v2603
      %2683 = vst [vmem:[%s148 + $0x188] sm:$0xff] %v2605
      %2684 = vst [vmem:[%s148 + $0x190] sm:$0xff] %v2607
      %2685 = vst [vmem:[%s148 + $0x198] sm:$0xff] %v2609
      %2686 = vst [vmem:[%s148 + $0x1a0] sm:$0xff] %v2611
      %2687 = vst [vmem:[%s148 + $0x1a8] sm:$0xff] %v2613
      %2688 = vst [vmem:[%s148 + $0x1b0] sm:$0xff] %v2615
      %2689 = vst [vmem:[%s148 + $0x1b8] sm:$0xff] %v2617
      %2690 = vst [vmem:[%s148 + $0x1c0] sm:$0xff] %v2619
      %2691 = vst [vmem:[%s148 + $0x1c8] sm:$0xff] %v2621
      %2692 = vst [vmem:[%s148 + $0x1d0] sm:$0xff] %v2623
      %2693 = vst [vmem:[%s148 + $0x1d8] sm:$0xff] %v2625
      %2694 = vst [vmem:[%s148 + $0x1e0] sm:$0xff] %v2627
      %2695 = vst [vmem:[%s148 + $0x1e8] sm:$0xff] %v2629
      %2696 = vst [vmem:[%s148 + $0x1f0] sm:$0xff] %v2631
      %2697 = vst [vmem:[%s148 + $0x1f8] sm:$0xff] %v2633
      %s2698 = smul.u32 64, %s13
      %p2699 = scmp.lt.s32.totalorder %s2698, 255
      %s2700 = scalar_select %p2699, %s2698, 255
      %s2701 = smul.addr %s2700, 8
      %s2702 = scalar_lea.vmem %s2, %s2701
      // Predicated region
      $region29: #{ssta_forward.9} parent=27 // pred_check
        %p2703 = pneg %p78
      $region30: #{ssta_forward.9} parent=27 // pred_check_branch
        %2705 = sbr.rel (%p2703) target = $region32
      $region31: #{ssta_forward.9} parent=27 // pred_region
        %s2706 = smul.u32 64, %s13
      $region32: #{ssta_forward.9} parent=27 // pred_fallthru
        _
    $region28: #{ssta_forward.9} parent=5 // pred_fallthru
      _
    %p2707 = scmp.le.s32.totalorder 2, %s8
    // Predicated region
    $region33: #{ssta_forward.9} parent=5 // pred_check
      %p2708 = pneg %p2707
    $region34: #{ssta_forward.9} parent=5 // pred_check_branch
      %2710 = sbr.rel (%p2708) target = $region36
    $region35: #{ssta_forward.9} parent=5 // pred_region
      %s2711 = ssub.s32 %s8, 2
      // Predicated region
      $region37: #{ssta_forward.9} parent=35 // pred_check
        %p2712 = pneg %p84
      $region38: #{ssta_forward.9} parent=35 // pred_check_branch
        %2714 = sbr.rel (%p2712) target = $region40
      $region39: #{ssta_forward.9} parent=35 // pred_region
        %s2715 = smul.u32 64, %s14
        %p2716 = scmp.lt.s32.totalorder %s2715, 255
        %s2717 = scalar_select %p2716, %s2715, 255
        %s2718 = smul.addr %s2717, 8
        %s2719 = scalar_lea.vmem %s2, %s2718
      $region40: #{ssta_forward.9} parent=35 // pred_fallthru
        _
    $region36: #{ssta_forward.9} parent=5 // pred_fallthru
      _
  $region6: #{ssta_forward.9} parent=0 // loop_footer
    %s12 = sadd.s32 1, %s8
  $region7: #{ssta_forward.9} parent=0 // loop_footer_branch
    %7 = sbr.rel target = $region3
  $region8: #{ssta_forward.9} parent=0 // loop_exit
    _

</llo_original>
